<compile_context>
chip_gen: v6e
topology: v6e:2x2x1
jax: 0.10.0
libtpu: 0.0.40
codegen_flags: <defaults>
</compile_context>

<pallas_src>
import functools

import jax
import jax.numpy as jnp
from jax.experimental import pallas as pl
from jax.experimental.pallas import tpu as pltpu

LN_EPS = 1e-5
BN_EPS = 1e-5

# ---- row layout of the packed (N_vec, E) vector slab -----------------------
_VEC_EMB_B, _VEC_LN_G, _VEC_LN_B = 0, 1, 2
_VEC_HDR = 3
(_FFN1_G, _FFN1_B, _FFN1_B2,
 _ATT_G, _ATT_B, _ATT_OUT_B,
 _CONV_G, _CONV_B, _PW1_BA, _PW1_BB, _DW_B, _BN_SC, _BN_SH, _PW2_B,
 _FFN2_G, _FFN2_B, _FFN2_B2,
 _FIN_G, _FIN_B) = range(19)
_NVL = 19


def _layernorm(x, g, b):
    mean = jnp.mean(x, axis=-1, keepdims=True)
    var = jnp.mean(jnp.square(x - mean), axis=-1, keepdims=True)
    return (x - mean) * jax.lax.rsqrt(var + LN_EPS) * g + b


def _silu(x):
    return x * jax.nn.sigmoid(x)


# ---------------------------------------------------------------------------
# Fully fused kernel: embed+LN -> L x Conformer layer -> fc_out.
# Grid is over the batch dimension only ("parallel").
# ---------------------------------------------------------------------------
def _sad_fused_kernel(L, H, K,
                      x_ref, emb_w_ref, vec_ref,
                      ffn_w1_ref, ffn_b1_ref, ffn_w2_ref,
                      wqkv_ref, bqkv_ref, wout_ref,
                      pw_ref, dw_ref, fcw_ref, fcb_ref,
                      o_ref):
    T = x_ref.shape[0]
    E = emb_w_ref.shape[1]
    hd = E // H
    pad = (K - 1) // 2
    scale = 1.0 / float(hd) ** 0.5

    def V(i):                       # (E,) row of the packed vector slab
        return vec_ref[i]

    def mm(a, b):
        return jnp.dot(a, b, preferred_element_type=jnp.float32)

    x = x_ref[...].astype(jnp.float32)                               # (T, D)

    # ---- input embedding + LayerNorm --------------------------------------
    x = _layernorm(mm(x, emb_w_ref[...]) + V(_VEC_EMB_B),
                   V(_VEC_LN_G), V(_VEC_LN_B))                       # (T, E)

    for l in range(L):                                               # static unroll
        r = _VEC_HDR + l * _NVL

        # ---- FFN1 (half-step residual) ------------------------------------
        h = _layernorm(x, V(r + _FFN1_G), V(r + _FFN1_B))
        h = _silu(mm(h, ffn_w1_ref[2 * l + 0]) + ffn_b1_ref[2 * l + 0])
        h = mm(h, ffn_w2_ref[2 * l + 0]) + V(r + _FFN1_B2)
        x = x + 0.5 * h

        # ---- Multi-head self-attention (full, unmasked) --------------------
        h = _layernorm(x, V(r + _ATT_G), V(r + _ATT_B))
        a = jnp.zeros((T, E), jnp.float32) + V(r + _ATT_OUT_B)
        for n in range(H):                                           # static unroll
            iq = (3 * l + 0) * H + n
            ik = (3 * l + 1) * H + n
            iv = (3 * l + 2) * H + n
            q = (mm(h, wqkv_ref[iq]) + bqkv_ref[iq]) * scale         # (T, hd)
            k = mm(h, wqkv_ref[ik]) + bqkv_ref[ik]                   # (T, hd)
            v = mm(h, wqkv_ref[iv]) + bqkv_ref[iv]                   # (T, hd)
            s = jax.lax.dot_general(q, k, (((1,), (1,)), ((), ())),
                                    preferred_element_type=jnp.float32)  # (T, T)
            s = s - jnp.max(s, axis=-1, keepdims=True)
            e = jnp.exp(s)
            p = e / jnp.sum(e, axis=-1, keepdims=True)               # exact softmax
            head = mm(p, v)                                          # (T, hd)
            # concat(heads) @ W_out == sum_n head_n @ W_out[n]
            a = a + mm(head, wout_ref[l * H + n])                    # (T, E)
        x = x + a

        # ---- Convolution module --------------------------------------------
        h = _layernorm(x, V(r + _CONV_G), V(r + _CONV_B))
        val = mm(h, pw_ref[3 * l + 0]) + V(r + _PW1_BA)
        gate = mm(h, pw_ref[3 * l + 1]) + V(r + _PW1_BB)
        g = val * jax.nn.sigmoid(gate)                               # GLU, (T, E)

        # depthwise conv: padded sequence kept as an in-register value.
        zpad = jnp.zeros((pad, E), jnp.float32)
        gp = jnp.concatenate([zpad, g, zpad], axis=0)                # (T+K-1, E)
        acc = jnp.zeros((T, E), jnp.float32) + V(r + _DW_B)
        for kk in range(K):                                          # static unroll
            acc = acc + gp[kk:kk + T, :] * dw_ref[l, kk, :]
        y = acc * V(r + _BN_SC) + V(r + _BN_SH)                      # folded BN (eval)
        h = _silu(y)
        h = mm(h, pw_ref[3 * l + 2]) + V(r + _PW2_B)
        x = x + h

        # ---- FFN2 (half-step residual) -------------------------------------
        h = _layernorm(x, V(r + _FFN2_G), V(r + _FFN2_B))
        h = _silu(mm(h, ffn_w1_ref[2 * l + 1]) + ffn_b1_ref[2 * l + 1])
        h = mm(h, ffn_w2_ref[2 * l + 1]) + V(r + _FFN2_B2)
        x = x + 0.5 * h

        # ---- final layer norm of the conformer layer ------------------------
        x = _layernorm(x, V(r + _FIN_G), V(r + _FIN_B))

    # ---- fc_out: lane-dense (1, T) output ----------------------------------
    out = jax.lax.dot_general(fcw_ref[...], x, (((1,), (1,)), ((), ())),
                              preferred_element_type=jnp.float32)    # (1, T)
    o_ref[...] = (out + fcb_ref[0]).astype(o_ref.dtype)


# ---------------------------------------------------------------------------
# Host-side parameter packing: a handful of slabs instead of ~34*L operands.
# ---------------------------------------------------------------------------
def pack_params(params, *, num_heads):
    E = params["emb_w"].shape[1]
    H = num_heads
    hd = E // H
    layers = params["layers"]

    vec_rows = [params["emb_b"], params["ln_g"], params["ln_b"]]
    ffn_w1, ffn_b1, ffn_w2 = [], [], []
    wqkv, bqkv, wout, pww, dww = [], [], [], [], []
    for lp in layers:
        bn_scale = lp["bn_g"] * jax.lax.rsqrt(lp["bn_var"] + BN_EPS)
        bn_shift = lp["bn_b"] - lp["bn_mean"] * bn_scale
        vec_rows += [
            lp["ffn1_ln_g"], lp["ffn1_ln_b"], lp["ffn1_b2"],
            lp["attn_ln_g"], lp["attn_ln_b"], lp["attn_out_b"],
            lp["conv_ln_g"], lp["conv_ln_b"],
            lp["conv_pw1_b"][:E], lp["conv_pw1_b"][E:],
            lp["dw_b"], bn_scale, bn_shift, lp["conv_pw2_b"],
            lp["ffn2_ln_g"], lp["ffn2_ln_b"], lp["ffn2_b2"],
            lp["final_ln_g"], lp["final_ln_b"],
        ]
        ffn_w1 += [lp["ffn1_w1"], lp["ffn2_w1"]]
        ffn_b1 += [lp["ffn1_b1"], lp["ffn2_b1"]]
        ffn_w2 += [lp["ffn1_w2"], lp["ffn2_w2"]]
        # MHSA weights pre-split per head -> leading-axis ref indexing in-kernel.
        w_in = lp["attn_in_w"].reshape(E, 3, H, hd).transpose(1, 2, 0, 3)  # (3,H,E,hd)
        wqkv.append(w_in.reshape(3 * H, E, hd))
        bqkv.append(lp["attn_in_b"].reshape(3 * H, hd))
        wout.append(lp["attn_out_w"].reshape(H, hd, E))
        pww += [lp["conv_pw1_w"][:, :E], lp["conv_pw1_w"][:, E:], lp["conv_pw2_w"]]
        # TODO(synk): PyTorch depthwise Conv1d weight is (E, 1, K); transpose to
        # (K, E) when importing real checkpoints (synthetic init already matches).
        dww.append(lp["dw_w"])

    return dict(
        emb_w=params["emb_w"],                                   # (D, E)
        vecs=jnp.stack(vec_rows, axis=0),                        # (3+19L, E)
        ffn_w1=jnp.stack(ffn_w1, axis=0),                        # (2L, E, F)
        ffn_b1=jnp.stack(ffn_b1, axis=0),                        # (2L, F)
        ffn_w2=jnp.stack(ffn_w2, axis=0),                        # (2L, F, E)
        wqkv=jnp.concatenate(wqkv, axis=0),                      # (3HL, E, hd)
        bqkv=jnp.concatenate(bqkv, axis=0),                      # (3HL, hd)
        wout=jnp.concatenate(wout, axis=0),                      # (HL, hd, E)
        pww=jnp.stack(pww, axis=0),                              # (3L, E, E)
        dww=jnp.stack(dww, axis=0),                              # (L, K, E)
        fcw=params["fc_w"].reshape(1, E),                        # (1, E)
        fcb=params["fc_b"].reshape(1,).astype(jnp.float32),      # (1,) -> SMEM
    )


# ---------------------------------------------------------------------------
# Full forward pass: exactly ONE pallas_call.
# ---------------------------------------------------------------------------
def sad_forward(x, params, *, num_heads, kernel_size):
    B, T, D = x.shape
    L = len(params["layers"])
    assert L >= 1
    p = pack_params(params, num_heads=num_heads)

    def rep(arr):       # whole-array operand, resident in VMEM for every grid step
        shp = arr.shape
        return pl.BlockSpec(shp, lambda b: (0,) * len(shp))

    kernel = functools.partial(_sad_fused_kernel, L, num_heads, kernel_size)
    out = pl.pallas_call(
        kernel,
        out_shape=jax.ShapeDtypeStruct((B, 1, T), jnp.float32),
        grid=(B,),
        in_specs=[
            pl.BlockSpec((None, T, D), lambda b: (b, 0, 0)),
            rep(p["emb_w"]), rep(p["vecs"]),
            rep(p["ffn_w1"]), rep(p["ffn_b1"]), rep(p["ffn_w2"]),
            rep(p["wqkv"]), rep(p["bqkv"]), rep(p["wout"]),
            rep(p["pww"]), rep(p["dww"]), rep(p["fcw"]),
            pl.BlockSpec(memory_space=pltpu.MemorySpace.SMEM),   # fc_out bias scalar
        ],
        out_specs=pl.BlockSpec((None, 1, T), lambda b: (b, 0, 0)),
        compiler_params=pltpu.CompilerParams(
            dimension_semantics=("parallel",)),
    )(x, p["emb_w"], p["vecs"], p["ffn_w1"], p["ffn_b1"], p["ffn_w2"],
      p["wqkv"], p["bqkv"], p["wout"], p["pww"], p["dww"], p["fcw"], p["fcb"])
    # (B, 1, T) -> (B, T, 1) is a free row-major reshape.
    return out.reshape(B, T, 1)


# ---------------------------------------------------------------------------
# Deterministic synthetic parameter init (shapes follow the PyTorch __init__)
# ---------------------------------------------------------------------------
def init_params(key, input_size, E, H, L, K, ffn_mult):
    F = E * ffn_mult
    keys = jax.random.split(key, 8 + L * 32)
    ctr = iter(range(len(keys)))

    def nrm(shape, scale=0.05):
        return scale * jax.random.normal(keys[next(ctr)], shape, dtype=jnp.float32)

    params = {
        "emb_w": nrm((input_size, E)),
        "emb_b": nrm((E,)),
        "ln_g": jnp.ones((E,), jnp.float32) + nrm((E,), 0.01),
        "ln_b": nrm((E,), 0.01),
        "fc_w": nrm((E, 1)),
        "fc_b": nrm((1,)),
        "layers": [],
    }
    for _ in range(L):
        lp = {
            # FFN1
            "ffn1_ln_g": jnp.ones((E,), jnp.float32) + nrm((E,), 0.01),
            "ffn1_ln_b": nrm((E,), 0.01),
            "ffn1_w1": nrm((E, F)), "ffn1_b1": nrm((F,)),
            "ffn1_w2": nrm((F, E)), "ffn1_b2": nrm((E,)),
            # self-attention
            "attn_ln_g": jnp.ones((E,), jnp.float32) + nrm((E,), 0.01),
            "attn_ln_b": nrm((E,), 0.01),
            "attn_in_w": nrm((E, 3 * E)), "attn_in_b": nrm((3 * E,)),
            "attn_out_w": nrm((E, E)), "attn_out_b": nrm((E,)),
            # convolution module
            "conv_ln_g": jnp.ones((E,), jnp.float32) + nrm((E,), 0.01),
            "conv_ln_b": nrm((E,), 0.01),
            "conv_pw1_w": nrm((E, 2 * E)), "conv_pw1_b": nrm((2 * E,)),
            "dw_w": nrm((K, E)), "dw_b": nrm((E,)),
            "bn_g": jnp.ones((E,), jnp.float32) + nrm((E,), 0.01),
            "bn_b": nrm((E,), 0.01),
            "bn_mean": jnp.zeros((E,), jnp.float32),
            "bn_var": jnp.ones((E,), jnp.float32),
            "conv_pw2_w": nrm((E, E)), "conv_pw2_b": nrm((E,)),
            # FFN2
            "ffn2_ln_g": jnp.ones((E,), jnp.float32) + nrm((E,), 0.01),
            "ffn2_ln_b": nrm((E,), 0.01),
            "ffn2_w1": nrm((E, F)), "ffn2_b1": nrm((F,)),
            "ffn2_w2": nrm((F, E)), "ffn2_b2": nrm((E,)),
            # final layer norm of the conformer layer
            "final_ln_g": jnp.ones((E,), jnp.float32) + nrm((E,), 0.01),
            "final_ln_b": nrm((E,), 0.01),
        }
        params["layers"].append(lp)
    return params


# ---------------------------------------------------------------------------
if __name__ == "__main__":
    B, T, INPUT_SIZE = 2, 16, 16
    EMBED, HEADS, LAYERS, KSIZE, FFN_MULT = 32, 4, 2, 31, 4

    root = jax.random.PRNGKey(0)
    pkey, xkey = jax.random.split(root)
    params = init_params(pkey, INPUT_SIZE, EMBED, HEADS, LAYERS, KSIZE, FFN_MULT)
    x = jax.random.normal(xkey, (B, T, INPUT_SIZE), dtype=jnp.float32)

    fwd = jax.jit(functools.partial(sad_forward, num_heads=HEADS, kernel_size=KSIZE))
    out = fwd(x, params)
    jax.block_until_ready(out)

    assert out.shape == (B, T, 1), out.shape
    assert bool(jnp.all(jnp.isfinite(out)))
    print("KERNEL_OK")
</pallas_src>

<mosaic_0001>
module attributes {stable_mosaic.version = 11 : i64} {
  func.func @_sad_fused_kernel(%arg0: i32, %arg1: memref<1x16x16xf32, #tpu.memory_space<vmem>>, %arg2: memref<16x32xf32, #tpu.memory_space<vmem>>, %arg3: memref<41x32xf32, #tpu.memory_space<vmem>>, %arg4: memref<4x32x128xf32, #tpu.memory_space<vmem>>, %arg5: memref<4x128xf32, #tpu.memory_space<vmem>>, %arg6: memref<4x128x32xf32, #tpu.memory_space<vmem>>, %arg7: memref<24x32x8xf32, #tpu.memory_space<vmem>>, %arg8: memref<24x8xf32, #tpu.memory_space<vmem>>, %arg9: memref<8x8x32xf32, #tpu.memory_space<vmem>>, %arg10: memref<6x32x32xf32, #tpu.memory_space<vmem>>, %arg11: memref<2x31x32xf32, #tpu.memory_space<vmem>>, %arg12: memref<1x32xf32, #tpu.memory_space<vmem>>, %arg13: memref<1xf32, #tpu.memory_space<smem>>, %arg14: memref<1x1x16xf32, #tpu.memory_space<vmem>>) attributes {dimension_semantics = [#tpu.dimension_semantics<parallel>], iteration_bounds = array<i64: 2>, scalar_prefetch = 0 : i64, scratch_operands = 0 : i64, tpu.core_type = #tpu.core_type<tc>, window_params = [{transform_indices = @transform_0, window_bounds = array<i64: 1, 16, 16>}, {pipeline_mode = #tpu.pipeline_mode<synchronous>, transform_indices = @transform_1, window_bounds = array<i64: 16, 32>}, {pipeline_mode = #tpu.pipeline_mode<synchronous>, transform_indices = @transform_2, window_bounds = array<i64: 41, 32>}, {pipeline_mode = #tpu.pipeline_mode<synchronous>, transform_indices = @transform_3, window_bounds = array<i64: 4, 32, 128>}, {pipeline_mode = #tpu.pipeline_mode<synchronous>, transform_indices = @transform_4, window_bounds = array<i64: 4, 128>}, {pipeline_mode = #tpu.pipeline_mode<synchronous>, transform_indices = @transform_5, window_bounds = array<i64: 4, 128, 32>}, {pipeline_mode = #tpu.pipeline_mode<synchronous>, transform_indices = @transform_6, window_bounds = array<i64: 24, 32, 8>}, {pipeline_mode = #tpu.pipeline_mode<synchronous>, transform_indices = @transform_7, window_bounds = array<i64: 24, 8>}, {pipeline_mode = #tpu.pipeline_mode<synchronous>, transform_indices = @transform_8, window_bounds = array<i64: 8, 8, 32>}, {pipeline_mode = #tpu.pipeline_mode<synchronous>, transform_indices = @transform_9, window_bounds = array<i64: 6, 32, 32>}, {pipeline_mode = #tpu.pipeline_mode<synchronous>, transform_indices = @transform_10, window_bounds = array<i64: 2, 31, 32>}, {pipeline_mode = #tpu.pipeline_mode<synchronous>, transform_indices = @transform_11, window_bounds = array<i64: 1, 32>}, {transform_indices = @transform_12, window_bounds = array<i64: 1>}, {transform_indices = @transform_13, window_bounds = array<i64: 1, 1, 16>}]} {
    %c0 = arith.constant 0 : index
    %c0_0 = arith.constant 0 : index
    %c0_1 = arith.constant 0 : index
    %0 = vector.load %arg1[%c0, %c0_0, %c0_1] : memref<1x16x16xf32, #tpu.memory_space<vmem>>, vector<1x16x16xf32>
    %1 = vector.shape_cast %0 : vector<1x16x16xf32> to vector<16x16xf32>
    %c0_2 = arith.constant 0 : index
    %c0_3 = arith.constant 0 : index
    %2 = vector.load %arg2[%c0_2, %c0_3] : memref<16x32xf32, #tpu.memory_space<vmem>>, vector<16x32xf32>
    %cst = arith.constant dense<0.000000e+00> : vector<16x32xf32>
    %3 = tpu.matmul %1, %2, %cst {dimension_numbers = #tpu.dot_dimension_numbers<[1], [0], [0], [1], [0, 0, 1, 1], [], []>} : vector<16x16xf32>, vector<16x32xf32>, vector<16x32xf32> -> vector<16x32xf32>
    %c0_4 = arith.constant 0 : index
    %c0_5 = arith.constant 0 : index
    %4 = vector.load %arg3[%c0_4, %c0_5] : memref<41x32xf32, #tpu.memory_space<vmem>>, vector<1x32xf32>
    %5 = vector.shape_cast %4 : vector<1x32xf32> to vector<32xf32>
    %6 = vector.shape_cast %5 : vector<32xf32> to vector<1x32xf32>
    %7 = vector.broadcast %6 : vector<1x32xf32> to vector<16x32xf32>
    %8 = arith.addf %3, %7 : vector<16x32xf32>
    %c1 = arith.constant 1 : index
    %c0_6 = arith.constant 0 : index
    %9 = vector.load %arg3[%c1, %c0_6] : memref<41x32xf32, #tpu.memory_space<vmem>>, vector<1x32xf32>
    %10 = vector.shape_cast %9 : vector<1x32xf32> to vector<32xf32>
    %c2 = arith.constant 2 : index
    %c0_7 = arith.constant 0 : index
    %11 = vector.load %arg3[%c2, %c0_7] : memref<41x32xf32, #tpu.memory_space<vmem>>, vector<1x32xf32>
    %12 = vector.shape_cast %11 : vector<1x32xf32> to vector<32xf32>
    %cst_8 = arith.constant dense<0.000000e+00> : vector<16xf32>
    %13 = vector.multi_reduction <add>, %8, %cst_8 [1] : vector<16x32xf32> to vector<16xf32>
    %14 = vector.shape_cast %13 : vector<16xf32> to vector<16x1xf32>
    %cst_9 = arith.constant 3.200000e+01 : f32
    %15 = vector.broadcast %cst_9 : f32 to vector<16x1xf32>
    %16 = arith.divf %14, %15 : vector<16x1xf32>
    %17 = vector.broadcast %16 : vector<16x1xf32> to vector<16x32xf32>
    %18 = arith.subf %8, %17 : vector<16x32xf32>
    %19 = arith.mulf %18, %18 : vector<16x32xf32>
    %cst_10 = arith.constant dense<0.000000e+00> : vector<16xf32>
    %20 = vector.multi_reduction <add>, %19, %cst_10 [1] : vector<16x32xf32> to vector<16xf32>
    %21 = vector.shape_cast %20 : vector<16xf32> to vector<16x1xf32>
    %cst_11 = arith.constant 3.200000e+01 : f32
    %22 = vector.broadcast %cst_11 : f32 to vector<16x1xf32>
    %23 = arith.divf %21, %22 : vector<16x1xf32>
    %24 = vector.broadcast %16 : vector<16x1xf32> to vector<16x32xf32>
    %25 = arith.subf %8, %24 : vector<16x32xf32>
    %cst_12 = arith.constant 9.99999974E-6 : f32
    %26 = vector.broadcast %cst_12 : f32 to vector<16x1xf32>
    %27 = arith.addf %23, %26 : vector<16x1xf32>
    %28 = math.rsqrt %27 : vector<16x1xf32>
    %29 = vector.broadcast %28 : vector<16x1xf32> to vector<16x32xf32>
    %30 = arith.mulf %25, %29 : vector<16x32xf32>
    %31 = vector.shape_cast %10 : vector<32xf32> to vector<1x32xf32>
    %32 = vector.broadcast %31 : vector<1x32xf32> to vector<16x32xf32>
    %33 = arith.mulf %30, %32 : vector<16x32xf32>
    %34 = vector.shape_cast %12 : vector<32xf32> to vector<1x32xf32>
    %35 = vector.broadcast %34 : vector<1x32xf32> to vector<16x32xf32>
    %36 = arith.addf %33, %35 : vector<16x32xf32>
    %c3 = arith.constant 3 : index
    %c0_13 = arith.constant 0 : index
    %37 = vector.load %arg3[%c3, %c0_13] : memref<41x32xf32, #tpu.memory_space<vmem>>, vector<1x32xf32>
    %38 = vector.shape_cast %37 : vector<1x32xf32> to vector<32xf32>
    %c4 = arith.constant 4 : index
    %c0_14 = arith.constant 0 : index
    %39 = vector.load %arg3[%c4, %c0_14] : memref<41x32xf32, #tpu.memory_space<vmem>>, vector<1x32xf32>
    %40 = vector.shape_cast %39 : vector<1x32xf32> to vector<32xf32>
    %cst_15 = arith.constant dense<0.000000e+00> : vector<16xf32>
    %41 = vector.multi_reduction <add>, %36, %cst_15 [1] : vector<16x32xf32> to vector<16xf32>
    %42 = vector.shape_cast %41 : vector<16xf32> to vector<16x1xf32>
    %cst_16 = arith.constant 3.200000e+01 : f32
    %43 = vector.broadcast %cst_16 : f32 to vector<16x1xf32>
    %44 = arith.divf %42, %43 : vector<16x1xf32>
    %45 = vector.broadcast %44 : vector<16x1xf32> to vector<16x32xf32>
    %46 = arith.subf %36, %45 : vector<16x32xf32>
    %47 = arith.mulf %46, %46 : vector<16x32xf32>
    %cst_17 = arith.constant dense<0.000000e+00> : vector<16xf32>
    %48 = vector.multi_reduction <add>, %47, %cst_17 [1] : vector<16x32xf32> to vector<16xf32>
    %49 = vector.shape_cast %48 : vector<16xf32> to vector<16x1xf32>
    %cst_18 = arith.constant 3.200000e+01 : f32
    %50 = vector.broadcast %cst_18 : f32 to vector<16x1xf32>
    %51 = arith.divf %49, %50 : vector<16x1xf32>
    %52 = vector.broadcast %44 : vector<16x1xf32> to vector<16x32xf32>
    %53 = arith.subf %36, %52 : vector<16x32xf32>
    %cst_19 = arith.constant 9.99999974E-6 : f32
    %54 = vector.broadcast %cst_19 : f32 to vector<16x1xf32>
    %55 = arith.addf %51, %54 : vector<16x1xf32>
    %56 = math.rsqrt %55 : vector<16x1xf32>
    %57 = vector.broadcast %56 : vector<16x1xf32> to vector<16x32xf32>
    %58 = arith.mulf %53, %57 : vector<16x32xf32>
    %59 = vector.shape_cast %38 : vector<32xf32> to vector<1x32xf32>
    %60 = vector.broadcast %59 : vector<1x32xf32> to vector<16x32xf32>
    %61 = arith.mulf %58, %60 : vector<16x32xf32>
    %62 = vector.shape_cast %40 : vector<32xf32> to vector<1x32xf32>
    %63 = vector.broadcast %62 : vector<1x32xf32> to vector<16x32xf32>
    %64 = arith.addf %61, %63 : vector<16x32xf32>
    %c0_20 = arith.constant 0 : index
    %c0_21 = arith.constant 0 : index
    %c0_22 = arith.constant 0 : index
    %65 = vector.load %arg4[%c0_20, %c0_21, %c0_22] : memref<4x32x128xf32, #tpu.memory_space<vmem>>, vector<1x32x128xf32>
    %66 = vector.shape_cast %65 : vector<1x32x128xf32> to vector<32x128xf32>
    %cst_23 = arith.constant dense<0.000000e+00> : vector<16x128xf32>
    %67 = tpu.matmul %64, %66, %cst_23 {dimension_numbers = #tpu.dot_dimension_numbers<[1], [0], [0], [1], [0, 0, 1, 1], [], []>} : vector<16x32xf32>, vector<32x128xf32>, vector<16x128xf32> -> vector<16x128xf32>
    %c0_24 = arith.constant 0 : index
    %c0_25 = arith.constant 0 : index
    %68 = vector.load %arg5[%c0_24, %c0_25] : memref<4x128xf32, #tpu.memory_space<vmem>>, vector<1x128xf32>
    %69 = vector.shape_cast %68 : vector<1x128xf32> to vector<128xf32>
    %70 = vector.shape_cast %69 : vector<128xf32> to vector<1x128xf32>
    %71 = vector.broadcast %70 : vector<1x128xf32> to vector<16x128xf32>
    %72 = arith.addf %67, %71 : vector<16x128xf32>
    %73 = arith.negf %72 : vector<16x128xf32>
    %74 = math.exp %73 : vector<16x128xf32>
    %cst_26 = arith.constant 1.000000e+00 : f32
    %75 = vector.broadcast %cst_26 : f32 to vector<16x128xf32>
    %76 = arith.addf %75, %74 : vector<16x128xf32>
    %77 = arith.divf %75, %76 : vector<16x128xf32>
    %78 = arith.mulf %72, %77 : vector<16x128xf32>
    %c0_27 = arith.constant 0 : index
    %c0_28 = arith.constant 0 : index
    %c0_29 = arith.constant 0 : index
    %79 = vector.load %arg6[%c0_27, %c0_28, %c0_29] : memref<4x128x32xf32, #tpu.memory_space<vmem>>, vector<1x128x32xf32>
    %80 = vector.shape_cast %79 : vector<1x128x32xf32> to vector<128x32xf32>
    %cst_30 = arith.constant dense<0.000000e+00> : vector<16x32xf32>
    %81 = tpu.matmul %78, %80, %cst_30 {dimension_numbers = #tpu.dot_dimension_numbers<[1], [0], [0], [1], [0, 0, 1, 1], [], []>} : vector<16x128xf32>, vector<128x32xf32>, vector<16x32xf32> -> vector<16x32xf32>
    %c5 = arith.constant 5 : index
    %c0_31 = arith.constant 0 : index
    %82 = vector.load %arg3[%c5, %c0_31] : memref<41x32xf32, #tpu.memory_space<vmem>>, vector<1x32xf32>
    %83 = vector.shape_cast %82 : vector<1x32xf32> to vector<32xf32>
    %84 = vector.shape_cast %83 : vector<32xf32> to vector<1x32xf32>
    %85 = vector.broadcast %84 : vector<1x32xf32> to vector<16x32xf32>
    %86 = arith.addf %81, %85 : vector<16x32xf32>
    %cst_32 = arith.constant 5.000000e-01 : f32
    %87 = vector.broadcast %cst_32 : f32 to vector<16x32xf32>
    %88 = arith.mulf %87, %86 : vector<16x32xf32>
    %89 = arith.addf %36, %88 : vector<16x32xf32>
    %c6 = arith.constant 6 : index
    %c0_33 = arith.constant 0 : index
    %90 = vector.load %arg3[%c6, %c0_33] : memref<41x32xf32, #tpu.memory_space<vmem>>, vector<1x32xf32>
    %91 = vector.shape_cast %90 : vector<1x32xf32> to vector<32xf32>
    %c7 = arith.constant 7 : index
    %c0_34 = arith.constant 0 : index
    %92 = vector.load %arg3[%c7, %c0_34] : memref<41x32xf32, #tpu.memory_space<vmem>>, vector<1x32xf32>
    %93 = vector.shape_cast %92 : vector<1x32xf32> to vector<32xf32>
    %cst_35 = arith.constant dense<0.000000e+00> : vector<16xf32>
    %94 = vector.multi_reduction <add>, %89, %cst_35 [1] : vector<16x32xf32> to vector<16xf32>
    %95 = vector.shape_cast %94 : vector<16xf32> to vector<16x1xf32>
    %cst_36 = arith.constant 3.200000e+01 : f32
    %96 = vector.broadcast %cst_36 : f32 to vector<16x1xf32>
    %97 = arith.divf %95, %96 : vector<16x1xf32>
    %98 = vector.broadcast %97 : vector<16x1xf32> to vector<16x32xf32>
    %99 = arith.subf %89, %98 : vector<16x32xf32>
    %100 = arith.mulf %99, %99 : vector<16x32xf32>
    %cst_37 = arith.constant dense<0.000000e+00> : vector<16xf32>
    %101 = vector.multi_reduction <add>, %100, %cst_37 [1] : vector<16x32xf32> to vector<16xf32>
    %102 = vector.shape_cast %101 : vector<16xf32> to vector<16x1xf32>
    %cst_38 = arith.constant 3.200000e+01 : f32
    %103 = vector.broadcast %cst_38 : f32 to vector<16x1xf32>
    %104 = arith.divf %102, %103 : vector<16x1xf32>
    %105 = vector.broadcast %97 : vector<16x1xf32> to vector<16x32xf32>
    %106 = arith.subf %89, %105 : vector<16x32xf32>
    %cst_39 = arith.constant 9.99999974E-6 : f32
    %107 = vector.broadcast %cst_39 : f32 to vector<16x1xf32>
    %108 = arith.addf %104, %107 : vector<16x1xf32>
    %109 = math.rsqrt %108 : vector<16x1xf32>
    %110 = vector.broadcast %109 : vector<16x1xf32> to vector<16x32xf32>
    %111 = arith.mulf %106, %110 : vector<16x32xf32>
    %112 = vector.shape_cast %91 : vector<32xf32> to vector<1x32xf32>
    %113 = vector.broadcast %112 : vector<1x32xf32> to vector<16x32xf32>
    %114 = arith.mulf %111, %113 : vector<16x32xf32>
    %115 = vector.shape_cast %93 : vector<32xf32> to vector<1x32xf32>
    %116 = vector.broadcast %115 : vector<1x32xf32> to vector<16x32xf32>
    %117 = arith.addf %114, %116 : vector<16x32xf32>
    %cst_40 = arith.constant 0.000000e+00 : f32
    %118 = vector.broadcast %cst_40 : f32 to vector<16x32xf32>
    %c8 = arith.constant 8 : index
    %c0_41 = arith.constant 0 : index
    %119 = vector.load %arg3[%c8, %c0_41] : memref<41x32xf32, #tpu.memory_space<vmem>>, vector<1x32xf32>
    %120 = vector.shape_cast %119 : vector<1x32xf32> to vector<32xf32>
    %121 = vector.shape_cast %120 : vector<32xf32> to vector<1x32xf32>
    %122 = vector.broadcast %121 : vector<1x32xf32> to vector<16x32xf32>
    %123 = arith.addf %118, %122 : vector<16x32xf32>
    %c0_42 = arith.constant 0 : index
    %c0_43 = arith.constant 0 : index
    %c0_44 = arith.constant 0 : index
    %124 = vector.load %arg7[%c0_42, %c0_43, %c0_44] : memref<24x32x8xf32, #tpu.memory_space<vmem>>, vector<1x32x8xf32>
    %125 = vector.shape_cast %124 : vector<1x32x8xf32> to vector<32x8xf32>
    %cst_45 = arith.constant dense<0.000000e+00> : vector<16x8xf32>
    %126 = tpu.matmul %117, %125, %cst_45 {dimension_numbers = #tpu.dot_dimension_numbers<[1], [0], [0], [1], [0, 0, 1, 1], [], []>} : vector<16x32xf32>, vector<32x8xf32>, vector<16x8xf32> -> vector<16x8xf32>
    %c0_46 = arith.constant 0 : index
    %c0_47 = arith.constant 0 : index
    %127 = vector.load %arg8[%c0_46, %c0_47] : memref<24x8xf32, #tpu.memory_space<vmem>>, vector<1x8xf32>
    %128 = vector.shape_cast %127 : vector<1x8xf32> to vector<8xf32>
    %129 = vector.shape_cast %128 : vector<8xf32> to vector<1x8xf32>
    %130 = vector.broadcast %129 : vector<1x8xf32> to vector<16x8xf32>
    %131 = arith.addf %126, %130 : vector<16x8xf32>
    %cst_48 = arith.constant 0.353553385 : f32
    %132 = vector.broadcast %cst_48 : f32 to vector<16x8xf32>
    %133 = arith.mulf %131, %132 : vector<16x8xf32>
    %c4_49 = arith.constant 4 : index
    %c0_50 = arith.constant 0 : index
    %c0_51 = arith.constant 0 : index
    %134 = vector.load %arg7[%c4_49, %c0_50, %c0_51] : memref<24x32x8xf32, #tpu.memory_space<vmem>>, vector<1x32x8xf32>
    %135 = vector.shape_cast %134 : vector<1x32x8xf32> to vector<32x8xf32>
    %cst_52 = arith.constant dense<0.000000e+00> : vector<16x8xf32>
    %136 = tpu.matmul %117, %135, %cst_52 {dimension_numbers = #tpu.dot_dimension_numbers<[1], [0], [0], [1], [0, 0, 1, 1], [], []>} : vector<16x32xf32>, vector<32x8xf32>, vector<16x8xf32> -> vector<16x8xf32>
    %c4_53 = arith.constant 4 : index
    %c0_54 = arith.constant 0 : index
    %137 = vector.load %arg8[%c4_53, %c0_54] : memref<24x8xf32, #tpu.memory_space<vmem>>, vector<1x8xf32>
    %138 = vector.shape_cast %137 : vector<1x8xf32> to vector<8xf32>
    %139 = vector.shape_cast %138 : vector<8xf32> to vector<1x8xf32>
    %140 = vector.broadcast %139 : vector<1x8xf32> to vector<16x8xf32>
    %141 = arith.addf %136, %140 : vector<16x8xf32>
    %c8_55 = arith.constant 8 : index
    %c0_56 = arith.constant 0 : index
    %c0_57 = arith.constant 0 : index
    %142 = vector.load %arg7[%c8_55, %c0_56, %c0_57] : memref<24x32x8xf32, #tpu.memory_space<vmem>>, vector<1x32x8xf32>
    %143 = vector.shape_cast %142 : vector<1x32x8xf32> to vector<32x8xf32>
    %cst_58 = arith.constant dense<0.000000e+00> : vector<16x8xf32>
    %144 = tpu.matmul %117, %143, %cst_58 {dimension_numbers = #tpu.dot_dimension_numbers<[1], [0], [0], [1], [0, 0, 1, 1], [], []>} : vector<16x32xf32>, vector<32x8xf32>, vector<16x8xf32> -> vector<16x8xf32>
    %c8_59 = arith.constant 8 : index
    %c0_60 = arith.constant 0 : index
    %145 = vector.load %arg8[%c8_59, %c0_60] : memref<24x8xf32, #tpu.memory_space<vmem>>, vector<1x8xf32>
    %146 = vector.shape_cast %145 : vector<1x8xf32> to vector<8xf32>
    %147 = vector.shape_cast %146 : vector<8xf32> to vector<1x8xf32>
    %148 = vector.broadcast %147 : vector<1x8xf32> to vector<16x8xf32>
    %149 = arith.addf %144, %148 : vector<16x8xf32>
    %cst_61 = arith.constant dense<0.000000e+00> : vector<16x16xf32>
    %150 = tpu.matmul %133, %141, %cst_61 {dimension_numbers = #tpu.dot_dimension_numbers<[1], [1], [0], [0], [0, 0, 1, 0], [], []>} : vector<16x8xf32>, vector<16x8xf32>, vector<16x16xf32> -> vector<16x16xf32>
    %cst_62 = arith.constant dense<0xFF800000> : vector<16xf32>
    %151 = vector.multi_reduction <maximumf>, %150, %cst_62 [1] : vector<16x16xf32> to vector<16xf32>
    %152 = vector.shape_cast %151 : vector<16xf32> to vector<16x1xf32>
    %153 = vector.broadcast %152 : vector<16x1xf32> to vector<16x16xf32>
    %154 = arith.subf %150, %153 : vector<16x16xf32>
    %155 = math.exp %154 : vector<16x16xf32>
    %cst_63 = arith.constant dense<0.000000e+00> : vector<16xf32>
    %156 = vector.multi_reduction <add>, %155, %cst_63 [1] : vector<16x16xf32> to vector<16xf32>
    %157 = vector.shape_cast %156 : vector<16xf32> to vector<16x1xf32>
    %158 = vector.broadcast %157 : vector<16x1xf32> to vector<16x16xf32>
    %159 = arith.divf %155, %158 : vector<16x16xf32>
    %cst_64 = arith.constant dense<0.000000e+00> : vector<16x8xf32>
    %160 = tpu.matmul %159, %149, %cst_64 {dimension_numbers = #tpu.dot_dimension_numbers<[1], [0], [0], [1], [0, 0, 1, 1], [], []>} : vector<16x16xf32>, vector<16x8xf32>, vector<16x8xf32> -> vector<16x8xf32>
    %c0_65 = arith.constant 0 : index
    %c0_66 = arith.constant 0 : index
    %c0_67 = arith.constant 0 : index
    %161 = vector.load %arg9[%c0_65, %c0_66, %c0_67] : memref<8x8x32xf32, #tpu.memory_space<vmem>>, vector<1x8x32xf32>
    %162 = vector.shape_cast %161 : vector<1x8x32xf32> to vector<8x32xf32>
    %cst_68 = arith.constant dense<0.000000e+00> : vector<16x32xf32>
    %163 = tpu.matmul %160, %162, %cst_68 {dimension_numbers = #tpu.dot_dimension_numbers<[1], [0], [0], [1], [0, 0, 1, 1], [], []>} : vector<16x8xf32>, vector<8x32xf32>, vector<16x32xf32> -> vector<16x32xf32>
    %164 = arith.addf %123, %163 : vector<16x32xf32>
    %c1_69 = arith.constant 1 : index
    %c0_70 = arith.constant 0 : index
    %c0_71 = arith.constant 0 : index
    %165 = vector.load %arg7[%c1_69, %c0_70, %c0_71] : memref<24x32x8xf32, #tpu.memory_space<vmem>>, vector<1x32x8xf32>
    %166 = vector.shape_cast %165 : vector<1x32x8xf32> to vector<32x8xf32>
    %cst_72 = arith.constant dense<0.000000e+00> : vector<16x8xf32>
    %167 = tpu.matmul %117, %166, %cst_72 {dimension_numbers = #tpu.dot_dimension_numbers<[1], [0], [0], [1], [0, 0, 1, 1], [], []>} : vector<16x32xf32>, vector<32x8xf32>, vector<16x8xf32> -> vector<16x8xf32>
    %c1_73 = arith.constant 1 : index
    %c0_74 = arith.constant 0 : index
    %168 = vector.load %arg8[%c1_73, %c0_74] : memref<24x8xf32, #tpu.memory_space<vmem>>, vector<1x8xf32>
    %169 = vector.shape_cast %168 : vector<1x8xf32> to vector<8xf32>
    %170 = vector.shape_cast %169 : vector<8xf32> to vector<1x8xf32>
    %171 = vector.broadcast %170 : vector<1x8xf32> to vector<16x8xf32>
    %172 = arith.addf %167, %171 : vector<16x8xf32>
    %cst_75 = arith.constant 0.353553385 : f32
    %173 = vector.broadcast %cst_75 : f32 to vector<16x8xf32>
    %174 = arith.mulf %172, %173 : vector<16x8xf32>
    %c5_76 = arith.constant 5 : index
    %c0_77 = arith.constant 0 : index
    %c0_78 = arith.constant 0 : index
    %175 = vector.load %arg7[%c5_76, %c0_77, %c0_78] : memref<24x32x8xf32, #tpu.memory_space<vmem>>, vector<1x32x8xf32>
    %176 = vector.shape_cast %175 : vector<1x32x8xf32> to vector<32x8xf32>
    %cst_79 = arith.constant dense<0.000000e+00> : vector<16x8xf32>
    %177 = tpu.matmul %117, %176, %cst_79 {dimension_numbers = #tpu.dot_dimension_numbers<[1], [0], [0], [1], [0, 0, 1, 1], [], []>} : vector<16x32xf32>, vector<32x8xf32>, vector<16x8xf32> -> vector<16x8xf32>
    %c5_80 = arith.constant 5 : index
    %c0_81 = arith.constant 0 : index
    %178 = vector.load %arg8[%c5_80, %c0_81] : memref<24x8xf32, #tpu.memory_space<vmem>>, vector<1x8xf32>
    %179 = vector.shape_cast %178 : vector<1x8xf32> to vector<8xf32>
    %180 = vector.shape_cast %179 : vector<8xf32> to vector<1x8xf32>
    %181 = vector.broadcast %180 : vector<1x8xf32> to vector<16x8xf32>
    %182 = arith.addf %177, %181 : vector<16x8xf32>
    %c9 = arith.constant 9 : index
    %c0_82 = arith.constant 0 : index
    %c0_83 = arith.constant 0 : index
    %183 = vector.load %arg7[%c9, %c0_82, %c0_83] : memref<24x32x8xf32, #tpu.memory_space<vmem>>, vector<1x32x8xf32>
    %184 = vector.shape_cast %183 : vector<1x32x8xf32> to vector<32x8xf32>
    %cst_84 = arith.constant dense<0.000000e+00> : vector<16x8xf32>
    %185 = tpu.matmul %117, %184, %cst_84 {dimension_numbers = #tpu.dot_dimension_numbers<[1], [0], [0], [1], [0, 0, 1, 1], [], []>} : vector<16x32xf32>, vector<32x8xf32>, vector<16x8xf32> -> vector<16x8xf32>
    %c9_85 = arith.constant 9 : index
    %c0_86 = arith.constant 0 : index
    %186 = vector.load %arg8[%c9_85, %c0_86] : memref<24x8xf32, #tpu.memory_space<vmem>>, vector<1x8xf32>
    %187 = vector.shape_cast %186 : vector<1x8xf32> to vector<8xf32>
    %188 = vector.shape_cast %187 : vector<8xf32> to vector<1x8xf32>
    %189 = vector.broadcast %188 : vector<1x8xf32> to vector<16x8xf32>
    %190 = arith.addf %185, %189 : vector<16x8xf32>
    %cst_87 = arith.constant dense<0.000000e+00> : vector<16x16xf32>
    %191 = tpu.matmul %174, %182, %cst_87 {dimension_numbers = #tpu.dot_dimension_numbers<[1], [1], [0], [0], [0, 0, 1, 0], [], []>} : vector<16x8xf32>, vector<16x8xf32>, vector<16x16xf32> -> vector<16x16xf32>
    %cst_88 = arith.constant dense<0xFF800000> : vector<16xf32>
    %192 = vector.multi_reduction <maximumf>, %191, %cst_88 [1] : vector<16x16xf32> to vector<16xf32>
    %193 = vector.shape_cast %192 : vector<16xf32> to vector<16x1xf32>
    %194 = vector.broadcast %193 : vector<16x1xf32> to vector<16x16xf32>
    %195 = arith.subf %191, %194 : vector<16x16xf32>
    %196 = math.exp %195 : vector<16x16xf32>
    %cst_89 = arith.constant dense<0.000000e+00> : vector<16xf32>
    %197 = vector.multi_reduction <add>, %196, %cst_89 [1] : vector<16x16xf32> to vector<16xf32>
    %198 = vector.shape_cast %197 : vector<16xf32> to vector<16x1xf32>
    %199 = vector.broadcast %198 : vector<16x1xf32> to vector<16x16xf32>
    %200 = arith.divf %196, %199 : vector<16x16xf32>
    %cst_90 = arith.constant dense<0.000000e+00> : vector<16x8xf32>
    %201 = tpu.matmul %200, %190, %cst_90 {dimension_numbers = #tpu.dot_dimension_numbers<[1], [0], [0], [1], [0, 0, 1, 1], [], []>} : vector<16x16xf32>, vector<16x8xf32>, vector<16x8xf32> -> vector<16x8xf32>
    %c1_91 = arith.constant 1 : index
    %c0_92 = arith.constant 0 : index
    %c0_93 = arith.constant 0 : index
    %202 = vector.load %arg9[%c1_91, %c0_92, %c0_93] : memref<8x8x32xf32, #tpu.memory_space<vmem>>, vector<1x8x32xf32>
    %203 = vector.shape_cast %202 : vector<1x8x32xf32> to vector<8x32xf32>
    %cst_94 = arith.constant dense<0.000000e+00> : vector<16x32xf32>
    %204 = tpu.matmul %201, %203, %cst_94 {dimension_numbers = #tpu.dot_dimension_numbers<[1], [0], [0], [1], [0, 0, 1, 1], [], []>} : vector<16x8xf32>, vector<8x32xf32>, vector<16x32xf32> -> vector<16x32xf32>
    %205 = arith.addf %164, %204 : vector<16x32xf32>
    %c2_95 = arith.constant 2 : index
    %c0_96 = arith.constant 0 : index
    %c0_97 = arith.constant 0 : index
    %206 = vector.load %arg7[%c2_95, %c0_96, %c0_97] : memref<24x32x8xf32, #tpu.memory_space<vmem>>, vector<1x32x8xf32>
    %207 = vector.shape_cast %206 : vector<1x32x8xf32> to vector<32x8xf32>
    %cst_98 = arith.constant dense<0.000000e+00> : vector<16x8xf32>
    %208 = tpu.matmul %117, %207, %cst_98 {dimension_numbers = #tpu.dot_dimension_numbers<[1], [0], [0], [1], [0, 0, 1, 1], [], []>} : vector<16x32xf32>, vector<32x8xf32>, vector<16x8xf32> -> vector<16x8xf32>
    %c2_99 = arith.constant 2 : index
    %c0_100 = arith.constant 0 : index
    %209 = vector.load %arg8[%c2_99, %c0_100] : memref<24x8xf32, #tpu.memory_space<vmem>>, vector<1x8xf32>
    %210 = vector.shape_cast %209 : vector<1x8xf32> to vector<8xf32>
    %211 = vector.shape_cast %210 : vector<8xf32> to vector<1x8xf32>
    %212 = vector.broadcast %211 : vector<1x8xf32> to vector<16x8xf32>
    %213 = arith.addf %208, %212 : vector<16x8xf32>
    %cst_101 = arith.constant 0.353553385 : f32
    %214 = vector.broadcast %cst_101 : f32 to vector<16x8xf32>
    %215 = arith.mulf %213, %214 : vector<16x8xf32>
    %c6_102 = arith.constant 6 : index
    %c0_103 = arith.constant 0 : index
    %c0_104 = arith.constant 0 : index
    %216 = vector.load %arg7[%c6_102, %c0_103, %c0_104] : memref<24x32x8xf32, #tpu.memory_space<vmem>>, vector<1x32x8xf32>
    %217 = vector.shape_cast %216 : vector<1x32x8xf32> to vector<32x8xf32>
    %cst_105 = arith.constant dense<0.000000e+00> : vector<16x8xf32>
    %218 = tpu.matmul %117, %217, %cst_105 {dimension_numbers = #tpu.dot_dimension_numbers<[1], [0], [0], [1], [0, 0, 1, 1], [], []>} : vector<16x32xf32>, vector<32x8xf32>, vector<16x8xf32> -> vector<16x8xf32>
    %c6_106 = arith.constant 6 : index
    %c0_107 = arith.constant 0 : index
    %219 = vector.load %arg8[%c6_106, %c0_107] : memref<24x8xf32, #tpu.memory_space<vmem>>, vector<1x8xf32>
    %220 = vector.shape_cast %219 : vector<1x8xf32> to vector<8xf32>
    %221 = vector.shape_cast %220 : vector<8xf32> to vector<1x8xf32>
    %222 = vector.broadcast %221 : vector<1x8xf32> to vector<16x8xf32>
    %223 = arith.addf %218, %222 : vector<16x8xf32>
    %c10 = arith.constant 10 : index
    %c0_108 = arith.constant 0 : index
    %c0_109 = arith.constant 0 : index
    %224 = vector.load %arg7[%c10, %c0_108, %c0_109] : memref<24x32x8xf32, #tpu.memory_space<vmem>>, vector<1x32x8xf32>
    %225 = vector.shape_cast %224 : vector<1x32x8xf32> to vector<32x8xf32>
    %cst_110 = arith.constant dense<0.000000e+00> : vector<16x8xf32>
    %226 = tpu.matmul %117, %225, %cst_110 {dimension_numbers = #tpu.dot_dimension_numbers<[1], [0], [0], [1], [0, 0, 1, 1], [], []>} : vector<16x32xf32>, vector<32x8xf32>, vector<16x8xf32> -> vector<16x8xf32>
    %c10_111 = arith.constant 10 : index
    %c0_112 = arith.constant 0 : index
    %227 = vector.load %arg8[%c10_111, %c0_112] : memref<24x8xf32, #tpu.memory_space<vmem>>, vector<1x8xf32>
    %228 = vector.shape_cast %227 : vector<1x8xf32> to vector<8xf32>
    %229 = vector.shape_cast %228 : vector<8xf32> to vector<1x8xf32>
    %230 = vector.broadcast %229 : vector<1x8xf32> to vector<16x8xf32>
    %231 = arith.addf %226, %230 : vector<16x8xf32>
    %cst_113 = arith.constant dense<0.000000e+00> : vector<16x16xf32>
    %232 = tpu.matmul %215, %223, %cst_113 {dimension_numbers = #tpu.dot_dimension_numbers<[1], [1], [0], [0], [0, 0, 1, 0], [], []>} : vector<16x8xf32>, vector<16x8xf32>, vector<16x16xf32> -> vector<16x16xf32>
    %cst_114 = arith.constant dense<0xFF800000> : vector<16xf32>
    %233 = vector.multi_reduction <maximumf>, %232, %cst_114 [1] : vector<16x16xf32> to vector<16xf32>
    %234 = vector.shape_cast %233 : vector<16xf32> to vector<16x1xf32>
    %235 = vector.broadcast %234 : vector<16x1xf32> to vector<16x16xf32>
    %236 = arith.subf %232, %235 : vector<16x16xf32>
    %237 = math.exp %236 : vector<16x16xf32>
    %cst_115 = arith.constant dense<0.000000e+00> : vector<16xf32>
    %238 = vector.multi_reduction <add>, %237, %cst_115 [1] : vector<16x16xf32> to vector<16xf32>
    %239 = vector.shape_cast %238 : vector<16xf32> to vector<16x1xf32>
    %240 = vector.broadcast %239 : vector<16x1xf32> to vector<16x16xf32>
    %241 = arith.divf %237, %240 : vector<16x16xf32>
    %cst_116 = arith.constant dense<0.000000e+00> : vector<16x8xf32>
    %242 = tpu.matmul %241, %231, %cst_116 {dimension_numbers = #tpu.dot_dimension_numbers<[1], [0], [0], [1], [0, 0, 1, 1], [], []>} : vector<16x16xf32>, vector<16x8xf32>, vector<16x8xf32> -> vector<16x8xf32>
    %c2_117 = arith.constant 2 : index
    %c0_118 = arith.constant 0 : index
    %c0_119 = arith.constant 0 : index
    %243 = vector.load %arg9[%c2_117, %c0_118, %c0_119] : memref<8x8x32xf32, #tpu.memory_space<vmem>>, vector<1x8x32xf32>
    %244 = vector.shape_cast %243 : vector<1x8x32xf32> to vector<8x32xf32>
    %cst_120 = arith.constant dense<0.000000e+00> : vector<16x32xf32>
    %245 = tpu.matmul %242, %244, %cst_120 {dimension_numbers = #tpu.dot_dimension_numbers<[1], [0], [0], [1], [0, 0, 1, 1], [], []>} : vector<16x8xf32>, vector<8x32xf32>, vector<16x32xf32> -> vector<16x32xf32>
    %246 = arith.addf %205, %245 : vector<16x32xf32>
    %c3_121 = arith.constant 3 : index
    %c0_122 = arith.constant 0 : index
    %c0_123 = arith.constant 0 : index
    %247 = vector.load %arg7[%c3_121, %c0_122, %c0_123] : memref<24x32x8xf32, #tpu.memory_space<vmem>>, vector<1x32x8xf32>
    %248 = vector.shape_cast %247 : vector<1x32x8xf32> to vector<32x8xf32>
    %cst_124 = arith.constant dense<0.000000e+00> : vector<16x8xf32>
    %249 = tpu.matmul %117, %248, %cst_124 {dimension_numbers = #tpu.dot_dimension_numbers<[1], [0], [0], [1], [0, 0, 1, 1], [], []>} : vector<16x32xf32>, vector<32x8xf32>, vector<16x8xf32> -> vector<16x8xf32>
    %c3_125 = arith.constant 3 : index
    %c0_126 = arith.constant 0 : index
    %250 = vector.load %arg8[%c3_125, %c0_126] : memref<24x8xf32, #tpu.memory_space<vmem>>, vector<1x8xf32>
    %251 = vector.shape_cast %250 : vector<1x8xf32> to vector<8xf32>
    %252 = vector.shape_cast %251 : vector<8xf32> to vector<1x8xf32>
    %253 = vector.broadcast %252 : vector<1x8xf32> to vector<16x8xf32>
    %254 = arith.addf %249, %253 : vector<16x8xf32>
    %cst_127 = arith.constant 0.353553385 : f32
    %255 = vector.broadcast %cst_127 : f32 to vector<16x8xf32>
    %256 = arith.mulf %254, %255 : vector<16x8xf32>
    %c7_128 = arith.constant 7 : index
    %c0_129 = arith.constant 0 : index
    %c0_130 = arith.constant 0 : index
    %257 = vector.load %arg7[%c7_128, %c0_129, %c0_130] : memref<24x32x8xf32, #tpu.memory_space<vmem>>, vector<1x32x8xf32>
    %258 = vector.shape_cast %257 : vector<1x32x8xf32> to vector<32x8xf32>
    %cst_131 = arith.constant dense<0.000000e+00> : vector<16x8xf32>
    %259 = tpu.matmul %117, %258, %cst_131 {dimension_numbers = #tpu.dot_dimension_numbers<[1], [0], [0], [1], [0, 0, 1, 1], [], []>} : vector<16x32xf32>, vector<32x8xf32>, vector<16x8xf32> -> vector<16x8xf32>
    %c7_132 = arith.constant 7 : index
    %c0_133 = arith.constant 0 : index
    %260 = vector.load %arg8[%c7_132, %c0_133] : memref<24x8xf32, #tpu.memory_space<vmem>>, vector<1x8xf32>
    %261 = vector.shape_cast %260 : vector<1x8xf32> to vector<8xf32>
    %262 = vector.shape_cast %261 : vector<8xf32> to vector<1x8xf32>
    %263 = vector.broadcast %262 : vector<1x8xf32> to vector<16x8xf32>
    %264 = arith.addf %259, %263 : vector<16x8xf32>
    %c11 = arith.constant 11 : index
    %c0_134 = arith.constant 0 : index
    %c0_135 = arith.constant 0 : index
    %265 = vector.load %arg7[%c11, %c0_134, %c0_135] : memref<24x32x8xf32, #tpu.memory_space<vmem>>, vector<1x32x8xf32>
    %266 = vector.shape_cast %265 : vector<1x32x8xf32> to vector<32x8xf32>
    %cst_136 = arith.constant dense<0.000000e+00> : vector<16x8xf32>
    %267 = tpu.matmul %117, %266, %cst_136 {dimension_numbers = #tpu.dot_dimension_numbers<[1], [0], [0], [1], [0, 0, 1, 1], [], []>} : vector<16x32xf32>, vector<32x8xf32>, vector<16x8xf32> -> vector<16x8xf32>
    %c11_137 = arith.constant 11 : index
    %c0_138 = arith.constant 0 : index
    %268 = vector.load %arg8[%c11_137, %c0_138] : memref<24x8xf32, #tpu.memory_space<vmem>>, vector<1x8xf32>
    %269 = vector.shape_cast %268 : vector<1x8xf32> to vector<8xf32>
    %270 = vector.shape_cast %269 : vector<8xf32> to vector<1x8xf32>
    %271 = vector.broadcast %270 : vector<1x8xf32> to vector<16x8xf32>
    %272 = arith.addf %267, %271 : vector<16x8xf32>
    %cst_139 = arith.constant dense<0.000000e+00> : vector<16x16xf32>
    %273 = tpu.matmul %256, %264, %cst_139 {dimension_numbers = #tpu.dot_dimension_numbers<[1], [1], [0], [0], [0, 0, 1, 0], [], []>} : vector<16x8xf32>, vector<16x8xf32>, vector<16x16xf32> -> vector<16x16xf32>
    %cst_140 = arith.constant dense<0xFF800000> : vector<16xf32>
    %274 = vector.multi_reduction <maximumf>, %273, %cst_140 [1] : vector<16x16xf32> to vector<16xf32>
    %275 = vector.shape_cast %274 : vector<16xf32> to vector<16x1xf32>
    %276 = vector.broadcast %275 : vector<16x1xf32> to vector<16x16xf32>
    %277 = arith.subf %273, %276 : vector<16x16xf32>
    %278 = math.exp %277 : vector<16x16xf32>
    %cst_141 = arith.constant dense<0.000000e+00> : vector<16xf32>
    %279 = vector.multi_reduction <add>, %278, %cst_141 [1] : vector<16x16xf32> to vector<16xf32>
    %280 = vector.shape_cast %279 : vector<16xf32> to vector<16x1xf32>
    %281 = vector.broadcast %280 : vector<16x1xf32> to vector<16x16xf32>
    %282 = arith.divf %278, %281 : vector<16x16xf32>
    %cst_142 = arith.constant dense<0.000000e+00> : vector<16x8xf32>
    %283 = tpu.matmul %282, %272, %cst_142 {dimension_numbers = #tpu.dot_dimension_numbers<[1], [0], [0], [1], [0, 0, 1, 1], [], []>} : vector<16x16xf32>, vector<16x8xf32>, vector<16x8xf32> -> vector<16x8xf32>
    %c3_143 = arith.constant 3 : index
    %c0_144 = arith.constant 0 : index
    %c0_145 = arith.constant 0 : index
    %284 = vector.load %arg9[%c3_143, %c0_144, %c0_145] : memref<8x8x32xf32, #tpu.memory_space<vmem>>, vector<1x8x32xf32>
    %285 = vector.shape_cast %284 : vector<1x8x32xf32> to vector<8x32xf32>
    %cst_146 = arith.constant dense<0.000000e+00> : vector<16x32xf32>
    %286 = tpu.matmul %283, %285, %cst_146 {dimension_numbers = #tpu.dot_dimension_numbers<[1], [0], [0], [1], [0, 0, 1, 1], [], []>} : vector<16x8xf32>, vector<8x32xf32>, vector<16x32xf32> -> vector<16x32xf32>
    %287 = arith.addf %246, %286 : vector<16x32xf32>
    %288 = arith.addf %89, %287 : vector<16x32xf32>
    %c9_147 = arith.constant 9 : index
    %c0_148 = arith.constant 0 : index
    %289 = vector.load %arg3[%c9_147, %c0_148] : memref<41x32xf32, #tpu.memory_space<vmem>>, vector<1x32xf32>
    %290 = vector.shape_cast %289 : vector<1x32xf32> to vector<32xf32>
    %c10_149 = arith.constant 10 : index
    %c0_150 = arith.constant 0 : index
    %291 = vector.load %arg3[%c10_149, %c0_150] : memref<41x32xf32, #tpu.memory_space<vmem>>, vector<1x32xf32>
    %292 = vector.shape_cast %291 : vector<1x32xf32> to vector<32xf32>
    %cst_151 = arith.constant dense<0.000000e+00> : vector<16xf32>
    %293 = vector.multi_reduction <add>, %288, %cst_151 [1] : vector<16x32xf32> to vector<16xf32>
    %294 = vector.shape_cast %293 : vector<16xf32> to vector<16x1xf32>
    %cst_152 = arith.constant 3.200000e+01 : f32
    %295 = vector.broadcast %cst_152 : f32 to vector<16x1xf32>
    %296 = arith.divf %294, %295 : vector<16x1xf32>
    %297 = vector.broadcast %296 : vector<16x1xf32> to vector<16x32xf32>
    %298 = arith.subf %288, %297 : vector<16x32xf32>
    %299 = arith.mulf %298, %298 : vector<16x32xf32>
    %cst_153 = arith.constant dense<0.000000e+00> : vector<16xf32>
    %300 = vector.multi_reduction <add>, %299, %cst_153 [1] : vector<16x32xf32> to vector<16xf32>
    %301 = vector.shape_cast %300 : vector<16xf32> to vector<16x1xf32>
    %cst_154 = arith.constant 3.200000e+01 : f32
    %302 = vector.broadcast %cst_154 : f32 to vector<16x1xf32>
    %303 = arith.divf %301, %302 : vector<16x1xf32>
    %304 = vector.broadcast %296 : vector<16x1xf32> to vector<16x32xf32>
    %305 = arith.subf %288, %304 : vector<16x32xf32>
    %cst_155 = arith.constant 9.99999974E-6 : f32
    %306 = vector.broadcast %cst_155 : f32 to vector<16x1xf32>
    %307 = arith.addf %303, %306 : vector<16x1xf32>
    %308 = math.rsqrt %307 : vector<16x1xf32>
    %309 = vector.broadcast %308 : vector<16x1xf32> to vector<16x32xf32>
    %310 = arith.mulf %305, %309 : vector<16x32xf32>
    %311 = vector.shape_cast %290 : vector<32xf32> to vector<1x32xf32>
    %312 = vector.broadcast %311 : vector<1x32xf32> to vector<16x32xf32>
    %313 = arith.mulf %310, %312 : vector<16x32xf32>
    %314 = vector.shape_cast %292 : vector<32xf32> to vector<1x32xf32>
    %315 = vector.broadcast %314 : vector<1x32xf32> to vector<16x32xf32>
    %316 = arith.addf %313, %315 : vector<16x32xf32>
    %c0_156 = arith.constant 0 : index
    %c0_157 = arith.constant 0 : index
    %c0_158 = arith.constant 0 : index
    %317 = vector.load %arg10[%c0_156, %c0_157, %c0_158] : memref<6x32x32xf32, #tpu.memory_space<vmem>>, vector<1x32x32xf32>
    %318 = vector.shape_cast %317 : vector<1x32x32xf32> to vector<32x32xf32>
    %cst_159 = arith.constant dense<0.000000e+00> : vector<16x32xf32>
    %319 = tpu.matmul %316, %318, %cst_159 {dimension_numbers = #tpu.dot_dimension_numbers<[1], [0], [0], [1], [0, 0, 1, 1], [], []>} : vector<16x32xf32>, vector<32x32xf32>, vector<16x32xf32> -> vector<16x32xf32>
    %c11_160 = arith.constant 11 : index
    %c0_161 = arith.constant 0 : index
    %320 = vector.load %arg3[%c11_160, %c0_161] : memref<41x32xf32, #tpu.memory_space<vmem>>, vector<1x32xf32>
    %321 = vector.shape_cast %320 : vector<1x32xf32> to vector<32xf32>
    %322 = vector.shape_cast %321 : vector<32xf32> to vector<1x32xf32>
    %323 = vector.broadcast %322 : vector<1x32xf32> to vector<16x32xf32>
    %324 = arith.addf %319, %323 : vector<16x32xf32>
    %c1_162 = arith.constant 1 : index
    %c0_163 = arith.constant 0 : index
    %c0_164 = arith.constant 0 : index
    %325 = vector.load %arg10[%c1_162, %c0_163, %c0_164] : memref<6x32x32xf32, #tpu.memory_space<vmem>>, vector<1x32x32xf32>
    %326 = vector.shape_cast %325 : vector<1x32x32xf32> to vector<32x32xf32>
    %cst_165 = arith.constant dense<0.000000e+00> : vector<16x32xf32>
    %327 = tpu.matmul %316, %326, %cst_165 {dimension_numbers = #tpu.dot_dimension_numbers<[1], [0], [0], [1], [0, 0, 1, 1], [], []>} : vector<16x32xf32>, vector<32x32xf32>, vector<16x32xf32> -> vector<16x32xf32>
    %c12 = arith.constant 12 : index
    %c0_166 = arith.constant 0 : index
    %328 = vector.load %arg3[%c12, %c0_166] : memref<41x32xf32, #tpu.memory_space<vmem>>, vector<1x32xf32>
    %329 = vector.shape_cast %328 : vector<1x32xf32> to vector<32xf32>
    %330 = vector.shape_cast %329 : vector<32xf32> to vector<1x32xf32>
    %331 = vector.broadcast %330 : vector<1x32xf32> to vector<16x32xf32>
    %332 = arith.addf %327, %331 : vector<16x32xf32>
    %333 = arith.negf %332 : vector<16x32xf32>
    %334 = math.exp %333 : vector<16x32xf32>
    %cst_167 = arith.constant 1.000000e+00 : f32
    %335 = vector.broadcast %cst_167 : f32 to vector<16x32xf32>
    %336 = arith.addf %335, %334 : vector<16x32xf32>
    %337 = arith.divf %335, %336 : vector<16x32xf32>
    %338 = arith.mulf %324, %337 : vector<16x32xf32>
    %cst_168 = arith.constant 0.000000e+00 : f32
    %339 = vector.broadcast %cst_168 : f32 to vector<15x32xf32>
    %340 = tpu.concatenate %339, %338, %339 in 0 : vector<15x32xf32>, vector<16x32xf32>, vector<15x32xf32> -> vector<46x32xf32>
    %cst_169 = arith.constant 0.000000e+00 : f32
    %341 = vector.broadcast %cst_169 : f32 to vector<16x32xf32>
    %c13 = arith.constant 13 : index
    %c0_170 = arith.constant 0 : index
    %342 = vector.load %arg3[%c13, %c0_170] : memref<41x32xf32, #tpu.memory_space<vmem>>, vector<1x32xf32>
    %343 = vector.shape_cast %342 : vector<1x32xf32> to vector<32xf32>
    %344 = vector.shape_cast %343 : vector<32xf32> to vector<1x32xf32>
    %345 = vector.broadcast %344 : vector<1x32xf32> to vector<16x32xf32>
    %346 = arith.addf %341, %345 : vector<16x32xf32>
    %347 = vector.extract_strided_slice %340 {offsets = [0, 0], sizes = [16, 32], strides = [1, 1]} : vector<46x32xf32> to vector<16x32xf32>
    %c0_171 = arith.constant 0 : index
    %c0_172 = arith.constant 0 : index
    %c0_173 = arith.constant 0 : index
    %348 = vector.load %arg11[%c0_171, %c0_172, %c0_173] : memref<2x31x32xf32, #tpu.memory_space<vmem>>, vector<1x1x32xf32>
    %349 = vector.shape_cast %348 : vector<1x1x32xf32> to vector<32xf32>
    %350 = vector.shape_cast %349 : vector<32xf32> to vector<1x32xf32>
    %351 = vector.broadcast %350 : vector<1x32xf32> to vector<16x32xf32>
    %352 = arith.mulf %347, %351 : vector<16x32xf32>
    %353 = arith.addf %346, %352 : vector<16x32xf32>
    %354 = vector.extract_strided_slice %340 {offsets = [1, 0], sizes = [16, 32], strides = [1, 1]} : vector<46x32xf32> to vector<16x32xf32>
    %c0_174 = arith.constant 0 : index
    %c1_175 = arith.constant 1 : index
    %c0_176 = arith.constant 0 : index
    %355 = vector.load %arg11[%c0_174, %c1_175, %c0_176] : memref<2x31x32xf32, #tpu.memory_space<vmem>>, vector<1x1x32xf32>
    %356 = vector.shape_cast %355 : vector<1x1x32xf32> to vector<32xf32>
    %357 = vector.shape_cast %356 : vector<32xf32> to vector<1x32xf32>
    %358 = vector.broadcast %357 : vector<1x32xf32> to vector<16x32xf32>
    %359 = arith.mulf %354, %358 : vector<16x32xf32>
    %360 = arith.addf %353, %359 : vector<16x32xf32>
    %361 = vector.extract_strided_slice %340 {offsets = [2, 0], sizes = [16, 32], strides = [1, 1]} : vector<46x32xf32> to vector<16x32xf32>
    %c0_177 = arith.constant 0 : index
    %c2_178 = arith.constant 2 : index
    %c0_179 = arith.constant 0 : index
    %362 = vector.load %arg11[%c0_177, %c2_178, %c0_179] : memref<2x31x32xf32, #tpu.memory_space<vmem>>, vector<1x1x32xf32>
    %363 = vector.shape_cast %362 : vector<1x1x32xf32> to vector<32xf32>
    %364 = vector.shape_cast %363 : vector<32xf32> to vector<1x32xf32>
    %365 = vector.broadcast %364 : vector<1x32xf32> to vector<16x32xf32>
    %366 = arith.mulf %361, %365 : vector<16x32xf32>
    %367 = arith.addf %360, %366 : vector<16x32xf32>
    %368 = vector.extract_strided_slice %340 {offsets = [3, 0], sizes = [16, 32], strides = [1, 1]} : vector<46x32xf32> to vector<16x32xf32>
    %c0_180 = arith.constant 0 : index
    %c3_181 = arith.constant 3 : index
    %c0_182 = arith.constant 0 : index
    %369 = vector.load %arg11[%c0_180, %c3_181, %c0_182] : memref<2x31x32xf32, #tpu.memory_space<vmem>>, vector<1x1x32xf32>
    %370 = vector.shape_cast %369 : vector<1x1x32xf32> to vector<32xf32>
    %371 = vector.shape_cast %370 : vector<32xf32> to vector<1x32xf32>
    %372 = vector.broadcast %371 : vector<1x32xf32> to vector<16x32xf32>
    %373 = arith.mulf %368, %372 : vector<16x32xf32>
    %374 = arith.addf %367, %373 : vector<16x32xf32>
    %375 = vector.extract_strided_slice %340 {offsets = [4, 0], sizes = [16, 32], strides = [1, 1]} : vector<46x32xf32> to vector<16x32xf32>
    %c0_183 = arith.constant 0 : index
    %c4_184 = arith.constant 4 : index
    %c0_185 = arith.constant 0 : index
    %376 = vector.load %arg11[%c0_183, %c4_184, %c0_185] : memref<2x31x32xf32, #tpu.memory_space<vmem>>, vector<1x1x32xf32>
    %377 = vector.shape_cast %376 : vector<1x1x32xf32> to vector<32xf32>
    %378 = vector.shape_cast %377 : vector<32xf32> to vector<1x32xf32>
    %379 = vector.broadcast %378 : vector<1x32xf32> to vector<16x32xf32>
    %380 = arith.mulf %375, %379 : vector<16x32xf32>
    %381 = arith.addf %374, %380 : vector<16x32xf32>
    %382 = vector.extract_strided_slice %340 {offsets = [5, 0], sizes = [16, 32], strides = [1, 1]} : vector<46x32xf32> to vector<16x32xf32>
    %c0_186 = arith.constant 0 : index
    %c5_187 = arith.constant 5 : index
    %c0_188 = arith.constant 0 : index
    %383 = vector.load %arg11[%c0_186, %c5_187, %c0_188] : memref<2x31x32xf32, #tpu.memory_space<vmem>>, vector<1x1x32xf32>
    %384 = vector.shape_cast %383 : vector<1x1x32xf32> to vector<32xf32>
    %385 = vector.shape_cast %384 : vector<32xf32> to vector<1x32xf32>
    %386 = vector.broadcast %385 : vector<1x32xf32> to vector<16x32xf32>
    %387 = arith.mulf %382, %386 : vector<16x32xf32>
    %388 = arith.addf %381, %387 : vector<16x32xf32>
    %389 = vector.extract_strided_slice %340 {offsets = [6, 0], sizes = [16, 32], strides = [1, 1]} : vector<46x32xf32> to vector<16x32xf32>
    %c0_189 = arith.constant 0 : index
    %c6_190 = arith.constant 6 : index
    %c0_191 = arith.constant 0 : index
    %390 = vector.load %arg11[%c0_189, %c6_190, %c0_191] : memref<2x31x32xf32, #tpu.memory_space<vmem>>, vector<1x1x32xf32>
    %391 = vector.shape_cast %390 : vector<1x1x32xf32> to vector<32xf32>
    %392 = vector.shape_cast %391 : vector<32xf32> to vector<1x32xf32>
    %393 = vector.broadcast %392 : vector<1x32xf32> to vector<16x32xf32>
    %394 = arith.mulf %389, %393 : vector<16x32xf32>
    %395 = arith.addf %388, %394 : vector<16x32xf32>
    %396 = vector.extract_strided_slice %340 {offsets = [7, 0], sizes = [16, 32], strides = [1, 1]} : vector<46x32xf32> to vector<16x32xf32>
    %c0_192 = arith.constant 0 : index
    %c7_193 = arith.constant 7 : index
    %c0_194 = arith.constant 0 : index
    %397 = vector.load %arg11[%c0_192, %c7_193, %c0_194] : memref<2x31x32xf32, #tpu.memory_space<vmem>>, vector<1x1x32xf32>
    %398 = vector.shape_cast %397 : vector<1x1x32xf32> to vector<32xf32>
    %399 = vector.shape_cast %398 : vector<32xf32> to vector<1x32xf32>
    %400 = vector.broadcast %399 : vector<1x32xf32> to vector<16x32xf32>
    %401 = arith.mulf %396, %400 : vector<16x32xf32>
    %402 = arith.addf %395, %401 : vector<16x32xf32>
    %403 = vector.extract_strided_slice %340 {offsets = [8, 0], sizes = [16, 32], strides = [1, 1]} : vector<46x32xf32> to vector<16x32xf32>
    %c0_195 = arith.constant 0 : index
    %c8_196 = arith.constant 8 : index
    %c0_197 = arith.constant 0 : index
    %404 = vector.load %arg11[%c0_195, %c8_196, %c0_197] : memref<2x31x32xf32, #tpu.memory_space<vmem>>, vector<1x1x32xf32>
    %405 = vector.shape_cast %404 : vector<1x1x32xf32> to vector<32xf32>
    %406 = vector.shape_cast %405 : vector<32xf32> to vector<1x32xf32>
    %407 = vector.broadcast %406 : vector<1x32xf32> to vector<16x32xf32>
    %408 = arith.mulf %403, %407 : vector<16x32xf32>
    %409 = arith.addf %402, %408 : vector<16x32xf32>
    %410 = vector.extract_strided_slice %340 {offsets = [9, 0], sizes = [16, 32], strides = [1, 1]} : vector<46x32xf32> to vector<16x32xf32>
    %c0_198 = arith.constant 0 : index
    %c9_199 = arith.constant 9 : index
    %c0_200 = arith.constant 0 : index
    %411 = vector.load %arg11[%c0_198, %c9_199, %c0_200] : memref<2x31x32xf32, #tpu.memory_space<vmem>>, vector<1x1x32xf32>
    %412 = vector.shape_cast %411 : vector<1x1x32xf32> to vector<32xf32>
    %413 = vector.shape_cast %412 : vector<32xf32> to vector<1x32xf32>
    %414 = vector.broadcast %413 : vector<1x32xf32> to vector<16x32xf32>
    %415 = arith.mulf %410, %414 : vector<16x32xf32>
    %416 = arith.addf %409, %415 : vector<16x32xf32>
    %417 = vector.extract_strided_slice %340 {offsets = [10, 0], sizes = [16, 32], strides = [1, 1]} : vector<46x32xf32> to vector<16x32xf32>
    %c0_201 = arith.constant 0 : index
    %c10_202 = arith.constant 10 : index
    %c0_203 = arith.constant 0 : index
    %418 = vector.load %arg11[%c0_201, %c10_202, %c0_203] : memref<2x31x32xf32, #tpu.memory_space<vmem>>, vector<1x1x32xf32>
    %419 = vector.shape_cast %418 : vector<1x1x32xf32> to vector<32xf32>
    %420 = vector.shape_cast %419 : vector<32xf32> to vector<1x32xf32>
    %421 = vector.broadcast %420 : vector<1x32xf32> to vector<16x32xf32>
    %422 = arith.mulf %417, %421 : vector<16x32xf32>
    %423 = arith.addf %416, %422 : vector<16x32xf32>
    %424 = vector.extract_strided_slice %340 {offsets = [11, 0], sizes = [16, 32], strides = [1, 1]} : vector<46x32xf32> to vector<16x32xf32>
    %c0_204 = arith.constant 0 : index
    %c11_205 = arith.constant 11 : index
    %c0_206 = arith.constant 0 : index
    %425 = vector.load %arg11[%c0_204, %c11_205, %c0_206] : memref<2x31x32xf32, #tpu.memory_space<vmem>>, vector<1x1x32xf32>
    %426 = vector.shape_cast %425 : vector<1x1x32xf32> to vector<32xf32>
    %427 = vector.shape_cast %426 : vector<32xf32> to vector<1x32xf32>
    %428 = vector.broadcast %427 : vector<1x32xf32> to vector<16x32xf32>
    %429 = arith.mulf %424, %428 : vector<16x32xf32>
    %430 = arith.addf %423, %429 : vector<16x32xf32>
    %431 = vector.extract_strided_slice %340 {offsets = [12, 0], sizes = [16, 32], strides = [1, 1]} : vector<46x32xf32> to vector<16x32xf32>
    %c0_207 = arith.constant 0 : index
    %c12_208 = arith.constant 12 : index
    %c0_209 = arith.constant 0 : index
    %432 = vector.load %arg11[%c0_207, %c12_208, %c0_209] : memref<2x31x32xf32, #tpu.memory_space<vmem>>, vector<1x1x32xf32>
    %433 = vector.shape_cast %432 : vector<1x1x32xf32> to vector<32xf32>
    %434 = vector.shape_cast %433 : vector<32xf32> to vector<1x32xf32>
    %435 = vector.broadcast %434 : vector<1x32xf32> to vector<16x32xf32>
    %436 = arith.mulf %431, %435 : vector<16x32xf32>
    %437 = arith.addf %430, %436 : vector<16x32xf32>
    %438 = vector.extract_strided_slice %340 {offsets = [13, 0], sizes = [16, 32], strides = [1, 1]} : vector<46x32xf32> to vector<16x32xf32>
    %c0_210 = arith.constant 0 : index
    %c13_211 = arith.constant 13 : index
    %c0_212 = arith.constant 0 : index
    %439 = vector.load %arg11[%c0_210, %c13_211, %c0_212] : memref<2x31x32xf32, #tpu.memory_space<vmem>>, vector<1x1x32xf32>
    %440 = vector.shape_cast %439 : vector<1x1x32xf32> to vector<32xf32>
    %441 = vector.shape_cast %440 : vector<32xf32> to vector<1x32xf32>
    %442 = vector.broadcast %441 : vector<1x32xf32> to vector<16x32xf32>
    %443 = arith.mulf %438, %442 : vector<16x32xf32>
    %444 = arith.addf %437, %443 : vector<16x32xf32>
    %445 = vector.extract_strided_slice %340 {offsets = [14, 0], sizes = [16, 32], strides = [1, 1]} : vector<46x32xf32> to vector<16x32xf32>
    %c0_213 = arith.constant 0 : index
    %c14 = arith.constant 14 : index
    %c0_214 = arith.constant 0 : index
    %446 = vector.load %arg11[%c0_213, %c14, %c0_214] : memref<2x31x32xf32, #tpu.memory_space<vmem>>, vector<1x1x32xf32>
    %447 = vector.shape_cast %446 : vector<1x1x32xf32> to vector<32xf32>
    %448 = vector.shape_cast %447 : vector<32xf32> to vector<1x32xf32>
    %449 = vector.broadcast %448 : vector<1x32xf32> to vector<16x32xf32>
    %450 = arith.mulf %445, %449 : vector<16x32xf32>
    %451 = arith.addf %444, %450 : vector<16x32xf32>
    %452 = vector.extract_strided_slice %340 {offsets = [15, 0], sizes = [16, 32], strides = [1, 1]} : vector<46x32xf32> to vector<16x32xf32>
    %c0_215 = arith.constant 0 : index
    %c15 = arith.constant 15 : index
    %c0_216 = arith.constant 0 : index
    %453 = vector.load %arg11[%c0_215, %c15, %c0_216] : memref<2x31x32xf32, #tpu.memory_space<vmem>>, vector<1x1x32xf32>
    %454 = vector.shape_cast %453 : vector<1x1x32xf32> to vector<32xf32>
    %455 = vector.shape_cast %454 : vector<32xf32> to vector<1x32xf32>
    %456 = vector.broadcast %455 : vector<1x32xf32> to vector<16x32xf32>
    %457 = arith.mulf %452, %456 : vector<16x32xf32>
    %458 = arith.addf %451, %457 : vector<16x32xf32>
    %459 = vector.extract_strided_slice %340 {offsets = [16, 0], sizes = [16, 32], strides = [1, 1]} : vector<46x32xf32> to vector<16x32xf32>
    %c0_217 = arith.constant 0 : index
    %c16 = arith.constant 16 : index
    %c0_218 = arith.constant 0 : index
    %460 = vector.load %arg11[%c0_217, %c16, %c0_218] : memref<2x31x32xf32, #tpu.memory_space<vmem>>, vector<1x1x32xf32>
    %461 = vector.shape_cast %460 : vector<1x1x32xf32> to vector<32xf32>
    %462 = vector.shape_cast %461 : vector<32xf32> to vector<1x32xf32>
    %463 = vector.broadcast %462 : vector<1x32xf32> to vector<16x32xf32>
    %464 = arith.mulf %459, %463 : vector<16x32xf32>
    %465 = arith.addf %458, %464 : vector<16x32xf32>
    %466 = vector.extract_strided_slice %340 {offsets = [17, 0], sizes = [16, 32], strides = [1, 1]} : vector<46x32xf32> to vector<16x32xf32>
    %c0_219 = arith.constant 0 : index
    %c17 = arith.constant 17 : index
    %c0_220 = arith.constant 0 : index
    %467 = vector.load %arg11[%c0_219, %c17, %c0_220] : memref<2x31x32xf32, #tpu.memory_space<vmem>>, vector<1x1x32xf32>
    %468 = vector.shape_cast %467 : vector<1x1x32xf32> to vector<32xf32>
    %469 = vector.shape_cast %468 : vector<32xf32> to vector<1x32xf32>
    %470 = vector.broadcast %469 : vector<1x32xf32> to vector<16x32xf32>
    %471 = arith.mulf %466, %470 : vector<16x32xf32>
    %472 = arith.addf %465, %471 : vector<16x32xf32>
    %473 = vector.extract_strided_slice %340 {offsets = [18, 0], sizes = [16, 32], strides = [1, 1]} : vector<46x32xf32> to vector<16x32xf32>
    %c0_221 = arith.constant 0 : index
    %c18 = arith.constant 18 : index
    %c0_222 = arith.constant 0 : index
    %474 = vector.load %arg11[%c0_221, %c18, %c0_222] : memref<2x31x32xf32, #tpu.memory_space<vmem>>, vector<1x1x32xf32>
    %475 = vector.shape_cast %474 : vector<1x1x32xf32> to vector<32xf32>
    %476 = vector.shape_cast %475 : vector<32xf32> to vector<1x32xf32>
    %477 = vector.broadcast %476 : vector<1x32xf32> to vector<16x32xf32>
    %478 = arith.mulf %473, %477 : vector<16x32xf32>
    %479 = arith.addf %472, %478 : vector<16x32xf32>
    %480 = vector.extract_strided_slice %340 {offsets = [19, 0], sizes = [16, 32], strides = [1, 1]} : vector<46x32xf32> to vector<16x32xf32>
    %c0_223 = arith.constant 0 : index
    %c19 = arith.constant 19 : index
    %c0_224 = arith.constant 0 : index
    %481 = vector.load %arg11[%c0_223, %c19, %c0_224] : memref<2x31x32xf32, #tpu.memory_space<vmem>>, vector<1x1x32xf32>
    %482 = vector.shape_cast %481 : vector<1x1x32xf32> to vector<32xf32>
    %483 = vector.shape_cast %482 : vector<32xf32> to vector<1x32xf32>
    %484 = vector.broadcast %483 : vector<1x32xf32> to vector<16x32xf32>
    %485 = arith.mulf %480, %484 : vector<16x32xf32>
    %486 = arith.addf %479, %485 : vector<16x32xf32>
    %487 = vector.extract_strided_slice %340 {offsets = [20, 0], sizes = [16, 32], strides = [1, 1]} : vector<46x32xf32> to vector<16x32xf32>
    %c0_225 = arith.constant 0 : index
    %c20 = arith.constant 20 : index
    %c0_226 = arith.constant 0 : index
    %488 = vector.load %arg11[%c0_225, %c20, %c0_226] : memref<2x31x32xf32, #tpu.memory_space<vmem>>, vector<1x1x32xf32>
    %489 = vector.shape_cast %488 : vector<1x1x32xf32> to vector<32xf32>
    %490 = vector.shape_cast %489 : vector<32xf32> to vector<1x32xf32>
    %491 = vector.broadcast %490 : vector<1x32xf32> to vector<16x32xf32>
    %492 = arith.mulf %487, %491 : vector<16x32xf32>
    %493 = arith.addf %486, %492 : vector<16x32xf32>
    %494 = vector.extract_strided_slice %340 {offsets = [21, 0], sizes = [16, 32], strides = [1, 1]} : vector<46x32xf32> to vector<16x32xf32>
    %c0_227 = arith.constant 0 : index
    %c21 = arith.constant 21 : index
    %c0_228 = arith.constant 0 : index
    %495 = vector.load %arg11[%c0_227, %c21, %c0_228] : memref<2x31x32xf32, #tpu.memory_space<vmem>>, vector<1x1x32xf32>
    %496 = vector.shape_cast %495 : vector<1x1x32xf32> to vector<32xf32>
    %497 = vector.shape_cast %496 : vector<32xf32> to vector<1x32xf32>
    %498 = vector.broadcast %497 : vector<1x32xf32> to vector<16x32xf32>
    %499 = arith.mulf %494, %498 : vector<16x32xf32>
    %500 = arith.addf %493, %499 : vector<16x32xf32>
    %501 = vector.extract_strided_slice %340 {offsets = [22, 0], sizes = [16, 32], strides = [1, 1]} : vector<46x32xf32> to vector<16x32xf32>
    %c0_229 = arith.constant 0 : index
    %c22 = arith.constant 22 : index
    %c0_230 = arith.constant 0 : index
    %502 = vector.load %arg11[%c0_229, %c22, %c0_230] : memref<2x31x32xf32, #tpu.memory_space<vmem>>, vector<1x1x32xf32>
    %503 = vector.shape_cast %502 : vector<1x1x32xf32> to vector<32xf32>
    %504 = vector.shape_cast %503 : vector<32xf32> to vector<1x32xf32>
    %505 = vector.broadcast %504 : vector<1x32xf32> to vector<16x32xf32>
    %506 = arith.mulf %501, %505 : vector<16x32xf32>
    %507 = arith.addf %500, %506 : vector<16x32xf32>
    %508 = vector.extract_strided_slice %340 {offsets = [23, 0], sizes = [16, 32], strides = [1, 1]} : vector<46x32xf32> to vector<16x32xf32>
    %c0_231 = arith.constant 0 : index
    %c23 = arith.constant 23 : index
    %c0_232 = arith.constant 0 : index
    %509 = vector.load %arg11[%c0_231, %c23, %c0_232] : memref<2x31x32xf32, #tpu.memory_space<vmem>>, vector<1x1x32xf32>
    %510 = vector.shape_cast %509 : vector<1x1x32xf32> to vector<32xf32>
    %511 = vector.shape_cast %510 : vector<32xf32> to vector<1x32xf32>
    %512 = vector.broadcast %511 : vector<1x32xf32> to vector<16x32xf32>
    %513 = arith.mulf %508, %512 : vector<16x32xf32>
    %514 = arith.addf %507, %513 : vector<16x32xf32>
    %515 = vector.extract_strided_slice %340 {offsets = [24, 0], sizes = [16, 32], strides = [1, 1]} : vector<46x32xf32> to vector<16x32xf32>
    %c0_233 = arith.constant 0 : index
    %c24 = arith.constant 24 : index
    %c0_234 = arith.constant 0 : index
    %516 = vector.load %arg11[%c0_233, %c24, %c0_234] : memref<2x31x32xf32, #tpu.memory_space<vmem>>, vector<1x1x32xf32>
    %517 = vector.shape_cast %516 : vector<1x1x32xf32> to vector<32xf32>
    %518 = vector.shape_cast %517 : vector<32xf32> to vector<1x32xf32>
    %519 = vector.broadcast %518 : vector<1x32xf32> to vector<16x32xf32>
    %520 = arith.mulf %515, %519 : vector<16x32xf32>
    %521 = arith.addf %514, %520 : vector<16x32xf32>
    %522 = vector.extract_strided_slice %340 {offsets = [25, 0], sizes = [16, 32], strides = [1, 1]} : vector<46x32xf32> to vector<16x32xf32>
    %c0_235 = arith.constant 0 : index
    %c25 = arith.constant 25 : index
    %c0_236 = arith.constant 0 : index
    %523 = vector.load %arg11[%c0_235, %c25, %c0_236] : memref<2x31x32xf32, #tpu.memory_space<vmem>>, vector<1x1x32xf32>
    %524 = vector.shape_cast %523 : vector<1x1x32xf32> to vector<32xf32>
    %525 = vector.shape_cast %524 : vector<32xf32> to vector<1x32xf32>
    %526 = vector.broadcast %525 : vector<1x32xf32> to vector<16x32xf32>
    %527 = arith.mulf %522, %526 : vector<16x32xf32>
    %528 = arith.addf %521, %527 : vector<16x32xf32>
    %529 = vector.extract_strided_slice %340 {offsets = [26, 0], sizes = [16, 32], strides = [1, 1]} : vector<46x32xf32> to vector<16x32xf32>
    %c0_237 = arith.constant 0 : index
    %c26 = arith.constant 26 : index
    %c0_238 = arith.constant 0 : index
    %530 = vector.load %arg11[%c0_237, %c26, %c0_238] : memref<2x31x32xf32, #tpu.memory_space<vmem>>, vector<1x1x32xf32>
    %531 = vector.shape_cast %530 : vector<1x1x32xf32> to vector<32xf32>
    %532 = vector.shape_cast %531 : vector<32xf32> to vector<1x32xf32>
    %533 = vector.broadcast %532 : vector<1x32xf32> to vector<16x32xf32>
    %534 = arith.mulf %529, %533 : vector<16x32xf32>
    %535 = arith.addf %528, %534 : vector<16x32xf32>
    %536 = vector.extract_strided_slice %340 {offsets = [27, 0], sizes = [16, 32], strides = [1, 1]} : vector<46x32xf32> to vector<16x32xf32>
    %c0_239 = arith.constant 0 : index
    %c27 = arith.constant 27 : index
    %c0_240 = arith.constant 0 : index
    %537 = vector.load %arg11[%c0_239, %c27, %c0_240] : memref<2x31x32xf32, #tpu.memory_space<vmem>>, vector<1x1x32xf32>
    %538 = vector.shape_cast %537 : vector<1x1x32xf32> to vector<32xf32>
    %539 = vector.shape_cast %538 : vector<32xf32> to vector<1x32xf32>
    %540 = vector.broadcast %539 : vector<1x32xf32> to vector<16x32xf32>
    %541 = arith.mulf %536, %540 : vector<16x32xf32>
    %542 = arith.addf %535, %541 : vector<16x32xf32>
    %543 = vector.extract_strided_slice %340 {offsets = [28, 0], sizes = [16, 32], strides = [1, 1]} : vector<46x32xf32> to vector<16x32xf32>
    %c0_241 = arith.constant 0 : index
    %c28 = arith.constant 28 : index
    %c0_242 = arith.constant 0 : index
    %544 = vector.load %arg11[%c0_241, %c28, %c0_242] : memref<2x31x32xf32, #tpu.memory_space<vmem>>, vector<1x1x32xf32>
    %545 = vector.shape_cast %544 : vector<1x1x32xf32> to vector<32xf32>
    %546 = vector.shape_cast %545 : vector<32xf32> to vector<1x32xf32>
    %547 = vector.broadcast %546 : vector<1x32xf32> to vector<16x32xf32>
    %548 = arith.mulf %543, %547 : vector<16x32xf32>
    %549 = arith.addf %542, %548 : vector<16x32xf32>
    %550 = vector.extract_strided_slice %340 {offsets = [29, 0], sizes = [16, 32], strides = [1, 1]} : vector<46x32xf32> to vector<16x32xf32>
    %c0_243 = arith.constant 0 : index
    %c29 = arith.constant 29 : index
    %c0_244 = arith.constant 0 : index
    %551 = vector.load %arg11[%c0_243, %c29, %c0_244] : memref<2x31x32xf32, #tpu.memory_space<vmem>>, vector<1x1x32xf32>
    %552 = vector.shape_cast %551 : vector<1x1x32xf32> to vector<32xf32>
    %553 = vector.shape_cast %552 : vector<32xf32> to vector<1x32xf32>
    %554 = vector.broadcast %553 : vector<1x32xf32> to vector<16x32xf32>
    %555 = arith.mulf %550, %554 : vector<16x32xf32>
    %556 = arith.addf %549, %555 : vector<16x32xf32>
    %557 = vector.extract_strided_slice %340 {offsets = [30, 0], sizes = [16, 32], strides = [1, 1]} : vector<46x32xf32> to vector<16x32xf32>
    %c0_245 = arith.constant 0 : index
    %c30 = arith.constant 30 : index
    %c0_246 = arith.constant 0 : index
    %558 = vector.load %arg11[%c0_245, %c30, %c0_246] : memref<2x31x32xf32, #tpu.memory_space<vmem>>, vector<1x1x32xf32>
    %559 = vector.shape_cast %558 : vector<1x1x32xf32> to vector<32xf32>
    %560 = vector.shape_cast %559 : vector<32xf32> to vector<1x32xf32>
    %561 = vector.broadcast %560 : vector<1x32xf32> to vector<16x32xf32>
    %562 = arith.mulf %557, %561 : vector<16x32xf32>
    %563 = arith.addf %556, %562 : vector<16x32xf32>
    %c14_247 = arith.constant 14 : index
    %c0_248 = arith.constant 0 : index
    %564 = vector.load %arg3[%c14_247, %c0_248] : memref<41x32xf32, #tpu.memory_space<vmem>>, vector<1x32xf32>
    %565 = vector.shape_cast %564 : vector<1x32xf32> to vector<32xf32>
    %566 = vector.shape_cast %565 : vector<32xf32> to vector<1x32xf32>
    %567 = vector.broadcast %566 : vector<1x32xf32> to vector<16x32xf32>
    %568 = arith.mulf %563, %567 : vector<16x32xf32>
    %c15_249 = arith.constant 15 : index
    %c0_250 = arith.constant 0 : index
    %569 = vector.load %arg3[%c15_249, %c0_250] : memref<41x32xf32, #tpu.memory_space<vmem>>, vector<1x32xf32>
    %570 = vector.shape_cast %569 : vector<1x32xf32> to vector<32xf32>
    %571 = vector.shape_cast %570 : vector<32xf32> to vector<1x32xf32>
    %572 = vector.broadcast %571 : vector<1x32xf32> to vector<16x32xf32>
    %573 = arith.addf %568, %572 : vector<16x32xf32>
    %574 = arith.negf %573 : vector<16x32xf32>
    %575 = math.exp %574 : vector<16x32xf32>
    %cst_251 = arith.constant 1.000000e+00 : f32
    %576 = vector.broadcast %cst_251 : f32 to vector<16x32xf32>
    %577 = arith.addf %576, %575 : vector<16x32xf32>
    %578 = arith.divf %576, %577 : vector<16x32xf32>
    %579 = arith.mulf %573, %578 : vector<16x32xf32>
    %c2_252 = arith.constant 2 : index
    %c0_253 = arith.constant 0 : index
    %c0_254 = arith.constant 0 : index
    %580 = vector.load %arg10[%c2_252, %c0_253, %c0_254] : memref<6x32x32xf32, #tpu.memory_space<vmem>>, vector<1x32x32xf32>
    %581 = vector.shape_cast %580 : vector<1x32x32xf32> to vector<32x32xf32>
    %cst_255 = arith.constant dense<0.000000e+00> : vector<16x32xf32>
    %582 = tpu.matmul %579, %581, %cst_255 {dimension_numbers = #tpu.dot_dimension_numbers<[1], [0], [0], [1], [0, 0, 1, 1], [], []>} : vector<16x32xf32>, vector<32x32xf32>, vector<16x32xf32> -> vector<16x32xf32>
    %c16_256 = arith.constant 16 : index
    %c0_257 = arith.constant 0 : index
    %583 = vector.load %arg3[%c16_256, %c0_257] : memref<41x32xf32, #tpu.memory_space<vmem>>, vector<1x32xf32>
    %584 = vector.shape_cast %583 : vector<1x32xf32> to vector<32xf32>
    %585 = vector.shape_cast %584 : vector<32xf32> to vector<1x32xf32>
    %586 = vector.broadcast %585 : vector<1x32xf32> to vector<16x32xf32>
    %587 = arith.addf %582, %586 : vector<16x32xf32>
    %588 = arith.addf %288, %587 : vector<16x32xf32>
    %c17_258 = arith.constant 17 : index
    %c0_259 = arith.constant 0 : index
    %589 = vector.load %arg3[%c17_258, %c0_259] : memref<41x32xf32, #tpu.memory_space<vmem>>, vector<1x32xf32>
    %590 = vector.shape_cast %589 : vector<1x32xf32> to vector<32xf32>
    %c18_260 = arith.constant 18 : index
    %c0_261 = arith.constant 0 : index
    %591 = vector.load %arg3[%c18_260, %c0_261] : memref<41x32xf32, #tpu.memory_space<vmem>>, vector<1x32xf32>
    %592 = vector.shape_cast %591 : vector<1x32xf32> to vector<32xf32>
    %cst_262 = arith.constant dense<0.000000e+00> : vector<16xf32>
    %593 = vector.multi_reduction <add>, %588, %cst_262 [1] : vector<16x32xf32> to vector<16xf32>
    %594 = vector.shape_cast %593 : vector<16xf32> to vector<16x1xf32>
    %cst_263 = arith.constant 3.200000e+01 : f32
    %595 = vector.broadcast %cst_263 : f32 to vector<16x1xf32>
    %596 = arith.divf %594, %595 : vector<16x1xf32>
    %597 = vector.broadcast %596 : vector<16x1xf32> to vector<16x32xf32>
    %598 = arith.subf %588, %597 : vector<16x32xf32>
    %599 = arith.mulf %598, %598 : vector<16x32xf32>
    %cst_264 = arith.constant dense<0.000000e+00> : vector<16xf32>
    %600 = vector.multi_reduction <add>, %599, %cst_264 [1] : vector<16x32xf32> to vector<16xf32>
    %601 = vector.shape_cast %600 : vector<16xf32> to vector<16x1xf32>
    %cst_265 = arith.constant 3.200000e+01 : f32
    %602 = vector.broadcast %cst_265 : f32 to vector<16x1xf32>
    %603 = arith.divf %601, %602 : vector<16x1xf32>
    %604 = vector.broadcast %596 : vector<16x1xf32> to vector<16x32xf32>
    %605 = arith.subf %588, %604 : vector<16x32xf32>
    %cst_266 = arith.constant 9.99999974E-6 : f32
    %606 = vector.broadcast %cst_266 : f32 to vector<16x1xf32>
    %607 = arith.addf %603, %606 : vector<16x1xf32>
    %608 = math.rsqrt %607 : vector<16x1xf32>
    %609 = vector.broadcast %608 : vector<16x1xf32> to vector<16x32xf32>
    %610 = arith.mulf %605, %609 : vector<16x32xf32>
    %611 = vector.shape_cast %590 : vector<32xf32> to vector<1x32xf32>
    %612 = vector.broadcast %611 : vector<1x32xf32> to vector<16x32xf32>
    %613 = arith.mulf %610, %612 : vector<16x32xf32>
    %614 = vector.shape_cast %592 : vector<32xf32> to vector<1x32xf32>
    %615 = vector.broadcast %614 : vector<1x32xf32> to vector<16x32xf32>
    %616 = arith.addf %613, %615 : vector<16x32xf32>
    %c1_267 = arith.constant 1 : index
    %c0_268 = arith.constant 0 : index
    %c0_269 = arith.constant 0 : index
    %617 = vector.load %arg4[%c1_267, %c0_268, %c0_269] : memref<4x32x128xf32, #tpu.memory_space<vmem>>, vector<1x32x128xf32>
    %618 = vector.shape_cast %617 : vector<1x32x128xf32> to vector<32x128xf32>
    %cst_270 = arith.constant dense<0.000000e+00> : vector<16x128xf32>
    %619 = tpu.matmul %616, %618, %cst_270 {dimension_numbers = #tpu.dot_dimension_numbers<[1], [0], [0], [1], [0, 0, 1, 1], [], []>} : vector<16x32xf32>, vector<32x128xf32>, vector<16x128xf32> -> vector<16x128xf32>
    %c1_271 = arith.constant 1 : index
    %c0_272 = arith.constant 0 : index
    %620 = vector.load %arg5[%c1_271, %c0_272] : memref<4x128xf32, #tpu.memory_space<vmem>>, vector<1x128xf32>
    %621 = vector.shape_cast %620 : vector<1x128xf32> to vector<128xf32>
    %622 = vector.shape_cast %621 : vector<128xf32> to vector<1x128xf32>
    %623 = vector.broadcast %622 : vector<1x128xf32> to vector<16x128xf32>
    %624 = arith.addf %619, %623 : vector<16x128xf32>
    %625 = arith.negf %624 : vector<16x128xf32>
    %626 = math.exp %625 : vector<16x128xf32>
    %cst_273 = arith.constant 1.000000e+00 : f32
    %627 = vector.broadcast %cst_273 : f32 to vector<16x128xf32>
    %628 = arith.addf %627, %626 : vector<16x128xf32>
    %629 = arith.divf %627, %628 : vector<16x128xf32>
    %630 = arith.mulf %624, %629 : vector<16x128xf32>
    %c1_274 = arith.constant 1 : index
    %c0_275 = arith.constant 0 : index
    %c0_276 = arith.constant 0 : index
    %631 = vector.load %arg6[%c1_274, %c0_275, %c0_276] : memref<4x128x32xf32, #tpu.memory_space<vmem>>, vector<1x128x32xf32>
    %632 = vector.shape_cast %631 : vector<1x128x32xf32> to vector<128x32xf32>
    %cst_277 = arith.constant dense<0.000000e+00> : vector<16x32xf32>
    %633 = tpu.matmul %630, %632, %cst_277 {dimension_numbers = #tpu.dot_dimension_numbers<[1], [0], [0], [1], [0, 0, 1, 1], [], []>} : vector<16x128xf32>, vector<128x32xf32>, vector<16x32xf32> -> vector<16x32xf32>
    %c19_278 = arith.constant 19 : index
    %c0_279 = arith.constant 0 : index
    %634 = vector.load %arg3[%c19_278, %c0_279] : memref<41x32xf32, #tpu.memory_space<vmem>>, vector<1x32xf32>
    %635 = vector.shape_cast %634 : vector<1x32xf32> to vector<32xf32>
    %636 = vector.shape_cast %635 : vector<32xf32> to vector<1x32xf32>
    %637 = vector.broadcast %636 : vector<1x32xf32> to vector<16x32xf32>
    %638 = arith.addf %633, %637 : vector<16x32xf32>
    %cst_280 = arith.constant 5.000000e-01 : f32
    %639 = vector.broadcast %cst_280 : f32 to vector<16x32xf32>
    %640 = arith.mulf %639, %638 : vector<16x32xf32>
    %641 = arith.addf %588, %640 : vector<16x32xf32>
    %c20_281 = arith.constant 20 : index
    %c0_282 = arith.constant 0 : index
    %642 = vector.load %arg3[%c20_281, %c0_282] : memref<41x32xf32, #tpu.memory_space<vmem>>, vector<1x32xf32>
    %643 = vector.shape_cast %642 : vector<1x32xf32> to vector<32xf32>
    %c21_283 = arith.constant 21 : index
    %c0_284 = arith.constant 0 : index
    %644 = vector.load %arg3[%c21_283, %c0_284] : memref<41x32xf32, #tpu.memory_space<vmem>>, vector<1x32xf32>
    %645 = vector.shape_cast %644 : vector<1x32xf32> to vector<32xf32>
    %cst_285 = arith.constant dense<0.000000e+00> : vector<16xf32>
    %646 = vector.multi_reduction <add>, %641, %cst_285 [1] : vector<16x32xf32> to vector<16xf32>
    %647 = vector.shape_cast %646 : vector<16xf32> to vector<16x1xf32>
    %cst_286 = arith.constant 3.200000e+01 : f32
    %648 = vector.broadcast %cst_286 : f32 to vector<16x1xf32>
    %649 = arith.divf %647, %648 : vector<16x1xf32>
    %650 = vector.broadcast %649 : vector<16x1xf32> to vector<16x32xf32>
    %651 = arith.subf %641, %650 : vector<16x32xf32>
    %652 = arith.mulf %651, %651 : vector<16x32xf32>
    %cst_287 = arith.constant dense<0.000000e+00> : vector<16xf32>
    %653 = vector.multi_reduction <add>, %652, %cst_287 [1] : vector<16x32xf32> to vector<16xf32>
    %654 = vector.shape_cast %653 : vector<16xf32> to vector<16x1xf32>
    %cst_288 = arith.constant 3.200000e+01 : f32
    %655 = vector.broadcast %cst_288 : f32 to vector<16x1xf32>
    %656 = arith.divf %654, %655 : vector<16x1xf32>
    %657 = vector.broadcast %649 : vector<16x1xf32> to vector<16x32xf32>
    %658 = arith.subf %641, %657 : vector<16x32xf32>
    %cst_289 = arith.constant 9.99999974E-6 : f32
    %659 = vector.broadcast %cst_289 : f32 to vector<16x1xf32>
    %660 = arith.addf %656, %659 : vector<16x1xf32>
    %661 = math.rsqrt %660 : vector<16x1xf32>
    %662 = vector.broadcast %661 : vector<16x1xf32> to vector<16x32xf32>
    %663 = arith.mulf %658, %662 : vector<16x32xf32>
    %664 = vector.shape_cast %643 : vector<32xf32> to vector<1x32xf32>
    %665 = vector.broadcast %664 : vector<1x32xf32> to vector<16x32xf32>
    %666 = arith.mulf %663, %665 : vector<16x32xf32>
    %667 = vector.shape_cast %645 : vector<32xf32> to vector<1x32xf32>
    %668 = vector.broadcast %667 : vector<1x32xf32> to vector<16x32xf32>
    %669 = arith.addf %666, %668 : vector<16x32xf32>
    %c22_290 = arith.constant 22 : index
    %c0_291 = arith.constant 0 : index
    %670 = vector.load %arg3[%c22_290, %c0_291] : memref<41x32xf32, #tpu.memory_space<vmem>>, vector<1x32xf32>
    %671 = vector.shape_cast %670 : vector<1x32xf32> to vector<32xf32>
    %c23_292 = arith.constant 23 : index
    %c0_293 = arith.constant 0 : index
    %672 = vector.load %arg3[%c23_292, %c0_293] : memref<41x32xf32, #tpu.memory_space<vmem>>, vector<1x32xf32>
    %673 = vector.shape_cast %672 : vector<1x32xf32> to vector<32xf32>
    %cst_294 = arith.constant dense<0.000000e+00> : vector<16xf32>
    %674 = vector.multi_reduction <add>, %669, %cst_294 [1] : vector<16x32xf32> to vector<16xf32>
    %675 = vector.shape_cast %674 : vector<16xf32> to vector<16x1xf32>
    %cst_295 = arith.constant 3.200000e+01 : f32
    %676 = vector.broadcast %cst_295 : f32 to vector<16x1xf32>
    %677 = arith.divf %675, %676 : vector<16x1xf32>
    %678 = vector.broadcast %677 : vector<16x1xf32> to vector<16x32xf32>
    %679 = arith.subf %669, %678 : vector<16x32xf32>
    %680 = arith.mulf %679, %679 : vector<16x32xf32>
    %cst_296 = arith.constant dense<0.000000e+00> : vector<16xf32>
    %681 = vector.multi_reduction <add>, %680, %cst_296 [1] : vector<16x32xf32> to vector<16xf32>
    %682 = vector.shape_cast %681 : vector<16xf32> to vector<16x1xf32>
    %cst_297 = arith.constant 3.200000e+01 : f32
    %683 = vector.broadcast %cst_297 : f32 to vector<16x1xf32>
    %684 = arith.divf %682, %683 : vector<16x1xf32>
    %685 = vector.broadcast %677 : vector<16x1xf32> to vector<16x32xf32>
    %686 = arith.subf %669, %685 : vector<16x32xf32>
    %cst_298 = arith.constant 9.99999974E-6 : f32
    %687 = vector.broadcast %cst_298 : f32 to vector<16x1xf32>
    %688 = arith.addf %684, %687 : vector<16x1xf32>
    %689 = math.rsqrt %688 : vector<16x1xf32>
    %690 = vector.broadcast %689 : vector<16x1xf32> to vector<16x32xf32>
    %691 = arith.mulf %686, %690 : vector<16x32xf32>
    %692 = vector.shape_cast %671 : vector<32xf32> to vector<1x32xf32>
    %693 = vector.broadcast %692 : vector<1x32xf32> to vector<16x32xf32>
    %694 = arith.mulf %691, %693 : vector<16x32xf32>
    %695 = vector.shape_cast %673 : vector<32xf32> to vector<1x32xf32>
    %696 = vector.broadcast %695 : vector<1x32xf32> to vector<16x32xf32>
    %697 = arith.addf %694, %696 : vector<16x32xf32>
    %c2_299 = arith.constant 2 : index
    %c0_300 = arith.constant 0 : index
    %c0_301 = arith.constant 0 : index
    %698 = vector.load %arg4[%c2_299, %c0_300, %c0_301] : memref<4x32x128xf32, #tpu.memory_space<vmem>>, vector<1x32x128xf32>
    %699 = vector.shape_cast %698 : vector<1x32x128xf32> to vector<32x128xf32>
    %cst_302 = arith.constant dense<0.000000e+00> : vector<16x128xf32>
    %700 = tpu.matmul %697, %699, %cst_302 {dimension_numbers = #tpu.dot_dimension_numbers<[1], [0], [0], [1], [0, 0, 1, 1], [], []>} : vector<16x32xf32>, vector<32x128xf32>, vector<16x128xf32> -> vector<16x128xf32>
    %c2_303 = arith.constant 2 : index
    %c0_304 = arith.constant 0 : index
    %701 = vector.load %arg5[%c2_303, %c0_304] : memref<4x128xf32, #tpu.memory_space<vmem>>, vector<1x128xf32>
    %702 = vector.shape_cast %701 : vector<1x128xf32> to vector<128xf32>
    %703 = vector.shape_cast %702 : vector<128xf32> to vector<1x128xf32>
    %704 = vector.broadcast %703 : vector<1x128xf32> to vector<16x128xf32>
    %705 = arith.addf %700, %704 : vector<16x128xf32>
    %706 = arith.negf %705 : vector<16x128xf32>
    %707 = math.exp %706 : vector<16x128xf32>
    %cst_305 = arith.constant 1.000000e+00 : f32
    %708 = vector.broadcast %cst_305 : f32 to vector<16x128xf32>
    %709 = arith.addf %708, %707 : vector<16x128xf32>
    %710 = arith.divf %708, %709 : vector<16x128xf32>
    %711 = arith.mulf %705, %710 : vector<16x128xf32>
    %c2_306 = arith.constant 2 : index
    %c0_307 = arith.constant 0 : index
    %c0_308 = arith.constant 0 : index
    %712 = vector.load %arg6[%c2_306, %c0_307, %c0_308] : memref<4x128x32xf32, #tpu.memory_space<vmem>>, vector<1x128x32xf32>
    %713 = vector.shape_cast %712 : vector<1x128x32xf32> to vector<128x32xf32>
    %cst_309 = arith.constant dense<0.000000e+00> : vector<16x32xf32>
    %714 = tpu.matmul %711, %713, %cst_309 {dimension_numbers = #tpu.dot_dimension_numbers<[1], [0], [0], [1], [0, 0, 1, 1], [], []>} : vector<16x128xf32>, vector<128x32xf32>, vector<16x32xf32> -> vector<16x32xf32>
    %c24_310 = arith.constant 24 : index
    %c0_311 = arith.constant 0 : index
    %715 = vector.load %arg3[%c24_310, %c0_311] : memref<41x32xf32, #tpu.memory_space<vmem>>, vector<1x32xf32>
    %716 = vector.shape_cast %715 : vector<1x32xf32> to vector<32xf32>
    %717 = vector.shape_cast %716 : vector<32xf32> to vector<1x32xf32>
    %718 = vector.broadcast %717 : vector<1x32xf32> to vector<16x32xf32>
    %719 = arith.addf %714, %718 : vector<16x32xf32>
    %cst_312 = arith.constant 5.000000e-01 : f32
    %720 = vector.broadcast %cst_312 : f32 to vector<16x32xf32>
    %721 = arith.mulf %720, %719 : vector<16x32xf32>
    %722 = arith.addf %669, %721 : vector<16x32xf32>
    %c25_313 = arith.constant 25 : index
    %c0_314 = arith.constant 0 : index
    %723 = vector.load %arg3[%c25_313, %c0_314] : memref<41x32xf32, #tpu.memory_space<vmem>>, vector<1x32xf32>
    %724 = vector.shape_cast %723 : vector<1x32xf32> to vector<32xf32>
    %c26_315 = arith.constant 26 : index
    %c0_316 = arith.constant 0 : index
    %725 = vector.load %arg3[%c26_315, %c0_316] : memref<41x32xf32, #tpu.memory_space<vmem>>, vector<1x32xf32>
    %726 = vector.shape_cast %725 : vector<1x32xf32> to vector<32xf32>
    %cst_317 = arith.constant dense<0.000000e+00> : vector<16xf32>
    %727 = vector.multi_reduction <add>, %722, %cst_317 [1] : vector<16x32xf32> to vector<16xf32>
    %728 = vector.shape_cast %727 : vector<16xf32> to vector<16x1xf32>
    %cst_318 = arith.constant 3.200000e+01 : f32
    %729 = vector.broadcast %cst_318 : f32 to vector<16x1xf32>
    %730 = arith.divf %728, %729 : vector<16x1xf32>
    %731 = vector.broadcast %730 : vector<16x1xf32> to vector<16x32xf32>
    %732 = arith.subf %722, %731 : vector<16x32xf32>
    %733 = arith.mulf %732, %732 : vector<16x32xf32>
    %cst_319 = arith.constant dense<0.000000e+00> : vector<16xf32>
    %734 = vector.multi_reduction <add>, %733, %cst_319 [1] : vector<16x32xf32> to vector<16xf32>
    %735 = vector.shape_cast %734 : vector<16xf32> to vector<16x1xf32>
    %cst_320 = arith.constant 3.200000e+01 : f32
    %736 = vector.broadcast %cst_320 : f32 to vector<16x1xf32>
    %737 = arith.divf %735, %736 : vector<16x1xf32>
    %738 = vector.broadcast %730 : vector<16x1xf32> to vector<16x32xf32>
    %739 = arith.subf %722, %738 : vector<16x32xf32>
    %cst_321 = arith.constant 9.99999974E-6 : f32
    %740 = vector.broadcast %cst_321 : f32 to vector<16x1xf32>
    %741 = arith.addf %737, %740 : vector<16x1xf32>
    %742 = math.rsqrt %741 : vector<16x1xf32>
    %743 = vector.broadcast %742 : vector<16x1xf32> to vector<16x32xf32>
    %744 = arith.mulf %739, %743 : vector<16x32xf32>
    %745 = vector.shape_cast %724 : vector<32xf32> to vector<1x32xf32>
    %746 = vector.broadcast %745 : vector<1x32xf32> to vector<16x32xf32>
    %747 = arith.mulf %744, %746 : vector<16x32xf32>
    %748 = vector.shape_cast %726 : vector<32xf32> to vector<1x32xf32>
    %749 = vector.broadcast %748 : vector<1x32xf32> to vector<16x32xf32>
    %750 = arith.addf %747, %749 : vector<16x32xf32>
    %cst_322 = arith.constant 0.000000e+00 : f32
    %751 = vector.broadcast %cst_322 : f32 to vector<16x32xf32>
    %c27_323 = arith.constant 27 : index
    %c0_324 = arith.constant 0 : index
    %752 = vector.load %arg3[%c27_323, %c0_324] : memref<41x32xf32, #tpu.memory_space<vmem>>, vector<1x32xf32>
    %753 = vector.shape_cast %752 : vector<1x32xf32> to vector<32xf32>
    %754 = vector.shape_cast %753 : vector<32xf32> to vector<1x32xf32>
    %755 = vector.broadcast %754 : vector<1x32xf32> to vector<16x32xf32>
    %756 = arith.addf %751, %755 : vector<16x32xf32>
    %c12_325 = arith.constant 12 : index
    %c0_326 = arith.constant 0 : index
    %c0_327 = arith.constant 0 : index
    %757 = vector.load %arg7[%c12_325, %c0_326, %c0_327] : memref<24x32x8xf32, #tpu.memory_space<vmem>>, vector<1x32x8xf32>
    %758 = vector.shape_cast %757 : vector<1x32x8xf32> to vector<32x8xf32>
    %cst_328 = arith.constant dense<0.000000e+00> : vector<16x8xf32>
    %759 = tpu.matmul %750, %758, %cst_328 {dimension_numbers = #tpu.dot_dimension_numbers<[1], [0], [0], [1], [0, 0, 1, 1], [], []>} : vector<16x32xf32>, vector<32x8xf32>, vector<16x8xf32> -> vector<16x8xf32>
    %c12_329 = arith.constant 12 : index
    %c0_330 = arith.constant 0 : index
    %760 = vector.load %arg8[%c12_329, %c0_330] : memref<24x8xf32, #tpu.memory_space<vmem>>, vector<1x8xf32>
    %761 = vector.shape_cast %760 : vector<1x8xf32> to vector<8xf32>
    %762 = vector.shape_cast %761 : vector<8xf32> to vector<1x8xf32>
    %763 = vector.broadcast %762 : vector<1x8xf32> to vector<16x8xf32>
    %764 = arith.addf %759, %763 : vector<16x8xf32>
    %cst_331 = arith.constant 0.353553385 : f32
    %765 = vector.broadcast %cst_331 : f32 to vector<16x8xf32>
    %766 = arith.mulf %764, %765 : vector<16x8xf32>
    %c16_332 = arith.constant 16 : index
    %c0_333 = arith.constant 0 : index
    %c0_334 = arith.constant 0 : index
    %767 = vector.load %arg7[%c16_332, %c0_333, %c0_334] : memref<24x32x8xf32, #tpu.memory_space<vmem>>, vector<1x32x8xf32>
    %768 = vector.shape_cast %767 : vector<1x32x8xf32> to vector<32x8xf32>
    %cst_335 = arith.constant dense<0.000000e+00> : vector<16x8xf32>
    %769 = tpu.matmul %750, %768, %cst_335 {dimension_numbers = #tpu.dot_dimension_numbers<[1], [0], [0], [1], [0, 0, 1, 1], [], []>} : vector<16x32xf32>, vector<32x8xf32>, vector<16x8xf32> -> vector<16x8xf32>
    %c16_336 = arith.constant 16 : index
    %c0_337 = arith.constant 0 : index
    %770 = vector.load %arg8[%c16_336, %c0_337] : memref<24x8xf32, #tpu.memory_space<vmem>>, vector<1x8xf32>
    %771 = vector.shape_cast %770 : vector<1x8xf32> to vector<8xf32>
    %772 = vector.shape_cast %771 : vector<8xf32> to vector<1x8xf32>
    %773 = vector.broadcast %772 : vector<1x8xf32> to vector<16x8xf32>
    %774 = arith.addf %769, %773 : vector<16x8xf32>
    %c20_338 = arith.constant 20 : index
    %c0_339 = arith.constant 0 : index
    %c0_340 = arith.constant 0 : index
    %775 = vector.load %arg7[%c20_338, %c0_339, %c0_340] : memref<24x32x8xf32, #tpu.memory_space<vmem>>, vector<1x32x8xf32>
    %776 = vector.shape_cast %775 : vector<1x32x8xf32> to vector<32x8xf32>
    %cst_341 = arith.constant dense<0.000000e+00> : vector<16x8xf32>
    %777 = tpu.matmul %750, %776, %cst_341 {dimension_numbers = #tpu.dot_dimension_numbers<[1], [0], [0], [1], [0, 0, 1, 1], [], []>} : vector<16x32xf32>, vector<32x8xf32>, vector<16x8xf32> -> vector<16x8xf32>
    %c20_342 = arith.constant 20 : index
    %c0_343 = arith.constant 0 : index
    %778 = vector.load %arg8[%c20_342, %c0_343] : memref<24x8xf32, #tpu.memory_space<vmem>>, vector<1x8xf32>
    %779 = vector.shape_cast %778 : vector<1x8xf32> to vector<8xf32>
    %780 = vector.shape_cast %779 : vector<8xf32> to vector<1x8xf32>
    %781 = vector.broadcast %780 : vector<1x8xf32> to vector<16x8xf32>
    %782 = arith.addf %777, %781 : vector<16x8xf32>
    %cst_344 = arith.constant dense<0.000000e+00> : vector<16x16xf32>
    %783 = tpu.matmul %766, %774, %cst_344 {dimension_numbers = #tpu.dot_dimension_numbers<[1], [1], [0], [0], [0, 0, 1, 0], [], []>} : vector<16x8xf32>, vector<16x8xf32>, vector<16x16xf32> -> vector<16x16xf32>
    %cst_345 = arith.constant dense<0xFF800000> : vector<16xf32>
    %784 = vector.multi_reduction <maximumf>, %783, %cst_345 [1] : vector<16x16xf32> to vector<16xf32>
    %785 = vector.shape_cast %784 : vector<16xf32> to vector<16x1xf32>
    %786 = vector.broadcast %785 : vector<16x1xf32> to vector<16x16xf32>
    %787 = arith.subf %783, %786 : vector<16x16xf32>
    %788 = math.exp %787 : vector<16x16xf32>
    %cst_346 = arith.constant dense<0.000000e+00> : vector<16xf32>
    %789 = vector.multi_reduction <add>, %788, %cst_346 [1] : vector<16x16xf32> to vector<16xf32>
    %790 = vector.shape_cast %789 : vector<16xf32> to vector<16x1xf32>
    %791 = vector.broadcast %790 : vector<16x1xf32> to vector<16x16xf32>
    %792 = arith.divf %788, %791 : vector<16x16xf32>
    %cst_347 = arith.constant dense<0.000000e+00> : vector<16x8xf32>
    %793 = tpu.matmul %792, %782, %cst_347 {dimension_numbers = #tpu.dot_dimension_numbers<[1], [0], [0], [1], [0, 0, 1, 1], [], []>} : vector<16x16xf32>, vector<16x8xf32>, vector<16x8xf32> -> vector<16x8xf32>
    %c4_348 = arith.constant 4 : index
    %c0_349 = arith.constant 0 : index
    %c0_350 = arith.constant 0 : index
    %794 = vector.load %arg9[%c4_348, %c0_349, %c0_350] : memref<8x8x32xf32, #tpu.memory_space<vmem>>, vector<1x8x32xf32>
    %795 = vector.shape_cast %794 : vector<1x8x32xf32> to vector<8x32xf32>
    %cst_351 = arith.constant dense<0.000000e+00> : vector<16x32xf32>
    %796 = tpu.matmul %793, %795, %cst_351 {dimension_numbers = #tpu.dot_dimension_numbers<[1], [0], [0], [1], [0, 0, 1, 1], [], []>} : vector<16x8xf32>, vector<8x32xf32>, vector<16x32xf32> -> vector<16x32xf32>
    %797 = arith.addf %756, %796 : vector<16x32xf32>
    %c13_352 = arith.constant 13 : index
    %c0_353 = arith.constant 0 : index
    %c0_354 = arith.constant 0 : index
    %798 = vector.load %arg7[%c13_352, %c0_353, %c0_354] : memref<24x32x8xf32, #tpu.memory_space<vmem>>, vector<1x32x8xf32>
    %799 = vector.shape_cast %798 : vector<1x32x8xf32> to vector<32x8xf32>
    %cst_355 = arith.constant dense<0.000000e+00> : vector<16x8xf32>
    %800 = tpu.matmul %750, %799, %cst_355 {dimension_numbers = #tpu.dot_dimension_numbers<[1], [0], [0], [1], [0, 0, 1, 1], [], []>} : vector<16x32xf32>, vector<32x8xf32>, vector<16x8xf32> -> vector<16x8xf32>
    %c13_356 = arith.constant 13 : index
    %c0_357 = arith.constant 0 : index
    %801 = vector.load %arg8[%c13_356, %c0_357] : memref<24x8xf32, #tpu.memory_space<vmem>>, vector<1x8xf32>
    %802 = vector.shape_cast %801 : vector<1x8xf32> to vector<8xf32>
    %803 = vector.shape_cast %802 : vector<8xf32> to vector<1x8xf32>
    %804 = vector.broadcast %803 : vector<1x8xf32> to vector<16x8xf32>
    %805 = arith.addf %800, %804 : vector<16x8xf32>
    %cst_358 = arith.constant 0.353553385 : f32
    %806 = vector.broadcast %cst_358 : f32 to vector<16x8xf32>
    %807 = arith.mulf %805, %806 : vector<16x8xf32>
    %c17_359 = arith.constant 17 : index
    %c0_360 = arith.constant 0 : index
    %c0_361 = arith.constant 0 : index
    %808 = vector.load %arg7[%c17_359, %c0_360, %c0_361] : memref<24x32x8xf32, #tpu.memory_space<vmem>>, vector<1x32x8xf32>
    %809 = vector.shape_cast %808 : vector<1x32x8xf32> to vector<32x8xf32>
    %cst_362 = arith.constant dense<0.000000e+00> : vector<16x8xf32>
    %810 = tpu.matmul %750, %809, %cst_362 {dimension_numbers = #tpu.dot_dimension_numbers<[1], [0], [0], [1], [0, 0, 1, 1], [], []>} : vector<16x32xf32>, vector<32x8xf32>, vector<16x8xf32> -> vector<16x8xf32>
    %c17_363 = arith.constant 17 : index
    %c0_364 = arith.constant 0 : index
    %811 = vector.load %arg8[%c17_363, %c0_364] : memref<24x8xf32, #tpu.memory_space<vmem>>, vector<1x8xf32>
    %812 = vector.shape_cast %811 : vector<1x8xf32> to vector<8xf32>
    %813 = vector.shape_cast %812 : vector<8xf32> to vector<1x8xf32>
    %814 = vector.broadcast %813 : vector<1x8xf32> to vector<16x8xf32>
    %815 = arith.addf %810, %814 : vector<16x8xf32>
    %c21_365 = arith.constant 21 : index
    %c0_366 = arith.constant 0 : index
    %c0_367 = arith.constant 0 : index
    %816 = vector.load %arg7[%c21_365, %c0_366, %c0_367] : memref<24x32x8xf32, #tpu.memory_space<vmem>>, vector<1x32x8xf32>
    %817 = vector.shape_cast %816 : vector<1x32x8xf32> to vector<32x8xf32>
    %cst_368 = arith.constant dense<0.000000e+00> : vector<16x8xf32>
    %818 = tpu.matmul %750, %817, %cst_368 {dimension_numbers = #tpu.dot_dimension_numbers<[1], [0], [0], [1], [0, 0, 1, 1], [], []>} : vector<16x32xf32>, vector<32x8xf32>, vector<16x8xf32> -> vector<16x8xf32>
    %c21_369 = arith.constant 21 : index
    %c0_370 = arith.constant 0 : index
    %819 = vector.load %arg8[%c21_369, %c0_370] : memref<24x8xf32, #tpu.memory_space<vmem>>, vector<1x8xf32>
    %820 = vector.shape_cast %819 : vector<1x8xf32> to vector<8xf32>
    %821 = vector.shape_cast %820 : vector<8xf32> to vector<1x8xf32>
    %822 = vector.broadcast %821 : vector<1x8xf32> to vector<16x8xf32>
    %823 = arith.addf %818, %822 : vector<16x8xf32>
    %cst_371 = arith.constant dense<0.000000e+00> : vector<16x16xf32>
    %824 = tpu.matmul %807, %815, %cst_371 {dimension_numbers = #tpu.dot_dimension_numbers<[1], [1], [0], [0], [0, 0, 1, 0], [], []>} : vector<16x8xf32>, vector<16x8xf32>, vector<16x16xf32> -> vector<16x16xf32>
    %cst_372 = arith.constant dense<0xFF800000> : vector<16xf32>
    %825 = vector.multi_reduction <maximumf>, %824, %cst_372 [1] : vector<16x16xf32> to vector<16xf32>
    %826 = vector.shape_cast %825 : vector<16xf32> to vector<16x1xf32>
    %827 = vector.broadcast %826 : vector<16x1xf32> to vector<16x16xf32>
    %828 = arith.subf %824, %827 : vector<16x16xf32>
    %829 = math.exp %828 : vector<16x16xf32>
    %cst_373 = arith.constant dense<0.000000e+00> : vector<16xf32>
    %830 = vector.multi_reduction <add>, %829, %cst_373 [1] : vector<16x16xf32> to vector<16xf32>
    %831 = vector.shape_cast %830 : vector<16xf32> to vector<16x1xf32>
    %832 = vector.broadcast %831 : vector<16x1xf32> to vector<16x16xf32>
    %833 = arith.divf %829, %832 : vector<16x16xf32>
    %cst_374 = arith.constant dense<0.000000e+00> : vector<16x8xf32>
    %834 = tpu.matmul %833, %823, %cst_374 {dimension_numbers = #tpu.dot_dimension_numbers<[1], [0], [0], [1], [0, 0, 1, 1], [], []>} : vector<16x16xf32>, vector<16x8xf32>, vector<16x8xf32> -> vector<16x8xf32>
    %c5_375 = arith.constant 5 : index
    %c0_376 = arith.constant 0 : index
    %c0_377 = arith.constant 0 : index
    %835 = vector.load %arg9[%c5_375, %c0_376, %c0_377] : memref<8x8x32xf32, #tpu.memory_space<vmem>>, vector<1x8x32xf32>
    %836 = vector.shape_cast %835 : vector<1x8x32xf32> to vector<8x32xf32>
    %cst_378 = arith.constant dense<0.000000e+00> : vector<16x32xf32>
    %837 = tpu.matmul %834, %836, %cst_378 {dimension_numbers = #tpu.dot_dimension_numbers<[1], [0], [0], [1], [0, 0, 1, 1], [], []>} : vector<16x8xf32>, vector<8x32xf32>, vector<16x32xf32> -> vector<16x32xf32>
    %838 = arith.addf %797, %837 : vector<16x32xf32>
    %c14_379 = arith.constant 14 : index
    %c0_380 = arith.constant 0 : index
    %c0_381 = arith.constant 0 : index
    %839 = vector.load %arg7[%c14_379, %c0_380, %c0_381] : memref<24x32x8xf32, #tpu.memory_space<vmem>>, vector<1x32x8xf32>
    %840 = vector.shape_cast %839 : vector<1x32x8xf32> to vector<32x8xf32>
    %cst_382 = arith.constant dense<0.000000e+00> : vector<16x8xf32>
    %841 = tpu.matmul %750, %840, %cst_382 {dimension_numbers = #tpu.dot_dimension_numbers<[1], [0], [0], [1], [0, 0, 1, 1], [], []>} : vector<16x32xf32>, vector<32x8xf32>, vector<16x8xf32> -> vector<16x8xf32>
    %c14_383 = arith.constant 14 : index
    %c0_384 = arith.constant 0 : index
    %842 = vector.load %arg8[%c14_383, %c0_384] : memref<24x8xf32, #tpu.memory_space<vmem>>, vector<1x8xf32>
    %843 = vector.shape_cast %842 : vector<1x8xf32> to vector<8xf32>
    %844 = vector.shape_cast %843 : vector<8xf32> to vector<1x8xf32>
    %845 = vector.broadcast %844 : vector<1x8xf32> to vector<16x8xf32>
    %846 = arith.addf %841, %845 : vector<16x8xf32>
    %cst_385 = arith.constant 0.353553385 : f32
    %847 = vector.broadcast %cst_385 : f32 to vector<16x8xf32>
    %848 = arith.mulf %846, %847 : vector<16x8xf32>
    %c18_386 = arith.constant 18 : index
    %c0_387 = arith.constant 0 : index
    %c0_388 = arith.constant 0 : index
    %849 = vector.load %arg7[%c18_386, %c0_387, %c0_388] : memref<24x32x8xf32, #tpu.memory_space<vmem>>, vector<1x32x8xf32>
    %850 = vector.shape_cast %849 : vector<1x32x8xf32> to vector<32x8xf32>
    %cst_389 = arith.constant dense<0.000000e+00> : vector<16x8xf32>
    %851 = tpu.matmul %750, %850, %cst_389 {dimension_numbers = #tpu.dot_dimension_numbers<[1], [0], [0], [1], [0, 0, 1, 1], [], []>} : vector<16x32xf32>, vector<32x8xf32>, vector<16x8xf32> -> vector<16x8xf32>
    %c18_390 = arith.constant 18 : index
    %c0_391 = arith.constant 0 : index
    %852 = vector.load %arg8[%c18_390, %c0_391] : memref<24x8xf32, #tpu.memory_space<vmem>>, vector<1x8xf32>
    %853 = vector.shape_cast %852 : vector<1x8xf32> to vector<8xf32>
    %854 = vector.shape_cast %853 : vector<8xf32> to vector<1x8xf32>
    %855 = vector.broadcast %854 : vector<1x8xf32> to vector<16x8xf32>
    %856 = arith.addf %851, %855 : vector<16x8xf32>
    %c22_392 = arith.constant 22 : index
    %c0_393 = arith.constant 0 : index
    %c0_394 = arith.constant 0 : index
    %857 = vector.load %arg7[%c22_392, %c0_393, %c0_394] : memref<24x32x8xf32, #tpu.memory_space<vmem>>, vector<1x32x8xf32>
    %858 = vector.shape_cast %857 : vector<1x32x8xf32> to vector<32x8xf32>
    %cst_395 = arith.constant dense<0.000000e+00> : vector<16x8xf32>
    %859 = tpu.matmul %750, %858, %cst_395 {dimension_numbers = #tpu.dot_dimension_numbers<[1], [0], [0], [1], [0, 0, 1, 1], [], []>} : vector<16x32xf32>, vector<32x8xf32>, vector<16x8xf32> -> vector<16x8xf32>
    %c22_396 = arith.constant 22 : index
    %c0_397 = arith.constant 0 : index
    %860 = vector.load %arg8[%c22_396, %c0_397] : memref<24x8xf32, #tpu.memory_space<vmem>>, vector<1x8xf32>
    %861 = vector.shape_cast %860 : vector<1x8xf32> to vector<8xf32>
    %862 = vector.shape_cast %861 : vector<8xf32> to vector<1x8xf32>
    %863 = vector.broadcast %862 : vector<1x8xf32> to vector<16x8xf32>
    %864 = arith.addf %859, %863 : vector<16x8xf32>
    %cst_398 = arith.constant dense<0.000000e+00> : vector<16x16xf32>
    %865 = tpu.matmul %848, %856, %cst_398 {dimension_numbers = #tpu.dot_dimension_numbers<[1], [1], [0], [0], [0, 0, 1, 0], [], []>} : vector<16x8xf32>, vector<16x8xf32>, vector<16x16xf32> -> vector<16x16xf32>
    %cst_399 = arith.constant dense<0xFF800000> : vector<16xf32>
    %866 = vector.multi_reduction <maximumf>, %865, %cst_399 [1] : vector<16x16xf32> to vector<16xf32>
    %867 = vector.shape_cast %866 : vector<16xf32> to vector<16x1xf32>
    %868 = vector.broadcast %867 : vector<16x1xf32> to vector<16x16xf32>
    %869 = arith.subf %865, %868 : vector<16x16xf32>
    %870 = math.exp %869 : vector<16x16xf32>
    %cst_400 = arith.constant dense<0.000000e+00> : vector<16xf32>
    %871 = vector.multi_reduction <add>, %870, %cst_400 [1] : vector<16x16xf32> to vector<16xf32>
    %872 = vector.shape_cast %871 : vector<16xf32> to vector<16x1xf32>
    %873 = vector.broadcast %872 : vector<16x1xf32> to vector<16x16xf32>
    %874 = arith.divf %870, %873 : vector<16x16xf32>
    %cst_401 = arith.constant dense<0.000000e+00> : vector<16x8xf32>
    %875 = tpu.matmul %874, %864, %cst_401 {dimension_numbers = #tpu.dot_dimension_numbers<[1], [0], [0], [1], [0, 0, 1, 1], [], []>} : vector<16x16xf32>, vector<16x8xf32>, vector<16x8xf32> -> vector<16x8xf32>
    %c6_402 = arith.constant 6 : index
    %c0_403 = arith.constant 0 : index
    %c0_404 = arith.constant 0 : index
    %876 = vector.load %arg9[%c6_402, %c0_403, %c0_404] : memref<8x8x32xf32, #tpu.memory_space<vmem>>, vector<1x8x32xf32>
    %877 = vector.shape_cast %876 : vector<1x8x32xf32> to vector<8x32xf32>
    %cst_405 = arith.constant dense<0.000000e+00> : vector<16x32xf32>
    %878 = tpu.matmul %875, %877, %cst_405 {dimension_numbers = #tpu.dot_dimension_numbers<[1], [0], [0], [1], [0, 0, 1, 1], [], []>} : vector<16x8xf32>, vector<8x32xf32>, vector<16x32xf32> -> vector<16x32xf32>
    %879 = arith.addf %838, %878 : vector<16x32xf32>
    %c15_406 = arith.constant 15 : index
    %c0_407 = arith.constant 0 : index
    %c0_408 = arith.constant 0 : index
    %880 = vector.load %arg7[%c15_406, %c0_407, %c0_408] : memref<24x32x8xf32, #tpu.memory_space<vmem>>, vector<1x32x8xf32>
    %881 = vector.shape_cast %880 : vector<1x32x8xf32> to vector<32x8xf32>
    %cst_409 = arith.constant dense<0.000000e+00> : vector<16x8xf32>
    %882 = tpu.matmul %750, %881, %cst_409 {dimension_numbers = #tpu.dot_dimension_numbers<[1], [0], [0], [1], [0, 0, 1, 1], [], []>} : vector<16x32xf32>, vector<32x8xf32>, vector<16x8xf32> -> vector<16x8xf32>
    %c15_410 = arith.constant 15 : index
    %c0_411 = arith.constant 0 : index
    %883 = vector.load %arg8[%c15_410, %c0_411] : memref<24x8xf32, #tpu.memory_space<vmem>>, vector<1x8xf32>
    %884 = vector.shape_cast %883 : vector<1x8xf32> to vector<8xf32>
    %885 = vector.shape_cast %884 : vector<8xf32> to vector<1x8xf32>
    %886 = vector.broadcast %885 : vector<1x8xf32> to vector<16x8xf32>
    %887 = arith.addf %882, %886 : vector<16x8xf32>
    %cst_412 = arith.constant 0.353553385 : f32
    %888 = vector.broadcast %cst_412 : f32 to vector<16x8xf32>
    %889 = arith.mulf %887, %888 : vector<16x8xf32>
    %c19_413 = arith.constant 19 : index
    %c0_414 = arith.constant 0 : index
    %c0_415 = arith.constant 0 : index
    %890 = vector.load %arg7[%c19_413, %c0_414, %c0_415] : memref<24x32x8xf32, #tpu.memory_space<vmem>>, vector<1x32x8xf32>
    %891 = vector.shape_cast %890 : vector<1x32x8xf32> to vector<32x8xf32>
    %cst_416 = arith.constant dense<0.000000e+00> : vector<16x8xf32>
    %892 = tpu.matmul %750, %891, %cst_416 {dimension_numbers = #tpu.dot_dimension_numbers<[1], [0], [0], [1], [0, 0, 1, 1], [], []>} : vector<16x32xf32>, vector<32x8xf32>, vector<16x8xf32> -> vector<16x8xf32>
    %c19_417 = arith.constant 19 : index
    %c0_418 = arith.constant 0 : index
    %893 = vector.load %arg8[%c19_417, %c0_418] : memref<24x8xf32, #tpu.memory_space<vmem>>, vector<1x8xf32>
    %894 = vector.shape_cast %893 : vector<1x8xf32> to vector<8xf32>
    %895 = vector.shape_cast %894 : vector<8xf32> to vector<1x8xf32>
    %896 = vector.broadcast %895 : vector<1x8xf32> to vector<16x8xf32>
    %897 = arith.addf %892, %896 : vector<16x8xf32>
    %c23_419 = arith.constant 23 : index
    %c0_420 = arith.constant 0 : index
    %c0_421 = arith.constant 0 : index
    %898 = vector.load %arg7[%c23_419, %c0_420, %c0_421] : memref<24x32x8xf32, #tpu.memory_space<vmem>>, vector<1x32x8xf32>
    %899 = vector.shape_cast %898 : vector<1x32x8xf32> to vector<32x8xf32>
    %cst_422 = arith.constant dense<0.000000e+00> : vector<16x8xf32>
    %900 = tpu.matmul %750, %899, %cst_422 {dimension_numbers = #tpu.dot_dimension_numbers<[1], [0], [0], [1], [0, 0, 1, 1], [], []>} : vector<16x32xf32>, vector<32x8xf32>, vector<16x8xf32> -> vector<16x8xf32>
    %c23_423 = arith.constant 23 : index
    %c0_424 = arith.constant 0 : index
    %901 = vector.load %arg8[%c23_423, %c0_424] : memref<24x8xf32, #tpu.memory_space<vmem>>, vector<1x8xf32>
    %902 = vector.shape_cast %901 : vector<1x8xf32> to vector<8xf32>
    %903 = vector.shape_cast %902 : vector<8xf32> to vector<1x8xf32>
    %904 = vector.broadcast %903 : vector<1x8xf32> to vector<16x8xf32>
    %905 = arith.addf %900, %904 : vector<16x8xf32>
    %cst_425 = arith.constant dense<0.000000e+00> : vector<16x16xf32>
    %906 = tpu.matmul %889, %897, %cst_425 {dimension_numbers = #tpu.dot_dimension_numbers<[1], [1], [0], [0], [0, 0, 1, 0], [], []>} : vector<16x8xf32>, vector<16x8xf32>, vector<16x16xf32> -> vector<16x16xf32>
    %cst_426 = arith.constant dense<0xFF800000> : vector<16xf32>
    %907 = vector.multi_reduction <maximumf>, %906, %cst_426 [1] : vector<16x16xf32> to vector<16xf32>
    %908 = vector.shape_cast %907 : vector<16xf32> to vector<16x1xf32>
    %909 = vector.broadcast %908 : vector<16x1xf32> to vector<16x16xf32>
    %910 = arith.subf %906, %909 : vector<16x16xf32>
    %911 = math.exp %910 : vector<16x16xf32>
    %cst_427 = arith.constant dense<0.000000e+00> : vector<16xf32>
    %912 = vector.multi_reduction <add>, %911, %cst_427 [1] : vector<16x16xf32> to vector<16xf32>
    %913 = vector.shape_cast %912 : vector<16xf32> to vector<16x1xf32>
    %914 = vector.broadcast %913 : vector<16x1xf32> to vector<16x16xf32>
    %915 = arith.divf %911, %914 : vector<16x16xf32>
    %cst_428 = arith.constant dense<0.000000e+00> : vector<16x8xf32>
    %916 = tpu.matmul %915, %905, %cst_428 {dimension_numbers = #tpu.dot_dimension_numbers<[1], [0], [0], [1], [0, 0, 1, 1], [], []>} : vector<16x16xf32>, vector<16x8xf32>, vector<16x8xf32> -> vector<16x8xf32>
    %c7_429 = arith.constant 7 : index
    %c0_430 = arith.constant 0 : index
    %c0_431 = arith.constant 0 : index
    %917 = vector.load %arg9[%c7_429, %c0_430, %c0_431] : memref<8x8x32xf32, #tpu.memory_space<vmem>>, vector<1x8x32xf32>
    %918 = vector.shape_cast %917 : vector<1x8x32xf32> to vector<8x32xf32>
    %cst_432 = arith.constant dense<0.000000e+00> : vector<16x32xf32>
    %919 = tpu.matmul %916, %918, %cst_432 {dimension_numbers = #tpu.dot_dimension_numbers<[1], [0], [0], [1], [0, 0, 1, 1], [], []>} : vector<16x8xf32>, vector<8x32xf32>, vector<16x32xf32> -> vector<16x32xf32>
    %920 = arith.addf %879, %919 : vector<16x32xf32>
    %921 = arith.addf %722, %920 : vector<16x32xf32>
    %c28_433 = arith.constant 28 : index
    %c0_434 = arith.constant 0 : index
    %922 = vector.load %arg3[%c28_433, %c0_434] : memref<41x32xf32, #tpu.memory_space<vmem>>, vector<1x32xf32>
    %923 = vector.shape_cast %922 : vector<1x32xf32> to vector<32xf32>
    %c29_435 = arith.constant 29 : index
    %c0_436 = arith.constant 0 : index
    %924 = vector.load %arg3[%c29_435, %c0_436] : memref<41x32xf32, #tpu.memory_space<vmem>>, vector<1x32xf32>
    %925 = vector.shape_cast %924 : vector<1x32xf32> to vector<32xf32>
    %cst_437 = arith.constant dense<0.000000e+00> : vector<16xf32>
    %926 = vector.multi_reduction <add>, %921, %cst_437 [1] : vector<16x32xf32> to vector<16xf32>
    %927 = vector.shape_cast %926 : vector<16xf32> to vector<16x1xf32>
    %cst_438 = arith.constant 3.200000e+01 : f32
    %928 = vector.broadcast %cst_438 : f32 to vector<16x1xf32>
    %929 = arith.divf %927, %928 : vector<16x1xf32>
    %930 = vector.broadcast %929 : vector<16x1xf32> to vector<16x32xf32>
    %931 = arith.subf %921, %930 : vector<16x32xf32>
    %932 = arith.mulf %931, %931 : vector<16x32xf32>
    %cst_439 = arith.constant dense<0.000000e+00> : vector<16xf32>
    %933 = vector.multi_reduction <add>, %932, %cst_439 [1] : vector<16x32xf32> to vector<16xf32>
    %934 = vector.shape_cast %933 : vector<16xf32> to vector<16x1xf32>
    %cst_440 = arith.constant 3.200000e+01 : f32
    %935 = vector.broadcast %cst_440 : f32 to vector<16x1xf32>
    %936 = arith.divf %934, %935 : vector<16x1xf32>
    %937 = vector.broadcast %929 : vector<16x1xf32> to vector<16x32xf32>
    %938 = arith.subf %921, %937 : vector<16x32xf32>
    %cst_441 = arith.constant 9.99999974E-6 : f32
    %939 = vector.broadcast %cst_441 : f32 to vector<16x1xf32>
    %940 = arith.addf %936, %939 : vector<16x1xf32>
    %941 = math.rsqrt %940 : vector<16x1xf32>
    %942 = vector.broadcast %941 : vector<16x1xf32> to vector<16x32xf32>
    %943 = arith.mulf %938, %942 : vector<16x32xf32>
    %944 = vector.shape_cast %923 : vector<32xf32> to vector<1x32xf32>
    %945 = vector.broadcast %944 : vector<1x32xf32> to vector<16x32xf32>
    %946 = arith.mulf %943, %945 : vector<16x32xf32>
    %947 = vector.shape_cast %925 : vector<32xf32> to vector<1x32xf32>
    %948 = vector.broadcast %947 : vector<1x32xf32> to vector<16x32xf32>
    %949 = arith.addf %946, %948 : vector<16x32xf32>
    %c3_442 = arith.constant 3 : index
    %c0_443 = arith.constant 0 : index
    %c0_444 = arith.constant 0 : index
    %950 = vector.load %arg10[%c3_442, %c0_443, %c0_444] : memref<6x32x32xf32, #tpu.memory_space<vmem>>, vector<1x32x32xf32>
    %951 = vector.shape_cast %950 : vector<1x32x32xf32> to vector<32x32xf32>
    %cst_445 = arith.constant dense<0.000000e+00> : vector<16x32xf32>
    %952 = tpu.matmul %949, %951, %cst_445 {dimension_numbers = #tpu.dot_dimension_numbers<[1], [0], [0], [1], [0, 0, 1, 1], [], []>} : vector<16x32xf32>, vector<32x32xf32>, vector<16x32xf32> -> vector<16x32xf32>
    %c30_446 = arith.constant 30 : index
    %c0_447 = arith.constant 0 : index
    %953 = vector.load %arg3[%c30_446, %c0_447] : memref<41x32xf32, #tpu.memory_space<vmem>>, vector<1x32xf32>
    %954 = vector.shape_cast %953 : vector<1x32xf32> to vector<32xf32>
    %955 = vector.shape_cast %954 : vector<32xf32> to vector<1x32xf32>
    %956 = vector.broadcast %955 : vector<1x32xf32> to vector<16x32xf32>
    %957 = arith.addf %952, %956 : vector<16x32xf32>
    %c4_448 = arith.constant 4 : index
    %c0_449 = arith.constant 0 : index
    %c0_450 = arith.constant 0 : index
    %958 = vector.load %arg10[%c4_448, %c0_449, %c0_450] : memref<6x32x32xf32, #tpu.memory_space<vmem>>, vector<1x32x32xf32>
    %959 = vector.shape_cast %958 : vector<1x32x32xf32> to vector<32x32xf32>
    %cst_451 = arith.constant dense<0.000000e+00> : vector<16x32xf32>
    %960 = tpu.matmul %949, %959, %cst_451 {dimension_numbers = #tpu.dot_dimension_numbers<[1], [0], [0], [1], [0, 0, 1, 1], [], []>} : vector<16x32xf32>, vector<32x32xf32>, vector<16x32xf32> -> vector<16x32xf32>
    %c31 = arith.constant 31 : index
    %c0_452 = arith.constant 0 : index
    %961 = vector.load %arg3[%c31, %c0_452] : memref<41x32xf32, #tpu.memory_space<vmem>>, vector<1x32xf32>
    %962 = vector.shape_cast %961 : vector<1x32xf32> to vector<32xf32>
    %963 = vector.shape_cast %962 : vector<32xf32> to vector<1x32xf32>
    %964 = vector.broadcast %963 : vector<1x32xf32> to vector<16x32xf32>
    %965 = arith.addf %960, %964 : vector<16x32xf32>
    %966 = arith.negf %965 : vector<16x32xf32>
    %967 = math.exp %966 : vector<16x32xf32>
    %cst_453 = arith.constant 1.000000e+00 : f32
    %968 = vector.broadcast %cst_453 : f32 to vector<16x32xf32>
    %969 = arith.addf %968, %967 : vector<16x32xf32>
    %970 = arith.divf %968, %969 : vector<16x32xf32>
    %971 = arith.mulf %957, %970 : vector<16x32xf32>
    %cst_454 = arith.constant 0.000000e+00 : f32
    %972 = vector.broadcast %cst_454 : f32 to vector<15x32xf32>
    %973 = tpu.concatenate %972, %971, %972 in 0 : vector<15x32xf32>, vector<16x32xf32>, vector<15x32xf32> -> vector<46x32xf32>
    %cst_455 = arith.constant 0.000000e+00 : f32
    %974 = vector.broadcast %cst_455 : f32 to vector<16x32xf32>
    %c32 = arith.constant 32 : index
    %c0_456 = arith.constant 0 : index
    %975 = vector.load %arg3[%c32, %c0_456] : memref<41x32xf32, #tpu.memory_space<vmem>>, vector<1x32xf32>
    %976 = vector.shape_cast %975 : vector<1x32xf32> to vector<32xf32>
    %977 = vector.shape_cast %976 : vector<32xf32> to vector<1x32xf32>
    %978 = vector.broadcast %977 : vector<1x32xf32> to vector<16x32xf32>
    %979 = arith.addf %974, %978 : vector<16x32xf32>
    %980 = vector.extract_strided_slice %973 {offsets = [0, 0], sizes = [16, 32], strides = [1, 1]} : vector<46x32xf32> to vector<16x32xf32>
    %c1_457 = arith.constant 1 : index
    %c0_458 = arith.constant 0 : index
    %c0_459 = arith.constant 0 : index
    %981 = vector.load %arg11[%c1_457, %c0_458, %c0_459] : memref<2x31x32xf32, #tpu.memory_space<vmem>>, vector<1x1x32xf32>
    %982 = vector.shape_cast %981 : vector<1x1x32xf32> to vector<32xf32>
    %983 = vector.shape_cast %982 : vector<32xf32> to vector<1x32xf32>
    %984 = vector.broadcast %983 : vector<1x32xf32> to vector<16x32xf32>
    %985 = arith.mulf %980, %984 : vector<16x32xf32>
    %986 = arith.addf %979, %985 : vector<16x32xf32>
    %987 = vector.extract_strided_slice %973 {offsets = [1, 0], sizes = [16, 32], strides = [1, 1]} : vector<46x32xf32> to vector<16x32xf32>
    %c1_460 = arith.constant 1 : index
    %c1_461 = arith.constant 1 : index
    %c0_462 = arith.constant 0 : index
    %988 = vector.load %arg11[%c1_460, %c1_461, %c0_462] : memref<2x31x32xf32, #tpu.memory_space<vmem>>, vector<1x1x32xf32>
    %989 = vector.shape_cast %988 : vector<1x1x32xf32> to vector<32xf32>
    %990 = vector.shape_cast %989 : vector<32xf32> to vector<1x32xf32>
    %991 = vector.broadcast %990 : vector<1x32xf32> to vector<16x32xf32>
    %992 = arith.mulf %987, %991 : vector<16x32xf32>
    %993 = arith.addf %986, %992 : vector<16x32xf32>
    %994 = vector.extract_strided_slice %973 {offsets = [2, 0], sizes = [16, 32], strides = [1, 1]} : vector<46x32xf32> to vector<16x32xf32>
    %c1_463 = arith.constant 1 : index
    %c2_464 = arith.constant 2 : index
    %c0_465 = arith.constant 0 : index
    %995 = vector.load %arg11[%c1_463, %c2_464, %c0_465] : memref<2x31x32xf32, #tpu.memory_space<vmem>>, vector<1x1x32xf32>
    %996 = vector.shape_cast %995 : vector<1x1x32xf32> to vector<32xf32>
    %997 = vector.shape_cast %996 : vector<32xf32> to vector<1x32xf32>
    %998 = vector.broadcast %997 : vector<1x32xf32> to vector<16x32xf32>
    %999 = arith.mulf %994, %998 : vector<16x32xf32>
    %1000 = arith.addf %993, %999 : vector<16x32xf32>
    %1001 = vector.extract_strided_slice %973 {offsets = [3, 0], sizes = [16, 32], strides = [1, 1]} : vector<46x32xf32> to vector<16x32xf32>
    %c1_466 = arith.constant 1 : index
    %c3_467 = arith.constant 3 : index
    %c0_468 = arith.constant 0 : index
    %1002 = vector.load %arg11[%c1_466, %c3_467, %c0_468] : memref<2x31x32xf32, #tpu.memory_space<vmem>>, vector<1x1x32xf32>
    %1003 = vector.shape_cast %1002 : vector<1x1x32xf32> to vector<32xf32>
    %1004 = vector.shape_cast %1003 : vector<32xf32> to vector<1x32xf32>
    %1005 = vector.broadcast %1004 : vector<1x32xf32> to vector<16x32xf32>
    %1006 = arith.mulf %1001, %1005 : vector<16x32xf32>
    %1007 = arith.addf %1000, %1006 : vector<16x32xf32>
    %1008 = vector.extract_strided_slice %973 {offsets = [4, 0], sizes = [16, 32], strides = [1, 1]} : vector<46x32xf32> to vector<16x32xf32>
    %c1_469 = arith.constant 1 : index
    %c4_470 = arith.constant 4 : index
    %c0_471 = arith.constant 0 : index
    %1009 = vector.load %arg11[%c1_469, %c4_470, %c0_471] : memref<2x31x32xf32, #tpu.memory_space<vmem>>, vector<1x1x32xf32>
    %1010 = vector.shape_cast %1009 : vector<1x1x32xf32> to vector<32xf32>
    %1011 = vector.shape_cast %1010 : vector<32xf32> to vector<1x32xf32>
    %1012 = vector.broadcast %1011 : vector<1x32xf32> to vector<16x32xf32>
    %1013 = arith.mulf %1008, %1012 : vector<16x32xf32>
    %1014 = arith.addf %1007, %1013 : vector<16x32xf32>
    %1015 = vector.extract_strided_slice %973 {offsets = [5, 0], sizes = [16, 32], strides = [1, 1]} : vector<46x32xf32> to vector<16x32xf32>
    %c1_472 = arith.constant 1 : index
    %c5_473 = arith.constant 5 : index
    %c0_474 = arith.constant 0 : index
    %1016 = vector.load %arg11[%c1_472, %c5_473, %c0_474] : memref<2x31x32xf32, #tpu.memory_space<vmem>>, vector<1x1x32xf32>
    %1017 = vector.shape_cast %1016 : vector<1x1x32xf32> to vector<32xf32>
    %1018 = vector.shape_cast %1017 : vector<32xf32> to vector<1x32xf32>
    %1019 = vector.broadcast %1018 : vector<1x32xf32> to vector<16x32xf32>
    %1020 = arith.mulf %1015, %1019 : vector<16x32xf32>
    %1021 = arith.addf %1014, %1020 : vector<16x32xf32>
    %1022 = vector.extract_strided_slice %973 {offsets = [6, 0], sizes = [16, 32], strides = [1, 1]} : vector<46x32xf32> to vector<16x32xf32>
    %c1_475 = arith.constant 1 : index
    %c6_476 = arith.constant 6 : index
    %c0_477 = arith.constant 0 : index
    %1023 = vector.load %arg11[%c1_475, %c6_476, %c0_477] : memref<2x31x32xf32, #tpu.memory_space<vmem>>, vector<1x1x32xf32>
    %1024 = vector.shape_cast %1023 : vector<1x1x32xf32> to vector<32xf32>
    %1025 = vector.shape_cast %1024 : vector<32xf32> to vector<1x32xf32>
    %1026 = vector.broadcast %1025 : vector<1x32xf32> to vector<16x32xf32>
    %1027 = arith.mulf %1022, %1026 : vector<16x32xf32>
    %1028 = arith.addf %1021, %1027 : vector<16x32xf32>
    %1029 = vector.extract_strided_slice %973 {offsets = [7, 0], sizes = [16, 32], strides = [1, 1]} : vector<46x32xf32> to vector<16x32xf32>
    %c1_478 = arith.constant 1 : index
    %c7_479 = arith.constant 7 : index
    %c0_480 = arith.constant 0 : index
    %1030 = vector.load %arg11[%c1_478, %c7_479, %c0_480] : memref<2x31x32xf32, #tpu.memory_space<vmem>>, vector<1x1x32xf32>
    %1031 = vector.shape_cast %1030 : vector<1x1x32xf32> to vector<32xf32>
    %1032 = vector.shape_cast %1031 : vector<32xf32> to vector<1x32xf32>
    %1033 = vector.broadcast %1032 : vector<1x32xf32> to vector<16x32xf32>
    %1034 = arith.mulf %1029, %1033 : vector<16x32xf32>
    %1035 = arith.addf %1028, %1034 : vector<16x32xf32>
    %1036 = vector.extract_strided_slice %973 {offsets = [8, 0], sizes = [16, 32], strides = [1, 1]} : vector<46x32xf32> to vector<16x32xf32>
    %c1_481 = arith.constant 1 : index
    %c8_482 = arith.constant 8 : index
    %c0_483 = arith.constant 0 : index
    %1037 = vector.load %arg11[%c1_481, %c8_482, %c0_483] : memref<2x31x32xf32, #tpu.memory_space<vmem>>, vector<1x1x32xf32>
    %1038 = vector.shape_cast %1037 : vector<1x1x32xf32> to vector<32xf32>
    %1039 = vector.shape_cast %1038 : vector<32xf32> to vector<1x32xf32>
    %1040 = vector.broadcast %1039 : vector<1x32xf32> to vector<16x32xf32>
    %1041 = arith.mulf %1036, %1040 : vector<16x32xf32>
    %1042 = arith.addf %1035, %1041 : vector<16x32xf32>
    %1043 = vector.extract_strided_slice %973 {offsets = [9, 0], sizes = [16, 32], strides = [1, 1]} : vector<46x32xf32> to vector<16x32xf32>
    %c1_484 = arith.constant 1 : index
    %c9_485 = arith.constant 9 : index
    %c0_486 = arith.constant 0 : index
    %1044 = vector.load %arg11[%c1_484, %c9_485, %c0_486] : memref<2x31x32xf32, #tpu.memory_space<vmem>>, vector<1x1x32xf32>
    %1045 = vector.shape_cast %1044 : vector<1x1x32xf32> to vector<32xf32>
    %1046 = vector.shape_cast %1045 : vector<32xf32> to vector<1x32xf32>
    %1047 = vector.broadcast %1046 : vector<1x32xf32> to vector<16x32xf32>
    %1048 = arith.mulf %1043, %1047 : vector<16x32xf32>
    %1049 = arith.addf %1042, %1048 : vector<16x32xf32>
    %1050 = vector.extract_strided_slice %973 {offsets = [10, 0], sizes = [16, 32], strides = [1, 1]} : vector<46x32xf32> to vector<16x32xf32>
    %c1_487 = arith.constant 1 : index
    %c10_488 = arith.constant 10 : index
    %c0_489 = arith.constant 0 : index
    %1051 = vector.load %arg11[%c1_487, %c10_488, %c0_489] : memref<2x31x32xf32, #tpu.memory_space<vmem>>, vector<1x1x32xf32>
    %1052 = vector.shape_cast %1051 : vector<1x1x32xf32> to vector<32xf32>
    %1053 = vector.shape_cast %1052 : vector<32xf32> to vector<1x32xf32>
    %1054 = vector.broadcast %1053 : vector<1x32xf32> to vector<16x32xf32>
    %1055 = arith.mulf %1050, %1054 : vector<16x32xf32>
    %1056 = arith.addf %1049, %1055 : vector<16x32xf32>
    %1057 = vector.extract_strided_slice %973 {offsets = [11, 0], sizes = [16, 32], strides = [1, 1]} : vector<46x32xf32> to vector<16x32xf32>
    %c1_490 = arith.constant 1 : index
    %c11_491 = arith.constant 11 : index
    %c0_492 = arith.constant 0 : index
    %1058 = vector.load %arg11[%c1_490, %c11_491, %c0_492] : memref<2x31x32xf32, #tpu.memory_space<vmem>>, vector<1x1x32xf32>
    %1059 = vector.shape_cast %1058 : vector<1x1x32xf32> to vector<32xf32>
    %1060 = vector.shape_cast %1059 : vector<32xf32> to vector<1x32xf32>
    %1061 = vector.broadcast %1060 : vector<1x32xf32> to vector<16x32xf32>
    %1062 = arith.mulf %1057, %1061 : vector<16x32xf32>
    %1063 = arith.addf %1056, %1062 : vector<16x32xf32>
    %1064 = vector.extract_strided_slice %973 {offsets = [12, 0], sizes = [16, 32], strides = [1, 1]} : vector<46x32xf32> to vector<16x32xf32>
    %c1_493 = arith.constant 1 : index
    %c12_494 = arith.constant 12 : index
    %c0_495 = arith.constant 0 : index
    %1065 = vector.load %arg11[%c1_493, %c12_494, %c0_495] : memref<2x31x32xf32, #tpu.memory_space<vmem>>, vector<1x1x32xf32>
    %1066 = vector.shape_cast %1065 : vector<1x1x32xf32> to vector<32xf32>
    %1067 = vector.shape_cast %1066 : vector<32xf32> to vector<1x32xf32>
    %1068 = vector.broadcast %1067 : vector<1x32xf32> to vector<16x32xf32>
    %1069 = arith.mulf %1064, %1068 : vector<16x32xf32>
    %1070 = arith.addf %1063, %1069 : vector<16x32xf32>
    %1071 = vector.extract_strided_slice %973 {offsets = [13, 0], sizes = [16, 32], strides = [1, 1]} : vector<46x32xf32> to vector<16x32xf32>
    %c1_496 = arith.constant 1 : index
    %c13_497 = arith.constant 13 : index
    %c0_498 = arith.constant 0 : index
    %1072 = vector.load %arg11[%c1_496, %c13_497, %c0_498] : memref<2x31x32xf32, #tpu.memory_space<vmem>>, vector<1x1x32xf32>
    %1073 = vector.shape_cast %1072 : vector<1x1x32xf32> to vector<32xf32>
    %1074 = vector.shape_cast %1073 : vector<32xf32> to vector<1x32xf32>
    %1075 = vector.broadcast %1074 : vector<1x32xf32> to vector<16x32xf32>
    %1076 = arith.mulf %1071, %1075 : vector<16x32xf32>
    %1077 = arith.addf %1070, %1076 : vector<16x32xf32>
    %1078 = vector.extract_strided_slice %973 {offsets = [14, 0], sizes = [16, 32], strides = [1, 1]} : vector<46x32xf32> to vector<16x32xf32>
    %c1_499 = arith.constant 1 : index
    %c14_500 = arith.constant 14 : index
    %c0_501 = arith.constant 0 : index
    %1079 = vector.load %arg11[%c1_499, %c14_500, %c0_501] : memref<2x31x32xf32, #tpu.memory_space<vmem>>, vector<1x1x32xf32>
    %1080 = vector.shape_cast %1079 : vector<1x1x32xf32> to vector<32xf32>
    %1081 = vector.shape_cast %1080 : vector<32xf32> to vector<1x32xf32>
    %1082 = vector.broadcast %1081 : vector<1x32xf32> to vector<16x32xf32>
    %1083 = arith.mulf %1078, %1082 : vector<16x32xf32>
    %1084 = arith.addf %1077, %1083 : vector<16x32xf32>
    %1085 = vector.extract_strided_slice %973 {offsets = [15, 0], sizes = [16, 32], strides = [1, 1]} : vector<46x32xf32> to vector<16x32xf32>
    %c1_502 = arith.constant 1 : index
    %c15_503 = arith.constant 15 : index
    %c0_504 = arith.constant 0 : index
    %1086 = vector.load %arg11[%c1_502, %c15_503, %c0_504] : memref<2x31x32xf32, #tpu.memory_space<vmem>>, vector<1x1x32xf32>
    %1087 = vector.shape_cast %1086 : vector<1x1x32xf32> to vector<32xf32>
    %1088 = vector.shape_cast %1087 : vector<32xf32> to vector<1x32xf32>
    %1089 = vector.broadcast %1088 : vector<1x32xf32> to vector<16x32xf32>
    %1090 = arith.mulf %1085, %1089 : vector<16x32xf32>
    %1091 = arith.addf %1084, %1090 : vector<16x32xf32>
    %1092 = vector.extract_strided_slice %973 {offsets = [16, 0], sizes = [16, 32], strides = [1, 1]} : vector<46x32xf32> to vector<16x32xf32>
    %c1_505 = arith.constant 1 : index
    %c16_506 = arith.constant 16 : index
    %c0_507 = arith.constant 0 : index
    %1093 = vector.load %arg11[%c1_505, %c16_506, %c0_507] : memref<2x31x32xf32, #tpu.memory_space<vmem>>, vector<1x1x32xf32>
    %1094 = vector.shape_cast %1093 : vector<1x1x32xf32> to vector<32xf32>
    %1095 = vector.shape_cast %1094 : vector<32xf32> to vector<1x32xf32>
    %1096 = vector.broadcast %1095 : vector<1x32xf32> to vector<16x32xf32>
    %1097 = arith.mulf %1092, %1096 : vector<16x32xf32>
    %1098 = arith.addf %1091, %1097 : vector<16x32xf32>
    %1099 = vector.extract_strided_slice %973 {offsets = [17, 0], sizes = [16, 32], strides = [1, 1]} : vector<46x32xf32> to vector<16x32xf32>
    %c1_508 = arith.constant 1 : index
    %c17_509 = arith.constant 17 : index
    %c0_510 = arith.constant 0 : index
    %1100 = vector.load %arg11[%c1_508, %c17_509, %c0_510] : memref<2x31x32xf32, #tpu.memory_space<vmem>>, vector<1x1x32xf32>
    %1101 = vector.shape_cast %1100 : vector<1x1x32xf32> to vector<32xf32>
    %1102 = vector.shape_cast %1101 : vector<32xf32> to vector<1x32xf32>
    %1103 = vector.broadcast %1102 : vector<1x32xf32> to vector<16x32xf32>
    %1104 = arith.mulf %1099, %1103 : vector<16x32xf32>
    %1105 = arith.addf %1098, %1104 : vector<16x32xf32>
    %1106 = vector.extract_strided_slice %973 {offsets = [18, 0], sizes = [16, 32], strides = [1, 1]} : vector<46x32xf32> to vector<16x32xf32>
    %c1_511 = arith.constant 1 : index
    %c18_512 = arith.constant 18 : index
    %c0_513 = arith.constant 0 : index
    %1107 = vector.load %arg11[%c1_511, %c18_512, %c0_513] : memref<2x31x32xf32, #tpu.memory_space<vmem>>, vector<1x1x32xf32>
    %1108 = vector.shape_cast %1107 : vector<1x1x32xf32> to vector<32xf32>
    %1109 = vector.shape_cast %1108 : vector<32xf32> to vector<1x32xf32>
    %1110 = vector.broadcast %1109 : vector<1x32xf32> to vector<16x32xf32>
    %1111 = arith.mulf %1106, %1110 : vector<16x32xf32>
    %1112 = arith.addf %1105, %1111 : vector<16x32xf32>
    %1113 = vector.extract_strided_slice %973 {offsets = [19, 0], sizes = [16, 32], strides = [1, 1]} : vector<46x32xf32> to vector<16x32xf32>
    %c1_514 = arith.constant 1 : index
    %c19_515 = arith.constant 19 : index
    %c0_516 = arith.constant 0 : index
    %1114 = vector.load %arg11[%c1_514, %c19_515, %c0_516] : memref<2x31x32xf32, #tpu.memory_space<vmem>>, vector<1x1x32xf32>
    %1115 = vector.shape_cast %1114 : vector<1x1x32xf32> to vector<32xf32>
    %1116 = vector.shape_cast %1115 : vector<32xf32> to vector<1x32xf32>
    %1117 = vector.broadcast %1116 : vector<1x32xf32> to vector<16x32xf32>
    %1118 = arith.mulf %1113, %1117 : vector<16x32xf32>
    %1119 = arith.addf %1112, %1118 : vector<16x32xf32>
    %1120 = vector.extract_strided_slice %973 {offsets = [20, 0], sizes = [16, 32], strides = [1, 1]} : vector<46x32xf32> to vector<16x32xf32>
    %c1_517 = arith.constant 1 : index
    %c20_518 = arith.constant 20 : index
    %c0_519 = arith.constant 0 : index
    %1121 = vector.load %arg11[%c1_517, %c20_518, %c0_519] : memref<2x31x32xf32, #tpu.memory_space<vmem>>, vector<1x1x32xf32>
    %1122 = vector.shape_cast %1121 : vector<1x1x32xf32> to vector<32xf32>
    %1123 = vector.shape_cast %1122 : vector<32xf32> to vector<1x32xf32>
    %1124 = vector.broadcast %1123 : vector<1x32xf32> to vector<16x32xf32>
    %1125 = arith.mulf %1120, %1124 : vector<16x32xf32>
    %1126 = arith.addf %1119, %1125 : vector<16x32xf32>
    %1127 = vector.extract_strided_slice %973 {offsets = [21, 0], sizes = [16, 32], strides = [1, 1]} : vector<46x32xf32> to vector<16x32xf32>
    %c1_520 = arith.constant 1 : index
    %c21_521 = arith.constant 21 : index
    %c0_522 = arith.constant 0 : index
    %1128 = vector.load %arg11[%c1_520, %c21_521, %c0_522] : memref<2x31x32xf32, #tpu.memory_space<vmem>>, vector<1x1x32xf32>
    %1129 = vector.shape_cast %1128 : vector<1x1x32xf32> to vector<32xf32>
    %1130 = vector.shape_cast %1129 : vector<32xf32> to vector<1x32xf32>
    %1131 = vector.broadcast %1130 : vector<1x32xf32> to vector<16x32xf32>
    %1132 = arith.mulf %1127, %1131 : vector<16x32xf32>
    %1133 = arith.addf %1126, %1132 : vector<16x32xf32>
    %1134 = vector.extract_strided_slice %973 {offsets = [22, 0], sizes = [16, 32], strides = [1, 1]} : vector<46x32xf32> to vector<16x32xf32>
    %c1_523 = arith.constant 1 : index
    %c22_524 = arith.constant 22 : index
    %c0_525 = arith.constant 0 : index
    %1135 = vector.load %arg11[%c1_523, %c22_524, %c0_525] : memref<2x31x32xf32, #tpu.memory_space<vmem>>, vector<1x1x32xf32>
    %1136 = vector.shape_cast %1135 : vector<1x1x32xf32> to vector<32xf32>
    %1137 = vector.shape_cast %1136 : vector<32xf32> to vector<1x32xf32>
    %1138 = vector.broadcast %1137 : vector<1x32xf32> to vector<16x32xf32>
    %1139 = arith.mulf %1134, %1138 : vector<16x32xf32>
    %1140 = arith.addf %1133, %1139 : vector<16x32xf32>
    %1141 = vector.extract_strided_slice %973 {offsets = [23, 0], sizes = [16, 32], strides = [1, 1]} : vector<46x32xf32> to vector<16x32xf32>
    %c1_526 = arith.constant 1 : index
    %c23_527 = arith.constant 23 : index
    %c0_528 = arith.constant 0 : index
    %1142 = vector.load %arg11[%c1_526, %c23_527, %c0_528] : memref<2x31x32xf32, #tpu.memory_space<vmem>>, vector<1x1x32xf32>
    %1143 = vector.shape_cast %1142 : vector<1x1x32xf32> to vector<32xf32>
    %1144 = vector.shape_cast %1143 : vector<32xf32> to vector<1x32xf32>
    %1145 = vector.broadcast %1144 : vector<1x32xf32> to vector<16x32xf32>
    %1146 = arith.mulf %1141, %1145 : vector<16x32xf32>
    %1147 = arith.addf %1140, %1146 : vector<16x32xf32>
    %1148 = vector.extract_strided_slice %973 {offsets = [24, 0], sizes = [16, 32], strides = [1, 1]} : vector<46x32xf32> to vector<16x32xf32>
    %c1_529 = arith.constant 1 : index
    %c24_530 = arith.constant 24 : index
    %c0_531 = arith.constant 0 : index
    %1149 = vector.load %arg11[%c1_529, %c24_530, %c0_531] : memref<2x31x32xf32, #tpu.memory_space<vmem>>, vector<1x1x32xf32>
    %1150 = vector.shape_cast %1149 : vector<1x1x32xf32> to vector<32xf32>
    %1151 = vector.shape_cast %1150 : vector<32xf32> to vector<1x32xf32>
    %1152 = vector.broadcast %1151 : vector<1x32xf32> to vector<16x32xf32>
    %1153 = arith.mulf %1148, %1152 : vector<16x32xf32>
    %1154 = arith.addf %1147, %1153 : vector<16x32xf32>
    %1155 = vector.extract_strided_slice %973 {offsets = [25, 0], sizes = [16, 32], strides = [1, 1]} : vector<46x32xf32> to vector<16x32xf32>
    %c1_532 = arith.constant 1 : index
    %c25_533 = arith.constant 25 : index
    %c0_534 = arith.constant 0 : index
    %1156 = vector.load %arg11[%c1_532, %c25_533, %c0_534] : memref<2x31x32xf32, #tpu.memory_space<vmem>>, vector<1x1x32xf32>
    %1157 = vector.shape_cast %1156 : vector<1x1x32xf32> to vector<32xf32>
    %1158 = vector.shape_cast %1157 : vector<32xf32> to vector<1x32xf32>
    %1159 = vector.broadcast %1158 : vector<1x32xf32> to vector<16x32xf32>
    %1160 = arith.mulf %1155, %1159 : vector<16x32xf32>
    %1161 = arith.addf %1154, %1160 : vector<16x32xf32>
    %1162 = vector.extract_strided_slice %973 {offsets = [26, 0], sizes = [16, 32], strides = [1, 1]} : vector<46x32xf32> to vector<16x32xf32>
    %c1_535 = arith.constant 1 : index
    %c26_536 = arith.constant 26 : index
    %c0_537 = arith.constant 0 : index
    %1163 = vector.load %arg11[%c1_535, %c26_536, %c0_537] : memref<2x31x32xf32, #tpu.memory_space<vmem>>, vector<1x1x32xf32>
    %1164 = vector.shape_cast %1163 : vector<1x1x32xf32> to vector<32xf32>
    %1165 = vector.shape_cast %1164 : vector<32xf32> to vector<1x32xf32>
    %1166 = vector.broadcast %1165 : vector<1x32xf32> to vector<16x32xf32>
    %1167 = arith.mulf %1162, %1166 : vector<16x32xf32>
    %1168 = arith.addf %1161, %1167 : vector<16x32xf32>
    %1169 = vector.extract_strided_slice %973 {offsets = [27, 0], sizes = [16, 32], strides = [1, 1]} : vector<46x32xf32> to vector<16x32xf32>
    %c1_538 = arith.constant 1 : index
    %c27_539 = arith.constant 27 : index
    %c0_540 = arith.constant 0 : index
    %1170 = vector.load %arg11[%c1_538, %c27_539, %c0_540] : memref<2x31x32xf32, #tpu.memory_space<vmem>>, vector<1x1x32xf32>
    %1171 = vector.shape_cast %1170 : vector<1x1x32xf32> to vector<32xf32>
    %1172 = vector.shape_cast %1171 : vector<32xf32> to vector<1x32xf32>
    %1173 = vector.broadcast %1172 : vector<1x32xf32> to vector<16x32xf32>
    %1174 = arith.mulf %1169, %1173 : vector<16x32xf32>
    %1175 = arith.addf %1168, %1174 : vector<16x32xf32>
    %1176 = vector.extract_strided_slice %973 {offsets = [28, 0], sizes = [16, 32], strides = [1, 1]} : vector<46x32xf32> to vector<16x32xf32>
    %c1_541 = arith.constant 1 : index
    %c28_542 = arith.constant 28 : index
    %c0_543 = arith.constant 0 : index
    %1177 = vector.load %arg11[%c1_541, %c28_542, %c0_543] : memref<2x31x32xf32, #tpu.memory_space<vmem>>, vector<1x1x32xf32>
    %1178 = vector.shape_cast %1177 : vector<1x1x32xf32> to vector<32xf32>
    %1179 = vector.shape_cast %1178 : vector<32xf32> to vector<1x32xf32>
    %1180 = vector.broadcast %1179 : vector<1x32xf32> to vector<16x32xf32>
    %1181 = arith.mulf %1176, %1180 : vector<16x32xf32>
    %1182 = arith.addf %1175, %1181 : vector<16x32xf32>
    %1183 = vector.extract_strided_slice %973 {offsets = [29, 0], sizes = [16, 32], strides = [1, 1]} : vector<46x32xf32> to vector<16x32xf32>
    %c1_544 = arith.constant 1 : index
    %c29_545 = arith.constant 29 : index
    %c0_546 = arith.constant 0 : index
    %1184 = vector.load %arg11[%c1_544, %c29_545, %c0_546] : memref<2x31x32xf32, #tpu.memory_space<vmem>>, vector<1x1x32xf32>
    %1185 = vector.shape_cast %1184 : vector<1x1x32xf32> to vector<32xf32>
    %1186 = vector.shape_cast %1185 : vector<32xf32> to vector<1x32xf32>
    %1187 = vector.broadcast %1186 : vector<1x32xf32> to vector<16x32xf32>
    %1188 = arith.mulf %1183, %1187 : vector<16x32xf32>
    %1189 = arith.addf %1182, %1188 : vector<16x32xf32>
    %1190 = vector.extract_strided_slice %973 {offsets = [30, 0], sizes = [16, 32], strides = [1, 1]} : vector<46x32xf32> to vector<16x32xf32>
    %c1_547 = arith.constant 1 : index
    %c30_548 = arith.constant 30 : index
    %c0_549 = arith.constant 0 : index
    %1191 = vector.load %arg11[%c1_547, %c30_548, %c0_549] : memref<2x31x32xf32, #tpu.memory_space<vmem>>, vector<1x1x32xf32>
    %1192 = vector.shape_cast %1191 : vector<1x1x32xf32> to vector<32xf32>
    %1193 = vector.shape_cast %1192 : vector<32xf32> to vector<1x32xf32>
    %1194 = vector.broadcast %1193 : vector<1x32xf32> to vector<16x32xf32>
    %1195 = arith.mulf %1190, %1194 : vector<16x32xf32>
    %1196 = arith.addf %1189, %1195 : vector<16x32xf32>
    %c33 = arith.constant 33 : index
    %c0_550 = arith.constant 0 : index
    %1197 = vector.load %arg3[%c33, %c0_550] : memref<41x32xf32, #tpu.memory_space<vmem>>, vector<1x32xf32>
    %1198 = vector.shape_cast %1197 : vector<1x32xf32> to vector<32xf32>
    %1199 = vector.shape_cast %1198 : vector<32xf32> to vector<1x32xf32>
    %1200 = vector.broadcast %1199 : vector<1x32xf32> to vector<16x32xf32>
    %1201 = arith.mulf %1196, %1200 : vector<16x32xf32>
    %c34 = arith.constant 34 : index
    %c0_551 = arith.constant 0 : index
    %1202 = vector.load %arg3[%c34, %c0_551] : memref<41x32xf32, #tpu.memory_space<vmem>>, vector<1x32xf32>
    %1203 = vector.shape_cast %1202 : vector<1x32xf32> to vector<32xf32>
    %1204 = vector.shape_cast %1203 : vector<32xf32> to vector<1x32xf32>
    %1205 = vector.broadcast %1204 : vector<1x32xf32> to vector<16x32xf32>
    %1206 = arith.addf %1201, %1205 : vector<16x32xf32>
    %1207 = arith.negf %1206 : vector<16x32xf32>
    %1208 = math.exp %1207 : vector<16x32xf32>
    %cst_552 = arith.constant 1.000000e+00 : f32
    %1209 = vector.broadcast %cst_552 : f32 to vector<16x32xf32>
    %1210 = arith.addf %1209, %1208 : vector<16x32xf32>
    %1211 = arith.divf %1209, %1210 : vector<16x32xf32>
    %1212 = arith.mulf %1206, %1211 : vector<16x32xf32>
    %c5_553 = arith.constant 5 : index
    %c0_554 = arith.constant 0 : index
    %c0_555 = arith.constant 0 : index
    %1213 = vector.load %arg10[%c5_553, %c0_554, %c0_555] : memref<6x32x32xf32, #tpu.memory_space<vmem>>, vector<1x32x32xf32>
    %1214 = vector.shape_cast %1213 : vector<1x32x32xf32> to vector<32x32xf32>
    %cst_556 = arith.constant dense<0.000000e+00> : vector<16x32xf32>
    %1215 = tpu.matmul %1212, %1214, %cst_556 {dimension_numbers = #tpu.dot_dimension_numbers<[1], [0], [0], [1], [0, 0, 1, 1], [], []>} : vector<16x32xf32>, vector<32x32xf32>, vector<16x32xf32> -> vector<16x32xf32>
    %c35 = arith.constant 35 : index
    %c0_557 = arith.constant 0 : index
    %1216 = vector.load %arg3[%c35, %c0_557] : memref<41x32xf32, #tpu.memory_space<vmem>>, vector<1x32xf32>
    %1217 = vector.shape_cast %1216 : vector<1x32xf32> to vector<32xf32>
    %1218 = vector.shape_cast %1217 : vector<32xf32> to vector<1x32xf32>
    %1219 = vector.broadcast %1218 : vector<1x32xf32> to vector<16x32xf32>
    %1220 = arith.addf %1215, %1219 : vector<16x32xf32>
    %1221 = arith.addf %921, %1220 : vector<16x32xf32>
    %c36 = arith.constant 36 : index
    %c0_558 = arith.constant 0 : index
    %1222 = vector.load %arg3[%c36, %c0_558] : memref<41x32xf32, #tpu.memory_space<vmem>>, vector<1x32xf32>
    %1223 = vector.shape_cast %1222 : vector<1x32xf32> to vector<32xf32>
    %c37 = arith.constant 37 : index
    %c0_559 = arith.constant 0 : index
    %1224 = vector.load %arg3[%c37, %c0_559] : memref<41x32xf32, #tpu.memory_space<vmem>>, vector<1x32xf32>
    %1225 = vector.shape_cast %1224 : vector<1x32xf32> to vector<32xf32>
    %cst_560 = arith.constant dense<0.000000e+00> : vector<16xf32>
    %1226 = vector.multi_reduction <add>, %1221, %cst_560 [1] : vector<16x32xf32> to vector<16xf32>
    %1227 = vector.shape_cast %1226 : vector<16xf32> to vector<16x1xf32>
    %cst_561 = arith.constant 3.200000e+01 : f32
    %1228 = vector.broadcast %cst_561 : f32 to vector<16x1xf32>
    %1229 = arith.divf %1227, %1228 : vector<16x1xf32>
    %1230 = vector.broadcast %1229 : vector<16x1xf32> to vector<16x32xf32>
    %1231 = arith.subf %1221, %1230 : vector<16x32xf32>
    %1232 = arith.mulf %1231, %1231 : vector<16x32xf32>
    %cst_562 = arith.constant dense<0.000000e+00> : vector<16xf32>
    %1233 = vector.multi_reduction <add>, %1232, %cst_562 [1] : vector<16x32xf32> to vector<16xf32>
    %1234 = vector.shape_cast %1233 : vector<16xf32> to vector<16x1xf32>
    %cst_563 = arith.constant 3.200000e+01 : f32
    %1235 = vector.broadcast %cst_563 : f32 to vector<16x1xf32>
    %1236 = arith.divf %1234, %1235 : vector<16x1xf32>
    %1237 = vector.broadcast %1229 : vector<16x1xf32> to vector<16x32xf32>
    %1238 = arith.subf %1221, %1237 : vector<16x32xf32>
    %cst_564 = arith.constant 9.99999974E-6 : f32
    %1239 = vector.broadcast %cst_564 : f32 to vector<16x1xf32>
    %1240 = arith.addf %1236, %1239 : vector<16x1xf32>
    %1241 = math.rsqrt %1240 : vector<16x1xf32>
    %1242 = vector.broadcast %1241 : vector<16x1xf32> to vector<16x32xf32>
    %1243 = arith.mulf %1238, %1242 : vector<16x32xf32>
    %1244 = vector.shape_cast %1223 : vector<32xf32> to vector<1x32xf32>
    %1245 = vector.broadcast %1244 : vector<1x32xf32> to vector<16x32xf32>
    %1246 = arith.mulf %1243, %1245 : vector<16x32xf32>
    %1247 = vector.shape_cast %1225 : vector<32xf32> to vector<1x32xf32>
    %1248 = vector.broadcast %1247 : vector<1x32xf32> to vector<16x32xf32>
    %1249 = arith.addf %1246, %1248 : vector<16x32xf32>
    %c3_565 = arith.constant 3 : index
    %c0_566 = arith.constant 0 : index
    %c0_567 = arith.constant 0 : index
    %1250 = vector.load %arg4[%c3_565, %c0_566, %c0_567] : memref<4x32x128xf32, #tpu.memory_space<vmem>>, vector<1x32x128xf32>
    %1251 = vector.shape_cast %1250 : vector<1x32x128xf32> to vector<32x128xf32>
    %cst_568 = arith.constant dense<0.000000e+00> : vector<16x128xf32>
    %1252 = tpu.matmul %1249, %1251, %cst_568 {dimension_numbers = #tpu.dot_dimension_numbers<[1], [0], [0], [1], [0, 0, 1, 1], [], []>} : vector<16x32xf32>, vector<32x128xf32>, vector<16x128xf32> -> vector<16x128xf32>
    %c3_569 = arith.constant 3 : index
    %c0_570 = arith.constant 0 : index
    %1253 = vector.load %arg5[%c3_569, %c0_570] : memref<4x128xf32, #tpu.memory_space<vmem>>, vector<1x128xf32>
    %1254 = vector.shape_cast %1253 : vector<1x128xf32> to vector<128xf32>
    %1255 = vector.shape_cast %1254 : vector<128xf32> to vector<1x128xf32>
    %1256 = vector.broadcast %1255 : vector<1x128xf32> to vector<16x128xf32>
    %1257 = arith.addf %1252, %1256 : vector<16x128xf32>
    %1258 = arith.negf %1257 : vector<16x128xf32>
    %1259 = math.exp %1258 : vector<16x128xf32>
    %cst_571 = arith.constant 1.000000e+00 : f32
    %1260 = vector.broadcast %cst_571 : f32 to vector<16x128xf32>
    %1261 = arith.addf %1260, %1259 : vector<16x128xf32>
    %1262 = arith.divf %1260, %1261 : vector<16x128xf32>
    %1263 = arith.mulf %1257, %1262 : vector<16x128xf32>
    %c3_572 = arith.constant 3 : index
    %c0_573 = arith.constant 0 : index
    %c0_574 = arith.constant 0 : index
    %1264 = vector.load %arg6[%c3_572, %c0_573, %c0_574] : memref<4x128x32xf32, #tpu.memory_space<vmem>>, vector<1x128x32xf32>
    %1265 = vector.shape_cast %1264 : vector<1x128x32xf32> to vector<128x32xf32>
    %cst_575 = arith.constant dense<0.000000e+00> : vector<16x32xf32>
    %1266 = tpu.matmul %1263, %1265, %cst_575 {dimension_numbers = #tpu.dot_dimension_numbers<[1], [0], [0], [1], [0, 0, 1, 1], [], []>} : vector<16x128xf32>, vector<128x32xf32>, vector<16x32xf32> -> vector<16x32xf32>
    %c38 = arith.constant 38 : index
    %c0_576 = arith.constant 0 : index
    %1267 = vector.load %arg3[%c38, %c0_576] : memref<41x32xf32, #tpu.memory_space<vmem>>, vector<1x32xf32>
    %1268 = vector.shape_cast %1267 : vector<1x32xf32> to vector<32xf32>
    %1269 = vector.shape_cast %1268 : vector<32xf32> to vector<1x32xf32>
    %1270 = vector.broadcast %1269 : vector<1x32xf32> to vector<16x32xf32>
    %1271 = arith.addf %1266, %1270 : vector<16x32xf32>
    %cst_577 = arith.constant 5.000000e-01 : f32
    %1272 = vector.broadcast %cst_577 : f32 to vector<16x32xf32>
    %1273 = arith.mulf %1272, %1271 : vector<16x32xf32>
    %1274 = arith.addf %1221, %1273 : vector<16x32xf32>
    %c39 = arith.constant 39 : index
    %c0_578 = arith.constant 0 : index
    %1275 = vector.load %arg3[%c39, %c0_578] : memref<41x32xf32, #tpu.memory_space<vmem>>, vector<1x32xf32>
    %1276 = vector.shape_cast %1275 : vector<1x32xf32> to vector<32xf32>
    %c40 = arith.constant 40 : index
    %c0_579 = arith.constant 0 : index
    %1277 = vector.load %arg3[%c40, %c0_579] : memref<41x32xf32, #tpu.memory_space<vmem>>, vector<1x32xf32>
    %1278 = vector.shape_cast %1277 : vector<1x32xf32> to vector<32xf32>
    %cst_580 = arith.constant dense<0.000000e+00> : vector<16xf32>
    %1279 = vector.multi_reduction <add>, %1274, %cst_580 [1] : vector<16x32xf32> to vector<16xf32>
    %1280 = vector.shape_cast %1279 : vector<16xf32> to vector<16x1xf32>
    %cst_581 = arith.constant 3.200000e+01 : f32
    %1281 = vector.broadcast %cst_581 : f32 to vector<16x1xf32>
    %1282 = arith.divf %1280, %1281 : vector<16x1xf32>
    %1283 = vector.broadcast %1282 : vector<16x1xf32> to vector<16x32xf32>
    %1284 = arith.subf %1274, %1283 : vector<16x32xf32>
    %1285 = arith.mulf %1284, %1284 : vector<16x32xf32>
    %cst_582 = arith.constant dense<0.000000e+00> : vector<16xf32>
    %1286 = vector.multi_reduction <add>, %1285, %cst_582 [1] : vector<16x32xf32> to vector<16xf32>
    %1287 = vector.shape_cast %1286 : vector<16xf32> to vector<16x1xf32>
    %cst_583 = arith.constant 3.200000e+01 : f32
    %1288 = vector.broadcast %cst_583 : f32 to vector<16x1xf32>
    %1289 = arith.divf %1287, %1288 : vector<16x1xf32>
    %1290 = vector.broadcast %1282 : vector<16x1xf32> to vector<16x32xf32>
    %1291 = arith.subf %1274, %1290 : vector<16x32xf32>
    %cst_584 = arith.constant 9.99999974E-6 : f32
    %1292 = vector.broadcast %cst_584 : f32 to vector<16x1xf32>
    %1293 = arith.addf %1289, %1292 : vector<16x1xf32>
    %1294 = math.rsqrt %1293 : vector<16x1xf32>
    %1295 = vector.broadcast %1294 : vector<16x1xf32> to vector<16x32xf32>
    %1296 = arith.mulf %1291, %1295 : vector<16x32xf32>
    %1297 = vector.shape_cast %1276 : vector<32xf32> to vector<1x32xf32>
    %1298 = vector.broadcast %1297 : vector<1x32xf32> to vector<16x32xf32>
    %1299 = arith.mulf %1296, %1298 : vector<16x32xf32>
    %1300 = vector.shape_cast %1278 : vector<32xf32> to vector<1x32xf32>
    %1301 = vector.broadcast %1300 : vector<1x32xf32> to vector<16x32xf32>
    %1302 = arith.addf %1299, %1301 : vector<16x32xf32>
    %c0_585 = arith.constant 0 : index
    %c0_586 = arith.constant 0 : index
    %1303 = vector.load %arg12[%c0_585, %c0_586] : memref<1x32xf32, #tpu.memory_space<vmem>>, vector<1x32xf32>
    %cst_587 = arith.constant dense<0.000000e+00> : vector<1x16xf32>
    %1304 = tpu.matmul %1303, %1302, %cst_587 {dimension_numbers = #tpu.dot_dimension_numbers<[1], [1], [0], [0], [0, 0, 1, 0], [], []>} : vector<1x32xf32>, vector<16x32xf32>, vector<1x16xf32> -> vector<1x16xf32>
    %c0_588 = arith.constant 0 : index
    %1305 = memref.load %arg13[%c0_588] : memref<1xf32, #tpu.memory_space<smem>>
    %1306 = vector.broadcast %1305 : f32 to vector<1x16xf32>
    %1307 = arith.addf %1304, %1306 : vector<1x16xf32>
    %c0_589 = arith.constant 0 : index
    %c0_590 = arith.constant 0 : index
    %c0_591 = arith.constant 0 : index
    %1308 = vector.load %arg14[%c0_589, %c0_590, %c0_591] : memref<1x1x16xf32, #tpu.memory_space<vmem>>, vector<1x1x16xf32>
    %1309 = vector.shape_cast %1308 : vector<1x1x16xf32> to vector<1x16xf32>
    %1310 = vector.shape_cast %1307 : vector<1x16xf32> to vector<1x1x16xf32>
    tpu.vector_store %arg14[%c0_589, %c0_590, %c0_591], %1310 {strides = array<i32>} : memref<1x1x16xf32, #tpu.memory_space<vmem>>, vector<1x1x16xf32>,
    return
  }
  func.func @transform_0(%arg0: i32) -> (i32, i32, i32) {
    %c0_i32 = arith.constant 0 : i32
    %c0_i32_0 = arith.constant 0 : i32
    %c0_i32_1 = arith.constant 0 : i32
    return %arg0, %c0_i32, %c0_i32_0 : i32, i32, i32
  }
  func.func @transform_1(%arg0: i32) -> (i32, i32) {
    %c0_i32 = arith.constant 0 : i32
    %c0_i32_0 = arith.constant 0 : i32
    %c0_i32_1 = arith.constant 0 : i32
    return %c0_i32, %c0_i32_0 : i32, i32
  }
  func.func @transform_2(%arg0: i32) -> (i32, i32) {
    %c0_i32 = arith.constant 0 : i32
    %c0_i32_0 = arith.constant 0 : i32
    %c0_i32_1 = arith.constant 0 : i32
    return %c0_i32, %c0_i32_0 : i32, i32
  }
  func.func @transform_3(%arg0: i32) -> (i32, i32, i32) {
    %c0_i32 = arith.constant 0 : i32
    %c0_i32_0 = arith.constant 0 : i32
    %c0_i32_1 = arith.constant 0 : i32
    %c0_i32_2 = arith.constant 0 : i32
    return %c0_i32, %c0_i32_0, %c0_i32_1 : i32, i32, i32
  }
  func.func @transform_4(%arg0: i32) -> (i32, i32) {
    %c0_i32 = arith.constant 0 : i32
    %c0_i32_0 = arith.constant 0 : i32
    %c0_i32_1 = arith.constant 0 : i32
    return %c0_i32, %c0_i32_0 : i32, i32
  }
  func.func @transform_5(%arg0: i32) -> (i32, i32, i32) {
    %c0_i32 = arith.constant 0 : i32
    %c0_i32_0 = arith.constant 0 : i32
    %c0_i32_1 = arith.constant 0 : i32
    %c0_i32_2 = arith.constant 0 : i32
    return %c0_i32, %c0_i32_0, %c0_i32_1 : i32, i32, i32
  }
  func.func @transform_6(%arg0: i32) -> (i32, i32, i32) {
    %c0_i32 = arith.constant 0 : i32
    %c0_i32_0 = arith.constant 0 : i32
    %c0_i32_1 = arith.constant 0 : i32
    %c0_i32_2 = arith.constant 0 : i32
    return %c0_i32, %c0_i32_0, %c0_i32_1 : i32, i32, i32
  }
  func.func @transform_7(%arg0: i32) -> (i32, i32) {
    %c0_i32 = arith.constant 0 : i32
    %c0_i32_0 = arith.constant 0 : i32
    %c0_i32_1 = arith.constant 0 : i32
    return %c0_i32, %c0_i32_0 : i32, i32
  }
  func.func @transform_8(%arg0: i32) -> (i32, i32, i32) {
    %c0_i32 = arith.constant 0 : i32
    %c0_i32_0 = arith.constant 0 : i32
    %c0_i32_1 = arith.constant 0 : i32
    %c0_i32_2 = arith.constant 0 : i32
    return %c0_i32, %c0_i32_0, %c0_i32_1 : i32, i32, i32
  }
  func.func @transform_9(%arg0: i32) -> (i32, i32, i32) {
    %c0_i32 = arith.constant 0 : i32
    %c0_i32_0 = arith.constant 0 : i32
    %c0_i32_1 = arith.constant 0 : i32
    %c0_i32_2 = arith.constant 0 : i32
    return %c0_i32, %c0_i32_0, %c0_i32_1 : i32, i32, i32
  }
  func.func @transform_10(%arg0: i32) -> (i32, i32, i32) {
    %c0_i32 = arith.constant 0 : i32
    %c0_i32_0 = arith.constant 0 : i32
    %c0_i32_1 = arith.constant 0 : i32
    %c0_i32_2 = arith.constant 0 : i32
    return %c0_i32, %c0_i32_0, %c0_i32_1 : i32, i32, i32
  }
  func.func @transform_11(%arg0: i32) -> (i32, i32) {
    %c0_i32 = arith.constant 0 : i32
    %c0_i32_0 = arith.constant 0 : i32
    %c0_i32_1 = arith.constant 0 : i32
    return %c0_i32, %c0_i32_0 : i32, i32
  }
  func.func @transform_12(%arg0: i32) -> i32 {
    %c0_i32 = arith.constant 0 : i32
    %c0_i32_0 = arith.constant 0 : i32
    return %c0_i32 : i32
  }
  func.func @transform_13(%arg0: i32) -> (i32, i32, i32) {
    %c0_i32 = arith.constant 0 : i32
    %c0_i32_0 = arith.constant 0 : i32
    %c0_i32_1 = arith.constant 0 : i32
    return %arg0, %c0_i32, %c0_i32_0 : i32, i32, i32
  }
}

</mosaic_0001>

<llo_original>
// kernel: sad_forward.1
$region0: #{sad_forward.1}
  #allocation0 [shape = 'u32[]', space=smem, size = 0x4, offset = 0x4, fixed_abs, tag = 'smem constant byte address 0x4 - core index']
  #allocation1 [shape = 'u32[144,128]{1,0:T(1,128)}', space=vmem, size = 0x12000, scoped, tag = 'internal scratch']
  #allocation2 [shape = 'f32[1]{0:T(128)S(6)}', space=smem, size = 0x200, scoped, tag = 'scoped memory for sad_forward.1']
  %s0 = inlined_call_operand.vmem [shape: f32[2,16,16], index: 0, kind: input, shape index: {}]
  %s1 = inlined_call_operand.vmem [shape: f32[16,32], index: 1, kind: input, shape index: {}]
  %s2 = inlined_call_operand.vmem [shape: f32[41,32], index: 2, kind: input, shape index: {}]
  %s3 = inlined_call_operand.vmem [shape: f32[4,32,128], index: 3, kind: input, shape index: {}]
  %s4 = inlined_call_operand.vmem [shape: f32[4,128], index: 4, kind: input, shape index: {}]
  %s5 = inlined_call_operand.vmem [shape: f32[4,128,32], index: 5, kind: input, shape index: {}]
  %s6 = inlined_call_operand.vmem [shape: f32[24,32,8], index: 6, kind: input, shape index: {}]
  %s7 = inlined_call_operand.vmem [shape: f32[24,8], index: 7, kind: input, shape index: {}]
  %s8 = inlined_call_operand.vmem [shape: f32[8,8,32], index: 8, kind: input, shape index: {}]
  %s9 = inlined_call_operand.vmem [shape: f32[6,32,32], index: 9, kind: input, shape index: {}]
  %s10 = inlined_call_operand.vmem [shape: f32[2,31,32], index: 10, kind: input, shape index: {}]
  %s11 = inlined_call_operand.vmem [shape: f32[1,32], index: 11, kind: input, shape index: {}]
  %s12 = inlined_call_operand.<no memory space> [shape: f32[1], index: 12, kind: input, shape index: {}]
  %s13 = inlined_call_operand.hbm [shape: f32[2,1,16], index: 13, kind: output, shape index: {}]
  %s14 = sld [smem:[#allocation0]]
  $region85: #{sad_forward.1} parent=0
    _
  %s16 = ssub.s32 1, %s14
  %s17 = scalar_select 0, %s16, %s14
  %18 = sst [smem:[#allocation2]] %s12
  $region1: #{sad_forward.1} parent=0
    #allocation3 [shape = 'u8[1024]{0}', space=vmem, size = 0x400, scoped, tag = 'output window, operand 0']
    #allocation4 [shape = 's32[2]{0}', space=sflag, size = 0x8, scoped, tag = 'scoped memory for sad_forward.1']
    %19 = vsyncpa [#allocation4], 0
    %s20 = scalar_lea.sflag [#allocation4], 1
    %21 = vsyncpa %s20, 0
    loop: start=0, step=1, limit=4
    $region2: #{sad_forward.1} parent=1 // loop_pre_header
      _
    $region3: #{sad_forward.1} parent=1 // loop_header
      %s23 = sphi 0, %s27
      %p24 = scmp.ge.s32.totalorder %s23, 4
      %s33 = sphi 0, %s35
      %s36 = sphi 0, %s33
      %s37 = sphi 0, %s36
      %s53 = sphi 0, %s37
      %s57 = sphi 0, %s57
      %s59 = sphi 0, %s57
      %s60 = sphi 0, %s59
      %s74 = sphi 0, %s60
      %s78 = sphi 0, %s78
      %s80 = sphi 0, %s78
      %s81 = sphi 0, %s80
      %s95 = sphi 0, %s81
      %s99 = sphi 0, %s99
      %s101 = sphi 0, %s99
      %s102 = sphi 0, %s101
      %s116 = sphi 0, %s102
      %s120 = sphi 0, %s120
      %s122 = sphi 0, %s120
      %s123 = sphi 0, %s122
      %s137 = sphi 0, %s123
      %s141 = sphi 0, %s141
      %s143 = sphi 0, %s141
      %s144 = sphi 0, %s143
      %s158 = sphi 0, %s144
      %s162 = sphi 0, %s162
      %s164 = sphi 0, %s162
      %s165 = sphi 0, %s164
      %s179 = sphi 0, %s165
      %s183 = sphi 0, %s183
      %s185 = sphi 0, %s183
      %s186 = sphi 0, %s185
      %s200 = sphi 0, %s186
      %s204 = sphi 0, %s204
      %s206 = sphi 0, %s204
      %s207 = sphi 0, %s206
      %s221 = sphi 0, %s207
      %s225 = sphi 0, %s225
      %s227 = sphi 0, %s225
      %s228 = sphi 0, %s227
      %s242 = sphi 0, %s228
      %s246 = sphi 0, %s246
      %s248 = sphi 0, %s246
      %s249 = sphi 0, %s248
      %s263 = sphi 0, %s249
      %s267 = sphi 0, %s267
      %s269 = sphi 0, %s267
      %s270 = sphi 0, %s269
      %s284 = sphi 0, %s270
      %s288 = sphi 0, %s288
      %s290 = sphi 0, %s288
      %s291 = sphi 0, %s290
      %s305 = sphi 0, %s291
      %s311 = sphi 0, %s313
      %s314 = sphi 0, %s311
      %s315 = sphi 0, %s314
      %s331 = sphi 0, %s315
    $region4: #{sad_forward.1} parent=1 // loop_header_branch
      %26 = sbr.rel (%p24) target = $region8
    $region5: #{sad_forward.1} parent=1 // loop_body
      %s28 = ssub.s32 %s23, 1
      %s29 = ssub.s32 %s23, 2
      %s30 = sadd.s32 %s23, 1
      %s31 = ssub.s32 %s23, %s30
      %p32 = scmp.eq.s32.totalorder %s31, 0
      %s34 = sadd.s32 %s33, 1
      %s35 = scalar_select %p32, %s33, %s34
      %p38 = pneg %p32
      %p39 = scmp.eq.s32.totalorder %s23, 1
      %p40 = por %p38, %p39
      %p41 = scmp.ne.s32.totalorder %s33, %s36
      %p42 = scmp.eq.s32.totalorder %s23, 0
      %p43 = por %p41, %p42
      %p44 = scmp.ne.s32.totalorder %s33, %s36
      %p45 = scmp.eq.s32.totalorder %s28, 1
      %p46 = por %p44, %p45
      %p47 = scmp.ne.s32.totalorder %s36, %s37
      %p48 = scmp.eq.s32.totalorder %s28, 0
      %p49 = por %p47, %p48
      %p50 = scmp.ne.s32.totalorder %s36, %s37
      %p51 = scmp.eq.s32.totalorder %s29, 1
      %p52 = por %p50, %p51
      %p54 = scmp.ne.s32.totalorder %s37, %s53
      %p55 = scmp.eq.s32.totalorder %s29, 0
      %p56 = por %p54, %p55
      %s58 = sadd.s32 %s57, 1
      %p61 = scmp.eq.s32.totalorder %s23, 1
      %p62 = scmp.ne.s32.totalorder %s57, %s59
      %p63 = scmp.eq.s32.totalorder %s23, 0
      %p64 = por %p62, %p63
      %p65 = scmp.ne.s32.totalorder %s57, %s59
      %p66 = scmp.eq.s32.totalorder %s28, 1
      %p67 = por %p65, %p66
      %p68 = scmp.ne.s32.totalorder %s59, %s60
      %p69 = scmp.eq.s32.totalorder %s28, 0
      %p70 = por %p68, %p69
      %p71 = scmp.ne.s32.totalorder %s59, %s60
      %p72 = scmp.eq.s32.totalorder %s29, 1
      %p73 = por %p71, %p72
      %p75 = scmp.ne.s32.totalorder %s60, %s74
      %p76 = scmp.eq.s32.totalorder %s29, 0
      %p77 = por %p75, %p76
      %s79 = sadd.s32 %s78, 1
      %p82 = scmp.eq.s32.totalorder %s23, 1
      %p83 = scmp.ne.s32.totalorder %s78, %s80
      %p84 = scmp.eq.s32.totalorder %s23, 0
      %p85 = por %p83, %p84
      %p86 = scmp.ne.s32.totalorder %s78, %s80
      %p87 = scmp.eq.s32.totalorder %s28, 1
      %p88 = por %p86, %p87
      %p89 = scmp.ne.s32.totalorder %s80, %s81
      %p90 = scmp.eq.s32.totalorder %s28, 0
      %p91 = por %p89, %p90
      %p92 = scmp.ne.s32.totalorder %s80, %s81
      %p93 = scmp.eq.s32.totalorder %s29, 1
      %p94 = por %p92, %p93
      %p96 = scmp.ne.s32.totalorder %s81, %s95
      %p97 = scmp.eq.s32.totalorder %s29, 0
      %p98 = por %p96, %p97
      %s100 = sadd.s32 %s99, 1
      %p103 = scmp.eq.s32.totalorder %s23, 1
      %p104 = scmp.ne.s32.totalorder %s99, %s101
      %p105 = scmp.eq.s32.totalorder %s23, 0
      %p106 = por %p104, %p105
      %p107 = scmp.ne.s32.totalorder %s99, %s101
      %p108 = scmp.eq.s32.totalorder %s28, 1
      %p109 = por %p107, %p108
      %p110 = scmp.ne.s32.totalorder %s101, %s102
      %p111 = scmp.eq.s32.totalorder %s28, 0
      %p112 = por %p110, %p111
      %p113 = scmp.ne.s32.totalorder %s101, %s102
      %p114 = scmp.eq.s32.totalorder %s29, 1
      %p115 = por %p113, %p114
      %p117 = scmp.ne.s32.totalorder %s102, %s116
      %p118 = scmp.eq.s32.totalorder %s29, 0
      %p119 = por %p117, %p118
      %s121 = sadd.s32 %s120, 1
      %p124 = scmp.eq.s32.totalorder %s23, 1
      %p125 = scmp.ne.s32.totalorder %s120, %s122
      %p126 = scmp.eq.s32.totalorder %s23, 0
      %p127 = por %p125, %p126
      %p128 = scmp.ne.s32.totalorder %s120, %s122
      %p129 = scmp.eq.s32.totalorder %s28, 1
      %p130 = por %p128, %p129
      %p131 = scmp.ne.s32.totalorder %s122, %s123
      %p132 = scmp.eq.s32.totalorder %s28, 0
      %p133 = por %p131, %p132
      %p134 = scmp.ne.s32.totalorder %s122, %s123
      %p135 = scmp.eq.s32.totalorder %s29, 1
      %p136 = por %p134, %p135
      %p138 = scmp.ne.s32.totalorder %s123, %s137
      %p139 = scmp.eq.s32.totalorder %s29, 0
      %p140 = por %p138, %p139
      %s142 = sadd.s32 %s141, 1
      %p145 = scmp.eq.s32.totalorder %s23, 1
      %p146 = scmp.ne.s32.totalorder %s141, %s143
      %p147 = scmp.eq.s32.totalorder %s23, 0
      %p148 = por %p146, %p147
      %p149 = scmp.ne.s32.totalorder %s141, %s143
      %p150 = scmp.eq.s32.totalorder %s28, 1
      %p151 = por %p149, %p150
      %p152 = scmp.ne.s32.totalorder %s143, %s144
      %p153 = scmp.eq.s32.totalorder %s28, 0
      %p154 = por %p152, %p153
      %p155 = scmp.ne.s32.totalorder %s143, %s144
      %p156 = scmp.eq.s32.totalorder %s29, 1
      %p157 = por %p155, %p156
      %p159 = scmp.ne.s32.totalorder %s144, %s158
      %p160 = scmp.eq.s32.totalorder %s29, 0
      %p161 = por %p159, %p160
      %s163 = sadd.s32 %s162, 1
      %p166 = scmp.eq.s32.totalorder %s23, 1
      %p167 = scmp.ne.s32.totalorder %s162, %s164
      %p168 = scmp.eq.s32.totalorder %s23, 0
      %p169 = por %p167, %p168
      %p170 = scmp.ne.s32.totalorder %s162, %s164
      %p171 = scmp.eq.s32.totalorder %s28, 1
      %p172 = por %p170, %p171
      %p173 = scmp.ne.s32.totalorder %s164, %s165
      %p174 = scmp.eq.s32.totalorder %s28, 0
      %p175 = por %p173, %p174
      %p176 = scmp.ne.s32.totalorder %s164, %s165
      %p177 = scmp.eq.s32.totalorder %s29, 1
      %p178 = por %p176, %p177
      %p180 = scmp.ne.s32.totalorder %s165, %s179
      %p181 = scmp.eq.s32.totalorder %s29, 0
      %p182 = por %p180, %p181
      %s184 = sadd.s32 %s183, 1
      %p187 = scmp.eq.s32.totalorder %s23, 1
      %p188 = scmp.ne.s32.totalorder %s183, %s185
      %p189 = scmp.eq.s32.totalorder %s23, 0
      %p190 = por %p188, %p189
      %p191 = scmp.ne.s32.totalorder %s183, %s185
      %p192 = scmp.eq.s32.totalorder %s28, 1
      %p193 = por %p191, %p192
      %p194 = scmp.ne.s32.totalorder %s185, %s186
      %p195 = scmp.eq.s32.totalorder %s28, 0
      %p196 = por %p194, %p195
      %p197 = scmp.ne.s32.totalorder %s185, %s186
      %p198 = scmp.eq.s32.totalorder %s29, 1
      %p199 = por %p197, %p198
      %p201 = scmp.ne.s32.totalorder %s186, %s200
      %p202 = scmp.eq.s32.totalorder %s29, 0
      %p203 = por %p201, %p202
      %s205 = sadd.s32 %s204, 1
      %p208 = scmp.eq.s32.totalorder %s23, 1
      %p209 = scmp.ne.s32.totalorder %s204, %s206
      %p210 = scmp.eq.s32.totalorder %s23, 0
      %p211 = por %p209, %p210
      %p212 = scmp.ne.s32.totalorder %s204, %s206
      %p213 = scmp.eq.s32.totalorder %s28, 1
      %p214 = por %p212, %p213
      %p215 = scmp.ne.s32.totalorder %s206, %s207
      %p216 = scmp.eq.s32.totalorder %s28, 0
      %p217 = por %p215, %p216
      %p218 = scmp.ne.s32.totalorder %s206, %s207
      %p219 = scmp.eq.s32.totalorder %s29, 1
      %p220 = por %p218, %p219
      %p222 = scmp.ne.s32.totalorder %s207, %s221
      %p223 = scmp.eq.s32.totalorder %s29, 0
      %p224 = por %p222, %p223
      %s226 = sadd.s32 %s225, 1
      %p229 = scmp.eq.s32.totalorder %s23, 1
      %p230 = scmp.ne.s32.totalorder %s225, %s227
      %p231 = scmp.eq.s32.totalorder %s23, 0
      %p232 = por %p230, %p231
      %p233 = scmp.ne.s32.totalorder %s225, %s227
      %p234 = scmp.eq.s32.totalorder %s28, 1
      %p235 = por %p233, %p234
      %p236 = scmp.ne.s32.totalorder %s227, %s228
      %p237 = scmp.eq.s32.totalorder %s28, 0
      %p238 = por %p236, %p237
      %p239 = scmp.ne.s32.totalorder %s227, %s228
      %p240 = scmp.eq.s32.totalorder %s29, 1
      %p241 = por %p239, %p240
      %p243 = scmp.ne.s32.totalorder %s228, %s242
      %p244 = scmp.eq.s32.totalorder %s29, 0
      %p245 = por %p243, %p244
      %s247 = sadd.s32 %s246, 1
      %p250 = scmp.eq.s32.totalorder %s23, 1
      %p251 = scmp.ne.s32.totalorder %s246, %s248
      %p252 = scmp.eq.s32.totalorder %s23, 0
      %p253 = por %p251, %p252
      %p254 = scmp.ne.s32.totalorder %s246, %s248
      %p255 = scmp.eq.s32.totalorder %s28, 1
      %p256 = por %p254, %p255
      %p257 = scmp.ne.s32.totalorder %s248, %s249
      %p258 = scmp.eq.s32.totalorder %s28, 0
      %p259 = por %p257, %p258
      %p260 = scmp.ne.s32.totalorder %s248, %s249
      %p261 = scmp.eq.s32.totalorder %s29, 1
      %p262 = por %p260, %p261
      %p264 = scmp.ne.s32.totalorder %s249, %s263
      %p265 = scmp.eq.s32.totalorder %s29, 0
      %p266 = por %p264, %p265
      %s268 = sadd.s32 %s267, 1
      %p271 = scmp.eq.s32.totalorder %s23, 1
      %p272 = scmp.ne.s32.totalorder %s267, %s269
      %p273 = scmp.eq.s32.totalorder %s23, 0
      %p274 = por %p272, %p273
      %p275 = scmp.ne.s32.totalorder %s267, %s269
      %p276 = scmp.eq.s32.totalorder %s28, 1
      %p277 = por %p275, %p276
      %p278 = scmp.ne.s32.totalorder %s269, %s270
      %p279 = scmp.eq.s32.totalorder %s28, 0
      %p280 = por %p278, %p279
      %p281 = scmp.ne.s32.totalorder %s269, %s270
      %p282 = scmp.eq.s32.totalorder %s29, 1
      %p283 = por %p281, %p282
      %p285 = scmp.ne.s32.totalorder %s270, %s284
      %p286 = scmp.eq.s32.totalorder %s29, 0
      %p287 = por %p285, %p286
      %s289 = sadd.s32 %s288, 1
      %p292 = scmp.eq.s32.totalorder %s23, 1
      %p293 = scmp.ne.s32.totalorder %s288, %s290
      %p294 = scmp.eq.s32.totalorder %s23, 0
      %p295 = por %p293, %p294
      %p296 = scmp.ne.s32.totalorder %s288, %s290
      %p297 = scmp.eq.s32.totalorder %s28, 1
      %p298 = por %p296, %p297
      %p299 = scmp.ne.s32.totalorder %s290, %s291
      %p300 = scmp.eq.s32.totalorder %s28, 0
      %p301 = por %p299, %p300
      %p302 = scmp.ne.s32.totalorder %s290, %s291
      %p303 = scmp.eq.s32.totalorder %s29, 1
      %p304 = por %p302, %p303
      %p306 = scmp.ne.s32.totalorder %s291, %s305
      %p307 = scmp.eq.s32.totalorder %s29, 0
      %p308 = por %p306, %p307
      %s309 = ssub.s32 %s23, %s30
      %p310 = scmp.eq.s32.totalorder %s309, 0
      %s312 = sadd.s32 %s311, 1
      %s313 = scalar_select %p310, %s311, %s312
      %p316 = pneg %p310
      %p317 = scmp.eq.s32.totalorder %s23, 1
      %p318 = por %p316, %p317
      %p319 = scmp.ne.s32.totalorder %s311, %s314
      %p320 = scmp.eq.s32.totalorder %s23, 0
      %p321 = por %p319, %p320
      %p322 = scmp.ne.s32.totalorder %s311, %s314
      %p323 = scmp.eq.s32.totalorder %s28, 1
      %p324 = por %p322, %p323
      %p325 = scmp.ne.s32.totalorder %s314, %s315
      %p326 = scmp.eq.s32.totalorder %s28, 0
      %p327 = por %p325, %p326
      %p328 = scmp.ne.s32.totalorder %s314, %s315
      %p329 = scmp.eq.s32.totalorder %s29, 1
      %p330 = por %p328, %p329
      %p332 = scmp.ne.s32.totalorder %s315, %s331
      %p333 = scmp.eq.s32.totalorder %s29, 0
      %p334 = por %p332, %p333
      %p335 = scmp.le.s32.totalorder 1, %s23
      %p336 = scmp.lt.s32.totalorder %s23, 3
      %p337 = pnand %p335, %p336
      %p338 = pneg %p337
      // Predicated region
      $region9: #{sad_forward.1} parent=5 // pred_check
        _
      $region10: #{sad_forward.1} parent=5 // pred_check_branch
        %340 = sbr.rel (%p337) target = $region12
      $region11: #{sad_forward.1} parent=5 // pred_region
        %s341 = ssub.s32 %s23, 1
        // Predicated region
        $region13: #{sad_forward.1} parent=11 // pred_check
          %p342 = pneg %p70
        $region14: #{sad_forward.1} parent=11 // pred_check_branch
          %344 = sbr.rel (%p342) target = $region16
        $region15: #{sad_forward.1} parent=11 // pred_region
          _
        $region16: #{sad_forward.1} parent=11 // pred_fallthru
          _
        // Predicated region
        $region17: #{sad_forward.1} parent=11 // pred_check
          %p345 = pneg %p91
        $region18: #{sad_forward.1} parent=11 // pred_check_branch
          %347 = sbr.rel (%p345) target = $region20
        $region19: #{sad_forward.1} parent=11 // pred_region
          _
        $region20: #{sad_forward.1} parent=11 // pred_fallthru
          _
        // Predicated region
        $region21: #{sad_forward.1} parent=11 // pred_check
          %p348 = pneg %p112
        $region22: #{sad_forward.1} parent=11 // pred_check_branch
          %350 = sbr.rel (%p348) target = $region24
        $region23: #{sad_forward.1} parent=11 // pred_region
          _
        $region24: #{sad_forward.1} parent=11 // pred_fallthru
          _
        // Predicated region
        $region25: #{sad_forward.1} parent=11 // pred_check
          %p351 = pneg %p133
        $region26: #{sad_forward.1} parent=11 // pred_check_branch
          %353 = sbr.rel (%p351) target = $region28
        $region27: #{sad_forward.1} parent=11 // pred_region
          _
        $region28: #{sad_forward.1} parent=11 // pred_fallthru
          _
        // Predicated region
        $region29: #{sad_forward.1} parent=11 // pred_check
          %p354 = pneg %p154
        $region30: #{sad_forward.1} parent=11 // pred_check_branch
          %356 = sbr.rel (%p354) target = $region32
        $region31: #{sad_forward.1} parent=11 // pred_region
          _
        $region32: #{sad_forward.1} parent=11 // pred_fallthru
          _
        // Predicated region
        $region33: #{sad_forward.1} parent=11 // pred_check
          %p357 = pneg %p175
        $region34: #{sad_forward.1} parent=11 // pred_check_branch
          %359 = sbr.rel (%p357) target = $region36
        $region35: #{sad_forward.1} parent=11 // pred_region
          _
        $region36: #{sad_forward.1} parent=11 // pred_fallthru
          _
        // Predicated region
        $region37: #{sad_forward.1} parent=11 // pred_check
          %p360 = pneg %p196
        $region38: #{sad_forward.1} parent=11 // pred_check_branch
          %362 = sbr.rel (%p360) target = $region40
        $region39: #{sad_forward.1} parent=11 // pred_region
          _
        $region40: #{sad_forward.1} parent=11 // pred_fallthru
          _
        // Predicated region
        $region41: #{sad_forward.1} parent=11 // pred_check
          %p363 = pneg %p217
        $region42: #{sad_forward.1} parent=11 // pred_check_branch
          %365 = sbr.rel (%p363) target = $region44
        $region43: #{sad_forward.1} parent=11 // pred_region
          _
        $region44: #{sad_forward.1} parent=11 // pred_fallthru
          _
        // Predicated region
        $region45: #{sad_forward.1} parent=11 // pred_check
          %p366 = pneg %p238
        $region46: #{sad_forward.1} parent=11 // pred_check_branch
          %368 = sbr.rel (%p366) target = $region48
        $region47: #{sad_forward.1} parent=11 // pred_region
          _
        $region48: #{sad_forward.1} parent=11 // pred_fallthru
          _
        // Predicated region
        $region49: #{sad_forward.1} parent=11 // pred_check
          %p369 = pneg %p259
        $region50: #{sad_forward.1} parent=11 // pred_check_branch
          %371 = sbr.rel (%p369) target = $region52
        $region51: #{sad_forward.1} parent=11 // pred_region
          _
        $region52: #{sad_forward.1} parent=11 // pred_fallthru
          _
        // Predicated region
        $region53: #{sad_forward.1} parent=11 // pred_check
          %p372 = pneg %p280
        $region54: #{sad_forward.1} parent=11 // pred_check_branch
          %374 = sbr.rel (%p372) target = $region56
        $region55: #{sad_forward.1} parent=11 // pred_region
          _
        $region56: #{sad_forward.1} parent=11 // pred_fallthru
          _
        // Predicated region
        $region57: #{sad_forward.1} parent=11 // pred_check
          %p375 = pneg %p301
        $region58: #{sad_forward.1} parent=11 // pred_check_branch
          %377 = sbr.rel (%p375) target = $region60
        $region59: #{sad_forward.1} parent=11 // pred_region
          _
        $region60: #{sad_forward.1} parent=11 // pred_fallthru
          _
      $region12: #{sad_forward.1} parent=5 // pred_fallthru
        _
      %p378 = scmp.lt.s32.totalorder %s23, 2
      // Predicated region
      $region61: #{sad_forward.1} parent=5 // pred_check
        %p379 = pneg %p378
      $region62: #{sad_forward.1} parent=5 // pred_check_branch
        %381 = sbr.rel (%p379) target = $region64
      $region63: #{sad_forward.1} parent=5 // pred_region
        // Predicated region
        $region65: #{sad_forward.1} parent=63 // pred_check
          %p382 = pneg %p43
        $region66: #{sad_forward.1} parent=63 // pred_check_branch
          %384 = sbr.rel (%p382) target = $region68
        $region67: #{sad_forward.1} parent=63 // pred_region
          %p385 = scmp.lt.s32.totalorder %s23, 1
          %s386 = scalar_select %p385, %s23, 1
          %s387 = smul.addr %s386, 2
          %s388 = smul.addr %s387, 8
          %s389 = scalar_lea.vmem %s0, %s388
        $region68: #{sad_forward.1} parent=63 // pred_fallthru
          _
      $region64: #{sad_forward.1} parent=5 // pred_fallthru
        _
      %p390 = scmp.le.s32.totalorder 1, %s23
      %p391 = scmp.lt.s32.totalorder %s23, 3
      %p392 = pnand %p390, %p391
      %p393 = pneg %p392
      // Predicated region
      $region69: #{sad_forward.1} parent=5 // pred_check
        _
      $region70: #{sad_forward.1} parent=5 // pred_check_branch
        %395 = sbr.rel (%p392) target = $region72
      $region71: #{sad_forward.1} parent=5 // pred_region
        %s396 = ssub.s32 %s23, 1
        %p397 = scmp.lt.s32.totalorder %s28, 1
        %s398 = scalar_select %p397, %s28, 1
        %s399 = smul.addr %s398, 2
        %s400 = smul.addr %s399, 8
        %s401 = scalar_lea.vmem %s0, %s400
        %p402 = pneg %p49
        %p403 = pneg %p46
        %p404 = pneg %p70
        %p405 = pneg %p67
        %p406 = pneg %p91
        %p407 = pneg %p88
        %p408 = pneg %p112
        %p409 = pneg %p109
        %p410 = pneg %p133
        %p411 = pneg %p130
        %p412 = pneg %p154
        %p413 = pneg %p151
        %p414 = pneg %p175
        %p415 = pneg %p172
        %p416 = pneg %p196
        %p417 = pneg %p193
        %p418 = pneg %p217
        %p419 = pneg %p214
        %p420 = pneg %p238
        %p421 = pneg %p235
        %p422 = pneg %p259
        %p423 = pneg %p256
        %p424 = pneg %p280
        %p425 = pneg %p277
        %p426 = pneg %p301
        %p427 = pneg %p298
        %p428 = pneg %p327
        %p429 = pneg %p324
        %s430 = sand.u32 %s314, 1
        %s431 = scalar_lea.sflag [#allocation4], %s430
        %s432 = sand.u32 %s314, 1
        %s433 = scalar_lea.vmem [#allocation3], %s432
        %p434 = scmp.lt.s32.totalorder %s28, 1
        %s435 = scalar_select %p434, %s28, 1
        %s436 = smul.addr %s435, 2
        %s437 = smul.addr %s436, 8
        %s438 = scalar_lea.vmem %s0, %s437
        %v439 = vld [vmem:[%s438] sm:$0xff]
        %v440 = vld [vmem:[%s438 + $0x8] sm:$0xff]
        %v441 = vld [vmem:[%s1] sm:$0xff]
        %v442 = vld [vmem:[%s1 + $0x8] sm:$0xff]
        %v443 = vld [vmem:[%s2] sm:$0x1]
        %v444 = vlaneseq
        %v445 = vshrl.u32 %v444, 7
        %v446 = vsub.s32 0, %v445
        %v447 = vrot.slane %v443, %v446
        %vm448 = vcmask 130048
        %v450 = vsel %vm448, %v439, 0
        %v453 = vsel %vm448, %v440, 0
        %455 = vmatprep.subr.mxu0 0.0
        %456 = vmatpush1.msra.mxu0 0.0
        %457 = vmatprep.subr.mxu0 0.0
        %458 = vmatpush1.msra.mxu0 0.0
        %459 = vmatprep.subr.mxu0 0.0
        %460 = vmatpush1.msra.mxu0 0.0
        %461 = vmatprep.subr.mxu0 0.0
        %462 = vmatpush1.msra.mxu0 0.0
        %463 = vmatprep.subr.mxu0 0.0
        %464 = vmatpush1.msra.mxu0 0.0
        %465 = vmatprep.subr.mxu0 0.0
        %466 = vmatpush1.msra.mxu0 0.0
        %467 = vmatprep.subr.mxu0 0.0
        %468 = vmatpush1.msra.mxu0 0.0
        %469 = vmatprep.subr.mxu0 0.0
        %470 = vmatpush1.msra.mxu0 0.0
        %471 = vmatprep.subr.mxu0 0.0
        %472 = vmatpush1.msra.mxu0 0.0
        %473 = vmatprep.subr.mxu0 0.0
        %474 = vmatpush1.msra.mxu0 0.0
        %475 = vmatprep.subr.mxu0 0.0
        %476 = vmatpush1.msra.mxu0 0.0
        %477 = vmatprep.subr.mxu0 0.0
        %478 = vmatpush1.msra.mxu0 0.0
        %479 = vmatprep.subr.mxu0 0.0
        %480 = vmatpush1.msra.mxu0 0.0
        %481 = vmatprep.subr.mxu0 0.0
        %482 = vmatpush1.msra.mxu0 0.0
        %483 = vmatprep.subr.mxu0 0.0
        %484 = vmatpush1.msra.mxu0 %v442
        %485 = vmatprep.subr.mxu0 0.0
        %486 = vmatpush1.msra.mxu0 %v441
        %487 = vmatprep.subr.mxu0 0.0
        %488 = vmatpush2.msra.mxu0 0.0
        %489 = vmatprep.subr.mxu0 0.0
        %490 = vmatpush2.msra.mxu0 0.0
        %491 = vmatprep.subr.mxu0 0.0
        %492 = vmatpush2.msra.mxu0 0.0
        %493 = vmatprep.subr.mxu0 0.0
        %494 = vmatpush2.msra.mxu0 0.0
        %495 = vmatprep.subr.mxu0 0.0
        %496 = vmatpush2.msra.mxu0 0.0
        %497 = vmatprep.subr.mxu0 0.0
        %498 = vmatpush2.msra.mxu0 0.0
        %499 = vmatprep.subr.mxu0 0.0
        %500 = vmatpush2.msra.mxu0 0.0
        %501 = vmatprep.subr.mxu0 0.0
        %502 = vmatpush2.msra.mxu0 0.0
        %503 = vmatprep.subr.mxu0 0.0
        %504 = vmatpush2.msra.mxu0 0.0
        %505 = vmatprep.subr.mxu0 0.0
        %506 = vmatpush2.msra.mxu0 0.0
        %507 = vmatprep.subr.mxu0 0.0
        %508 = vmatpush2.msra.mxu0 0.0
        %509 = vmatprep.subr.mxu0 0.0
        %510 = vmatpush2.msra.mxu0 0.0
        %511 = vmatprep.subr.mxu0 0.0
        %512 = vmatpush2.msra.mxu0 0.0
        %513 = vmatprep.subr.mxu0 0.0
        %514 = vmatpush2.msra.mxu0 0.0
        %515 = vmatprep.subr.mxu0 0.0
        %516 = vmatpush2.msra.mxu0 0.0
        %517 = vmatprep.subr.mxu0 0.0
        %518 = vmatpush2.msra.mxu0 0.0
        %519 = vmatprep.mubr.f32.mxu0 0.0
        %520 = vmatmul.mubr.f32.gmra.mxu0 %v450
        %v521 = vpop.f32.mrf.mxu0
        %v522 = vadd.f32 %v447, %v521
        %v523 = vpop.f32.mrf.mxu0
        %524 = vmatprep.mubr.f32.mxu0 0.0
        %525 = vmatmul.mubr.f32.gmra.mxu0 %v453
        %v526 = vpop.f32.mrf.mxu0
        %v527 = vadd.f32 %v447, %v526
        %v528 = vpop.f32.mrf.mxu0
        %529 = vdwg.mxu0
        %v530 = vld [vmem:[%s2 + $0x1] sm:$0x1]
        %v531 = vld [vmem:[%s2 + $0x2] sm:$0x1]
        %vm532 = vcmask 261120
        %v533 = vsel %vm532, %v522, 0.0
        %534 = vadd.xlane.f32.xlu0 %v533
        %v535 = vpop.xlane.xlu0 %534
        %v536 = vsel %vm532, %v527, 0.0
        %537 = vadd.xlane.f32.xlu0 %v536
        %v538 = vpop.xlane.xlu0 %537
        %v539 = vrcp.pop 32.0
        %v540 = vmul.f32 %v535, %v539
        %v541 = vmul.f32 %v538, %v539
        %v542 = vsub.f32 %v522, %v540
        %v543 = vsub.f32 %v527, %v541
        %v544 = vmul.f32 %v542, %v542
        %v545 = vmul.f32 %v543, %v543
        %v546 = vsel %vm532, %v544, 0.0
        %547 = vadd.xlane.f32.xlu0 %v546
        %v548 = vpop.xlane.xlu0 %547
        %v549 = vsel %vm532, %v545, 0.0
        %550 = vadd.xlane.f32.xlu0 %v549
        %v551 = vpop.xlane.xlu0 %550
        %v552 = vmul.f32 %v548, %v539
        %v553 = vmul.f32 %v551, %v539
        %v554 = vadd.f32 %v552, 1e-05
        %v555 = vadd.f32 %v553, 1e-05
        %v556 = vrsqrt.pop %v554
        %v557 = vrsqrt.pop %v555
        %v558 = vmul.f32 %v542, %v556
        %v559 = vmul.f32 %v543, %v557
        %v560 = vlaneseq
        %v561 = vshrl.u32 %v560, 7
        %v562 = vsub.s32 0, %v561
        %v563 = vrot.slane %v530, %v562
        %v564 = vmul.f32 %v558, %v563
        %v565 = vmul.f32 %v559, %v563
        %v566 = vlaneseq
        %v567 = vshrl.u32 %v566, 7
        %v568 = vsub.s32 0, %v567
        %v569 = vrot.slane %v531, %v568
        %v570 = vadd.f32 %v564, %v569
        %v571 = vadd.f32 %v565, %v569
        %v572 = vld [vmem:[%s2 + $0x3] sm:$0x1]
        %v573 = vld [vmem:[%s2 + $0x4] sm:$0x1]
        %v574 = vsel %vm532, %v570, 0.0
        %575 = vadd.xlane.f32.xlu0 %v574
        %v576 = vpop.xlane.xlu0 %575
        %v577 = vsel %vm532, %v571, 0.0
        %578 = vadd.xlane.f32.xlu0 %v577
        %v579 = vpop.xlane.xlu0 %578
        %v580 = vmul.f32 %v576, %v539
        %v581 = vmul.f32 %v579, %v539
        %v582 = vsub.f32 %v570, %v580
        %v583 = vsub.f32 %v571, %v581
        %v584 = vmul.f32 %v582, %v582
        %v585 = vmul.f32 %v583, %v583
        %v586 = vsel %vm532, %v584, 0.0
        %587 = vadd.xlane.f32.xlu0 %v586
        %v588 = vpop.xlane.xlu0 %587
        %v589 = vsel %vm532, %v585, 0.0
        %590 = vadd.xlane.f32.xlu0 %v589
        %v591 = vpop.xlane.xlu0 %590
        %v592 = vmul.f32 %v588, %v539
        %v593 = vmul.f32 %v591, %v539
        %v594 = vadd.f32 %v592, 1e-05
        %v595 = vadd.f32 %v593, 1e-05
        %v596 = vrsqrt.pop %v594
        %v597 = vrsqrt.pop %v595
        %v598 = vmul.f32 %v582, %v596
        %v599 = vmul.f32 %v583, %v597
        %v600 = vlaneseq
        %v601 = vshrl.u32 %v600, 7
        %v602 = vsub.s32 0, %v601
        %v603 = vrot.slane %v572, %v602
        %v604 = vmul.f32 %v598, %v603
        %v605 = vmul.f32 %v599, %v603
        %v606 = vlaneseq
        %v607 = vshrl.u32 %v606, 7
        %v608 = vsub.s32 0, %v607
        %v609 = vrot.slane %v573, %v608
        %v610 = vadd.f32 %v604, %v609
        %v611 = vadd.f32 %v605, %v609
        %v612 = vld [vmem:[%s3] sm:$0xff]
        %v613 = vld [vmem:[%s3 + $0x8] sm:$0xff]
        %v614 = vld [vmem:[%s3 + $0x10] sm:$0xff]
        %v615 = vld [vmem:[%s3 + $0x18] sm:$0xff]
        %v616 = vld [vmem:[%s4] sm:$0x1]
        %v617 = vlaneseq
        %v618 = vshrl.u32 %v617, 7
        %v619 = vsub.s32 0, %v618
        %v620 = vrot.slane %v616, %v619
        %v622 = vsel %vm532, %v610, 0
        %v625 = vsel %vm532, %v611, 0
        %627 = vmatprep.subr.mxu0 0.0
        %628 = vmatpush1.msra.mxu0 0.0
        %629 = vmatprep.subr.mxu0 0.0
        %630 = vmatpush1.msra.mxu0 0.0
        %631 = vmatprep.subr.mxu0 0.0
        %632 = vmatpush1.msra.mxu0 0.0
        %633 = vmatprep.subr.mxu0 0.0
        %634 = vmatpush1.msra.mxu0 0.0
        %635 = vmatprep.subr.mxu0 0.0
        %636 = vmatpush1.msra.mxu0 0.0
        %637 = vmatprep.subr.mxu0 0.0
        %638 = vmatpush1.msra.mxu0 0.0
        %639 = vmatprep.subr.mxu0 0.0
        %640 = vmatpush1.msra.mxu0 0.0
        %641 = vmatprep.subr.mxu0 0.0
        %642 = vmatpush1.msra.mxu0 0.0
        %643 = vmatprep.subr.mxu0 0.0
        %644 = vmatpush1.msra.mxu0 0.0
        %645 = vmatprep.subr.mxu0 0.0
        %646 = vmatpush1.msra.mxu0 0.0
        %647 = vmatprep.subr.mxu0 0.0
        %648 = vmatpush1.msra.mxu0 0.0
        %649 = vmatprep.subr.mxu0 0.0
        %650 = vmatpush1.msra.mxu0 0.0
        %651 = vmatprep.subr.mxu0 0.0
        %652 = vmatpush1.msra.mxu0 %v615
        %653 = vmatprep.subr.mxu0 0.0
        %654 = vmatpush1.msra.mxu0 %v614
        %655 = vmatprep.subr.mxu0 0.0
        %656 = vmatpush1.msra.mxu0 %v613
        %657 = vmatprep.subr.mxu0 0.0
        %658 = vmatpush1.msra.mxu0 %v612
        %659 = vmatprep.subr.mxu0 0.0
        %660 = vmatpush2.msra.mxu0 0.0
        %661 = vmatprep.subr.mxu0 0.0
        %662 = vmatpush2.msra.mxu0 0.0
        %663 = vmatprep.subr.mxu0 0.0
        %664 = vmatpush2.msra.mxu0 0.0
        %665 = vmatprep.subr.mxu0 0.0
        %666 = vmatpush2.msra.mxu0 0.0
        %667 = vmatprep.subr.mxu0 0.0
        %668 = vmatpush2.msra.mxu0 0.0
        %669 = vmatprep.subr.mxu0 0.0
        %670 = vmatpush2.msra.mxu0 0.0
        %671 = vmatprep.subr.mxu0 0.0
        %672 = vmatpush2.msra.mxu0 0.0
        %673 = vmatprep.subr.mxu0 0.0
        %674 = vmatpush2.msra.mxu0 0.0
        %675 = vmatprep.subr.mxu0 0.0
        %676 = vmatpush2.msra.mxu0 0.0
        %677 = vmatprep.subr.mxu0 0.0
        %678 = vmatpush2.msra.mxu0 0.0
        %679 = vmatprep.subr.mxu0 0.0
        %680 = vmatpush2.msra.mxu0 0.0
        %681 = vmatprep.subr.mxu0 0.0
        %682 = vmatpush2.msra.mxu0 0.0
        %683 = vmatprep.subr.mxu0 0.0
        %684 = vmatpush2.msra.mxu0 0.0
        %685 = vmatprep.subr.mxu0 0.0
        %686 = vmatpush2.msra.mxu0 0.0
        %687 = vmatprep.subr.mxu0 0.0
        %688 = vmatpush2.msra.mxu0 0.0
        %689 = vmatprep.subr.mxu0 0.0
        %690 = vmatpush2.msra.mxu0 0.0
        %691 = vmatprep.mubr.f32.mxu0 0.0
        %692 = vmatmul.mubr.f32.gmra.mxu0 %v622
        %v693 = vpop.f32.mrf.mxu0
        %v694 = vadd.f32 %v620, %v693
        %v695 = vpop.f32.mrf.mxu0
        %696 = vmatprep.mubr.f32.mxu0 0.0
        %697 = vmatmul.mubr.f32.gmra.mxu0 %v625
        %v698 = vpop.f32.mrf.mxu0
        %v699 = vadd.f32 %v620, %v698
        %v700 = vpop.f32.mrf.mxu0
        %701 = vdwg.mxu0
        %v702 = vxor.u32 %v694, 2147483648
        %v703 = vxor.u32 %v699, 2147483648
        %v704 = vmul.f32 %v702, 1.442695
        %v705 = vpow.pop %v704
        %v706 = vmul.f32 %v703, 1.442695
        %v707 = vpow.pop %v706
        %v708 = vadd.f32 %v705, 1.0
        %v709 = vadd.f32 %v707, 1.0
        %v710 = vrcp.pop %v708
        %v711 = vmul.f32 1.0, %v710
        %v712 = vrcp.pop %v709
        %v713 = vmul.f32 1.0, %v712
        %v714 = vmul.f32 %v694, %v711
        %v715 = vmul.f32 %v699, %v713
        %v716 = vld [vmem:[%s5] sm:$0xff]
        %v717 = vld [vmem:[%s5 + $0x8] sm:$0xff]
        %v718 = vld [vmem:[%s5 + $0x10] sm:$0xff]
        %v719 = vld [vmem:[%s5 + $0x18] sm:$0xff]
        %v720 = vld [vmem:[%s5 + $0x20] sm:$0xff]
        %v721 = vld [vmem:[%s5 + $0x28] sm:$0xff]
        %v722 = vld [vmem:[%s5 + $0x30] sm:$0xff]
        %v723 = vld [vmem:[%s5 + $0x38] sm:$0xff]
        %v724 = vld [vmem:[%s5 + $0x40] sm:$0xff]
        %v725 = vld [vmem:[%s5 + $0x48] sm:$0xff]
        %v726 = vld [vmem:[%s5 + $0x50] sm:$0xff]
        %v727 = vld [vmem:[%s5 + $0x58] sm:$0xff]
        %v728 = vld [vmem:[%s5 + $0x60] sm:$0xff]
        %v729 = vld [vmem:[%s5 + $0x68] sm:$0xff]
        %v730 = vld [vmem:[%s5 + $0x70] sm:$0xff]
        %v731 = vld [vmem:[%s5 + $0x78] sm:$0xff]
        %v732 = vld [vmem:[%s2 + $0x5] sm:$0x1]
        %v733 = vlaneseq
        %v734 = vshrl.u32 %v733, 7
        %v735 = vsub.s32 0, %v734
        %v736 = vrot.slane %v732, %v735
        %737 = vmatprep.subr.mxu0 0.0
        %738 = vmatpush1.msra.mxu0 %v731
        %739 = vmatprep.subr.mxu0 0.0
        %740 = vmatpush1.msra.mxu0 %v730
        %741 = vmatprep.subr.mxu0 0.0
        %742 = vmatpush1.msra.mxu0 %v729
        %743 = vmatprep.subr.mxu0 0.0
        %744 = vmatpush1.msra.mxu0 %v728
        %745 = vmatprep.subr.mxu0 0.0
        %746 = vmatpush1.msra.mxu0 %v727
        %747 = vmatprep.subr.mxu0 0.0
        %748 = vmatpush1.msra.mxu0 %v726
        %749 = vmatprep.subr.mxu0 0.0
        %750 = vmatpush1.msra.mxu0 %v725
        %751 = vmatprep.subr.mxu0 0.0
        %752 = vmatpush1.msra.mxu0 %v724
        %753 = vmatprep.subr.mxu0 0.0
        %754 = vmatpush1.msra.mxu0 %v723
        %755 = vmatprep.subr.mxu0 0.0
        %756 = vmatpush1.msra.mxu0 %v722
        %757 = vmatprep.subr.mxu0 0.0
        %758 = vmatpush1.msra.mxu0 %v721
        %759 = vmatprep.subr.mxu0 0.0
        %760 = vmatpush1.msra.mxu0 %v720
        %761 = vmatprep.subr.mxu0 0.0
        %762 = vmatpush1.msra.mxu0 %v719
        %763 = vmatprep.subr.mxu0 0.0
        %764 = vmatpush1.msra.mxu0 %v718
        %765 = vmatprep.subr.mxu0 0.0
        %766 = vmatpush1.msra.mxu0 %v717
        %767 = vmatprep.subr.mxu0 0.0
        %768 = vmatpush1.msra.mxu0 %v716
        %769 = vmatprep.subr.mxu0 0.0
        %770 = vmatpush2.msra.mxu0 0.0
        %771 = vmatprep.subr.mxu0 0.0
        %772 = vmatpush2.msra.mxu0 0.0
        %773 = vmatprep.subr.mxu0 0.0
        %774 = vmatpush2.msra.mxu0 0.0
        %775 = vmatprep.subr.mxu0 0.0
        %776 = vmatpush2.msra.mxu0 0.0
        %777 = vmatprep.subr.mxu0 0.0
        %778 = vmatpush2.msra.mxu0 0.0
        %779 = vmatprep.subr.mxu0 0.0
        %780 = vmatpush2.msra.mxu0 0.0
        %781 = vmatprep.subr.mxu0 0.0
        %782 = vmatpush2.msra.mxu0 0.0
        %783 = vmatprep.subr.mxu0 0.0
        %784 = vmatpush2.msra.mxu0 0.0
        %785 = vmatprep.subr.mxu0 0.0
        %786 = vmatpush2.msra.mxu0 0.0
        %787 = vmatprep.subr.mxu0 0.0
        %788 = vmatpush2.msra.mxu0 0.0
        %789 = vmatprep.subr.mxu0 0.0
        %790 = vmatpush2.msra.mxu0 0.0
        %791 = vmatprep.subr.mxu0 0.0
        %792 = vmatpush2.msra.mxu0 0.0
        %793 = vmatprep.subr.mxu0 0.0
        %794 = vmatpush2.msra.mxu0 0.0
        %795 = vmatprep.subr.mxu0 0.0
        %796 = vmatpush2.msra.mxu0 0.0
        %797 = vmatprep.subr.mxu0 0.0
        %798 = vmatpush2.msra.mxu0 0.0
        %799 = vmatprep.subr.mxu0 0.0
        %800 = vmatpush2.msra.mxu0 0.0
        %801 = vmatprep.mubr.f32.mxu0 0.0
        %802 = vmatmul.mubr.f32.gmra.mxu0 %v714
        %v803 = vpop.f32.mrf.mxu0
        %v804 = vadd.f32 %v736, %v803
        %v805 = vpop.f32.mrf.mxu0
        %806 = vmatprep.mubr.f32.mxu0 0.0
        %807 = vmatmul.mubr.f32.gmra.mxu0 %v715
        %v808 = vpop.f32.mrf.mxu0
        %v809 = vadd.f32 %v736, %v808
        %v810 = vpop.f32.mrf.mxu0
        %811 = vdwg.mxu0
        %v812 = vmul.f32 %v804, 0.5
        %v813 = vmul.f32 %v809, 0.5
        %v814 = vadd.f32 %v570, %v812
        %v815 = vadd.f32 %v571, %v813
        %v816 = vld [vmem:[%s2 + $0x6] sm:$0x1]
        %v817 = vld [vmem:[%s2 + $0x7] sm:$0x1]
        %v818 = vsel %vm532, %v814, 0.0
        %819 = vadd.xlane.f32.xlu0 %v818
        %v820 = vpop.xlane.xlu0 %819
        %v821 = vsel %vm532, %v815, 0.0
        %822 = vadd.xlane.f32.xlu0 %v821
        %v823 = vpop.xlane.xlu0 %822
        %v824 = vmul.f32 %v820, %v539
        %v825 = vmul.f32 %v823, %v539
        %v826 = vsub.f32 %v814, %v824
        %v827 = vsub.f32 %v815, %v825
        %v828 = vmul.f32 %v826, %v826
        %v829 = vmul.f32 %v827, %v827
        %v830 = vsel %vm532, %v828, 0.0
        %831 = vadd.xlane.f32.xlu0 %v830
        %v832 = vpop.xlane.xlu0 %831
        %v833 = vsel %vm532, %v829, 0.0
        %834 = vadd.xlane.f32.xlu0 %v833
        %v835 = vpop.xlane.xlu0 %834
        %v836 = vmul.f32 %v832, %v539
        %v837 = vmul.f32 %v835, %v539
        %v838 = vadd.f32 %v836, 1e-05
        %v839 = vadd.f32 %v837, 1e-05
        %v840 = vrsqrt.pop %v838
        %v841 = vrsqrt.pop %v839
        %v842 = vmul.f32 %v826, %v840
        %v843 = vmul.f32 %v827, %v841
        %v844 = vlaneseq
        %v845 = vshrl.u32 %v844, 7
        %v846 = vsub.s32 0, %v845
        %v847 = vrot.slane %v816, %v846
        %v848 = vmul.f32 %v842, %v847
        %v849 = vmul.f32 %v843, %v847
        %v850 = vlaneseq
        %v851 = vshrl.u32 %v850, 7
        %v852 = vsub.s32 0, %v851
        %v853 = vrot.slane %v817, %v852
        %v854 = vadd.f32 %v848, %v853
        %v855 = vadd.f32 %v849, %v853
        %v856 = vld [vmem:[%s2 + $0x8] sm:$0x1]
        %v857 = vlaneseq
        %v858 = vshrl.u32 %v857, 7
        %v859 = vsub.s32 0, %v858
        %v860 = vrot.slane %v856, %v859
        %v861 = vadd.f32 %v860, 0.0
        %v862 = vld [vmem:[%s6] sm:$0xff]
        %v863 = vld [vmem:[%s6 + $0x8] sm:$0xff]
        %v864 = vld [vmem:[%s6 + $0x10] sm:$0xff]
        %v865 = vld [vmem:[%s6 + $0x18] sm:$0xff]
        %v866 = vld [vmem:[%s7] sm:$0x1]
        %v867 = vlaneseq
        %v868 = vshrl.u32 %v867, 7
        %v869 = vsub.s32 0, %v868
        %v870 = vrot.slane %v866, %v869
        %v872 = vsel %vm532, %v854, 0
        %v875 = vsel %vm532, %v855, 0
        %877 = vmatprep.subr.mxu0 0.0
        %878 = vmatpush1.msra.mxu0 0.0
        %879 = vmatprep.subr.mxu0 0.0
        %880 = vmatpush1.msra.mxu0 0.0
        %881 = vmatprep.subr.mxu0 0.0
        %882 = vmatpush1.msra.mxu0 0.0
        %883 = vmatprep.subr.mxu0 0.0
        %884 = vmatpush1.msra.mxu0 0.0
        %885 = vmatprep.subr.mxu0 0.0
        %886 = vmatpush1.msra.mxu0 0.0
        %887 = vmatprep.subr.mxu0 0.0
        %888 = vmatpush1.msra.mxu0 0.0
        %889 = vmatprep.subr.mxu0 0.0
        %890 = vmatpush1.msra.mxu0 0.0
        %891 = vmatprep.subr.mxu0 0.0
        %892 = vmatpush1.msra.mxu0 0.0
        %893 = vmatprep.subr.mxu0 0.0
        %894 = vmatpush1.msra.mxu0 0.0
        %895 = vmatprep.subr.mxu0 0.0
        %896 = vmatpush1.msra.mxu0 0.0
        %897 = vmatprep.subr.mxu0 0.0
        %898 = vmatpush1.msra.mxu0 0.0
        %899 = vmatprep.subr.mxu0 0.0
        %900 = vmatpush1.msra.mxu0 0.0
        %901 = vmatprep.subr.mxu0 0.0
        %902 = vmatpush1.msra.mxu0 %v865
        %903 = vmatprep.subr.mxu0 0.0
        %904 = vmatpush1.msra.mxu0 %v864
        %905 = vmatprep.subr.mxu0 0.0
        %906 = vmatpush1.msra.mxu0 %v863
        %907 = vmatprep.subr.mxu0 0.0
        %908 = vmatpush1.msra.mxu0 %v862
        %909 = vmatprep.subr.mxu0 0.0
        %910 = vmatpush2.msra.mxu0 0.0
        %911 = vmatprep.subr.mxu0 0.0
        %912 = vmatpush2.msra.mxu0 0.0
        %913 = vmatprep.subr.mxu0 0.0
        %914 = vmatpush2.msra.mxu0 0.0
        %915 = vmatprep.subr.mxu0 0.0
        %916 = vmatpush2.msra.mxu0 0.0
        %917 = vmatprep.subr.mxu0 0.0
        %918 = vmatpush2.msra.mxu0 0.0
        %919 = vmatprep.subr.mxu0 0.0
        %920 = vmatpush2.msra.mxu0 0.0
        %921 = vmatprep.subr.mxu0 0.0
        %922 = vmatpush2.msra.mxu0 0.0
        %923 = vmatprep.subr.mxu0 0.0
        %924 = vmatpush2.msra.mxu0 0.0
        %925 = vmatprep.subr.mxu0 0.0
        %926 = vmatpush2.msra.mxu0 0.0
        %927 = vmatprep.subr.mxu0 0.0
        %928 = vmatpush2.msra.mxu0 0.0
        %929 = vmatprep.subr.mxu0 0.0
        %930 = vmatpush2.msra.mxu0 0.0
        %931 = vmatprep.subr.mxu0 0.0
        %932 = vmatpush2.msra.mxu0 0.0
        %933 = vmatprep.subr.mxu0 0.0
        %934 = vmatpush2.msra.mxu0 0.0
        %935 = vmatprep.subr.mxu0 0.0
        %936 = vmatpush2.msra.mxu0 0.0
        %937 = vmatprep.subr.mxu0 0.0
        %938 = vmatpush2.msra.mxu0 0.0
        %939 = vmatprep.subr.mxu0 0.0
        %940 = vmatpush2.msra.mxu0 0.0
        %941 = vmatprep.mubr.f32.mxu0 0.0
        %942 = vmatmul.mubr.f32.gmra.mxu0 %v872
        %v943 = vpop.f32.mrf.mxu0
        %v944 = vadd.f32 %v870, %v943
        %v945 = vpop.f32.mrf.mxu0
        %946 = vmatprep.mubr.f32.mxu0 0.0
        %947 = vmatmul.mubr.f32.gmra.mxu0 %v875
        %v948 = vpop.f32.mrf.mxu0
        %v949 = vadd.f32 %v870, %v948
        %v950 = vpop.f32.mrf.mxu0
        %951 = vdwg.mxu0
        %v952 = vmul.f32 %v944, 0.35355338
        %v953 = vmul.f32 %v949, 0.35355338
        %s954 = scalar_lea.vmem %s6, 128
        %v955 = vld [vmem:[%s954] sm:$0xff]
        %v956 = vld [vmem:[%s954 + $0x8] sm:$0xff]
        %v957 = vld [vmem:[%s954 + $0x10] sm:$0xff]
        %v958 = vld [vmem:[%s954 + $0x18] sm:$0xff]
        %v959 = vld [vmem:[%s7 + $0x4] sm:$0x1]
        %v960 = vlaneseq
        %v961 = vshrl.u32 %v960, 7
        %v962 = vsub.s32 0, %v961
        %v963 = vrot.slane %v959, %v962
        %964 = vmatprep.subr.mxu0 0.0
        %965 = vmatpush1.msra.mxu0 0.0
        %966 = vmatprep.subr.mxu0 0.0
        %967 = vmatpush1.msra.mxu0 0.0
        %968 = vmatprep.subr.mxu0 0.0
        %969 = vmatpush1.msra.mxu0 0.0
        %970 = vmatprep.subr.mxu0 0.0
        %971 = vmatpush1.msra.mxu0 0.0
        %972 = vmatprep.subr.mxu0 0.0
        %973 = vmatpush1.msra.mxu0 0.0
        %974 = vmatprep.subr.mxu0 0.0
        %975 = vmatpush1.msra.mxu0 0.0
        %976 = vmatprep.subr.mxu0 0.0
        %977 = vmatpush1.msra.mxu0 0.0
        %978 = vmatprep.subr.mxu0 0.0
        %979 = vmatpush1.msra.mxu0 0.0
        %980 = vmatprep.subr.mxu0 0.0
        %981 = vmatpush1.msra.mxu0 0.0
        %982 = vmatprep.subr.mxu0 0.0
        %983 = vmatpush1.msra.mxu0 0.0
        %984 = vmatprep.subr.mxu0 0.0
        %985 = vmatpush1.msra.mxu0 0.0
        %986 = vmatprep.subr.mxu0 0.0
        %987 = vmatpush1.msra.mxu0 0.0
        %988 = vmatprep.subr.mxu0 0.0
        %989 = vmatpush1.msra.mxu0 %v958
        %990 = vmatprep.subr.mxu0 0.0
        %991 = vmatpush1.msra.mxu0 %v957
        %992 = vmatprep.subr.mxu0 0.0
        %993 = vmatpush1.msra.mxu0 %v956
        %994 = vmatprep.subr.mxu0 0.0
        %995 = vmatpush1.msra.mxu0 %v955
        %996 = vmatprep.subr.mxu0 0.0
        %997 = vmatpush2.msra.mxu0 0.0
        %998 = vmatprep.subr.mxu0 0.0
        %999 = vmatpush2.msra.mxu0 0.0
        %1000 = vmatprep.subr.mxu0 0.0
        %1001 = vmatpush2.msra.mxu0 0.0
        %1002 = vmatprep.subr.mxu0 0.0
        %1003 = vmatpush2.msra.mxu0 0.0
        %1004 = vmatprep.subr.mxu0 0.0
        %1005 = vmatpush2.msra.mxu0 0.0
        %1006 = vmatprep.subr.mxu0 0.0
        %1007 = vmatpush2.msra.mxu0 0.0
        %1008 = vmatprep.subr.mxu0 0.0
        %1009 = vmatpush2.msra.mxu0 0.0
        %1010 = vmatprep.subr.mxu0 0.0
        %1011 = vmatpush2.msra.mxu0 0.0
        %1012 = vmatprep.subr.mxu0 0.0
        %1013 = vmatpush2.msra.mxu0 0.0
        %1014 = vmatprep.subr.mxu0 0.0
        %1015 = vmatpush2.msra.mxu0 0.0
        %1016 = vmatprep.subr.mxu0 0.0
        %1017 = vmatpush2.msra.mxu0 0.0
        %1018 = vmatprep.subr.mxu0 0.0
        %1019 = vmatpush2.msra.mxu0 0.0
        %1020 = vmatprep.subr.mxu0 0.0
        %1021 = vmatpush2.msra.mxu0 0.0
        %1022 = vmatprep.subr.mxu0 0.0
        %1023 = vmatpush2.msra.mxu0 0.0
        %1024 = vmatprep.subr.mxu0 0.0
        %1025 = vmatpush2.msra.mxu0 0.0
        %1026 = vmatprep.subr.mxu0 0.0
        %1027 = vmatpush2.msra.mxu0 0.0
        %1028 = vmatprep.mubr.f32.mxu0 0.0
        %1029 = vmatmul.mubr.f32.gmra.mxu0 %v872
        %v1030 = vpop.f32.mrf.mxu0
        %v1031 = vadd.f32 %v963, %v1030
        %v1032 = vpop.f32.mrf.mxu0
        %1033 = vmatprep.mubr.f32.mxu0 0.0
        %1034 = vmatmul.mubr.f32.gmra.mxu0 %v875
        %v1035 = vpop.f32.mrf.mxu0
        %v1036 = vadd.f32 %v963, %v1035
        %v1037 = vpop.f32.mrf.mxu0
        %1038 = vdwg.mxu0
        %s1039 = scalar_lea.vmem %s6, 256
        %v1040 = vld [vmem:[%s1039] sm:$0xff]
        %v1041 = vld [vmem:[%s1039 + $0x8] sm:$0xff]
        %v1042 = vld [vmem:[%s1039 + $0x10] sm:$0xff]
        %v1043 = vld [vmem:[%s1039 + $0x18] sm:$0xff]
        %v1044 = vld [vmem:[%s7 + $0x8] sm:$0x1]
        %v1045 = vlaneseq
        %v1046 = vshrl.u32 %v1045, 7
        %v1047 = vsub.s32 0, %v1046
        %v1048 = vrot.slane %v1044, %v1047
        %1049 = vmatprep.subr.mxu0 0.0
        %1050 = vmatpush1.msra.mxu0 0.0
        %1051 = vmatprep.subr.mxu0 0.0
        %1052 = vmatpush1.msra.mxu0 0.0
        %1053 = vmatprep.subr.mxu0 0.0
        %1054 = vmatpush1.msra.mxu0 0.0
        %1055 = vmatprep.subr.mxu0 0.0
        %1056 = vmatpush1.msra.mxu0 0.0
        %1057 = vmatprep.subr.mxu0 0.0
        %1058 = vmatpush1.msra.mxu0 0.0
        %1059 = vmatprep.subr.mxu0 0.0
        %1060 = vmatpush1.msra.mxu0 0.0
        %1061 = vmatprep.subr.mxu0 0.0
        %1062 = vmatpush1.msra.mxu0 0.0
        %1063 = vmatprep.subr.mxu0 0.0
        %1064 = vmatpush1.msra.mxu0 0.0
        %1065 = vmatprep.subr.mxu0 0.0
        %1066 = vmatpush1.msra.mxu0 0.0
        %1067 = vmatprep.subr.mxu0 0.0
        %1068 = vmatpush1.msra.mxu0 0.0
        %1069 = vmatprep.subr.mxu0 0.0
        %1070 = vmatpush1.msra.mxu0 0.0
        %1071 = vmatprep.subr.mxu0 0.0
        %1072 = vmatpush1.msra.mxu0 0.0
        %1073 = vmatprep.subr.mxu0 0.0
        %1074 = vmatpush1.msra.mxu0 %v1043
        %1075 = vmatprep.subr.mxu0 0.0
        %1076 = vmatpush1.msra.mxu0 %v1042
        %1077 = vmatprep.subr.mxu0 0.0
        %1078 = vmatpush1.msra.mxu0 %v1041
        %1079 = vmatprep.subr.mxu0 0.0
        %1080 = vmatpush1.msra.mxu0 %v1040
        %1081 = vmatprep.subr.mxu0 0.0
        %1082 = vmatpush2.msra.mxu0 0.0
        %1083 = vmatprep.subr.mxu0 0.0
        %1084 = vmatpush2.msra.mxu0 0.0
        %1085 = vmatprep.subr.mxu0 0.0
        %1086 = vmatpush2.msra.mxu0 0.0
        %1087 = vmatprep.subr.mxu0 0.0
        %1088 = vmatpush2.msra.mxu0 0.0
        %1089 = vmatprep.subr.mxu0 0.0
        %1090 = vmatpush2.msra.mxu0 0.0
        %1091 = vmatprep.subr.mxu0 0.0
        %1092 = vmatpush2.msra.mxu0 0.0
        %1093 = vmatprep.subr.mxu0 0.0
        %1094 = vmatpush2.msra.mxu0 0.0
        %1095 = vmatprep.subr.mxu0 0.0
        %1096 = vmatpush2.msra.mxu0 0.0
        %1097 = vmatprep.subr.mxu0 0.0
        %1098 = vmatpush2.msra.mxu0 0.0
        %1099 = vmatprep.subr.mxu0 0.0
        %1100 = vmatpush2.msra.mxu0 0.0
        %1101 = vmatprep.subr.mxu0 0.0
        %1102 = vmatpush2.msra.mxu0 0.0
        %1103 = vmatprep.subr.mxu0 0.0
        %1104 = vmatpush2.msra.mxu0 0.0
        %1105 = vmatprep.subr.mxu0 0.0
        %1106 = vmatpush2.msra.mxu0 0.0
        %1107 = vmatprep.subr.mxu0 0.0
        %1108 = vmatpush2.msra.mxu0 0.0
        %1109 = vmatprep.subr.mxu0 0.0
        %1110 = vmatpush2.msra.mxu0 0.0
        %1111 = vmatprep.subr.mxu0 0.0
        %1112 = vmatpush2.msra.mxu0 0.0
        %1113 = vmatprep.mubr.f32.mxu0 0.0
        %1114 = vmatmul.mubr.f32.gmra.mxu0 %v872
        %v1115 = vpop.f32.mrf.mxu0
        %v1116 = vadd.f32 %v1048, %v1115
        %v1117 = vpop.f32.mrf.mxu0
        %1118 = vmatprep.mubr.f32.mxu0 0.0
        %1119 = vmatmul.mubr.f32.gmra.mxu0 %v875
        %v1120 = vpop.f32.mrf.mxu0
        %v1121 = vadd.f32 %v1048, %v1120
        %v1122 = vpop.f32.mrf.mxu0
        %1123 = vdwg.mxu0
        %vm1124 = vcmask 64512
        %v1126 = vsel %vm1124, %v952, 0
        %v1129 = vsel %vm1124, %v953, 0
        %v1132 = vsel %vm1124, %v1031, 0
        %v1135 = vsel %vm1124, %v1036, 0
        %1137 = vmatprep.subr.mxu0 0.0
        %1138 = vmatpush1.xpose.msra.mxu0 0.0
        %1139 = vmatprep.subr.mxu0 0.0
        %1140 = vmatpush1.xpose.msra.mxu0 0.0
        %1141 = vmatprep.subr.mxu0 0.0
        %1142 = vmatpush1.xpose.msra.mxu0 0.0
        %1143 = vmatprep.subr.mxu0 0.0
        %1144 = vmatpush1.xpose.msra.mxu0 0.0
        %1145 = vmatprep.subr.mxu0 0.0
        %1146 = vmatpush1.xpose.msra.mxu0 0.0
        %1147 = vmatprep.subr.mxu0 0.0
        %1148 = vmatpush1.xpose.msra.mxu0 0.0
        %1149 = vmatprep.subr.mxu0 0.0
        %1150 = vmatpush1.xpose.msra.mxu0 0.0
        %1151 = vmatprep.subr.mxu0 0.0
        %1152 = vmatpush1.xpose.msra.mxu0 0.0
        %1153 = vmatprep.subr.mxu0 0.0
        %1154 = vmatpush1.xpose.msra.mxu0 0.0
        %1155 = vmatprep.subr.mxu0 0.0
        %1156 = vmatpush1.xpose.msra.mxu0 0.0
        %1157 = vmatprep.subr.mxu0 0.0
        %1158 = vmatpush1.xpose.msra.mxu0 0.0
        %1159 = vmatprep.subr.mxu0 0.0
        %1160 = vmatpush1.xpose.msra.mxu0 0.0
        %1161 = vmatprep.subr.mxu0 0.0
        %1162 = vmatpush1.xpose.msra.mxu0 0.0
        %1163 = vmatprep.subr.mxu0 0.0
        %1164 = vmatpush1.xpose.msra.mxu0 0.0
        %1165 = vmatprep.subr.mxu0 0.0
        %1166 = vmatpush1.xpose.msra.mxu0 %v1135
        %1167 = vmatprep.subr.mxu0 0.0
        %1168 = vmatpush1.xpose.msra.mxu0 %v1132
        %1169 = vmatprep.subr.mxu0 0.0
        %1170 = vmatpush2.xpose.msra.mxu0 0.0
        %1171 = vmatprep.subr.mxu0 0.0
        %1172 = vmatpush2.xpose.msra.mxu0 0.0
        %1173 = vmatprep.subr.mxu0 0.0
        %1174 = vmatpush2.xpose.msra.mxu0 0.0
        %1175 = vmatprep.subr.mxu0 0.0
        %1176 = vmatpush2.xpose.msra.mxu0 0.0
        %1177 = vmatprep.subr.mxu0 0.0
        %1178 = vmatpush2.xpose.msra.mxu0 0.0
        %1179 = vmatprep.subr.mxu0 0.0
        %1180 = vmatpush2.xpose.msra.mxu0 0.0
        %1181 = vmatprep.subr.mxu0 0.0
        %1182 = vmatpush2.xpose.msra.mxu0 0.0
        %1183 = vmatprep.subr.mxu0 0.0
        %1184 = vmatpush2.xpose.msra.mxu0 0.0
        %1185 = vmatprep.subr.mxu0 0.0
        %1186 = vmatpush2.xpose.msra.mxu0 0.0
        %1187 = vmatprep.subr.mxu0 0.0
        %1188 = vmatpush2.xpose.msra.mxu0 0.0
        %1189 = vmatprep.subr.mxu0 0.0
        %1190 = vmatpush2.xpose.msra.mxu0 0.0
        %1191 = vmatprep.subr.mxu0 0.0
        %1192 = vmatpush2.xpose.msra.mxu0 0.0
        %1193 = vmatprep.subr.mxu0 0.0
        %1194 = vmatpush2.xpose.msra.mxu0 0.0
        %1195 = vmatprep.subr.mxu0 0.0
        %1196 = vmatpush2.xpose.msra.mxu0 0.0
        %1197 = vmatprep.subr.mxu0 0.0
        %1198 = vmatpush2.xpose.msra.mxu0 0.0
        %1199 = vmatprep.subr.mxu0 0.0
        %1200 = vmatpush2.xpose.msra.mxu0 0.0
        %1201 = vmatprep.mubr.f32.mxu0 0.0
        %1202 = vmatmul.mubr.f32.gmra.mxu0 %v1126
        %v1203 = vpop.f32.mrf.mxu0
        %v1204 = vadd.f32 0.0, %v1203
        %v1205 = vpop.f32.mrf.mxu0
        %1206 = vmatprep.mubr.f32.mxu0 0.0
        %1207 = vmatmul.mubr.f32.gmra.mxu0 %v1129
        %v1208 = vpop.f32.mrf.mxu0
        %v1209 = vadd.f32 0.0, %v1208
        %v1210 = vpop.f32.mrf.mxu0
        %1211 = vdwg.mxu0
        %v1212 = vsel %vm448, %v1204, -inf
        %1213 = vmax.xlane.f32.xlu0 %v1212
        %v1214 = vpop.xlane.xlu0 %1213
        %v1215 = vsel %vm448, %v1209, -inf
        %1216 = vmax.xlane.f32.xlu0 %v1215
        %v1217 = vpop.xlane.xlu0 %1216
        %v1218 = vsub.f32 %v1204, %v1214
        %v1219 = vsub.f32 %v1209, %v1217
        %v1220 = vmul.f32 %v1218, 1.442695
        %v1221 = vpow.pop %v1220
        %v1222 = vmul.f32 %v1219, 1.442695
        %v1223 = vpow.pop %v1222
        %v1224 = vsel %vm448, %v1221, 0.0
        %1225 = vadd.xlane.f32.xlu0 %v1224
        %v1226 = vpop.xlane.xlu0 %1225
        %v1227 = vsel %vm448, %v1223, 0.0
        %1228 = vadd.xlane.f32.xlu0 %v1227
        %v1229 = vpop.xlane.xlu0 %1228
        %v1230 = vrcp.pop %v1226
        %v1231 = vmul.f32 %v1221, %v1230
        %v1232 = vrcp.pop %v1229
        %v1233 = vmul.f32 %v1223, %v1232
        %v1235 = vsel %vm448, %v1231, 0
        %v1238 = vsel %vm448, %v1233, 0
        %1240 = vmatprep.subr.mxu0 0.0
        %1241 = vmatpush1.msra.mxu0 0.0
        %1242 = vmatprep.subr.mxu0 0.0
        %1243 = vmatpush1.msra.mxu0 0.0
        %1244 = vmatprep.subr.mxu0 0.0
        %1245 = vmatpush1.msra.mxu0 0.0
        %1246 = vmatprep.subr.mxu0 0.0
        %1247 = vmatpush1.msra.mxu0 0.0
        %1248 = vmatprep.subr.mxu0 0.0
        %1249 = vmatpush1.msra.mxu0 0.0
        %1250 = vmatprep.subr.mxu0 0.0
        %1251 = vmatpush1.msra.mxu0 0.0
        %1252 = vmatprep.subr.mxu0 0.0
        %1253 = vmatpush1.msra.mxu0 0.0
        %1254 = vmatprep.subr.mxu0 0.0
        %1255 = vmatpush1.msra.mxu0 0.0
        %1256 = vmatprep.subr.mxu0 0.0
        %1257 = vmatpush1.msra.mxu0 0.0
        %1258 = vmatprep.subr.mxu0 0.0
        %1259 = vmatpush1.msra.mxu0 0.0
        %1260 = vmatprep.subr.mxu0 0.0
        %1261 = vmatpush1.msra.mxu0 0.0
        %1262 = vmatprep.subr.mxu0 0.0
        %1263 = vmatpush1.msra.mxu0 0.0
        %1264 = vmatprep.subr.mxu0 0.0
        %1265 = vmatpush1.msra.mxu0 0.0
        %1266 = vmatprep.subr.mxu0 0.0
        %1267 = vmatpush1.msra.mxu0 0.0
        %1268 = vmatprep.subr.mxu0 0.0
        %1269 = vmatpush1.msra.mxu0 %v1121
        %1270 = vmatprep.subr.mxu0 0.0
        %1271 = vmatpush1.msra.mxu0 %v1116
        %1272 = vmatprep.subr.mxu0 0.0
        %1273 = vmatpush2.msra.mxu0 0.0
        %1274 = vmatprep.subr.mxu0 0.0
        %1275 = vmatpush2.msra.mxu0 0.0
        %1276 = vmatprep.subr.mxu0 0.0
        %1277 = vmatpush2.msra.mxu0 0.0
        %1278 = vmatprep.subr.mxu0 0.0
        %1279 = vmatpush2.msra.mxu0 0.0
        %1280 = vmatprep.subr.mxu0 0.0
        %1281 = vmatpush2.msra.mxu0 0.0
        %1282 = vmatprep.subr.mxu0 0.0
        %1283 = vmatpush2.msra.mxu0 0.0
        %1284 = vmatprep.subr.mxu0 0.0
        %1285 = vmatpush2.msra.mxu0 0.0
        %1286 = vmatprep.subr.mxu0 0.0
        %1287 = vmatpush2.msra.mxu0 0.0
        %1288 = vmatprep.subr.mxu0 0.0
        %1289 = vmatpush2.msra.mxu0 0.0
        %1290 = vmatprep.subr.mxu0 0.0
        %1291 = vmatpush2.msra.mxu0 0.0
        %1292 = vmatprep.subr.mxu0 0.0
        %1293 = vmatpush2.msra.mxu0 0.0
        %1294 = vmatprep.subr.mxu0 0.0
        %1295 = vmatpush2.msra.mxu0 0.0
        %1296 = vmatprep.subr.mxu0 0.0
        %1297 = vmatpush2.msra.mxu0 0.0
        %1298 = vmatprep.subr.mxu0 0.0
        %1299 = vmatpush2.msra.mxu0 0.0
        %1300 = vmatprep.subr.mxu0 0.0
        %1301 = vmatpush2.msra.mxu0 0.0
        %1302 = vmatprep.subr.mxu0 0.0
        %1303 = vmatpush2.msra.mxu0 0.0
        %1304 = vmatprep.mubr.f32.mxu0 0.0
        %1305 = vmatmul.mubr.f32.gmra.mxu0 %v1235
        %v1306 = vpop.f32.mrf.mxu0
        %v1307 = vadd.f32 0.0, %v1306
        %v1308 = vpop.f32.mrf.mxu0
        %1309 = vmatprep.mubr.f32.mxu0 0.0
        %1310 = vmatmul.mubr.f32.gmra.mxu0 %v1238
        %v1311 = vpop.f32.mrf.mxu0
        %v1312 = vadd.f32 0.0, %v1311
        %v1313 = vpop.f32.mrf.mxu0
        %1314 = vdwg.mxu0
        %v1315 = vld [vmem:[%s8] sm:$0xff]
        %v1317 = vsel %vm1124, %v1307, 0
        %v1320 = vsel %vm1124, %v1312, 0
        %1322 = vmatprep.subr.mxu0 0.0
        %1323 = vmatpush1.msra.mxu0 0.0
        %1324 = vmatprep.subr.mxu0 0.0
        %1325 = vmatpush1.msra.mxu0 0.0
        %1326 = vmatprep.subr.mxu0 0.0
        %1327 = vmatpush1.msra.mxu0 0.0
        %1328 = vmatprep.subr.mxu0 0.0
        %1329 = vmatpush1.msra.mxu0 0.0
        %1330 = vmatprep.subr.mxu0 0.0
        %1331 = vmatpush1.msra.mxu0 0.0
        %1332 = vmatprep.subr.mxu0 0.0
        %1333 = vmatpush1.msra.mxu0 0.0
        %1334 = vmatprep.subr.mxu0 0.0
        %1335 = vmatpush1.msra.mxu0 0.0
        %1336 = vmatprep.subr.mxu0 0.0
        %1337 = vmatpush1.msra.mxu0 0.0
        %1338 = vmatprep.subr.mxu0 0.0
        %1339 = vmatpush1.msra.mxu0 0.0
        %1340 = vmatprep.subr.mxu0 0.0
        %1341 = vmatpush1.msra.mxu0 0.0
        %1342 = vmatprep.subr.mxu0 0.0
        %1343 = vmatpush1.msra.mxu0 0.0
        %1344 = vmatprep.subr.mxu0 0.0
        %1345 = vmatpush1.msra.mxu0 0.0
        %1346 = vmatprep.subr.mxu0 0.0
        %1347 = vmatpush1.msra.mxu0 0.0
        %1348 = vmatprep.subr.mxu0 0.0
        %1349 = vmatpush1.msra.mxu0 0.0
        %1350 = vmatprep.subr.mxu0 0.0
        %1351 = vmatpush1.msra.mxu0 0.0
        %1352 = vmatprep.subr.mxu0 0.0
        %1353 = vmatpush1.msra.mxu0 %v1315
        %1354 = vmatprep.subr.mxu0 0.0
        %1355 = vmatpush2.msra.mxu0 0.0
        %1356 = vmatprep.subr.mxu0 0.0
        %1357 = vmatpush2.msra.mxu0 0.0
        %1358 = vmatprep.subr.mxu0 0.0
        %1359 = vmatpush2.msra.mxu0 0.0
        %1360 = vmatprep.subr.mxu0 0.0
        %1361 = vmatpush2.msra.mxu0 0.0
        %1362 = vmatprep.subr.mxu0 0.0
        %1363 = vmatpush2.msra.mxu0 0.0
        %1364 = vmatprep.subr.mxu0 0.0
        %1365 = vmatpush2.msra.mxu0 0.0
        %1366 = vmatprep.subr.mxu0 0.0
        %1367 = vmatpush2.msra.mxu0 0.0
        %1368 = vmatprep.subr.mxu0 0.0
        %1369 = vmatpush2.msra.mxu0 0.0
        %1370 = vmatprep.subr.mxu0 0.0
        %1371 = vmatpush2.msra.mxu0 0.0
        %1372 = vmatprep.subr.mxu0 0.0
        %1373 = vmatpush2.msra.mxu0 0.0
        %1374 = vmatprep.subr.mxu0 0.0
        %1375 = vmatpush2.msra.mxu0 0.0
        %1376 = vmatprep.subr.mxu0 0.0
        %1377 = vmatpush2.msra.mxu0 0.0
        %1378 = vmatprep.subr.mxu0 0.0
        %1379 = vmatpush2.msra.mxu0 0.0
        %1380 = vmatprep.subr.mxu0 0.0
        %1381 = vmatpush2.msra.mxu0 0.0
        %1382 = vmatprep.subr.mxu0 0.0
        %1383 = vmatpush2.msra.mxu0 0.0
        %1384 = vmatprep.subr.mxu0 0.0
        %1385 = vmatpush2.msra.mxu0 0.0
        %1386 = vmatprep.mubr.f32.mxu0 0.0
        %1387 = vmatmul.mubr.f32.gmra.mxu0 %v1317
        %v1388 = vpop.f32.mrf.mxu0
        %v1389 = vadd.f32 0.0, %v1388
        %v1390 = vpop.f32.mrf.mxu0
        %1391 = vmatprep.mubr.f32.mxu0 0.0
        %1392 = vmatmul.mubr.f32.gmra.mxu0 %v1320
        %v1393 = vpop.f32.mrf.mxu0
        %v1394 = vadd.f32 0.0, %v1393
        %v1395 = vpop.f32.mrf.mxu0
        %1396 = vdwg.mxu0
        %v1397 = vadd.f32 %v861, %v1389
        %v1398 = vadd.f32 %v861, %v1394
        %s1399 = scalar_lea.vmem %s6, 32
        %v1400 = vld [vmem:[%s1399] sm:$0xff]
        %v1401 = vld [vmem:[%s1399 + $0x8] sm:$0xff]
        %v1402 = vld [vmem:[%s1399 + $0x10] sm:$0xff]
        %v1403 = vld [vmem:[%s1399 + $0x18] sm:$0xff]
        %v1404 = vld [vmem:[%s7 + $0x1] sm:$0x1]
        %v1405 = vlaneseq
        %v1406 = vshrl.u32 %v1405, 7
        %v1407 = vsub.s32 0, %v1406
        %v1408 = vrot.slane %v1404, %v1407
        %1409 = vmatprep.subr.mxu0 0.0
        %1410 = vmatpush1.msra.mxu0 0.0
        %1411 = vmatprep.subr.mxu0 0.0
        %1412 = vmatpush1.msra.mxu0 0.0
        %1413 = vmatprep.subr.mxu0 0.0
        %1414 = vmatpush1.msra.mxu0 0.0
        %1415 = vmatprep.subr.mxu0 0.0
        %1416 = vmatpush1.msra.mxu0 0.0
        %1417 = vmatprep.subr.mxu0 0.0
        %1418 = vmatpush1.msra.mxu0 0.0
        %1419 = vmatprep.subr.mxu0 0.0
        %1420 = vmatpush1.msra.mxu0 0.0
        %1421 = vmatprep.subr.mxu0 0.0
        %1422 = vmatpush1.msra.mxu0 0.0
        %1423 = vmatprep.subr.mxu0 0.0
        %1424 = vmatpush1.msra.mxu0 0.0
        %1425 = vmatprep.subr.mxu0 0.0
        %1426 = vmatpush1.msra.mxu0 0.0
        %1427 = vmatprep.subr.mxu0 0.0
        %1428 = vmatpush1.msra.mxu0 0.0
        %1429 = vmatprep.subr.mxu0 0.0
        %1430 = vmatpush1.msra.mxu0 0.0
        %1431 = vmatprep.subr.mxu0 0.0
        %1432 = vmatpush1.msra.mxu0 0.0
        %1433 = vmatprep.subr.mxu0 0.0
        %1434 = vmatpush1.msra.mxu0 %v1403
        %1435 = vmatprep.subr.mxu0 0.0
        %1436 = vmatpush1.msra.mxu0 %v1402
        %1437 = vmatprep.subr.mxu0 0.0
        %1438 = vmatpush1.msra.mxu0 %v1401
        %1439 = vmatprep.subr.mxu0 0.0
        %1440 = vmatpush1.msra.mxu0 %v1400
        %1441 = vmatprep.subr.mxu0 0.0
        %1442 = vmatpush2.msra.mxu0 0.0
        %1443 = vmatprep.subr.mxu0 0.0
        %1444 = vmatpush2.msra.mxu0 0.0
        %1445 = vmatprep.subr.mxu0 0.0
        %1446 = vmatpush2.msra.mxu0 0.0
        %1447 = vmatprep.subr.mxu0 0.0
        %1448 = vmatpush2.msra.mxu0 0.0
        %1449 = vmatprep.subr.mxu0 0.0
        %1450 = vmatpush2.msra.mxu0 0.0
        %1451 = vmatprep.subr.mxu0 0.0
        %1452 = vmatpush2.msra.mxu0 0.0
        %1453 = vmatprep.subr.mxu0 0.0
        %1454 = vmatpush2.msra.mxu0 0.0
        %1455 = vmatprep.subr.mxu0 0.0
        %1456 = vmatpush2.msra.mxu0 0.0
        %1457 = vmatprep.subr.mxu0 0.0
        %1458 = vmatpush2.msra.mxu0 0.0
        %1459 = vmatprep.subr.mxu0 0.0
        %1460 = vmatpush2.msra.mxu0 0.0
        %1461 = vmatprep.subr.mxu0 0.0
        %1462 = vmatpush2.msra.mxu0 0.0
        %1463 = vmatprep.subr.mxu0 0.0
        %1464 = vmatpush2.msra.mxu0 0.0
        %1465 = vmatprep.subr.mxu0 0.0
        %1466 = vmatpush2.msra.mxu0 0.0
        %1467 = vmatprep.subr.mxu0 0.0
        %1468 = vmatpush2.msra.mxu0 0.0
        %1469 = vmatprep.subr.mxu0 0.0
        %1470 = vmatpush2.msra.mxu0 0.0
        %1471 = vmatprep.subr.mxu0 0.0
        %1472 = vmatpush2.msra.mxu0 0.0
        %1473 = vmatprep.mubr.f32.mxu0 0.0
        %1474 = vmatmul.mubr.f32.gmra.mxu0 %v872
        %v1475 = vpop.f32.mrf.mxu0
        %v1476 = vadd.f32 %v1408, %v1475
        %v1477 = vpop.f32.mrf.mxu0
        %1478 = vmatprep.mubr.f32.mxu0 0.0
        %1479 = vmatmul.mubr.f32.gmra.mxu0 %v875
        %v1480 = vpop.f32.mrf.mxu0
        %v1481 = vadd.f32 %v1408, %v1480
        %v1482 = vpop.f32.mrf.mxu0
        %1483 = vdwg.mxu0
        %v1484 = vmul.f32 %v1476, 0.35355338
        %v1485 = vmul.f32 %v1481, 0.35355338
        %s1486 = scalar_lea.vmem %s6, 160
        %v1487 = vld [vmem:[%s1486] sm:$0xff]
        %v1488 = vld [vmem:[%s1486 + $0x8] sm:$0xff]
        %v1489 = vld [vmem:[%s1486 + $0x10] sm:$0xff]
        %v1490 = vld [vmem:[%s1486 + $0x18] sm:$0xff]
        %v1491 = vld [vmem:[%s7 + $0x5] sm:$0x1]
        %v1492 = vlaneseq
        %v1493 = vshrl.u32 %v1492, 7
        %v1494 = vsub.s32 0, %v1493
        %v1495 = vrot.slane %v1491, %v1494
        %1496 = vmatprep.subr.mxu0 0.0
        %1497 = vmatpush1.msra.mxu0 0.0
        %1498 = vmatprep.subr.mxu0 0.0
        %1499 = vmatpush1.msra.mxu0 0.0
        %1500 = vmatprep.subr.mxu0 0.0
        %1501 = vmatpush1.msra.mxu0 0.0
        %1502 = vmatprep.subr.mxu0 0.0
        %1503 = vmatpush1.msra.mxu0 0.0
        %1504 = vmatprep.subr.mxu0 0.0
        %1505 = vmatpush1.msra.mxu0 0.0
        %1506 = vmatprep.subr.mxu0 0.0
        %1507 = vmatpush1.msra.mxu0 0.0
        %1508 = vmatprep.subr.mxu0 0.0
        %1509 = vmatpush1.msra.mxu0 0.0
        %1510 = vmatprep.subr.mxu0 0.0
        %1511 = vmatpush1.msra.mxu0 0.0
        %1512 = vmatprep.subr.mxu0 0.0
        %1513 = vmatpush1.msra.mxu0 0.0
        %1514 = vmatprep.subr.mxu0 0.0
        %1515 = vmatpush1.msra.mxu0 0.0
        %1516 = vmatprep.subr.mxu0 0.0
        %1517 = vmatpush1.msra.mxu0 0.0
        %1518 = vmatprep.subr.mxu0 0.0
        %1519 = vmatpush1.msra.mxu0 0.0
        %1520 = vmatprep.subr.mxu0 0.0
        %1521 = vmatpush1.msra.mxu0 %v1490
        %1522 = vmatprep.subr.mxu0 0.0
        %1523 = vmatpush1.msra.mxu0 %v1489
        %1524 = vmatprep.subr.mxu0 0.0
        %1525 = vmatpush1.msra.mxu0 %v1488
        %1526 = vmatprep.subr.mxu0 0.0
        %1527 = vmatpush1.msra.mxu0 %v1487
        %1528 = vmatprep.subr.mxu0 0.0
        %1529 = vmatpush2.msra.mxu0 0.0
        %1530 = vmatprep.subr.mxu0 0.0
        %1531 = vmatpush2.msra.mxu0 0.0
        %1532 = vmatprep.subr.mxu0 0.0
        %1533 = vmatpush2.msra.mxu0 0.0
        %1534 = vmatprep.subr.mxu0 0.0
        %1535 = vmatpush2.msra.mxu0 0.0
        %1536 = vmatprep.subr.mxu0 0.0
        %1537 = vmatpush2.msra.mxu0 0.0
        %1538 = vmatprep.subr.mxu0 0.0
        %1539 = vmatpush2.msra.mxu0 0.0
        %1540 = vmatprep.subr.mxu0 0.0
        %1541 = vmatpush2.msra.mxu0 0.0
        %1542 = vmatprep.subr.mxu0 0.0
        %1543 = vmatpush2.msra.mxu0 0.0
        %1544 = vmatprep.subr.mxu0 0.0
        %1545 = vmatpush2.msra.mxu0 0.0
        %1546 = vmatprep.subr.mxu0 0.0
        %1547 = vmatpush2.msra.mxu0 0.0
        %1548 = vmatprep.subr.mxu0 0.0
        %1549 = vmatpush2.msra.mxu0 0.0
        %1550 = vmatprep.subr.mxu0 0.0
        %1551 = vmatpush2.msra.mxu0 0.0
        %1552 = vmatprep.subr.mxu0 0.0
        %1553 = vmatpush2.msra.mxu0 0.0
        %1554 = vmatprep.subr.mxu0 0.0
        %1555 = vmatpush2.msra.mxu0 0.0
        %1556 = vmatprep.subr.mxu0 0.0
        %1557 = vmatpush2.msra.mxu0 0.0
        %1558 = vmatprep.subr.mxu0 0.0
        %1559 = vmatpush2.msra.mxu0 0.0
        %1560 = vmatprep.mubr.f32.mxu0 0.0
        %1561 = vmatmul.mubr.f32.gmra.mxu0 %v872
        %v1562 = vpop.f32.mrf.mxu0
        %v1563 = vadd.f32 %v1495, %v1562
        %v1564 = vpop.f32.mrf.mxu0
        %1565 = vmatprep.mubr.f32.mxu0 0.0
        %1566 = vmatmul.mubr.f32.gmra.mxu0 %v875
        %v1567 = vpop.f32.mrf.mxu0
        %v1568 = vadd.f32 %v1495, %v1567
        %v1569 = vpop.f32.mrf.mxu0
        %1570 = vdwg.mxu0
        %s1571 = scalar_lea.vmem %s6, 288
        %v1572 = vld [vmem:[%s1571] sm:$0xff]
        %v1573 = vld [vmem:[%s1571 + $0x8] sm:$0xff]
        %v1574 = vld [vmem:[%s1571 + $0x10] sm:$0xff]
        %v1575 = vld [vmem:[%s1571 + $0x18] sm:$0xff]
        %v1576 = vld [vmem:[%s7 + $0x9] sm:$0x1]
        %v1577 = vlaneseq
        %v1578 = vshrl.u32 %v1577, 7
        %v1579 = vsub.s32 0, %v1578
        %v1580 = vrot.slane %v1576, %v1579
        %1581 = vmatprep.subr.mxu0 0.0
        %1582 = vmatpush1.msra.mxu0 0.0
        %1583 = vmatprep.subr.mxu0 0.0
        %1584 = vmatpush1.msra.mxu0 0.0
        %1585 = vmatprep.subr.mxu0 0.0
        %1586 = vmatpush1.msra.mxu0 0.0
        %1587 = vmatprep.subr.mxu0 0.0
        %1588 = vmatpush1.msra.mxu0 0.0
        %1589 = vmatprep.subr.mxu0 0.0
        %1590 = vmatpush1.msra.mxu0 0.0
        %1591 = vmatprep.subr.mxu0 0.0
        %1592 = vmatpush1.msra.mxu0 0.0
        %1593 = vmatprep.subr.mxu0 0.0
        %1594 = vmatpush1.msra.mxu0 0.0
        %1595 = vmatprep.subr.mxu0 0.0
        %1596 = vmatpush1.msra.mxu0 0.0
        %1597 = vmatprep.subr.mxu0 0.0
        %1598 = vmatpush1.msra.mxu0 0.0
        %1599 = vmatprep.subr.mxu0 0.0
        %1600 = vmatpush1.msra.mxu0 0.0
        %1601 = vmatprep.subr.mxu0 0.0
        %1602 = vmatpush1.msra.mxu0 0.0
        %1603 = vmatprep.subr.mxu0 0.0
        %1604 = vmatpush1.msra.mxu0 0.0
        %1605 = vmatprep.subr.mxu0 0.0
        %1606 = vmatpush1.msra.mxu0 %v1575
        %1607 = vmatprep.subr.mxu0 0.0
        %1608 = vmatpush1.msra.mxu0 %v1574
        %1609 = vmatprep.subr.mxu0 0.0
        %1610 = vmatpush1.msra.mxu0 %v1573
        %1611 = vmatprep.subr.mxu0 0.0
        %1612 = vmatpush1.msra.mxu0 %v1572
        %1613 = vmatprep.subr.mxu0 0.0
        %1614 = vmatpush2.msra.mxu0 0.0
        %1615 = vmatprep.subr.mxu0 0.0
        %1616 = vmatpush2.msra.mxu0 0.0
        %1617 = vmatprep.subr.mxu0 0.0
        %1618 = vmatpush2.msra.mxu0 0.0
        %1619 = vmatprep.subr.mxu0 0.0
        %1620 = vmatpush2.msra.mxu0 0.0
        %1621 = vmatprep.subr.mxu0 0.0
        %1622 = vmatpush2.msra.mxu0 0.0
        %1623 = vmatprep.subr.mxu0 0.0
        %1624 = vmatpush2.msra.mxu0 0.0
        %1625 = vmatprep.subr.mxu0 0.0
        %1626 = vmatpush2.msra.mxu0 0.0
        %1627 = vmatprep.subr.mxu0 0.0
        %1628 = vmatpush2.msra.mxu0 0.0
        %1629 = vmatprep.subr.mxu0 0.0
        %1630 = vmatpush2.msra.mxu0 0.0
        %1631 = vmatprep.subr.mxu0 0.0
        %1632 = vmatpush2.msra.mxu0 0.0
        %1633 = vmatprep.subr.mxu0 0.0
        %1634 = vmatpush2.msra.mxu0 0.0
        %1635 = vmatprep.subr.mxu0 0.0
        %1636 = vmatpush2.msra.mxu0 0.0
        %1637 = vmatprep.subr.mxu0 0.0
        %1638 = vmatpush2.msra.mxu0 0.0
        %1639 = vmatprep.subr.mxu0 0.0
        %1640 = vmatpush2.msra.mxu0 0.0
        %1641 = vmatprep.subr.mxu0 0.0
        %1642 = vmatpush2.msra.mxu0 0.0
        %1643 = vmatprep.subr.mxu0 0.0
        %1644 = vmatpush2.msra.mxu0 0.0
        %1645 = vmatprep.mubr.f32.mxu0 0.0
        %1646 = vmatmul.mubr.f32.gmra.mxu0 %v872
        %v1647 = vpop.f32.mrf.mxu0
        %v1648 = vadd.f32 %v1580, %v1647
        %v1649 = vpop.f32.mrf.mxu0
        %1650 = vmatprep.mubr.f32.mxu0 0.0
        %1651 = vmatmul.mubr.f32.gmra.mxu0 %v875
        %v1652 = vpop.f32.mrf.mxu0
        %v1653 = vadd.f32 %v1580, %v1652
        %v1654 = vpop.f32.mrf.mxu0
        %1655 = vdwg.mxu0
        %v1657 = vsel %vm1124, %v1484, 0
        %v1660 = vsel %vm1124, %v1485, 0
        %v1663 = vsel %vm1124, %v1563, 0
        %v1666 = vsel %vm1124, %v1568, 0
        %1668 = vmatprep.subr.mxu0 0.0
        %1669 = vmatpush1.xpose.msra.mxu0 0.0
        %1670 = vmatprep.subr.mxu0 0.0
        %1671 = vmatpush1.xpose.msra.mxu0 0.0
        %1672 = vmatprep.subr.mxu0 0.0
        %1673 = vmatpush1.xpose.msra.mxu0 0.0
        %1674 = vmatprep.subr.mxu0 0.0
        %1675 = vmatpush1.xpose.msra.mxu0 0.0
        %1676 = vmatprep.subr.mxu0 0.0
        %1677 = vmatpush1.xpose.msra.mxu0 0.0
        %1678 = vmatprep.subr.mxu0 0.0
        %1679 = vmatpush1.xpose.msra.mxu0 0.0
        %1680 = vmatprep.subr.mxu0 0.0
        %1681 = vmatpush1.xpose.msra.mxu0 0.0
        %1682 = vmatprep.subr.mxu0 0.0
        %1683 = vmatpush1.xpose.msra.mxu0 0.0
        %1684 = vmatprep.subr.mxu0 0.0
        %1685 = vmatpush1.xpose.msra.mxu0 0.0
        %1686 = vmatprep.subr.mxu0 0.0
        %1687 = vmatpush1.xpose.msra.mxu0 0.0
        %1688 = vmatprep.subr.mxu0 0.0
        %1689 = vmatpush1.xpose.msra.mxu0 0.0
        %1690 = vmatprep.subr.mxu0 0.0
        %1691 = vmatpush1.xpose.msra.mxu0 0.0
        %1692 = vmatprep.subr.mxu0 0.0
        %1693 = vmatpush1.xpose.msra.mxu0 0.0
        %1694 = vmatprep.subr.mxu0 0.0
        %1695 = vmatpush1.xpose.msra.mxu0 0.0
        %1696 = vmatprep.subr.mxu0 0.0
        %1697 = vmatpush1.xpose.msra.mxu0 %v1666
        %1698 = vmatprep.subr.mxu0 0.0
        %1699 = vmatpush1.xpose.msra.mxu0 %v1663
        %1700 = vmatprep.subr.mxu0 0.0
        %1701 = vmatpush2.xpose.msra.mxu0 0.0
        %1702 = vmatprep.subr.mxu0 0.0
        %1703 = vmatpush2.xpose.msra.mxu0 0.0
        %1704 = vmatprep.subr.mxu0 0.0
        %1705 = vmatpush2.xpose.msra.mxu0 0.0
        %1706 = vmatprep.subr.mxu0 0.0
        %1707 = vmatpush2.xpose.msra.mxu0 0.0
        %1708 = vmatprep.subr.mxu0 0.0
        %1709 = vmatpush2.xpose.msra.mxu0 0.0
        %1710 = vmatprep.subr.mxu0 0.0
        %1711 = vmatpush2.xpose.msra.mxu0 0.0
        %1712 = vmatprep.subr.mxu0 0.0
        %1713 = vmatpush2.xpose.msra.mxu0 0.0
        %1714 = vmatprep.subr.mxu0 0.0
        %1715 = vmatpush2.xpose.msra.mxu0 0.0
        %1716 = vmatprep.subr.mxu0 0.0
        %1717 = vmatpush2.xpose.msra.mxu0 0.0
        %1718 = vmatprep.subr.mxu0 0.0
        %1719 = vmatpush2.xpose.msra.mxu0 0.0
        %1720 = vmatprep.subr.mxu0 0.0
        %1721 = vmatpush2.xpose.msra.mxu0 0.0
        %1722 = vmatprep.subr.mxu0 0.0
        %1723 = vmatpush2.xpose.msra.mxu0 0.0
        %1724 = vmatprep.subr.mxu0 0.0
        %1725 = vmatpush2.xpose.msra.mxu0 0.0
        %1726 = vmatprep.subr.mxu0 0.0
        %1727 = vmatpush2.xpose.msra.mxu0 0.0
        %1728 = vmatprep.subr.mxu0 0.0
        %1729 = vmatpush2.xpose.msra.mxu0 0.0
        %1730 = vmatprep.subr.mxu0 0.0
        %1731 = vmatpush2.xpose.msra.mxu0 0.0
        %1732 = vmatprep.mubr.f32.mxu0 0.0
        %1733 = vmatmul.mubr.f32.gmra.mxu0 %v1657
        %v1734 = vpop.f32.mrf.mxu0
        %v1735 = vadd.f32 0.0, %v1734
        %v1736 = vpop.f32.mrf.mxu0
        %1737 = vmatprep.mubr.f32.mxu0 0.0
        %1738 = vmatmul.mubr.f32.gmra.mxu0 %v1660
        %v1739 = vpop.f32.mrf.mxu0
        %v1740 = vadd.f32 0.0, %v1739
        %v1741 = vpop.f32.mrf.mxu0
        %1742 = vdwg.mxu0
        %v1743 = vsel %vm448, %v1735, -inf
        %1744 = vmax.xlane.f32.xlu0 %v1743
        %v1745 = vpop.xlane.xlu0 %1744
        %v1746 = vsel %vm448, %v1740, -inf
        %1747 = vmax.xlane.f32.xlu0 %v1746
        %v1748 = vpop.xlane.xlu0 %1747
        %v1749 = vsub.f32 %v1735, %v1745
        %v1750 = vsub.f32 %v1740, %v1748
        %v1751 = vmul.f32 %v1749, 1.442695
        %v1752 = vpow.pop %v1751
        %v1753 = vmul.f32 %v1750, 1.442695
        %v1754 = vpow.pop %v1753
        %v1755 = vsel %vm448, %v1752, 0.0
        %1756 = vadd.xlane.f32.xlu0 %v1755
        %v1757 = vpop.xlane.xlu0 %1756
        %v1758 = vsel %vm448, %v1754, 0.0
        %1759 = vadd.xlane.f32.xlu0 %v1758
        %v1760 = vpop.xlane.xlu0 %1759
        %v1761 = vrcp.pop %v1757
        %v1762 = vmul.f32 %v1752, %v1761
        %v1763 = vrcp.pop %v1760
        %v1764 = vmul.f32 %v1754, %v1763
        %v1766 = vsel %vm448, %v1762, 0
        %v1769 = vsel %vm448, %v1764, 0
        %1771 = vmatprep.subr.mxu0 0.0
        %1772 = vmatpush1.msra.mxu0 0.0
        %1773 = vmatprep.subr.mxu0 0.0
        %1774 = vmatpush1.msra.mxu0 0.0
        %1775 = vmatprep.subr.mxu0 0.0
        %1776 = vmatpush1.msra.mxu0 0.0
        %1777 = vmatprep.subr.mxu0 0.0
        %1778 = vmatpush1.msra.mxu0 0.0
        %1779 = vmatprep.subr.mxu0 0.0
        %1780 = vmatpush1.msra.mxu0 0.0
        %1781 = vmatprep.subr.mxu0 0.0
        %1782 = vmatpush1.msra.mxu0 0.0
        %1783 = vmatprep.subr.mxu0 0.0
        %1784 = vmatpush1.msra.mxu0 0.0
        %1785 = vmatprep.subr.mxu0 0.0
        %1786 = vmatpush1.msra.mxu0 0.0
        %1787 = vmatprep.subr.mxu0 0.0
        %1788 = vmatpush1.msra.mxu0 0.0
        %1789 = vmatprep.subr.mxu0 0.0
        %1790 = vmatpush1.msra.mxu0 0.0
        %1791 = vmatprep.subr.mxu0 0.0
        %1792 = vmatpush1.msra.mxu0 0.0
        %1793 = vmatprep.subr.mxu0 0.0
        %1794 = vmatpush1.msra.mxu0 0.0
        %1795 = vmatprep.subr.mxu0 0.0
        %1796 = vmatpush1.msra.mxu0 0.0
        %1797 = vmatprep.subr.mxu0 0.0
        %1798 = vmatpush1.msra.mxu0 0.0
        %1799 = vmatprep.subr.mxu0 0.0
        %1800 = vmatpush1.msra.mxu0 %v1653
        %1801 = vmatprep.subr.mxu0 0.0
        %1802 = vmatpush1.msra.mxu0 %v1648
        %1803 = vmatprep.subr.mxu0 0.0
        %1804 = vmatpush2.msra.mxu0 0.0
        %1805 = vmatprep.subr.mxu0 0.0
        %1806 = vmatpush2.msra.mxu0 0.0
        %1807 = vmatprep.subr.mxu0 0.0
        %1808 = vmatpush2.msra.mxu0 0.0
        %1809 = vmatprep.subr.mxu0 0.0
        %1810 = vmatpush2.msra.mxu0 0.0
        %1811 = vmatprep.subr.mxu0 0.0
        %1812 = vmatpush2.msra.mxu0 0.0
        %1813 = vmatprep.subr.mxu0 0.0
        %1814 = vmatpush2.msra.mxu0 0.0
        %1815 = vmatprep.subr.mxu0 0.0
        %1816 = vmatpush2.msra.mxu0 0.0
        %1817 = vmatprep.subr.mxu0 0.0
        %1818 = vmatpush2.msra.mxu0 0.0
        %1819 = vmatprep.subr.mxu0 0.0
        %1820 = vmatpush2.msra.mxu0 0.0
        %1821 = vmatprep.subr.mxu0 0.0
        %1822 = vmatpush2.msra.mxu0 0.0
        %1823 = vmatprep.subr.mxu0 0.0
        %1824 = vmatpush2.msra.mxu0 0.0
        %1825 = vmatprep.subr.mxu0 0.0
        %1826 = vmatpush2.msra.mxu0 0.0
        %1827 = vmatprep.subr.mxu0 0.0
        %1828 = vmatpush2.msra.mxu0 0.0
        %1829 = vmatprep.subr.mxu0 0.0
        %1830 = vmatpush2.msra.mxu0 0.0
        %1831 = vmatprep.subr.mxu0 0.0
        %1832 = vmatpush2.msra.mxu0 0.0
        %1833 = vmatprep.subr.mxu0 0.0
        %1834 = vmatpush2.msra.mxu0 0.0
        %1835 = vmatprep.mubr.f32.mxu0 0.0
        %1836 = vmatmul.mubr.f32.gmra.mxu0 %v1766
        %v1837 = vpop.f32.mrf.mxu0
        %v1838 = vadd.f32 0.0, %v1837
        %v1839 = vpop.f32.mrf.mxu0
        %1840 = vmatprep.mubr.f32.mxu0 0.0
        %1841 = vmatmul.mubr.f32.gmra.mxu0 %v1769
        %v1842 = vpop.f32.mrf.mxu0
        %v1843 = vadd.f32 0.0, %v1842
        %v1844 = vpop.f32.mrf.mxu0
        %1845 = vdwg.mxu0
        %s1846 = scalar_lea.vmem %s8, 8
        %v1847 = vld [vmem:[%s1846] sm:$0xff]
        %v1849 = vsel %vm1124, %v1838, 0
        %v1852 = vsel %vm1124, %v1843, 0
        %1854 = vmatprep.subr.mxu0 0.0
        %1855 = vmatpush1.msra.mxu0 0.0
        %1856 = vmatprep.subr.mxu0 0.0
        %1857 = vmatpush1.msra.mxu0 0.0
        %1858 = vmatprep.subr.mxu0 0.0
        %1859 = vmatpush1.msra.mxu0 0.0
        %1860 = vmatprep.subr.mxu0 0.0
        %1861 = vmatpush1.msra.mxu0 0.0
        %1862 = vmatprep.subr.mxu0 0.0
        %1863 = vmatpush1.msra.mxu0 0.0
        %1864 = vmatprep.subr.mxu0 0.0
        %1865 = vmatpush1.msra.mxu0 0.0
        %1866 = vmatprep.subr.mxu0 0.0
        %1867 = vmatpush1.msra.mxu0 0.0
        %1868 = vmatprep.subr.mxu0 0.0
        %1869 = vmatpush1.msra.mxu0 0.0
        %1870 = vmatprep.subr.mxu0 0.0
        %1871 = vmatpush1.msra.mxu0 0.0
        %1872 = vmatprep.subr.mxu0 0.0
        %1873 = vmatpush1.msra.mxu0 0.0
        %1874 = vmatprep.subr.mxu0 0.0
        %1875 = vmatpush1.msra.mxu0 0.0
        %1876 = vmatprep.subr.mxu0 0.0
        %1877 = vmatpush1.msra.mxu0 0.0
        %1878 = vmatprep.subr.mxu0 0.0
        %1879 = vmatpush1.msra.mxu0 0.0
        %1880 = vmatprep.subr.mxu0 0.0
        %1881 = vmatpush1.msra.mxu0 0.0
        %1882 = vmatprep.subr.mxu0 0.0
        %1883 = vmatpush1.msra.mxu0 0.0
        %1884 = vmatprep.subr.mxu0 0.0
        %1885 = vmatpush1.msra.mxu0 %v1847
        %1886 = vmatprep.subr.mxu0 0.0
        %1887 = vmatpush2.msra.mxu0 0.0
        %1888 = vmatprep.subr.mxu0 0.0
        %1889 = vmatpush2.msra.mxu0 0.0
        %1890 = vmatprep.subr.mxu0 0.0
        %1891 = vmatpush2.msra.mxu0 0.0
        %1892 = vmatprep.subr.mxu0 0.0
        %1893 = vmatpush2.msra.mxu0 0.0
        %1894 = vmatprep.subr.mxu0 0.0
        %1895 = vmatpush2.msra.mxu0 0.0
        %1896 = vmatprep.subr.mxu0 0.0
        %1897 = vmatpush2.msra.mxu0 0.0
        %1898 = vmatprep.subr.mxu0 0.0
        %1899 = vmatpush2.msra.mxu0 0.0
        %1900 = vmatprep.subr.mxu0 0.0
        %1901 = vmatpush2.msra.mxu0 0.0
        %1902 = vmatprep.subr.mxu0 0.0
        %1903 = vmatpush2.msra.mxu0 0.0
        %1904 = vmatprep.subr.mxu0 0.0
        %1905 = vmatpush2.msra.mxu0 0.0
        %1906 = vmatprep.subr.mxu0 0.0
        %1907 = vmatpush2.msra.mxu0 0.0
        %1908 = vmatprep.subr.mxu0 0.0
        %1909 = vmatpush2.msra.mxu0 0.0
        %1910 = vmatprep.subr.mxu0 0.0
        %1911 = vmatpush2.msra.mxu0 0.0
        %1912 = vmatprep.subr.mxu0 0.0
        %1913 = vmatpush2.msra.mxu0 0.0
        %1914 = vmatprep.subr.mxu0 0.0
        %1915 = vmatpush2.msra.mxu0 0.0
        %1916 = vmatprep.subr.mxu0 0.0
        %1917 = vmatpush2.msra.mxu0 0.0
        %1918 = vmatprep.mubr.f32.mxu0 0.0
        %1919 = vmatmul.mubr.f32.gmra.mxu0 %v1849
        %v1920 = vpop.f32.mrf.mxu0
        %v1921 = vadd.f32 0.0, %v1920
        %v1922 = vpop.f32.mrf.mxu0
        %1923 = vmatprep.mubr.f32.mxu0 0.0
        %1924 = vmatmul.mubr.f32.gmra.mxu0 %v1852
        %v1925 = vpop.f32.mrf.mxu0
        %v1926 = vadd.f32 0.0, %v1925
        %v1927 = vpop.f32.mrf.mxu0
        %1928 = vdwg.mxu0
        %v1929 = vadd.f32 %v1397, %v1921
        %v1930 = vadd.f32 %v1398, %v1926
        %s1931 = scalar_lea.vmem %s6, 64
        %v1932 = vld [vmem:[%s1931] sm:$0xff]
        %v1933 = vld [vmem:[%s1931 + $0x8] sm:$0xff]
        %v1934 = vld [vmem:[%s1931 + $0x10] sm:$0xff]
        %v1935 = vld [vmem:[%s1931 + $0x18] sm:$0xff]
        %v1936 = vld [vmem:[%s7 + $0x2] sm:$0x1]
        %v1937 = vlaneseq
        %v1938 = vshrl.u32 %v1937, 7
        %v1939 = vsub.s32 0, %v1938
        %v1940 = vrot.slane %v1936, %v1939
        %1941 = vmatprep.subr.mxu0 0.0
        %1942 = vmatpush1.msra.mxu0 0.0
        %1943 = vmatprep.subr.mxu0 0.0
        %1944 = vmatpush1.msra.mxu0 0.0
        %1945 = vmatprep.subr.mxu0 0.0
        %1946 = vmatpush1.msra.mxu0 0.0
        %1947 = vmatprep.subr.mxu0 0.0
        %1948 = vmatpush1.msra.mxu0 0.0
        %1949 = vmatprep.subr.mxu0 0.0
        %1950 = vmatpush1.msra.mxu0 0.0
        %1951 = vmatprep.subr.mxu0 0.0
        %1952 = vmatpush1.msra.mxu0 0.0
        %1953 = vmatprep.subr.mxu0 0.0
        %1954 = vmatpush1.msra.mxu0 0.0
        %1955 = vmatprep.subr.mxu0 0.0
        %1956 = vmatpush1.msra.mxu0 0.0
        %1957 = vmatprep.subr.mxu0 0.0
        %1958 = vmatpush1.msra.mxu0 0.0
        %1959 = vmatprep.subr.mxu0 0.0
        %1960 = vmatpush1.msra.mxu0 0.0
        %1961 = vmatprep.subr.mxu0 0.0
        %1962 = vmatpush1.msra.mxu0 0.0
        %1963 = vmatprep.subr.mxu0 0.0
        %1964 = vmatpush1.msra.mxu0 0.0
        %1965 = vmatprep.subr.mxu0 0.0
        %1966 = vmatpush1.msra.mxu0 %v1935
        %1967 = vmatprep.subr.mxu0 0.0
        %1968 = vmatpush1.msra.mxu0 %v1934
        %1969 = vmatprep.subr.mxu0 0.0
        %1970 = vmatpush1.msra.mxu0 %v1933
        %1971 = vmatprep.subr.mxu0 0.0
        %1972 = vmatpush1.msra.mxu0 %v1932
        %1973 = vmatprep.subr.mxu0 0.0
        %1974 = vmatpush2.msra.mxu0 0.0
        %1975 = vmatprep.subr.mxu0 0.0
        %1976 = vmatpush2.msra.mxu0 0.0
        %1977 = vmatprep.subr.mxu0 0.0
        %1978 = vmatpush2.msra.mxu0 0.0
        %1979 = vmatprep.subr.mxu0 0.0
        %1980 = vmatpush2.msra.mxu0 0.0
        %1981 = vmatprep.subr.mxu0 0.0
        %1982 = vmatpush2.msra.mxu0 0.0
        %1983 = vmatprep.subr.mxu0 0.0
        %1984 = vmatpush2.msra.mxu0 0.0
        %1985 = vmatprep.subr.mxu0 0.0
        %1986 = vmatpush2.msra.mxu0 0.0
        %1987 = vmatprep.subr.mxu0 0.0
        %1988 = vmatpush2.msra.mxu0 0.0
        %1989 = vmatprep.subr.mxu0 0.0
        %1990 = vmatpush2.msra.mxu0 0.0
        %1991 = vmatprep.subr.mxu0 0.0
        %1992 = vmatpush2.msra.mxu0 0.0
        %1993 = vmatprep.subr.mxu0 0.0
        %1994 = vmatpush2.msra.mxu0 0.0
        %1995 = vmatprep.subr.mxu0 0.0
        %1996 = vmatpush2.msra.mxu0 0.0
        %1997 = vmatprep.subr.mxu0 0.0
        %1998 = vmatpush2.msra.mxu0 0.0
        %1999 = vmatprep.subr.mxu0 0.0
        %2000 = vmatpush2.msra.mxu0 0.0
        %2001 = vmatprep.subr.mxu0 0.0
        %2002 = vmatpush2.msra.mxu0 0.0
        %2003 = vmatprep.subr.mxu0 0.0
        %2004 = vmatpush2.msra.mxu0 0.0
        %2005 = vmatprep.mubr.f32.mxu0 0.0
        %2006 = vmatmul.mubr.f32.gmra.mxu0 %v872
        %v2007 = vpop.f32.mrf.mxu0
        %v2008 = vadd.f32 %v1940, %v2007
        %v2009 = vpop.f32.mrf.mxu0
        %2010 = vmatprep.mubr.f32.mxu0 0.0
        %2011 = vmatmul.mubr.f32.gmra.mxu0 %v875
        %v2012 = vpop.f32.mrf.mxu0
        %v2013 = vadd.f32 %v1940, %v2012
        %v2014 = vpop.f32.mrf.mxu0
        %2015 = vdwg.mxu0
        %v2016 = vmul.f32 %v2008, 0.35355338
        %v2017 = vmul.f32 %v2013, 0.35355338
        %s2018 = scalar_lea.vmem %s6, 192
        %v2019 = vld [vmem:[%s2018] sm:$0xff]
        %v2020 = vld [vmem:[%s2018 + $0x8] sm:$0xff]
        %v2021 = vld [vmem:[%s2018 + $0x10] sm:$0xff]
        %v2022 = vld [vmem:[%s2018 + $0x18] sm:$0xff]
        %v2023 = vld [vmem:[%s7 + $0x6] sm:$0x1]
        %v2024 = vlaneseq
        %v2025 = vshrl.u32 %v2024, 7
        %v2026 = vsub.s32 0, %v2025
        %v2027 = vrot.slane %v2023, %v2026
        %2028 = vmatprep.subr.mxu0 0.0
        %2029 = vmatpush1.msra.mxu0 0.0
        %2030 = vmatprep.subr.mxu0 0.0
        %2031 = vmatpush1.msra.mxu0 0.0
        %2032 = vmatprep.subr.mxu0 0.0
        %2033 = vmatpush1.msra.mxu0 0.0
        %2034 = vmatprep.subr.mxu0 0.0
        %2035 = vmatpush1.msra.mxu0 0.0
        %2036 = vmatprep.subr.mxu0 0.0
        %2037 = vmatpush1.msra.mxu0 0.0
        %2038 = vmatprep.subr.mxu0 0.0
        %2039 = vmatpush1.msra.mxu0 0.0
        %2040 = vmatprep.subr.mxu0 0.0
        %2041 = vmatpush1.msra.mxu0 0.0
        %2042 = vmatprep.subr.mxu0 0.0
        %2043 = vmatpush1.msra.mxu0 0.0
        %2044 = vmatprep.subr.mxu0 0.0
        %2045 = vmatpush1.msra.mxu0 0.0
        %2046 = vmatprep.subr.mxu0 0.0
        %2047 = vmatpush1.msra.mxu0 0.0
        %2048 = vmatprep.subr.mxu0 0.0
        %2049 = vmatpush1.msra.mxu0 0.0
        %2050 = vmatprep.subr.mxu0 0.0
        %2051 = vmatpush1.msra.mxu0 0.0
        %2052 = vmatprep.subr.mxu0 0.0
        %2053 = vmatpush1.msra.mxu0 %v2022
        %2054 = vmatprep.subr.mxu0 0.0
        %2055 = vmatpush1.msra.mxu0 %v2021
        %2056 = vmatprep.subr.mxu0 0.0
        %2057 = vmatpush1.msra.mxu0 %v2020
        %2058 = vmatprep.subr.mxu0 0.0
        %2059 = vmatpush1.msra.mxu0 %v2019
        %2060 = vmatprep.subr.mxu0 0.0
        %2061 = vmatpush2.msra.mxu0 0.0
        %2062 = vmatprep.subr.mxu0 0.0
        %2063 = vmatpush2.msra.mxu0 0.0
        %2064 = vmatprep.subr.mxu0 0.0
        %2065 = vmatpush2.msra.mxu0 0.0
        %2066 = vmatprep.subr.mxu0 0.0
        %2067 = vmatpush2.msra.mxu0 0.0
        %2068 = vmatprep.subr.mxu0 0.0
        %2069 = vmatpush2.msra.mxu0 0.0
        %2070 = vmatprep.subr.mxu0 0.0
        %2071 = vmatpush2.msra.mxu0 0.0
        %2072 = vmatprep.subr.mxu0 0.0
        %2073 = vmatpush2.msra.mxu0 0.0
        %2074 = vmatprep.subr.mxu0 0.0
        %2075 = vmatpush2.msra.mxu0 0.0
        %2076 = vmatprep.subr.mxu0 0.0
        %2077 = vmatpush2.msra.mxu0 0.0
        %2078 = vmatprep.subr.mxu0 0.0
        %2079 = vmatpush2.msra.mxu0 0.0
        %2080 = vmatprep.subr.mxu0 0.0
        %2081 = vmatpush2.msra.mxu0 0.0
        %2082 = vmatprep.subr.mxu0 0.0
        %2083 = vmatpush2.msra.mxu0 0.0
        %2084 = vmatprep.subr.mxu0 0.0
        %2085 = vmatpush2.msra.mxu0 0.0
        %2086 = vmatprep.subr.mxu0 0.0
        %2087 = vmatpush2.msra.mxu0 0.0
        %2088 = vmatprep.subr.mxu0 0.0
        %2089 = vmatpush2.msra.mxu0 0.0
        %2090 = vmatprep.subr.mxu0 0.0
        %2091 = vmatpush2.msra.mxu0 0.0
        %2092 = vmatprep.mubr.f32.mxu0 0.0
        %2093 = vmatmul.mubr.f32.gmra.mxu0 %v872
        %v2094 = vpop.f32.mrf.mxu0
        %v2095 = vadd.f32 %v2027, %v2094
        %v2096 = vpop.f32.mrf.mxu0
        %2097 = vmatprep.mubr.f32.mxu0 0.0
        %2098 = vmatmul.mubr.f32.gmra.mxu0 %v875
        %v2099 = vpop.f32.mrf.mxu0
        %v2100 = vadd.f32 %v2027, %v2099
        %v2101 = vpop.f32.mrf.mxu0
        %2102 = vdwg.mxu0
        %s2103 = scalar_lea.vmem %s6, 320
        %v2104 = vld [vmem:[%s2103] sm:$0xff]
        %v2105 = vld [vmem:[%s2103 + $0x8] sm:$0xff]
        %v2106 = vld [vmem:[%s2103 + $0x10] sm:$0xff]
        %v2107 = vld [vmem:[%s2103 + $0x18] sm:$0xff]
        %v2108 = vld [vmem:[%s7 + $0xa] sm:$0x1]
        %v2109 = vlaneseq
        %v2110 = vshrl.u32 %v2109, 7
        %v2111 = vsub.s32 0, %v2110
        %v2112 = vrot.slane %v2108, %v2111
        %2113 = vmatprep.subr.mxu0 0.0
        %2114 = vmatpush1.msra.mxu0 0.0
        %2115 = vmatprep.subr.mxu0 0.0
        %2116 = vmatpush1.msra.mxu0 0.0
        %2117 = vmatprep.subr.mxu0 0.0
        %2118 = vmatpush1.msra.mxu0 0.0
        %2119 = vmatprep.subr.mxu0 0.0
        %2120 = vmatpush1.msra.mxu0 0.0
        %2121 = vmatprep.subr.mxu0 0.0
        %2122 = vmatpush1.msra.mxu0 0.0
        %2123 = vmatprep.subr.mxu0 0.0
        %2124 = vmatpush1.msra.mxu0 0.0
        %2125 = vmatprep.subr.mxu0 0.0
        %2126 = vmatpush1.msra.mxu0 0.0
        %2127 = vmatprep.subr.mxu0 0.0
        %2128 = vmatpush1.msra.mxu0 0.0
        %2129 = vmatprep.subr.mxu0 0.0
        %2130 = vmatpush1.msra.mxu0 0.0
        %2131 = vmatprep.subr.mxu0 0.0
        %2132 = vmatpush1.msra.mxu0 0.0
        %2133 = vmatprep.subr.mxu0 0.0
        %2134 = vmatpush1.msra.mxu0 0.0
        %2135 = vmatprep.subr.mxu0 0.0
        %2136 = vmatpush1.msra.mxu0 0.0
        %2137 = vmatprep.subr.mxu0 0.0
        %2138 = vmatpush1.msra.mxu0 %v2107
        %2139 = vmatprep.subr.mxu0 0.0
        %2140 = vmatpush1.msra.mxu0 %v2106
        %2141 = vmatprep.subr.mxu0 0.0
        %2142 = vmatpush1.msra.mxu0 %v2105
        %2143 = vmatprep.subr.mxu0 0.0
        %2144 = vmatpush1.msra.mxu0 %v2104
        %2145 = vmatprep.subr.mxu0 0.0
        %2146 = vmatpush2.msra.mxu0 0.0
        %2147 = vmatprep.subr.mxu0 0.0
        %2148 = vmatpush2.msra.mxu0 0.0
        %2149 = vmatprep.subr.mxu0 0.0
        %2150 = vmatpush2.msra.mxu0 0.0
        %2151 = vmatprep.subr.mxu0 0.0
        %2152 = vmatpush2.msra.mxu0 0.0
        %2153 = vmatprep.subr.mxu0 0.0
        %2154 = vmatpush2.msra.mxu0 0.0
        %2155 = vmatprep.subr.mxu0 0.0
        %2156 = vmatpush2.msra.mxu0 0.0
        %2157 = vmatprep.subr.mxu0 0.0
        %2158 = vmatpush2.msra.mxu0 0.0
        %2159 = vmatprep.subr.mxu0 0.0
        %2160 = vmatpush2.msra.mxu0 0.0
        %2161 = vmatprep.subr.mxu0 0.0
        %2162 = vmatpush2.msra.mxu0 0.0
        %2163 = vmatprep.subr.mxu0 0.0
        %2164 = vmatpush2.msra.mxu0 0.0
        %2165 = vmatprep.subr.mxu0 0.0
        %2166 = vmatpush2.msra.mxu0 0.0
        %2167 = vmatprep.subr.mxu0 0.0
        %2168 = vmatpush2.msra.mxu0 0.0
        %2169 = vmatprep.subr.mxu0 0.0
        %2170 = vmatpush2.msra.mxu0 0.0
        %2171 = vmatprep.subr.mxu0 0.0
        %2172 = vmatpush2.msra.mxu0 0.0
        %2173 = vmatprep.subr.mxu0 0.0
        %2174 = vmatpush2.msra.mxu0 0.0
        %2175 = vmatprep.subr.mxu0 0.0
        %2176 = vmatpush2.msra.mxu0 0.0
        %2177 = vmatprep.mubr.f32.mxu0 0.0
        %2178 = vmatmul.mubr.f32.gmra.mxu0 %v872
        %v2179 = vpop.f32.mrf.mxu0
        %v2180 = vadd.f32 %v2112, %v2179
        %v2181 = vpop.f32.mrf.mxu0
        %2182 = vmatprep.mubr.f32.mxu0 0.0
        %2183 = vmatmul.mubr.f32.gmra.mxu0 %v875
        %v2184 = vpop.f32.mrf.mxu0
        %v2185 = vadd.f32 %v2112, %v2184
        %v2186 = vpop.f32.mrf.mxu0
        %2187 = vdwg.mxu0
        %v2189 = vsel %vm1124, %v2016, 0
        %v2192 = vsel %vm1124, %v2017, 0
        %v2195 = vsel %vm1124, %v2095, 0
        %v2198 = vsel %vm1124, %v2100, 0
        %2200 = vmatprep.subr.mxu0 0.0
        %2201 = vmatpush1.xpose.msra.mxu0 0.0
        %2202 = vmatprep.subr.mxu0 0.0
        %2203 = vmatpush1.xpose.msra.mxu0 0.0
        %2204 = vmatprep.subr.mxu0 0.0
        %2205 = vmatpush1.xpose.msra.mxu0 0.0
        %2206 = vmatprep.subr.mxu0 0.0
        %2207 = vmatpush1.xpose.msra.mxu0 0.0
        %2208 = vmatprep.subr.mxu0 0.0
        %2209 = vmatpush1.xpose.msra.mxu0 0.0
        %2210 = vmatprep.subr.mxu0 0.0
        %2211 = vmatpush1.xpose.msra.mxu0 0.0
        %2212 = vmatprep.subr.mxu0 0.0
        %2213 = vmatpush1.xpose.msra.mxu0 0.0
        %2214 = vmatprep.subr.mxu0 0.0
        %2215 = vmatpush1.xpose.msra.mxu0 0.0
        %2216 = vmatprep.subr.mxu0 0.0
        %2217 = vmatpush1.xpose.msra.mxu0 0.0
        %2218 = vmatprep.subr.mxu0 0.0
        %2219 = vmatpush1.xpose.msra.mxu0 0.0
        %2220 = vmatprep.subr.mxu0 0.0
        %2221 = vmatpush1.xpose.msra.mxu0 0.0
        %2222 = vmatprep.subr.mxu0 0.0
        %2223 = vmatpush1.xpose.msra.mxu0 0.0
        %2224 = vmatprep.subr.mxu0 0.0
        %2225 = vmatpush1.xpose.msra.mxu0 0.0
        %2226 = vmatprep.subr.mxu0 0.0
        %2227 = vmatpush1.xpose.msra.mxu0 0.0
        %2228 = vmatprep.subr.mxu0 0.0
        %2229 = vmatpush1.xpose.msra.mxu0 %v2198
        %2230 = vmatprep.subr.mxu0 0.0
        %2231 = vmatpush1.xpose.msra.mxu0 %v2195
        %2232 = vmatprep.subr.mxu0 0.0
        %2233 = vmatpush2.xpose.msra.mxu0 0.0
        %2234 = vmatprep.subr.mxu0 0.0
        %2235 = vmatpush2.xpose.msra.mxu0 0.0
        %2236 = vmatprep.subr.mxu0 0.0
        %2237 = vmatpush2.xpose.msra.mxu0 0.0
        %2238 = vmatprep.subr.mxu0 0.0
        %2239 = vmatpush2.xpose.msra.mxu0 0.0
        %2240 = vmatprep.subr.mxu0 0.0
        %2241 = vmatpush2.xpose.msra.mxu0 0.0
        %2242 = vmatprep.subr.mxu0 0.0
        %2243 = vmatpush2.xpose.msra.mxu0 0.0
        %2244 = vmatprep.subr.mxu0 0.0
        %2245 = vmatpush2.xpose.msra.mxu0 0.0
        %2246 = vmatprep.subr.mxu0 0.0
        %2247 = vmatpush2.xpose.msra.mxu0 0.0
        %2248 = vmatprep.subr.mxu0 0.0
        %2249 = vmatpush2.xpose.msra.mxu0 0.0
        %2250 = vmatprep.subr.mxu0 0.0
        %2251 = vmatpush2.xpose.msra.mxu0 0.0
        %2252 = vmatprep.subr.mxu0 0.0
        %2253 = vmatpush2.xpose.msra.mxu0 0.0
        %2254 = vmatprep.subr.mxu0 0.0
        %2255 = vmatpush2.xpose.msra.mxu0 0.0
        %2256 = vmatprep.subr.mxu0 0.0
        %2257 = vmatpush2.xpose.msra.mxu0 0.0
        %2258 = vmatprep.subr.mxu0 0.0
        %2259 = vmatpush2.xpose.msra.mxu0 0.0
        %2260 = vmatprep.subr.mxu0 0.0
        %2261 = vmatpush2.xpose.msra.mxu0 0.0
        %2262 = vmatprep.subr.mxu0 0.0
        %2263 = vmatpush2.xpose.msra.mxu0 0.0
        %2264 = vmatprep.mubr.f32.mxu0 0.0
        %2265 = vmatmul.mubr.f32.gmra.mxu0 %v2189
        %v2266 = vpop.f32.mrf.mxu0
        %v2267 = vadd.f32 0.0, %v2266
        %v2268 = vpop.f32.mrf.mxu0
        %2269 = vmatprep.mubr.f32.mxu0 0.0
        %2270 = vmatmul.mubr.f32.gmra.mxu0 %v2192
        %v2271 = vpop.f32.mrf.mxu0
        %v2272 = vadd.f32 0.0, %v2271
        %v2273 = vpop.f32.mrf.mxu0
        %2274 = vdwg.mxu0
        %v2275 = vsel %vm448, %v2267, -inf
        %2276 = vmax.xlane.f32.xlu0 %v2275
        %v2277 = vpop.xlane.xlu0 %2276
        %v2278 = vsel %vm448, %v2272, -inf
        %2279 = vmax.xlane.f32.xlu0 %v2278
        %v2280 = vpop.xlane.xlu0 %2279
        %v2281 = vsub.f32 %v2267, %v2277
        %v2282 = vsub.f32 %v2272, %v2280
        %v2283 = vmul.f32 %v2281, 1.442695
        %v2284 = vpow.pop %v2283
        %v2285 = vmul.f32 %v2282, 1.442695
        %v2286 = vpow.pop %v2285
        %v2287 = vsel %vm448, %v2284, 0.0
        %2288 = vadd.xlane.f32.xlu0 %v2287
        %v2289 = vpop.xlane.xlu0 %2288
        %v2290 = vsel %vm448, %v2286, 0.0
        %2291 = vadd.xlane.f32.xlu0 %v2290
        %v2292 = vpop.xlane.xlu0 %2291
        %v2293 = vrcp.pop %v2289
        %v2294 = vmul.f32 %v2284, %v2293
        %v2295 = vrcp.pop %v2292
        %v2296 = vmul.f32 %v2286, %v2295
        %v2298 = vsel %vm448, %v2294, 0
        %v2301 = vsel %vm448, %v2296, 0
        %2303 = vmatprep.subr.mxu0 0.0
        %2304 = vmatpush1.msra.mxu0 0.0
        %2305 = vmatprep.subr.mxu0 0.0
        %2306 = vmatpush1.msra.mxu0 0.0
        %2307 = vmatprep.subr.mxu0 0.0
        %2308 = vmatpush1.msra.mxu0 0.0
        %2309 = vmatprep.subr.mxu0 0.0
        %2310 = vmatpush1.msra.mxu0 0.0
        %2311 = vmatprep.subr.mxu0 0.0
        %2312 = vmatpush1.msra.mxu0 0.0
        %2313 = vmatprep.subr.mxu0 0.0
        %2314 = vmatpush1.msra.mxu0 0.0
        %2315 = vmatprep.subr.mxu0 0.0
        %2316 = vmatpush1.msra.mxu0 0.0
        %2317 = vmatprep.subr.mxu0 0.0
        %2318 = vmatpush1.msra.mxu0 0.0
        %2319 = vmatprep.subr.mxu0 0.0
        %2320 = vmatpush1.msra.mxu0 0.0
        %2321 = vmatprep.subr.mxu0 0.0
        %2322 = vmatpush1.msra.mxu0 0.0
        %2323 = vmatprep.subr.mxu0 0.0
        %2324 = vmatpush1.msra.mxu0 0.0
        %2325 = vmatprep.subr.mxu0 0.0
        %2326 = vmatpush1.msra.mxu0 0.0
        %2327 = vmatprep.subr.mxu0 0.0
        %2328 = vmatpush1.msra.mxu0 0.0
        %2329 = vmatprep.subr.mxu0 0.0
        %2330 = vmatpush1.msra.mxu0 0.0
        %2331 = vmatprep.subr.mxu0 0.0
        %2332 = vmatpush1.msra.mxu0 %v2185
        %2333 = vmatprep.subr.mxu0 0.0
        %2334 = vmatpush1.msra.mxu0 %v2180
        %2335 = vmatprep.subr.mxu0 0.0
        %2336 = vmatpush2.msra.mxu0 0.0
        %2337 = vmatprep.subr.mxu0 0.0
        %2338 = vmatpush2.msra.mxu0 0.0
        %2339 = vmatprep.subr.mxu0 0.0
        %2340 = vmatpush2.msra.mxu0 0.0
        %2341 = vmatprep.subr.mxu0 0.0
        %2342 = vmatpush2.msra.mxu0 0.0
        %2343 = vmatprep.subr.mxu0 0.0
        %2344 = vmatpush2.msra.mxu0 0.0
        %2345 = vmatprep.subr.mxu0 0.0
        %2346 = vmatpush2.msra.mxu0 0.0
        %2347 = vmatprep.subr.mxu0 0.0
        %2348 = vmatpush2.msra.mxu0 0.0
        %2349 = vmatprep.subr.mxu0 0.0
        %2350 = vmatpush2.msra.mxu0 0.0
        %2351 = vmatprep.subr.mxu0 0.0
        %2352 = vmatpush2.msra.mxu0 0.0
        %2353 = vmatprep.subr.mxu0 0.0
        %2354 = vmatpush2.msra.mxu0 0.0
        %2355 = vmatprep.subr.mxu0 0.0
        %2356 = vmatpush2.msra.mxu0 0.0
        %2357 = vmatprep.subr.mxu0 0.0
        %2358 = vmatpush2.msra.mxu0 0.0
        %2359 = vmatprep.subr.mxu0 0.0
        %2360 = vmatpush2.msra.mxu0 0.0
        %2361 = vmatprep.subr.mxu0 0.0
        %2362 = vmatpush2.msra.mxu0 0.0
        %2363 = vmatprep.subr.mxu0 0.0
        %2364 = vmatpush2.msra.mxu0 0.0
        %2365 = vmatprep.subr.mxu0 0.0
        %2366 = vmatpush2.msra.mxu0 0.0
        %2367 = vmatprep.mubr.f32.mxu0 0.0
        %2368 = vmatmul.mubr.f32.gmra.mxu0 %v2298
        %v2369 = vpop.f32.mrf.mxu0
        %v2370 = vadd.f32 0.0, %v2369
        %v2371 = vpop.f32.mrf.mxu0
        %2372 = vmatprep.mubr.f32.mxu0 0.0
        %2373 = vmatmul.mubr.f32.gmra.mxu0 %v2301
        %v2374 = vpop.f32.mrf.mxu0
        %v2375 = vadd.f32 0.0, %v2374
        %v2376 = vpop.f32.mrf.mxu0
        %2377 = vdwg.mxu0
        %s2378 = scalar_lea.vmem %s8, 16
        %v2379 = vld [vmem:[%s2378] sm:$0xff]
        %v2381 = vsel %vm1124, %v2370, 0
        %v2384 = vsel %vm1124, %v2375, 0
        %2386 = vmatprep.subr.mxu0 0.0
        %2387 = vmatpush1.msra.mxu0 0.0
        %2388 = vmatprep.subr.mxu0 0.0
        %2389 = vmatpush1.msra.mxu0 0.0
        %2390 = vmatprep.subr.mxu0 0.0
        %2391 = vmatpush1.msra.mxu0 0.0
        %2392 = vmatprep.subr.mxu0 0.0
        %2393 = vmatpush1.msra.mxu0 0.0
        %2394 = vmatprep.subr.mxu0 0.0
        %2395 = vmatpush1.msra.mxu0 0.0
        %2396 = vmatprep.subr.mxu0 0.0
        %2397 = vmatpush1.msra.mxu0 0.0
        %2398 = vmatprep.subr.mxu0 0.0
        %2399 = vmatpush1.msra.mxu0 0.0
        %2400 = vmatprep.subr.mxu0 0.0
        %2401 = vmatpush1.msra.mxu0 0.0
        %2402 = vmatprep.subr.mxu0 0.0
        %2403 = vmatpush1.msra.mxu0 0.0
        %2404 = vmatprep.subr.mxu0 0.0
        %2405 = vmatpush1.msra.mxu0 0.0
        %2406 = vmatprep.subr.mxu0 0.0
        %2407 = vmatpush1.msra.mxu0 0.0
        %2408 = vmatprep.subr.mxu0 0.0
        %2409 = vmatpush1.msra.mxu0 0.0
        %2410 = vmatprep.subr.mxu0 0.0
        %2411 = vmatpush1.msra.mxu0 0.0
        %2412 = vmatprep.subr.mxu0 0.0
        %2413 = vmatpush1.msra.mxu0 0.0
        %2414 = vmatprep.subr.mxu0 0.0
        %2415 = vmatpush1.msra.mxu0 0.0
        %2416 = vmatprep.subr.mxu0 0.0
        %2417 = vmatpush1.msra.mxu0 %v2379
        %2418 = vmatprep.subr.mxu0 0.0
        %2419 = vmatpush2.msra.mxu0 0.0
        %2420 = vmatprep.subr.mxu0 0.0
        %2421 = vmatpush2.msra.mxu0 0.0
        %2422 = vmatprep.subr.mxu0 0.0
        %2423 = vmatpush2.msra.mxu0 0.0
        %2424 = vmatprep.subr.mxu0 0.0
        %2425 = vmatpush2.msra.mxu0 0.0
        %2426 = vmatprep.subr.mxu0 0.0
        %2427 = vmatpush2.msra.mxu0 0.0
        %2428 = vmatprep.subr.mxu0 0.0
        %2429 = vmatpush2.msra.mxu0 0.0
        %2430 = vmatprep.subr.mxu0 0.0
        %2431 = vmatpush2.msra.mxu0 0.0
        %2432 = vmatprep.subr.mxu0 0.0
        %2433 = vmatpush2.msra.mxu0 0.0
        %2434 = vmatprep.subr.mxu0 0.0
        %2435 = vmatpush2.msra.mxu0 0.0
        %2436 = vmatprep.subr.mxu0 0.0
        %2437 = vmatpush2.msra.mxu0 0.0
        %2438 = vmatprep.subr.mxu0 0.0
        %2439 = vmatpush2.msra.mxu0 0.0
        %2440 = vmatprep.subr.mxu0 0.0
        %2441 = vmatpush2.msra.mxu0 0.0
        %2442 = vmatprep.subr.mxu0 0.0
        %2443 = vmatpush2.msra.mxu0 0.0
        %2444 = vmatprep.subr.mxu0 0.0
        %2445 = vmatpush2.msra.mxu0 0.0
        %2446 = vmatprep.subr.mxu0 0.0
        %2447 = vmatpush2.msra.mxu0 0.0
        %2448 = vmatprep.subr.mxu0 0.0
        %2449 = vmatpush2.msra.mxu0 0.0
        %2450 = vmatprep.mubr.f32.mxu0 0.0
        %2451 = vmatmul.mubr.f32.gmra.mxu0 %v2381
        %v2452 = vpop.f32.mrf.mxu0
        %v2453 = vadd.f32 0.0, %v2452
        %v2454 = vpop.f32.mrf.mxu0
        %2455 = vmatprep.mubr.f32.mxu0 0.0
        %2456 = vmatmul.mubr.f32.gmra.mxu0 %v2384
        %v2457 = vpop.f32.mrf.mxu0
        %v2458 = vadd.f32 0.0, %v2457
        %v2459 = vpop.f32.mrf.mxu0
        %2460 = vdwg.mxu0
        %v2461 = vadd.f32 %v1929, %v2453
        %v2462 = vadd.f32 %v1930, %v2458
        %s2463 = scalar_lea.vmem %s6, 96
        %v2464 = vld [vmem:[%s2463] sm:$0xff]
        %v2465 = vld [vmem:[%s2463 + $0x8] sm:$0xff]
        %v2466 = vld [vmem:[%s2463 + $0x10] sm:$0xff]
        %v2467 = vld [vmem:[%s2463 + $0x18] sm:$0xff]
        %v2468 = vld [vmem:[%s7 + $0x3] sm:$0x1]
        %v2469 = vlaneseq
        %v2470 = vshrl.u32 %v2469, 7
        %v2471 = vsub.s32 0, %v2470
        %v2472 = vrot.slane %v2468, %v2471
        %2473 = vmatprep.subr.mxu0 0.0
        %2474 = vmatpush1.msra.mxu0 0.0
        %2475 = vmatprep.subr.mxu0 0.0
        %2476 = vmatpush1.msra.mxu0 0.0
        %2477 = vmatprep.subr.mxu0 0.0
        %2478 = vmatpush1.msra.mxu0 0.0
        %2479 = vmatprep.subr.mxu0 0.0
        %2480 = vmatpush1.msra.mxu0 0.0
        %2481 = vmatprep.subr.mxu0 0.0
        %2482 = vmatpush1.msra.mxu0 0.0
        %2483 = vmatprep.subr.mxu0 0.0
        %2484 = vmatpush1.msra.mxu0 0.0
        %2485 = vmatprep.subr.mxu0 0.0
        %2486 = vmatpush1.msra.mxu0 0.0
        %2487 = vmatprep.subr.mxu0 0.0
        %2488 = vmatpush1.msra.mxu0 0.0
        %2489 = vmatprep.subr.mxu0 0.0
        %2490 = vmatpush1.msra.mxu0 0.0
        %2491 = vmatprep.subr.mxu0 0.0
        %2492 = vmatpush1.msra.mxu0 0.0
        %2493 = vmatprep.subr.mxu0 0.0
        %2494 = vmatpush1.msra.mxu0 0.0
        %2495 = vmatprep.subr.mxu0 0.0
        %2496 = vmatpush1.msra.mxu0 0.0
        %2497 = vmatprep.subr.mxu0 0.0
        %2498 = vmatpush1.msra.mxu0 %v2467
        %2499 = vmatprep.subr.mxu0 0.0
        %2500 = vmatpush1.msra.mxu0 %v2466
        %2501 = vmatprep.subr.mxu0 0.0
        %2502 = vmatpush1.msra.mxu0 %v2465
        %2503 = vmatprep.subr.mxu0 0.0
        %2504 = vmatpush1.msra.mxu0 %v2464
        %2505 = vmatprep.subr.mxu0 0.0
        %2506 = vmatpush2.msra.mxu0 0.0
        %2507 = vmatprep.subr.mxu0 0.0
        %2508 = vmatpush2.msra.mxu0 0.0
        %2509 = vmatprep.subr.mxu0 0.0
        %2510 = vmatpush2.msra.mxu0 0.0
        %2511 = vmatprep.subr.mxu0 0.0
        %2512 = vmatpush2.msra.mxu0 0.0
        %2513 = vmatprep.subr.mxu0 0.0
        %2514 = vmatpush2.msra.mxu0 0.0
        %2515 = vmatprep.subr.mxu0 0.0
        %2516 = vmatpush2.msra.mxu0 0.0
        %2517 = vmatprep.subr.mxu0 0.0
        %2518 = vmatpush2.msra.mxu0 0.0
        %2519 = vmatprep.subr.mxu0 0.0
        %2520 = vmatpush2.msra.mxu0 0.0
        %2521 = vmatprep.subr.mxu0 0.0
        %2522 = vmatpush2.msra.mxu0 0.0
        %2523 = vmatprep.subr.mxu0 0.0
        %2524 = vmatpush2.msra.mxu0 0.0
        %2525 = vmatprep.subr.mxu0 0.0
        %2526 = vmatpush2.msra.mxu0 0.0
        %2527 = vmatprep.subr.mxu0 0.0
        %2528 = vmatpush2.msra.mxu0 0.0
        %2529 = vmatprep.subr.mxu0 0.0
        %2530 = vmatpush2.msra.mxu0 0.0
        %2531 = vmatprep.subr.mxu0 0.0
        %2532 = vmatpush2.msra.mxu0 0.0
        %2533 = vmatprep.subr.mxu0 0.0
        %2534 = vmatpush2.msra.mxu0 0.0
        %2535 = vmatprep.subr.mxu0 0.0
        %2536 = vmatpush2.msra.mxu0 0.0
        %2537 = vmatprep.mubr.f32.mxu0 0.0
        %2538 = vmatmul.mubr.f32.gmra.mxu0 %v872
        %v2539 = vpop.f32.mrf.mxu0
        %v2540 = vadd.f32 %v2472, %v2539
        %v2541 = vpop.f32.mrf.mxu0
        %2542 = vmatprep.mubr.f32.mxu0 0.0
        %2543 = vmatmul.mubr.f32.gmra.mxu0 %v875
        %v2544 = vpop.f32.mrf.mxu0
        %v2545 = vadd.f32 %v2472, %v2544
        %v2546 = vpop.f32.mrf.mxu0
        %2547 = vdwg.mxu0
        %v2548 = vmul.f32 %v2540, 0.35355338
        %v2549 = vmul.f32 %v2545, 0.35355338
        %s2550 = scalar_lea.vmem %s6, 224
        %v2551 = vld [vmem:[%s2550] sm:$0xff]
        %v2552 = vld [vmem:[%s2550 + $0x8] sm:$0xff]
        %v2553 = vld [vmem:[%s2550 + $0x10] sm:$0xff]
        %v2554 = vld [vmem:[%s2550 + $0x18] sm:$0xff]
        %v2555 = vld [vmem:[%s7 + $0x7] sm:$0x1]
        %v2556 = vlaneseq
        %v2557 = vshrl.u32 %v2556, 7
        %v2558 = vsub.s32 0, %v2557
        %v2559 = vrot.slane %v2555, %v2558
        %2560 = vmatprep.subr.mxu0 0.0
        %2561 = vmatpush1.msra.mxu0 0.0
        %2562 = vmatprep.subr.mxu0 0.0
        %2563 = vmatpush1.msra.mxu0 0.0
        %2564 = vmatprep.subr.mxu0 0.0
        %2565 = vmatpush1.msra.mxu0 0.0
        %2566 = vmatprep.subr.mxu0 0.0
        %2567 = vmatpush1.msra.mxu0 0.0
        %2568 = vmatprep.subr.mxu0 0.0
        %2569 = vmatpush1.msra.mxu0 0.0
        %2570 = vmatprep.subr.mxu0 0.0
        %2571 = vmatpush1.msra.mxu0 0.0
        %2572 = vmatprep.subr.mxu0 0.0
        %2573 = vmatpush1.msra.mxu0 0.0
        %2574 = vmatprep.subr.mxu0 0.0
        %2575 = vmatpush1.msra.mxu0 0.0
        %2576 = vmatprep.subr.mxu0 0.0
        %2577 = vmatpush1.msra.mxu0 0.0
        %2578 = vmatprep.subr.mxu0 0.0
        %2579 = vmatpush1.msra.mxu0 0.0
        %2580 = vmatprep.subr.mxu0 0.0
        %2581 = vmatpush1.msra.mxu0 0.0
        %2582 = vmatprep.subr.mxu0 0.0
        %2583 = vmatpush1.msra.mxu0 0.0
        %2584 = vmatprep.subr.mxu0 0.0
        %2585 = vmatpush1.msra.mxu0 %v2554
        %2586 = vmatprep.subr.mxu0 0.0
        %2587 = vmatpush1.msra.mxu0 %v2553
        %2588 = vmatprep.subr.mxu0 0.0
        %2589 = vmatpush1.msra.mxu0 %v2552
        %2590 = vmatprep.subr.mxu0 0.0
        %2591 = vmatpush1.msra.mxu0 %v2551
        %2592 = vmatprep.subr.mxu0 0.0
        %2593 = vmatpush2.msra.mxu0 0.0
        %2594 = vmatprep.subr.mxu0 0.0
        %2595 = vmatpush2.msra.mxu0 0.0
        %2596 = vmatprep.subr.mxu0 0.0
        %2597 = vmatpush2.msra.mxu0 0.0
        %2598 = vmatprep.subr.mxu0 0.0
        %2599 = vmatpush2.msra.mxu0 0.0
        %2600 = vmatprep.subr.mxu0 0.0
        %2601 = vmatpush2.msra.mxu0 0.0
        %2602 = vmatprep.subr.mxu0 0.0
        %2603 = vmatpush2.msra.mxu0 0.0
        %2604 = vmatprep.subr.mxu0 0.0
        %2605 = vmatpush2.msra.mxu0 0.0
        %2606 = vmatprep.subr.mxu0 0.0
        %2607 = vmatpush2.msra.mxu0 0.0
        %2608 = vmatprep.subr.mxu0 0.0
        %2609 = vmatpush2.msra.mxu0 0.0
        %2610 = vmatprep.subr.mxu0 0.0
        %2611 = vmatpush2.msra.mxu0 0.0
        %2612 = vmatprep.subr.mxu0 0.0
        %2613 = vmatpush2.msra.mxu0 0.0
        %2614 = vmatprep.subr.mxu0 0.0
        %2615 = vmatpush2.msra.mxu0 0.0
        %2616 = vmatprep.subr.mxu0 0.0
        %2617 = vmatpush2.msra.mxu0 0.0
        %2618 = vmatprep.subr.mxu0 0.0
        %2619 = vmatpush2.msra.mxu0 0.0
        %2620 = vmatprep.subr.mxu0 0.0
        %2621 = vmatpush2.msra.mxu0 0.0
        %2622 = vmatprep.subr.mxu0 0.0
        %2623 = vmatpush2.msra.mxu0 0.0
        %2624 = vmatprep.mubr.f32.mxu0 0.0
        %2625 = vmatmul.mubr.f32.gmra.mxu0 %v872
        %v2626 = vpop.f32.mrf.mxu0
        %v2627 = vadd.f32 %v2559, %v2626
        %v2628 = vpop.f32.mrf.mxu0
        %2629 = vmatprep.mubr.f32.mxu0 0.0
        %2630 = vmatmul.mubr.f32.gmra.mxu0 %v875
        %v2631 = vpop.f32.mrf.mxu0
        %v2632 = vadd.f32 %v2559, %v2631
        %v2633 = vpop.f32.mrf.mxu0
        %2634 = vdwg.mxu0
        %s2635 = scalar_lea.vmem %s6, 352
        %v2636 = vld [vmem:[%s2635] sm:$0xff]
        %v2637 = vld [vmem:[%s2635 + $0x8] sm:$0xff]
        %v2638 = vld [vmem:[%s2635 + $0x10] sm:$0xff]
        %v2639 = vld [vmem:[%s2635 + $0x18] sm:$0xff]
        %v2640 = vld [vmem:[%s7 + $0xb] sm:$0x1]
        %v2641 = vlaneseq
        %v2642 = vshrl.u32 %v2641, 7
        %v2643 = vsub.s32 0, %v2642
        %v2644 = vrot.slane %v2640, %v2643
        %2645 = vmatprep.subr.mxu0 0.0
        %2646 = vmatpush1.msra.mxu0 0.0
        %2647 = vmatprep.subr.mxu0 0.0
        %2648 = vmatpush1.msra.mxu0 0.0
        %2649 = vmatprep.subr.mxu0 0.0
        %2650 = vmatpush1.msra.mxu0 0.0
        %2651 = vmatprep.subr.mxu0 0.0
        %2652 = vmatpush1.msra.mxu0 0.0
        %2653 = vmatprep.subr.mxu0 0.0
        %2654 = vmatpush1.msra.mxu0 0.0
        %2655 = vmatprep.subr.mxu0 0.0
        %2656 = vmatpush1.msra.mxu0 0.0
        %2657 = vmatprep.subr.mxu0 0.0
        %2658 = vmatpush1.msra.mxu0 0.0
        %2659 = vmatprep.subr.mxu0 0.0
        %2660 = vmatpush1.msra.mxu0 0.0
        %2661 = vmatprep.subr.mxu0 0.0
        %2662 = vmatpush1.msra.mxu0 0.0
        %2663 = vmatprep.subr.mxu0 0.0
        %2664 = vmatpush1.msra.mxu0 0.0
        %2665 = vmatprep.subr.mxu0 0.0
        %2666 = vmatpush1.msra.mxu0 0.0
        %2667 = vmatprep.subr.mxu0 0.0
        %2668 = vmatpush1.msra.mxu0 0.0
        %2669 = vmatprep.subr.mxu0 0.0
        %2670 = vmatpush1.msra.mxu0 %v2639
        %2671 = vmatprep.subr.mxu0 0.0
        %2672 = vmatpush1.msra.mxu0 %v2638
        %2673 = vmatprep.subr.mxu0 0.0
        %2674 = vmatpush1.msra.mxu0 %v2637
        %2675 = vmatprep.subr.mxu0 0.0
        %2676 = vmatpush1.msra.mxu0 %v2636
        %2677 = vmatprep.subr.mxu0 0.0
        %2678 = vmatpush2.msra.mxu0 0.0
        %2679 = vmatprep.subr.mxu0 0.0
        %2680 = vmatpush2.msra.mxu0 0.0
        %2681 = vmatprep.subr.mxu0 0.0
        %2682 = vmatpush2.msra.mxu0 0.0
        %2683 = vmatprep.subr.mxu0 0.0
        %2684 = vmatpush2.msra.mxu0 0.0
        %2685 = vmatprep.subr.mxu0 0.0
        %2686 = vmatpush2.msra.mxu0 0.0
        %2687 = vmatprep.subr.mxu0 0.0
        %2688 = vmatpush2.msra.mxu0 0.0
        %2689 = vmatprep.subr.mxu0 0.0
        %2690 = vmatpush2.msra.mxu0 0.0
        %2691 = vmatprep.subr.mxu0 0.0
        %2692 = vmatpush2.msra.mxu0 0.0
        %2693 = vmatprep.subr.mxu0 0.0
        %2694 = vmatpush2.msra.mxu0 0.0
        %2695 = vmatprep.subr.mxu0 0.0
        %2696 = vmatpush2.msra.mxu0 0.0
        %2697 = vmatprep.subr.mxu0 0.0
        %2698 = vmatpush2.msra.mxu0 0.0
        %2699 = vmatprep.subr.mxu0 0.0
        %2700 = vmatpush2.msra.mxu0 0.0
        %2701 = vmatprep.subr.mxu0 0.0
        %2702 = vmatpush2.msra.mxu0 0.0
        %2703 = vmatprep.subr.mxu0 0.0
        %2704 = vmatpush2.msra.mxu0 0.0
        %2705 = vmatprep.subr.mxu0 0.0
        %2706 = vmatpush2.msra.mxu0 0.0
        %2707 = vmatprep.subr.mxu0 0.0
        %2708 = vmatpush2.msra.mxu0 0.0
        %2709 = vmatprep.mubr.f32.mxu0 0.0
        %2710 = vmatmul.mubr.f32.gmra.mxu0 %v872
        %v2711 = vpop.f32.mrf.mxu0
        %v2712 = vadd.f32 %v2644, %v2711
        %v2713 = vpop.f32.mrf.mxu0
        %2714 = vmatprep.mubr.f32.mxu0 0.0
        %2715 = vmatmul.mubr.f32.gmra.mxu0 %v875
        %v2716 = vpop.f32.mrf.mxu0
        %v2717 = vadd.f32 %v2644, %v2716
        %v2718 = vpop.f32.mrf.mxu0
        %2719 = vdwg.mxu0
        %v2721 = vsel %vm1124, %v2548, 0
        %v2724 = vsel %vm1124, %v2549, 0
        %v2727 = vsel %vm1124, %v2627, 0
        %v2730 = vsel %vm1124, %v2632, 0
        %2732 = vmatprep.subr.mxu0 0.0
        %2733 = vmatpush1.xpose.msra.mxu0 0.0
        %2734 = vmatprep.subr.mxu0 0.0
        %2735 = vmatpush1.xpose.msra.mxu0 0.0
        %2736 = vmatprep.subr.mxu0 0.0
        %2737 = vmatpush1.xpose.msra.mxu0 0.0
        %2738 = vmatprep.subr.mxu0 0.0
        %2739 = vmatpush1.xpose.msra.mxu0 0.0
        %2740 = vmatprep.subr.mxu0 0.0
        %2741 = vmatpush1.xpose.msra.mxu0 0.0
        %2742 = vmatprep.subr.mxu0 0.0
        %2743 = vmatpush1.xpose.msra.mxu0 0.0
        %2744 = vmatprep.subr.mxu0 0.0
        %2745 = vmatpush1.xpose.msra.mxu0 0.0
        %2746 = vmatprep.subr.mxu0 0.0
        %2747 = vmatpush1.xpose.msra.mxu0 0.0
        %2748 = vmatprep.subr.mxu0 0.0
        %2749 = vmatpush1.xpose.msra.mxu0 0.0
        %2750 = vmatprep.subr.mxu0 0.0
        %2751 = vmatpush1.xpose.msra.mxu0 0.0
        %2752 = vmatprep.subr.mxu0 0.0
        %2753 = vmatpush1.xpose.msra.mxu0 0.0
        %2754 = vmatprep.subr.mxu0 0.0
        %2755 = vmatpush1.xpose.msra.mxu0 0.0
        %2756 = vmatprep.subr.mxu0 0.0
        %2757 = vmatpush1.xpose.msra.mxu0 0.0
        %2758 = vmatprep.subr.mxu0 0.0
        %2759 = vmatpush1.xpose.msra.mxu0 0.0
        %2760 = vmatprep.subr.mxu0 0.0
        %2761 = vmatpush1.xpose.msra.mxu0 %v2730
        %2762 = vmatprep.subr.mxu0 0.0
        %2763 = vmatpush1.xpose.msra.mxu0 %v2727
        %2764 = vmatprep.subr.mxu0 0.0
        %2765 = vmatpush2.xpose.msra.mxu0 0.0
        %2766 = vmatprep.subr.mxu0 0.0
        %2767 = vmatpush2.xpose.msra.mxu0 0.0
        %2768 = vmatprep.subr.mxu0 0.0
        %2769 = vmatpush2.xpose.msra.mxu0 0.0
        %2770 = vmatprep.subr.mxu0 0.0
        %2771 = vmatpush2.xpose.msra.mxu0 0.0
        %2772 = vmatprep.subr.mxu0 0.0
        %2773 = vmatpush2.xpose.msra.mxu0 0.0
        %2774 = vmatprep.subr.mxu0 0.0
        %2775 = vmatpush2.xpose.msra.mxu0 0.0
        %2776 = vmatprep.subr.mxu0 0.0
        %2777 = vmatpush2.xpose.msra.mxu0 0.0
        %2778 = vmatprep.subr.mxu0 0.0
        %2779 = vmatpush2.xpose.msra.mxu0 0.0
        %2780 = vmatprep.subr.mxu0 0.0
        %2781 = vmatpush2.xpose.msra.mxu0 0.0
        %2782 = vmatprep.subr.mxu0 0.0
        %2783 = vmatpush2.xpose.msra.mxu0 0.0
        %2784 = vmatprep.subr.mxu0 0.0
        %2785 = vmatpush2.xpose.msra.mxu0 0.0
        %2786 = vmatprep.subr.mxu0 0.0
        %2787 = vmatpush2.xpose.msra.mxu0 0.0
        %2788 = vmatprep.subr.mxu0 0.0
        %2789 = vmatpush2.xpose.msra.mxu0 0.0
        %2790 = vmatprep.subr.mxu0 0.0
        %2791 = vmatpush2.xpose.msra.mxu0 0.0
        %2792 = vmatprep.subr.mxu0 0.0
        %2793 = vmatpush2.xpose.msra.mxu0 0.0
        %2794 = vmatprep.subr.mxu0 0.0
        %2795 = vmatpush2.xpose.msra.mxu0 0.0
        %2796 = vmatprep.mubr.f32.mxu0 0.0
        %2797 = vmatmul.mubr.f32.gmra.mxu0 %v2721
        %v2798 = vpop.f32.mrf.mxu0
        %v2799 = vadd.f32 0.0, %v2798
        %v2800 = vpop.f32.mrf.mxu0
        %2801 = vmatprep.mubr.f32.mxu0 0.0
        %2802 = vmatmul.mubr.f32.gmra.mxu0 %v2724
        %v2803 = vpop.f32.mrf.mxu0
        %v2804 = vadd.f32 0.0, %v2803
        %v2805 = vpop.f32.mrf.mxu0
        %2806 = vdwg.mxu0
        %v2807 = vsel %vm448, %v2799, -inf
        %2808 = vmax.xlane.f32.xlu0 %v2807
        %v2809 = vpop.xlane.xlu0 %2808
        %v2810 = vsel %vm448, %v2804, -inf
        %2811 = vmax.xlane.f32.xlu0 %v2810
        %v2812 = vpop.xlane.xlu0 %2811
        %v2813 = vsub.f32 %v2799, %v2809
        %v2814 = vsub.f32 %v2804, %v2812
        %v2815 = vmul.f32 %v2813, 1.442695
        %v2816 = vpow.pop %v2815
        %v2817 = vmul.f32 %v2814, 1.442695
        %v2818 = vpow.pop %v2817
        %v2819 = vsel %vm448, %v2816, 0.0
        %2820 = vadd.xlane.f32.xlu0 %v2819
        %v2821 = vpop.xlane.xlu0 %2820
        %v2822 = vsel %vm448, %v2818, 0.0
        %2823 = vadd.xlane.f32.xlu0 %v2822
        %v2824 = vpop.xlane.xlu0 %2823
        %v2825 = vrcp.pop %v2821
        %v2826 = vmul.f32 %v2816, %v2825
        %v2827 = vrcp.pop %v2824
        %v2828 = vmul.f32 %v2818, %v2827
        %v2830 = vsel %vm448, %v2826, 0
        %v2833 = vsel %vm448, %v2828, 0
        %2835 = vmatprep.subr.mxu0 0.0
        %2836 = vmatpush1.msra.mxu0 0.0
        %2837 = vmatprep.subr.mxu0 0.0
        %2838 = vmatpush1.msra.mxu0 0.0
        %2839 = vmatprep.subr.mxu0 0.0
        %2840 = vmatpush1.msra.mxu0 0.0
        %2841 = vmatprep.subr.mxu0 0.0
        %2842 = vmatpush1.msra.mxu0 0.0
        %2843 = vmatprep.subr.mxu0 0.0
        %2844 = vmatpush1.msra.mxu0 0.0
        %2845 = vmatprep.subr.mxu0 0.0
        %2846 = vmatpush1.msra.mxu0 0.0
        %2847 = vmatprep.subr.mxu0 0.0
        %2848 = vmatpush1.msra.mxu0 0.0
        %2849 = vmatprep.subr.mxu0 0.0
        %2850 = vmatpush1.msra.mxu0 0.0
        %2851 = vmatprep.subr.mxu0 0.0
        %2852 = vmatpush1.msra.mxu0 0.0
        %2853 = vmatprep.subr.mxu0 0.0
        %2854 = vmatpush1.msra.mxu0 0.0
        %2855 = vmatprep.subr.mxu0 0.0
        %2856 = vmatpush1.msra.mxu0 0.0
        %2857 = vmatprep.subr.mxu0 0.0
        %2858 = vmatpush1.msra.mxu0 0.0
        %2859 = vmatprep.subr.mxu0 0.0
        %2860 = vmatpush1.msra.mxu0 0.0
        %2861 = vmatprep.subr.mxu0 0.0
        %2862 = vmatpush1.msra.mxu0 0.0
        %2863 = vmatprep.subr.mxu0 0.0
        %2864 = vmatpush1.msra.mxu0 %v2717
        %2865 = vmatprep.subr.mxu0 0.0
        %2866 = vmatpush1.msra.mxu0 %v2712
        %2867 = vmatprep.subr.mxu0 0.0
        %2868 = vmatpush2.msra.mxu0 0.0
        %2869 = vmatprep.subr.mxu0 0.0
        %2870 = vmatpush2.msra.mxu0 0.0
        %2871 = vmatprep.subr.mxu0 0.0
        %2872 = vmatpush2.msra.mxu0 0.0
        %2873 = vmatprep.subr.mxu0 0.0
        %2874 = vmatpush2.msra.mxu0 0.0
        %2875 = vmatprep.subr.mxu0 0.0
        %2876 = vmatpush2.msra.mxu0 0.0
        %2877 = vmatprep.subr.mxu0 0.0
        %2878 = vmatpush2.msra.mxu0 0.0
        %2879 = vmatprep.subr.mxu0 0.0
        %2880 = vmatpush2.msra.mxu0 0.0
        %2881 = vmatprep.subr.mxu0 0.0
        %2882 = vmatpush2.msra.mxu0 0.0
        %2883 = vmatprep.subr.mxu0 0.0
        %2884 = vmatpush2.msra.mxu0 0.0
        %2885 = vmatprep.subr.mxu0 0.0
        %2886 = vmatpush2.msra.mxu0 0.0
        %2887 = vmatprep.subr.mxu0 0.0
        %2888 = vmatpush2.msra.mxu0 0.0
        %2889 = vmatprep.subr.mxu0 0.0
        %2890 = vmatpush2.msra.mxu0 0.0
        %2891 = vmatprep.subr.mxu0 0.0
        %2892 = vmatpush2.msra.mxu0 0.0
        %2893 = vmatprep.subr.mxu0 0.0
        %2894 = vmatpush2.msra.mxu0 0.0
        %2895 = vmatprep.subr.mxu0 0.0
        %2896 = vmatpush2.msra.mxu0 0.0
        %2897 = vmatprep.subr.mxu0 0.0
        %2898 = vmatpush2.msra.mxu0 0.0
        %2899 = vmatprep.mubr.f32.mxu0 0.0
        %2900 = vmatmul.mubr.f32.gmra.mxu0 %v2830
        %v2901 = vpop.f32.mrf.mxu0
        %v2902 = vadd.f32 0.0, %v2901
        %v2903 = vpop.f32.mrf.mxu0
        %2904 = vmatprep.mubr.f32.mxu0 0.0
        %2905 = vmatmul.mubr.f32.gmra.mxu0 %v2833
        %v2906 = vpop.f32.mrf.mxu0
        %v2907 = vadd.f32 0.0, %v2906
        %v2908 = vpop.f32.mrf.mxu0
        %2909 = vdwg.mxu0
        %s2910 = scalar_lea.vmem %s8, 24
        %v2911 = vld [vmem:[%s2910] sm:$0xff]
        %v2913 = vsel %vm1124, %v2902, 0
        %v2916 = vsel %vm1124, %v2907, 0
        %2918 = vmatprep.subr.mxu0 0.0
        %2919 = vmatpush1.msra.mxu0 0.0
        %2920 = vmatprep.subr.mxu0 0.0
        %2921 = vmatpush1.msra.mxu0 0.0
        %2922 = vmatprep.subr.mxu0 0.0
        %2923 = vmatpush1.msra.mxu0 0.0
        %2924 = vmatprep.subr.mxu0 0.0
        %2925 = vmatpush1.msra.mxu0 0.0
        %2926 = vmatprep.subr.mxu0 0.0
        %2927 = vmatpush1.msra.mxu0 0.0
        %2928 = vmatprep.subr.mxu0 0.0
        %2929 = vmatpush1.msra.mxu0 0.0
        %2930 = vmatprep.subr.mxu0 0.0
        %2931 = vmatpush1.msra.mxu0 0.0
        %2932 = vmatprep.subr.mxu0 0.0
        %2933 = vmatpush1.msra.mxu0 0.0
        %2934 = vmatprep.subr.mxu0 0.0
        %2935 = vmatpush1.msra.mxu0 0.0
        %2936 = vmatprep.subr.mxu0 0.0
        %2937 = vmatpush1.msra.mxu0 0.0
        %2938 = vmatprep.subr.mxu0 0.0
        %2939 = vmatpush1.msra.mxu0 0.0
        %2940 = vmatprep.subr.mxu0 0.0
        %2941 = vmatpush1.msra.mxu0 0.0
        %2942 = vmatprep.subr.mxu0 0.0
        %2943 = vmatpush1.msra.mxu0 0.0
        %2944 = vmatprep.subr.mxu0 0.0
        %2945 = vmatpush1.msra.mxu0 0.0
        %2946 = vmatprep.subr.mxu0 0.0
        %2947 = vmatpush1.msra.mxu0 0.0
        %2948 = vmatprep.subr.mxu0 0.0
        %2949 = vmatpush1.msra.mxu0 %v2911
        %2950 = vmatprep.subr.mxu0 0.0
        %2951 = vmatpush2.msra.mxu0 0.0
        %2952 = vmatprep.subr.mxu0 0.0
        %2953 = vmatpush2.msra.mxu0 0.0
        %2954 = vmatprep.subr.mxu0 0.0
        %2955 = vmatpush2.msra.mxu0 0.0
        %2956 = vmatprep.subr.mxu0 0.0
        %2957 = vmatpush2.msra.mxu0 0.0
        %2958 = vmatprep.subr.mxu0 0.0
        %2959 = vmatpush2.msra.mxu0 0.0
        %2960 = vmatprep.subr.mxu0 0.0
        %2961 = vmatpush2.msra.mxu0 0.0
        %2962 = vmatprep.subr.mxu0 0.0
        %2963 = vmatpush2.msra.mxu0 0.0
        %2964 = vmatprep.subr.mxu0 0.0
        %2965 = vmatpush2.msra.mxu0 0.0
        %2966 = vmatprep.subr.mxu0 0.0
        %2967 = vmatpush2.msra.mxu0 0.0
        %2968 = vmatprep.subr.mxu0 0.0
        %2969 = vmatpush2.msra.mxu0 0.0
        %2970 = vmatprep.subr.mxu0 0.0
        %2971 = vmatpush2.msra.mxu0 0.0
        %2972 = vmatprep.subr.mxu0 0.0
        %2973 = vmatpush2.msra.mxu0 0.0
        %2974 = vmatprep.subr.mxu0 0.0
        %2975 = vmatpush2.msra.mxu0 0.0
        %2976 = vmatprep.subr.mxu0 0.0
        %2977 = vmatpush2.msra.mxu0 0.0
        %2978 = vmatprep.subr.mxu0 0.0
        %2979 = vmatpush2.msra.mxu0 0.0
        %2980 = vmatprep.subr.mxu0 0.0
        %2981 = vmatpush2.msra.mxu0 0.0
        %2982 = vmatprep.mubr.f32.mxu0 0.0
        %2983 = vmatmul.mubr.f32.gmra.mxu0 %v2913
        %v2984 = vpop.f32.mrf.mxu0
        %v2985 = vadd.f32 0.0, %v2984
        %v2986 = vpop.f32.mrf.mxu0
        %2987 = vmatprep.mubr.f32.mxu0 0.0
        %2988 = vmatmul.mubr.f32.gmra.mxu0 %v2916
        %v2989 = vpop.f32.mrf.mxu0
        %v2990 = vadd.f32 0.0, %v2989
        %v2991 = vpop.f32.mrf.mxu0
        %2992 = vdwg.mxu0
        %v2993 = vadd.f32 %v2461, %v2985
        %v2994 = vadd.f32 %v2462, %v2990
        %v2995 = vadd.f32 %v814, %v2993
        %v2996 = vadd.f32 %v815, %v2994
        %v2997 = vld [vmem:[%s2 + $0x9] sm:$0x1]
        %v2998 = vld [vmem:[%s2 + $0xa] sm:$0x1]
        %v2999 = vsel %vm532, %v2995, 0.0
        %3000 = vadd.xlane.f32.xlu0 %v2999
        %v3001 = vpop.xlane.xlu0 %3000
        %v3002 = vsel %vm532, %v2996, 0.0
        %3003 = vadd.xlane.f32.xlu0 %v3002
        %v3004 = vpop.xlane.xlu0 %3003
        %v3005 = vmul.f32 %v3001, %v539
        %v3006 = vmul.f32 %v3004, %v539
        %v3007 = vsub.f32 %v2995, %v3005
        %v3008 = vsub.f32 %v2996, %v3006
        %v3009 = vmul.f32 %v3007, %v3007
        %v3010 = vmul.f32 %v3008, %v3008
        %v3011 = vsel %vm532, %v3009, 0.0
        %3012 = vadd.xlane.f32.xlu0 %v3011
        %v3013 = vpop.xlane.xlu0 %3012
        %v3014 = vsel %vm532, %v3010, 0.0
        %3015 = vadd.xlane.f32.xlu0 %v3014
        %v3016 = vpop.xlane.xlu0 %3015
        %v3017 = vmul.f32 %v3013, %v539
        %v3018 = vmul.f32 %v3016, %v539
        %v3019 = vadd.f32 %v3017, 1e-05
        %v3020 = vadd.f32 %v3018, 1e-05
        %v3021 = vrsqrt.pop %v3019
        %v3022 = vrsqrt.pop %v3020
        %v3023 = vmul.f32 %v3007, %v3021
        %v3024 = vmul.f32 %v3008, %v3022
        %v3025 = vlaneseq
        %v3026 = vshrl.u32 %v3025, 7
        %v3027 = vsub.s32 0, %v3026
        %v3028 = vrot.slane %v2997, %v3027
        %v3029 = vmul.f32 %v3023, %v3028
        %v3030 = vmul.f32 %v3024, %v3028
        %v3031 = vlaneseq
        %v3032 = vshrl.u32 %v3031, 7
        %v3033 = vsub.s32 0, %v3032
        %v3034 = vrot.slane %v2998, %v3033
        %v3035 = vadd.f32 %v3029, %v3034
        %v3036 = vadd.f32 %v3030, %v3034
        %v3037 = vld [vmem:[%s9] sm:$0xff]
        %v3038 = vld [vmem:[%s9 + $0x8] sm:$0xff]
        %v3039 = vld [vmem:[%s9 + $0x10] sm:$0xff]
        %v3040 = vld [vmem:[%s9 + $0x18] sm:$0xff]
        %v3041 = vld [vmem:[%s2 + $0xb] sm:$0x1]
        %v3042 = vlaneseq
        %v3043 = vshrl.u32 %v3042, 7
        %v3044 = vsub.s32 0, %v3043
        %v3045 = vrot.slane %v3041, %v3044
        %v3047 = vsel %vm532, %v3035, 0
        %v3050 = vsel %vm532, %v3036, 0
        %3052 = vmatprep.subr.mxu0 0.0
        %3053 = vmatpush1.msra.mxu0 0.0
        %3054 = vmatprep.subr.mxu0 0.0
        %3055 = vmatpush1.msra.mxu0 0.0
        %3056 = vmatprep.subr.mxu0 0.0
        %3057 = vmatpush1.msra.mxu0 0.0
        %3058 = vmatprep.subr.mxu0 0.0
        %3059 = vmatpush1.msra.mxu0 0.0
        %3060 = vmatprep.subr.mxu0 0.0
        %3061 = vmatpush1.msra.mxu0 0.0
        %3062 = vmatprep.subr.mxu0 0.0
        %3063 = vmatpush1.msra.mxu0 0.0
        %3064 = vmatprep.subr.mxu0 0.0
        %3065 = vmatpush1.msra.mxu0 0.0
        %3066 = vmatprep.subr.mxu0 0.0
        %3067 = vmatpush1.msra.mxu0 0.0
        %3068 = vmatprep.subr.mxu0 0.0
        %3069 = vmatpush1.msra.mxu0 0.0
        %3070 = vmatprep.subr.mxu0 0.0
        %3071 = vmatpush1.msra.mxu0 0.0
        %3072 = vmatprep.subr.mxu0 0.0
        %3073 = vmatpush1.msra.mxu0 0.0
        %3074 = vmatprep.subr.mxu0 0.0
        %3075 = vmatpush1.msra.mxu0 0.0
        %3076 = vmatprep.subr.mxu0 0.0
        %3077 = vmatpush1.msra.mxu0 %v3040
        %3078 = vmatprep.subr.mxu0 0.0
        %3079 = vmatpush1.msra.mxu0 %v3039
        %3080 = vmatprep.subr.mxu0 0.0
        %3081 = vmatpush1.msra.mxu0 %v3038
        %3082 = vmatprep.subr.mxu0 0.0
        %3083 = vmatpush1.msra.mxu0 %v3037
        %3084 = vmatprep.subr.mxu0 0.0
        %3085 = vmatpush2.msra.mxu0 0.0
        %3086 = vmatprep.subr.mxu0 0.0
        %3087 = vmatpush2.msra.mxu0 0.0
        %3088 = vmatprep.subr.mxu0 0.0
        %3089 = vmatpush2.msra.mxu0 0.0
        %3090 = vmatprep.subr.mxu0 0.0
        %3091 = vmatpush2.msra.mxu0 0.0
        %3092 = vmatprep.subr.mxu0 0.0
        %3093 = vmatpush2.msra.mxu0 0.0
        %3094 = vmatprep.subr.mxu0 0.0
        %3095 = vmatpush2.msra.mxu0 0.0
        %3096 = vmatprep.subr.mxu0 0.0
        %3097 = vmatpush2.msra.mxu0 0.0
        %3098 = vmatprep.subr.mxu0 0.0
        %3099 = vmatpush2.msra.mxu0 0.0
        %3100 = vmatprep.subr.mxu0 0.0
        %3101 = vmatpush2.msra.mxu0 0.0
        %3102 = vmatprep.subr.mxu0 0.0
        %3103 = vmatpush2.msra.mxu0 0.0
        %3104 = vmatprep.subr.mxu0 0.0
        %3105 = vmatpush2.msra.mxu0 0.0
        %3106 = vmatprep.subr.mxu0 0.0
        %3107 = vmatpush2.msra.mxu0 0.0
        %3108 = vmatprep.subr.mxu0 0.0
        %3109 = vmatpush2.msra.mxu0 0.0
        %3110 = vmatprep.subr.mxu0 0.0
        %3111 = vmatpush2.msra.mxu0 0.0
        %3112 = vmatprep.subr.mxu0 0.0
        %3113 = vmatpush2.msra.mxu0 0.0
        %3114 = vmatprep.subr.mxu0 0.0
        %3115 = vmatpush2.msra.mxu0 0.0
        %3116 = vmatprep.mubr.f32.mxu0 0.0
        %3117 = vmatmul.mubr.f32.gmra.mxu0 %v3047
        %v3118 = vpop.f32.mrf.mxu0
        %v3119 = vadd.f32 %v3045, %v3118
        %v3120 = vpop.f32.mrf.mxu0
        %3121 = vmatprep.mubr.f32.mxu0 0.0
        %3122 = vmatmul.mubr.f32.gmra.mxu0 %v3050
        %v3123 = vpop.f32.mrf.mxu0
        %v3124 = vadd.f32 %v3045, %v3123
        %v3125 = vpop.f32.mrf.mxu0
        %3126 = vdwg.mxu0
        %s3127 = scalar_lea.vmem %s9, 32
        %v3128 = vld [vmem:[%s3127] sm:$0xff]
        %v3129 = vld [vmem:[%s3127 + $0x8] sm:$0xff]
        %v3130 = vld [vmem:[%s3127 + $0x10] sm:$0xff]
        %v3131 = vld [vmem:[%s3127 + $0x18] sm:$0xff]
        %v3132 = vld [vmem:[%s2 + $0xc] sm:$0x1]
        %v3133 = vlaneseq
        %v3134 = vshrl.u32 %v3133, 7
        %v3135 = vsub.s32 0, %v3134
        %v3136 = vrot.slane %v3132, %v3135
        %3137 = vmatprep.subr.mxu0 0.0
        %3138 = vmatpush1.msra.mxu0 0.0
        %3139 = vmatprep.subr.mxu0 0.0
        %3140 = vmatpush1.msra.mxu0 0.0
        %3141 = vmatprep.subr.mxu0 0.0
        %3142 = vmatpush1.msra.mxu0 0.0
        %3143 = vmatprep.subr.mxu0 0.0
        %3144 = vmatpush1.msra.mxu0 0.0
        %3145 = vmatprep.subr.mxu0 0.0
        %3146 = vmatpush1.msra.mxu0 0.0
        %3147 = vmatprep.subr.mxu0 0.0
        %3148 = vmatpush1.msra.mxu0 0.0
        %3149 = vmatprep.subr.mxu0 0.0
        %3150 = vmatpush1.msra.mxu0 0.0
        %3151 = vmatprep.subr.mxu0 0.0
        %3152 = vmatpush1.msra.mxu0 0.0
        %3153 = vmatprep.subr.mxu0 0.0
        %3154 = vmatpush1.msra.mxu0 0.0
        %3155 = vmatprep.subr.mxu0 0.0
        %3156 = vmatpush1.msra.mxu0 0.0
        %3157 = vmatprep.subr.mxu0 0.0
        %3158 = vmatpush1.msra.mxu0 0.0
        %3159 = vmatprep.subr.mxu0 0.0
        %3160 = vmatpush1.msra.mxu0 0.0
        %3161 = vmatprep.subr.mxu0 0.0
        %3162 = vmatpush1.msra.mxu0 %v3131
        %3163 = vmatprep.subr.mxu0 0.0
        %3164 = vmatpush1.msra.mxu0 %v3130
        %3165 = vmatprep.subr.mxu0 0.0
        %3166 = vmatpush1.msra.mxu0 %v3129
        %3167 = vmatprep.subr.mxu0 0.0
        %3168 = vmatpush1.msra.mxu0 %v3128
        %3169 = vmatprep.subr.mxu0 0.0
        %3170 = vmatpush2.msra.mxu0 0.0
        %3171 = vmatprep.subr.mxu0 0.0
        %3172 = vmatpush2.msra.mxu0 0.0
        %3173 = vmatprep.subr.mxu0 0.0
        %3174 = vmatpush2.msra.mxu0 0.0
        %3175 = vmatprep.subr.mxu0 0.0
        %3176 = vmatpush2.msra.mxu0 0.0
        %3177 = vmatprep.subr.mxu0 0.0
        %3178 = vmatpush2.msra.mxu0 0.0
        %3179 = vmatprep.subr.mxu0 0.0
        %3180 = vmatpush2.msra.mxu0 0.0
        %3181 = vmatprep.subr.mxu0 0.0
        %3182 = vmatpush2.msra.mxu0 0.0
        %3183 = vmatprep.subr.mxu0 0.0
        %3184 = vmatpush2.msra.mxu0 0.0
        %3185 = vmatprep.subr.mxu0 0.0
        %3186 = vmatpush2.msra.mxu0 0.0
        %3187 = vmatprep.subr.mxu0 0.0
        %3188 = vmatpush2.msra.mxu0 0.0
        %3189 = vmatprep.subr.mxu0 0.0
        %3190 = vmatpush2.msra.mxu0 0.0
        %3191 = vmatprep.subr.mxu0 0.0
        %3192 = vmatpush2.msra.mxu0 0.0
        %3193 = vmatprep.subr.mxu0 0.0
        %3194 = vmatpush2.msra.mxu0 0.0
        %3195 = vmatprep.subr.mxu0 0.0
        %3196 = vmatpush2.msra.mxu0 0.0
        %3197 = vmatprep.subr.mxu0 0.0
        %3198 = vmatpush2.msra.mxu0 0.0
        %3199 = vmatprep.subr.mxu0 0.0
        %3200 = vmatpush2.msra.mxu0 0.0
        %3201 = vmatprep.mubr.f32.mxu0 0.0
        %3202 = vmatmul.mubr.f32.gmra.mxu0 %v3047
        %v3203 = vpop.f32.mrf.mxu0
        %v3204 = vadd.f32 %v3136, %v3203
        %v3205 = vpop.f32.mrf.mxu0
        %3206 = vmatprep.mubr.f32.mxu0 0.0
        %3207 = vmatmul.mubr.f32.gmra.mxu0 %v3050
        %v3208 = vpop.f32.mrf.mxu0
        %v3209 = vadd.f32 %v3136, %v3208
        %v3210 = vpop.f32.mrf.mxu0
        %3211 = vdwg.mxu0
        %v3212 = vxor.u32 %v3204, 2147483648
        %v3213 = vxor.u32 %v3209, 2147483648
        %v3214 = vmul.f32 %v3212, 1.442695
        %v3215 = vpow.pop %v3214
        %v3216 = vmul.f32 %v3213, 1.442695
        %v3217 = vpow.pop %v3216
        %v3218 = vadd.f32 %v3215, 1.0
        %v3219 = vadd.f32 %v3217, 1.0
        %v3220 = vrcp.pop %v3218
        %v3221 = vmul.f32 1.0, %v3220
        %v3222 = vrcp.pop %v3219
        %v3223 = vmul.f32 1.0, %v3222
        %v3224 = vmul.f32 %v3119, %v3221
        %v3225 = vmul.f32 %v3124, %v3223
        %vm3228 = vcmask 1046528
        %v3229 = vrot.slane %v3224, 1
        %v3230 = vrot.slane %v3225, 1
        %v3231 = vsel %vm3228, %v3229, %v3230
        %v3235 = vsel %vm3228, 0.0, %v3229
        %v3236 = vsel %vm3228, %v3230, 0.0
        %v3237 = vld [vmem:[%s2 + $0xd] sm:$0x1]
        %v3238 = vlaneseq
        %v3239 = vshrl.u32 %v3238, 7
        %v3240 = vsub.s32 0, %v3239
        %v3241 = vrot.slane %v3237, %v3240
        %v3242 = vadd.f32 %v3241, 0.0
        %v3243 = vld [vmem:[%s10] sm:$0x1]
        %v3244 = vlaneseq
        %v3245 = vshrl.u32 %v3244, 7
        %v3246 = vsub.s32 0, %v3245
        %v3247 = vrot.slane %v3243, %v3246
        %v3248 = vmul.f32 %v3247, 0.0
        %v3249 = vmul.f32 %v3235, %v3247
        %v3250 = vadd.f32 %v3242, %v3248
        %v3251 = vadd.f32 %v3242, %v3249
        %v3252 = vld [vmem:[%s10 + $0x1] sm:$0x1]
        %v3253 = vlaneseq
        %v3254 = vshrl.u32 %v3253, 7
        %v3255 = vsub.s32 0, %v3254
        %v3256 = vrot.slane %v3252, %v3255
        %v3257 = vmul.f32 %v3256, 0.0
        %v3258 = vmul.f32 %v3235, %v3256
        %v3259 = vmul.f32 %v3231, %v3256
        %v3263 = vrot.slane %v3257, 1
        %v3264 = vrot.slane %v3258, 1
        %v3265 = vsel %vm3228, %v3263, %v3264
        %v3266 = vrot.slane %v3259, 1
        %v3267 = vsel %vm3228, %v3264, %v3266
        %v3270 = vadd.f32 %v3250, %v3265
        %v3271 = vadd.f32 %v3251, %v3267
        %v3272 = vld [vmem:[%s10 + $0x2] sm:$0x1]
        %v3273 = vlaneseq
        %v3274 = vshrl.u32 %v3273, 7
        %v3275 = vsub.s32 0, %v3274
        %v3276 = vrot.slane %v3272, %v3275
        %v3277 = vmul.f32 %v3276, 0.0
        %v3278 = vmul.f32 %v3235, %v3276
        %v3279 = vmul.f32 %v3231, %v3276
        %vm3283 = vcmask 1045504
        %v3284 = vrot.slane %v3277, 2
        %v3285 = vrot.slane %v3278, 2
        %v3286 = vsel %vm3283, %v3284, %v3285
        %v3287 = vrot.slane %v3279, 2
        %v3288 = vsel %vm3283, %v3285, %v3287
        %v3291 = vadd.f32 %v3270, %v3286
        %v3292 = vadd.f32 %v3271, %v3288
        %v3293 = vld [vmem:[%s10 + $0x3] sm:$0x1]
        %v3294 = vlaneseq
        %v3295 = vshrl.u32 %v3294, 7
        %v3296 = vsub.s32 0, %v3295
        %v3297 = vrot.slane %v3293, %v3296
        %v3298 = vmul.f32 %v3297, 0.0
        %v3299 = vmul.f32 %v3235, %v3297
        %v3300 = vmul.f32 %v3231, %v3297
        %vm3304 = vcmask 1044480
        %v3305 = vrot.slane %v3298, 3
        %v3306 = vrot.slane %v3299, 3
        %v3307 = vsel %vm3304, %v3305, %v3306
        %v3308 = vrot.slane %v3300, 3
        %v3309 = vsel %vm3304, %v3306, %v3308
        %v3312 = vadd.f32 %v3291, %v3307
        %v3313 = vadd.f32 %v3292, %v3309
        %v3314 = vld [vmem:[%s10 + $0x4] sm:$0x1]
        %v3315 = vlaneseq
        %v3316 = vshrl.u32 %v3315, 7
        %v3317 = vsub.s32 0, %v3316
        %v3318 = vrot.slane %v3314, %v3317
        %v3319 = vmul.f32 %v3318, 0.0
        %v3320 = vmul.f32 %v3235, %v3318
        %v3321 = vmul.f32 %v3231, %v3318
        %vm3325 = vcmask 1043456
        %v3326 = vrot.slane %v3319, 4
        %v3327 = vrot.slane %v3320, 4
        %v3328 = vsel %vm3325, %v3326, %v3327
        %v3329 = vrot.slane %v3321, 4
        %v3330 = vsel %vm3325, %v3327, %v3329
        %v3333 = vadd.f32 %v3312, %v3328
        %v3334 = vadd.f32 %v3313, %v3330
        %v3335 = vld [vmem:[%s10 + $0x5] sm:$0x1]
        %v3336 = vlaneseq
        %v3337 = vshrl.u32 %v3336, 7
        %v3338 = vsub.s32 0, %v3337
        %v3339 = vrot.slane %v3335, %v3338
        %v3340 = vmul.f32 %v3339, 0.0
        %v3341 = vmul.f32 %v3235, %v3339
        %v3342 = vmul.f32 %v3231, %v3339
        %vm3346 = vcmask 1042432
        %v3347 = vrot.slane %v3340, 5
        %v3348 = vrot.slane %v3341, 5
        %v3349 = vsel %vm3346, %v3347, %v3348
        %v3350 = vrot.slane %v3342, 5
        %v3351 = vsel %vm3346, %v3348, %v3350
        %v3354 = vadd.f32 %v3333, %v3349
        %v3355 = vadd.f32 %v3334, %v3351
        %v3356 = vld [vmem:[%s10 + $0x6] sm:$0x1]
        %v3357 = vlaneseq
        %v3358 = vshrl.u32 %v3357, 7
        %v3359 = vsub.s32 0, %v3358
        %v3360 = vrot.slane %v3356, %v3359
        %v3361 = vmul.f32 %v3360, 0.0
        %v3362 = vmul.f32 %v3235, %v3360
        %v3363 = vmul.f32 %v3231, %v3360
        %vm3367 = vcmask 1041408
        %v3368 = vrot.slane %v3361, 6
        %v3369 = vrot.slane %v3362, 6
        %v3370 = vsel %vm3367, %v3368, %v3369
        %v3371 = vrot.slane %v3363, 6
        %v3372 = vsel %vm3367, %v3369, %v3371
        %v3375 = vadd.f32 %v3354, %v3370
        %v3376 = vadd.f32 %v3355, %v3372
        %v3377 = vld [vmem:[%s10 + $0x7] sm:$0x1]
        %v3378 = vlaneseq
        %v3379 = vshrl.u32 %v3378, 7
        %v3380 = vsub.s32 0, %v3379
        %v3381 = vrot.slane %v3377, %v3380
        %v3382 = vmul.f32 %v3381, 0.0
        %v3383 = vmul.f32 %v3235, %v3381
        %v3384 = vmul.f32 %v3231, %v3381
        %vm3388 = vcmask 1040384
        %v3389 = vrot.slane %v3382, 7
        %v3390 = vrot.slane %v3383, 7
        %v3391 = vsel %vm3388, %v3389, %v3390
        %v3392 = vrot.slane %v3384, 7
        %v3393 = vsel %vm3388, %v3390, %v3392
        %v3396 = vadd.f32 %v3375, %v3391
        %v3397 = vadd.f32 %v3376, %v3393
        %v3398 = vld [vmem:[%s10 + $0x8] sm:$0x1]
        %v3399 = vlaneseq
        %v3400 = vshrl.u32 %v3399, 7
        %v3401 = vsub.s32 0, %v3400
        %v3402 = vrot.slane %v3398, %v3401
        %v3403 = vmul.f32 %v3235, %v3402
        %v3404 = vmul.f32 %v3231, %v3402
        %v3405 = vadd.f32 %v3396, %v3403
        %v3406 = vadd.f32 %v3397, %v3404
        %v3407 = vld [vmem:[%s10 + $0x9] sm:$0x1]
        %v3408 = vlaneseq
        %v3409 = vshrl.u32 %v3408, 7
        %v3410 = vsub.s32 0, %v3409
        %v3411 = vrot.slane %v3407, %v3410
        %v3412 = vmul.f32 %v3235, %v3411
        %v3413 = vmul.f32 %v3231, %v3411
        %v3414 = vmul.f32 %v3236, %v3411
        %v3418 = vrot.slane %v3412, 1
        %v3419 = vrot.slane %v3413, 1
        %v3420 = vsel %vm3228, %v3418, %v3419
        %v3421 = vrot.slane %v3414, 1
        %v3422 = vsel %vm3228, %v3419, %v3421
        %v3425 = vadd.f32 %v3405, %v3420
        %v3426 = vadd.f32 %v3406, %v3422
        %v3427 = vld [vmem:[%s10 + $0xa] sm:$0x1]
        %v3428 = vlaneseq
        %v3429 = vshrl.u32 %v3428, 7
        %v3430 = vsub.s32 0, %v3429
        %v3431 = vrot.slane %v3427, %v3430
        %v3432 = vmul.f32 %v3235, %v3431
        %v3433 = vmul.f32 %v3231, %v3431
        %v3434 = vmul.f32 %v3236, %v3431
        %v3438 = vrot.slane %v3432, 2
        %v3439 = vrot.slane %v3433, 2
        %v3440 = vsel %vm3283, %v3438, %v3439
        %v3441 = vrot.slane %v3434, 2
        %v3442 = vsel %vm3283, %v3439, %v3441
        %v3445 = vadd.f32 %v3425, %v3440
        %v3446 = vadd.f32 %v3426, %v3442
        %v3447 = vld [vmem:[%s10 + $0xb] sm:$0x1]
        %v3448 = vlaneseq
        %v3449 = vshrl.u32 %v3448, 7
        %v3450 = vsub.s32 0, %v3449
        %v3451 = vrot.slane %v3447, %v3450
        %v3452 = vmul.f32 %v3235, %v3451
        %v3453 = vmul.f32 %v3231, %v3451
        %v3454 = vmul.f32 %v3236, %v3451
        %v3458 = vrot.slane %v3452, 3
        %v3459 = vrot.slane %v3453, 3
        %v3460 = vsel %vm3304, %v3458, %v3459
        %v3461 = vrot.slane %v3454, 3
        %v3462 = vsel %vm3304, %v3459, %v3461
        %v3465 = vadd.f32 %v3445, %v3460
        %v3466 = vadd.f32 %v3446, %v3462
        %v3467 = vld [vmem:[%s10 + $0xc] sm:$0x1]
        %v3468 = vlaneseq
        %v3469 = vshrl.u32 %v3468, 7
        %v3470 = vsub.s32 0, %v3469
        %v3471 = vrot.slane %v3467, %v3470
        %v3472 = vmul.f32 %v3235, %v3471
        %v3473 = vmul.f32 %v3231, %v3471
        %v3474 = vmul.f32 %v3236, %v3471
        %v3478 = vrot.slane %v3472, 4
        %v3479 = vrot.slane %v3473, 4
        %v3480 = vsel %vm3325, %v3478, %v3479
        %v3481 = vrot.slane %v3474, 4
        %v3482 = vsel %vm3325, %v3479, %v3481
        %v3485 = vadd.f32 %v3465, %v3480
        %v3486 = vadd.f32 %v3466, %v3482
        %v3487 = vld [vmem:[%s10 + $0xd] sm:$0x1]
        %v3488 = vlaneseq
        %v3489 = vshrl.u32 %v3488, 7
        %v3490 = vsub.s32 0, %v3489
        %v3491 = vrot.slane %v3487, %v3490
        %v3492 = vmul.f32 %v3235, %v3491
        %v3493 = vmul.f32 %v3231, %v3491
        %v3494 = vmul.f32 %v3236, %v3491
        %v3498 = vrot.slane %v3492, 5
        %v3499 = vrot.slane %v3493, 5
        %v3500 = vsel %vm3346, %v3498, %v3499
        %v3501 = vrot.slane %v3494, 5
        %v3502 = vsel %vm3346, %v3499, %v3501
        %v3505 = vadd.f32 %v3485, %v3500
        %v3506 = vadd.f32 %v3486, %v3502
        %v3507 = vld [vmem:[%s10 + $0xe] sm:$0x1]
        %v3508 = vlaneseq
        %v3509 = vshrl.u32 %v3508, 7
        %v3510 = vsub.s32 0, %v3509
        %v3511 = vrot.slane %v3507, %v3510
        %v3512 = vmul.f32 %v3235, %v3511
        %v3513 = vmul.f32 %v3231, %v3511
        %v3514 = vmul.f32 %v3236, %v3511
        %v3518 = vrot.slane %v3512, 6
        %v3519 = vrot.slane %v3513, 6
        %v3520 = vsel %vm3367, %v3518, %v3519
        %v3521 = vrot.slane %v3514, 6
        %v3522 = vsel %vm3367, %v3519, %v3521
        %v3525 = vadd.f32 %v3505, %v3520
        %v3526 = vadd.f32 %v3506, %v3522
        %v3527 = vld [vmem:[%s10 + $0xf] sm:$0x1]
        %v3528 = vlaneseq
        %v3529 = vshrl.u32 %v3528, 7
        %v3530 = vsub.s32 0, %v3529
        %v3531 = vrot.slane %v3527, %v3530
        %v3532 = vmul.f32 %v3235, %v3531
        %v3533 = vmul.f32 %v3231, %v3531
        %v3534 = vmul.f32 %v3236, %v3531
        %v3538 = vrot.slane %v3532, 7
        %v3539 = vrot.slane %v3533, 7
        %v3540 = vsel %vm3388, %v3538, %v3539
        %v3541 = vrot.slane %v3534, 7
        %v3542 = vsel %vm3388, %v3539, %v3541
        %v3545 = vadd.f32 %v3525, %v3540
        %v3546 = vadd.f32 %v3526, %v3542
        %v3547 = vld [vmem:[%s10 + $0x10] sm:$0x1]
        %v3548 = vlaneseq
        %v3549 = vshrl.u32 %v3548, 7
        %v3550 = vsub.s32 0, %v3549
        %v3551 = vrot.slane %v3547, %v3550
        %v3552 = vmul.f32 %v3231, %v3551
        %v3553 = vmul.f32 %v3236, %v3551
        %v3554 = vadd.f32 %v3545, %v3552
        %v3555 = vadd.f32 %v3546, %v3553
        %v3556 = vld [vmem:[%s10 + $0x11] sm:$0x1]
        %v3557 = vlaneseq
        %v3558 = vshrl.u32 %v3557, 7
        %v3559 = vsub.s32 0, %v3558
        %v3560 = vrot.slane %v3556, %v3559
        %v3561 = vmul.f32 %v3231, %v3560
        %v3562 = vmul.f32 %v3236, %v3560
        %v3563 = vmul.f32 %v3560, 0.0
        %v3567 = vrot.slane %v3561, 1
        %v3568 = vrot.slane %v3562, 1
        %v3569 = vsel %vm3228, %v3567, %v3568
        %v3570 = vrot.slane %v3563, 1
        %v3571 = vsel %vm3228, %v3568, %v3570
        %v3574 = vadd.f32 %v3554, %v3569
        %v3575 = vadd.f32 %v3555, %v3571
        %v3576 = vld [vmem:[%s10 + $0x12] sm:$0x1]
        %v3577 = vlaneseq
        %v3578 = vshrl.u32 %v3577, 7
        %v3579 = vsub.s32 0, %v3578
        %v3580 = vrot.slane %v3576, %v3579
        %v3581 = vmul.f32 %v3231, %v3580
        %v3582 = vmul.f32 %v3236, %v3580
        %v3583 = vmul.f32 %v3580, 0.0
        %v3587 = vrot.slane %v3581, 2
        %v3588 = vrot.slane %v3582, 2
        %v3589 = vsel %vm3283, %v3587, %v3588
        %v3590 = vrot.slane %v3583, 2
        %v3591 = vsel %vm3283, %v3588, %v3590
        %v3594 = vadd.f32 %v3574, %v3589
        %v3595 = vadd.f32 %v3575, %v3591
        %v3596 = vld [vmem:[%s10 + $0x13] sm:$0x1]
        %v3597 = vlaneseq
        %v3598 = vshrl.u32 %v3597, 7
        %v3599 = vsub.s32 0, %v3598
        %v3600 = vrot.slane %v3596, %v3599
        %v3601 = vmul.f32 %v3231, %v3600
        %v3602 = vmul.f32 %v3236, %v3600
        %v3603 = vmul.f32 %v3600, 0.0
        %v3607 = vrot.slane %v3601, 3
        %v3608 = vrot.slane %v3602, 3
        %v3609 = vsel %vm3304, %v3607, %v3608
        %v3610 = vrot.slane %v3603, 3
        %v3611 = vsel %vm3304, %v3608, %v3610
        %v3614 = vadd.f32 %v3594, %v3609
        %v3615 = vadd.f32 %v3595, %v3611
        %v3616 = vld [vmem:[%s10 + $0x14] sm:$0x1]
        %v3617 = vlaneseq
        %v3618 = vshrl.u32 %v3617, 7
        %v3619 = vsub.s32 0, %v3618
        %v3620 = vrot.slane %v3616, %v3619
        %v3621 = vmul.f32 %v3231, %v3620
        %v3622 = vmul.f32 %v3236, %v3620
        %v3623 = vmul.f32 %v3620, 0.0
        %v3627 = vrot.slane %v3621, 4
        %v3628 = vrot.slane %v3622, 4
        %v3629 = vsel %vm3325, %v3627, %v3628
        %v3630 = vrot.slane %v3623, 4
        %v3631 = vsel %vm3325, %v3628, %v3630
        %v3634 = vadd.f32 %v3614, %v3629
        %v3635 = vadd.f32 %v3615, %v3631
        %v3636 = vld [vmem:[%s10 + $0x15] sm:$0x1]
        %v3637 = vlaneseq
        %v3638 = vshrl.u32 %v3637, 7
        %v3639 = vsub.s32 0, %v3638
        %v3640 = vrot.slane %v3636, %v3639
        %v3641 = vmul.f32 %v3231, %v3640
        %v3642 = vmul.f32 %v3236, %v3640
        %v3643 = vmul.f32 %v3640, 0.0
        %v3647 = vrot.slane %v3641, 5
        %v3648 = vrot.slane %v3642, 5
        %v3649 = vsel %vm3346, %v3647, %v3648
        %v3650 = vrot.slane %v3643, 5
        %v3651 = vsel %vm3346, %v3648, %v3650
        %v3654 = vadd.f32 %v3634, %v3649
        %v3655 = vadd.f32 %v3635, %v3651
        %v3656 = vld [vmem:[%s10 + $0x16] sm:$0x1]
        %v3657 = vlaneseq
        %v3658 = vshrl.u32 %v3657, 7
        %v3659 = vsub.s32 0, %v3658
        %v3660 = vrot.slane %v3656, %v3659
        %v3661 = vmul.f32 %v3231, %v3660
        %v3662 = vmul.f32 %v3236, %v3660
        %v3663 = vmul.f32 %v3660, 0.0
        %v3667 = vrot.slane %v3661, 6
        %v3668 = vrot.slane %v3662, 6
        %v3669 = vsel %vm3367, %v3667, %v3668
        %v3670 = vrot.slane %v3663, 6
        %v3671 = vsel %vm3367, %v3668, %v3670
        %v3674 = vadd.f32 %v3654, %v3669
        %v3675 = vadd.f32 %v3655, %v3671
        %v3676 = vld [vmem:[%s10 + $0x17] sm:$0x1]
        %v3677 = vlaneseq
        %v3678 = vshrl.u32 %v3677, 7
        %v3679 = vsub.s32 0, %v3678
        %v3680 = vrot.slane %v3676, %v3679
        %v3681 = vmul.f32 %v3231, %v3680
        %v3682 = vmul.f32 %v3236, %v3680
        %v3683 = vmul.f32 %v3680, 0.0
        %v3687 = vrot.slane %v3681, 7
        %v3688 = vrot.slane %v3682, 7
        %v3689 = vsel %vm3388, %v3687, %v3688
        %v3690 = vrot.slane %v3683, 7
        %v3691 = vsel %vm3388, %v3688, %v3690
        %v3694 = vadd.f32 %v3674, %v3689
        %v3695 = vadd.f32 %v3675, %v3691
        %v3696 = vld [vmem:[%s10 + $0x18] sm:$0x1]
        %v3697 = vlaneseq
        %v3698 = vshrl.u32 %v3697, 7
        %v3699 = vsub.s32 0, %v3698
        %v3700 = vrot.slane %v3696, %v3699
        %v3701 = vmul.f32 %v3236, %v3700
        %v3702 = vmul.f32 %v3700, 0.0
        %v3703 = vadd.f32 %v3694, %v3701
        %v3704 = vadd.f32 %v3695, %v3702
        %v3705 = vld [vmem:[%s10 + $0x19] sm:$0x1]
        %v3706 = vlaneseq
        %v3707 = vshrl.u32 %v3706, 7
        %v3708 = vsub.s32 0, %v3707
        %v3709 = vrot.slane %v3705, %v3708
        %v3710 = vmul.f32 %v3236, %v3709
        %v3711 = vmul.f32 %v3709, 0.0
        %v3714 = vrot.slane %v3710, 1
        %v3715 = vrot.slane %v3711, 1
        %v3716 = vsel %vm3228, %v3714, %v3715
        %v3717 = vsel %vm3228, %v3715, %v3715
        %v3720 = vadd.f32 %v3703, %v3716
        %v3721 = vadd.f32 %v3704, %v3717
        %v3722 = vld [vmem:[%s10 + $0x1a] sm:$0x1]
        %v3723 = vlaneseq
        %v3724 = vshrl.u32 %v3723, 7
        %v3725 = vsub.s32 0, %v3724
        %v3726 = vrot.slane %v3722, %v3725
        %v3727 = vmul.f32 %v3236, %v3726
        %v3728 = vmul.f32 %v3726, 0.0
        %v3731 = vrot.slane %v3727, 2
        %v3732 = vrot.slane %v3728, 2
        %v3733 = vsel %vm3283, %v3731, %v3732
        %v3734 = vsel %vm3283, %v3732, %v3732
        %v3737 = vadd.f32 %v3720, %v3733
        %v3738 = vadd.f32 %v3721, %v3734
        %v3739 = vld [vmem:[%s10 + $0x1b] sm:$0x1]
        %v3740 = vlaneseq
        %v3741 = vshrl.u32 %v3740, 7
        %v3742 = vsub.s32 0, %v3741
        %v3743 = vrot.slane %v3739, %v3742
        %v3744 = vmul.f32 %v3236, %v3743
        %v3745 = vmul.f32 %v3743, 0.0
        %v3748 = vrot.slane %v3744, 3
        %v3749 = vrot.slane %v3745, 3
        %v3750 = vsel %vm3304, %v3748, %v3749
        %v3751 = vsel %vm3304, %v3749, %v3749
        %v3754 = vadd.f32 %v3737, %v3750
        %v3755 = vadd.f32 %v3738, %v3751
        %v3756 = vld [vmem:[%s10 + $0x1c] sm:$0x1]
        %v3757 = vlaneseq
        %v3758 = vshrl.u32 %v3757, 7
        %v3759 = vsub.s32 0, %v3758
        %v3760 = vrot.slane %v3756, %v3759
        %v3761 = vmul.f32 %v3236, %v3760
        %v3762 = vmul.f32 %v3760, 0.0
        %v3765 = vrot.slane %v3761, 4
        %v3766 = vrot.slane %v3762, 4
        %v3767 = vsel %vm3325, %v3765, %v3766
        %v3768 = vsel %vm3325, %v3766, %v3766
        %v3771 = vadd.f32 %v3754, %v3767
        %v3772 = vadd.f32 %v3755, %v3768
        %v3773 = vld [vmem:[%s10 + $0x1d] sm:$0x1]
        %v3774 = vlaneseq
        %v3775 = vshrl.u32 %v3774, 7
        %v3776 = vsub.s32 0, %v3775
        %v3777 = vrot.slane %v3773, %v3776
        %v3778 = vmul.f32 %v3236, %v3777
        %v3779 = vmul.f32 %v3777, 0.0
        %v3782 = vrot.slane %v3778, 5
        %v3783 = vrot.slane %v3779, 5
        %v3784 = vsel %vm3346, %v3782, %v3783
        %v3785 = vsel %vm3346, %v3783, %v3783
        %v3788 = vadd.f32 %v3771, %v3784
        %v3789 = vadd.f32 %v3772, %v3785
        %v3790 = vld [vmem:[%s10 + $0x1e] sm:$0x1]
        %v3791 = vlaneseq
        %v3792 = vshrl.u32 %v3791, 7
        %v3793 = vsub.s32 0, %v3792
        %v3794 = vrot.slane %v3790, %v3793
        %v3795 = vmul.f32 %v3236, %v3794
        %v3796 = vmul.f32 %v3794, 0.0
        %v3799 = vrot.slane %v3795, 6
        %v3800 = vrot.slane %v3796, 6
        %v3801 = vsel %vm3367, %v3799, %v3800
        %v3802 = vsel %vm3367, %v3800, %v3800
        %v3805 = vadd.f32 %v3788, %v3801
        %v3806 = vadd.f32 %v3789, %v3802
        %v3807 = vld [vmem:[%s2 + $0xe] sm:$0x1]
        %v3808 = vlaneseq
        %v3809 = vshrl.u32 %v3808, 7
        %v3810 = vsub.s32 0, %v3809
        %v3811 = vrot.slane %v3807, %v3810
        %v3812 = vmul.f32 %v3805, %v3811
        %v3813 = vmul.f32 %v3806, %v3811
        %v3814 = vld [vmem:[%s2 + $0xf] sm:$0x1]
        %v3815 = vlaneseq
        %v3816 = vshrl.u32 %v3815, 7
        %v3817 = vsub.s32 0, %v3816
        %v3818 = vrot.slane %v3814, %v3817
        %v3819 = vadd.f32 %v3812, %v3818
        %v3820 = vadd.f32 %v3813, %v3818
        %v3821 = vxor.u32 %v3819, 2147483648
        %v3822 = vxor.u32 %v3820, 2147483648
        %v3823 = vmul.f32 %v3821, 1.442695
        %v3824 = vpow.pop %v3823
        %v3825 = vmul.f32 %v3822, 1.442695
        %v3826 = vpow.pop %v3825
        %v3827 = vadd.f32 %v3824, 1.0
        %v3828 = vadd.f32 %v3826, 1.0
        %v3829 = vrcp.pop %v3827
        %v3830 = vmul.f32 1.0, %v3829
        %v3831 = vrcp.pop %v3828
        %v3832 = vmul.f32 1.0, %v3831
        %v3833 = vmul.f32 %v3819, %v3830
        %v3834 = vmul.f32 %v3820, %v3832
        %s3835 = scalar_lea.vmem %s9, 64
        %v3836 = vld [vmem:[%s3835] sm:$0xff]
        %v3837 = vld [vmem:[%s3835 + $0x8] sm:$0xff]
        %v3838 = vld [vmem:[%s3835 + $0x10] sm:$0xff]
        %v3839 = vld [vmem:[%s3835 + $0x18] sm:$0xff]
        %v3840 = vld [vmem:[%s2 + $0x10] sm:$0x1]
        %v3841 = vlaneseq
        %v3842 = vshrl.u32 %v3841, 7
        %v3843 = vsub.s32 0, %v3842
        %v3844 = vrot.slane %v3840, %v3843
        %v3846 = vsel %vm532, %v3833, 0
        %v3849 = vsel %vm532, %v3834, 0
        %3851 = vmatprep.subr.mxu0 0.0
        %3852 = vmatpush1.msra.mxu0 0.0
        %3853 = vmatprep.subr.mxu0 0.0
        %3854 = vmatpush1.msra.mxu0 0.0
        %3855 = vmatprep.subr.mxu0 0.0
        %3856 = vmatpush1.msra.mxu0 0.0
        %3857 = vmatprep.subr.mxu0 0.0
        %3858 = vmatpush1.msra.mxu0 0.0
        %3859 = vmatprep.subr.mxu0 0.0
        %3860 = vmatpush1.msra.mxu0 0.0
        %3861 = vmatprep.subr.mxu0 0.0
        %3862 = vmatpush1.msra.mxu0 0.0
        %3863 = vmatprep.subr.mxu0 0.0
        %3864 = vmatpush1.msra.mxu0 0.0
        %3865 = vmatprep.subr.mxu0 0.0
        %3866 = vmatpush1.msra.mxu0 0.0
        %3867 = vmatprep.subr.mxu0 0.0
        %3868 = vmatpush1.msra.mxu0 0.0
        %3869 = vmatprep.subr.mxu0 0.0
        %3870 = vmatpush1.msra.mxu0 0.0
        %3871 = vmatprep.subr.mxu0 0.0
        %3872 = vmatpush1.msra.mxu0 0.0
        %3873 = vmatprep.subr.mxu0 0.0
        %3874 = vmatpush1.msra.mxu0 0.0
        %3875 = vmatprep.subr.mxu0 0.0
        %3876 = vmatpush1.msra.mxu0 %v3839
        %3877 = vmatprep.subr.mxu0 0.0
        %3878 = vmatpush1.msra.mxu0 %v3838
        %3879 = vmatprep.subr.mxu0 0.0
        %3880 = vmatpush1.msra.mxu0 %v3837
        %3881 = vmatprep.subr.mxu0 0.0
        %3882 = vmatpush1.msra.mxu0 %v3836
        %3883 = vmatprep.subr.mxu0 0.0
        %3884 = vmatpush2.msra.mxu0 0.0
        %3885 = vmatprep.subr.mxu0 0.0
        %3886 = vmatpush2.msra.mxu0 0.0
        %3887 = vmatprep.subr.mxu0 0.0
        %3888 = vmatpush2.msra.mxu0 0.0
        %3889 = vmatprep.subr.mxu0 0.0
        %3890 = vmatpush2.msra.mxu0 0.0
        %3891 = vmatprep.subr.mxu0 0.0
        %3892 = vmatpush2.msra.mxu0 0.0
        %3893 = vmatprep.subr.mxu0 0.0
        %3894 = vmatpush2.msra.mxu0 0.0
        %3895 = vmatprep.subr.mxu0 0.0
        %3896 = vmatpush2.msra.mxu0 0.0
        %3897 = vmatprep.subr.mxu0 0.0
        %3898 = vmatpush2.msra.mxu0 0.0
        %3899 = vmatprep.subr.mxu0 0.0
        %3900 = vmatpush2.msra.mxu0 0.0
        %3901 = vmatprep.subr.mxu0 0.0
        %3902 = vmatpush2.msra.mxu0 0.0
        %3903 = vmatprep.subr.mxu0 0.0
        %3904 = vmatpush2.msra.mxu0 0.0
        %3905 = vmatprep.subr.mxu0 0.0
        %3906 = vmatpush2.msra.mxu0 0.0
        %3907 = vmatprep.subr.mxu0 0.0
        %3908 = vmatpush2.msra.mxu0 0.0
        %3909 = vmatprep.subr.mxu0 0.0
        %3910 = vmatpush2.msra.mxu0 0.0
        %3911 = vmatprep.subr.mxu0 0.0
        %3912 = vmatpush2.msra.mxu0 0.0
        %3913 = vmatprep.subr.mxu0 0.0
        %3914 = vmatpush2.msra.mxu0 0.0
        %3915 = vmatprep.mubr.f32.mxu0 0.0
        %3916 = vmatmul.mubr.f32.gmra.mxu0 %v3846
        %v3917 = vpop.f32.mrf.mxu0
        %v3918 = vadd.f32 %v3844, %v3917
        %v3919 = vpop.f32.mrf.mxu0
        %3920 = vmatprep.mubr.f32.mxu0 0.0
        %3921 = vmatmul.mubr.f32.gmra.mxu0 %v3849
        %v3922 = vpop.f32.mrf.mxu0
        %v3923 = vadd.f32 %v3844, %v3922
        %v3924 = vpop.f32.mrf.mxu0
        %3925 = vdwg.mxu0
        %v3926 = vadd.f32 %v2995, %v3918
        %v3927 = vadd.f32 %v2996, %v3923
        %v3928 = vld [vmem:[%s2 + $0x11] sm:$0x1]
        %v3929 = vld [vmem:[%s2 + $0x12] sm:$0x1]
        %v3930 = vsel %vm532, %v3926, 0.0
        %3931 = vadd.xlane.f32.xlu0 %v3930
        %v3932 = vpop.xlane.xlu0 %3931
        %v3933 = vsel %vm532, %v3927, 0.0
        %3934 = vadd.xlane.f32.xlu0 %v3933
        %v3935 = vpop.xlane.xlu0 %3934
        %v3936 = vmul.f32 %v3932, %v539
        %v3937 = vmul.f32 %v3935, %v539
        %v3938 = vsub.f32 %v3926, %v3936
        %v3939 = vsub.f32 %v3927, %v3937
        %v3940 = vmul.f32 %v3938, %v3938
        %v3941 = vmul.f32 %v3939, %v3939
        %v3942 = vsel %vm532, %v3940, 0.0
        %3943 = vadd.xlane.f32.xlu0 %v3942
        %v3944 = vpop.xlane.xlu0 %3943
        %v3945 = vsel %vm532, %v3941, 0.0
        %3946 = vadd.xlane.f32.xlu0 %v3945
        %v3947 = vpop.xlane.xlu0 %3946
        %v3948 = vmul.f32 %v3944, %v539
        %v3949 = vmul.f32 %v3947, %v539
        %v3950 = vadd.f32 %v3948, 1e-05
        %v3951 = vadd.f32 %v3949, 1e-05
        %v3952 = vrsqrt.pop %v3950
        %v3953 = vrsqrt.pop %v3951
        %v3954 = vmul.f32 %v3938, %v3952
        %v3955 = vmul.f32 %v3939, %v3953
        %v3956 = vlaneseq
        %v3957 = vshrl.u32 %v3956, 7
        %v3958 = vsub.s32 0, %v3957
        %v3959 = vrot.slane %v3928, %v3958
        %v3960 = vmul.f32 %v3954, %v3959
        %v3961 = vmul.f32 %v3955, %v3959
        %v3962 = vlaneseq
        %v3963 = vshrl.u32 %v3962, 7
        %v3964 = vsub.s32 0, %v3963
        %v3965 = vrot.slane %v3929, %v3964
        %v3966 = vadd.f32 %v3960, %v3965
        %v3967 = vadd.f32 %v3961, %v3965
        %s3968 = scalar_lea.vmem %s3, 32
        %v3969 = vld [vmem:[%s3968] sm:$0xff]
        %v3970 = vld [vmem:[%s3968 + $0x8] sm:$0xff]
        %v3971 = vld [vmem:[%s3968 + $0x10] sm:$0xff]
        %v3972 = vld [vmem:[%s3968 + $0x18] sm:$0xff]
        %v3973 = vld [vmem:[%s4 + $0x1] sm:$0x1]
        %v3974 = vlaneseq
        %v3975 = vshrl.u32 %v3974, 7
        %v3976 = vsub.s32 0, %v3975
        %v3977 = vrot.slane %v3973, %v3976
        %v3979 = vsel %vm532, %v3966, 0
        %v3982 = vsel %vm532, %v3967, 0
        %3984 = vmatprep.subr.mxu0 0.0
        %3985 = vmatpush1.msra.mxu0 0.0
        %3986 = vmatprep.subr.mxu0 0.0
        %3987 = vmatpush1.msra.mxu0 0.0
        %3988 = vmatprep.subr.mxu0 0.0
        %3989 = vmatpush1.msra.mxu0 0.0
        %3990 = vmatprep.subr.mxu0 0.0
        %3991 = vmatpush1.msra.mxu0 0.0
        %3992 = vmatprep.subr.mxu0 0.0
        %3993 = vmatpush1.msra.mxu0 0.0
        %3994 = vmatprep.subr.mxu0 0.0
        %3995 = vmatpush1.msra.mxu0 0.0
        %3996 = vmatprep.subr.mxu0 0.0
        %3997 = vmatpush1.msra.mxu0 0.0
        %3998 = vmatprep.subr.mxu0 0.0
        %3999 = vmatpush1.msra.mxu0 0.0
        %4000 = vmatprep.subr.mxu0 0.0
        %4001 = vmatpush1.msra.mxu0 0.0
        %4002 = vmatprep.subr.mxu0 0.0
        %4003 = vmatpush1.msra.mxu0 0.0
        %4004 = vmatprep.subr.mxu0 0.0
        %4005 = vmatpush1.msra.mxu0 0.0
        %4006 = vmatprep.subr.mxu0 0.0
        %4007 = vmatpush1.msra.mxu0 0.0
        %4008 = vmatprep.subr.mxu0 0.0
        %4009 = vmatpush1.msra.mxu0 %v3972
        %4010 = vmatprep.subr.mxu0 0.0
        %4011 = vmatpush1.msra.mxu0 %v3971
        %4012 = vmatprep.subr.mxu0 0.0
        %4013 = vmatpush1.msra.mxu0 %v3970
        %4014 = vmatprep.subr.mxu0 0.0
        %4015 = vmatpush1.msra.mxu0 %v3969
        %4016 = vmatprep.subr.mxu0 0.0
        %4017 = vmatpush2.msra.mxu0 0.0
        %4018 = vmatprep.subr.mxu0 0.0
        %4019 = vmatpush2.msra.mxu0 0.0
        %4020 = vmatprep.subr.mxu0 0.0
        %4021 = vmatpush2.msra.mxu0 0.0
        %4022 = vmatprep.subr.mxu0 0.0
        %4023 = vmatpush2.msra.mxu0 0.0
        %4024 = vmatprep.subr.mxu0 0.0
        %4025 = vmatpush2.msra.mxu0 0.0
        %4026 = vmatprep.subr.mxu0 0.0
        %4027 = vmatpush2.msra.mxu0 0.0
        %4028 = vmatprep.subr.mxu0 0.0
        %4029 = vmatpush2.msra.mxu0 0.0
        %4030 = vmatprep.subr.mxu0 0.0
        %4031 = vmatpush2.msra.mxu0 0.0
        %4032 = vmatprep.subr.mxu0 0.0
        %4033 = vmatpush2.msra.mxu0 0.0
        %4034 = vmatprep.subr.mxu0 0.0
        %4035 = vmatpush2.msra.mxu0 0.0
        %4036 = vmatprep.subr.mxu0 0.0
        %4037 = vmatpush2.msra.mxu0 0.0
        %4038 = vmatprep.subr.mxu0 0.0
        %4039 = vmatpush2.msra.mxu0 0.0
        %4040 = vmatprep.subr.mxu0 0.0
        %4041 = vmatpush2.msra.mxu0 0.0
        %4042 = vmatprep.subr.mxu0 0.0
        %4043 = vmatpush2.msra.mxu0 0.0
        %4044 = vmatprep.subr.mxu0 0.0
        %4045 = vmatpush2.msra.mxu0 0.0
        %4046 = vmatprep.subr.mxu0 0.0
        %4047 = vmatpush2.msra.mxu0 0.0
        %4048 = vmatprep.mubr.f32.mxu0 0.0
        %4049 = vmatmul.mubr.f32.gmra.mxu0 %v3979
        %v4050 = vpop.f32.mrf.mxu0
        %v4051 = vadd.f32 %v3977, %v4050
        %v4052 = vpop.f32.mrf.mxu0
        %4053 = vmatprep.mubr.f32.mxu0 0.0
        %4054 = vmatmul.mubr.f32.gmra.mxu0 %v3982
        %v4055 = vpop.f32.mrf.mxu0
        %v4056 = vadd.f32 %v3977, %v4055
        %v4057 = vpop.f32.mrf.mxu0
        %4058 = vdwg.mxu0
        %v4059 = vxor.u32 %v4051, 2147483648
        %v4060 = vxor.u32 %v4056, 2147483648
        %v4061 = vmul.f32 %v4059, 1.442695
        %v4062 = vpow.pop %v4061
        %v4063 = vmul.f32 %v4060, 1.442695
        %v4064 = vpow.pop %v4063
        %v4065 = vadd.f32 %v4062, 1.0
        %v4066 = vadd.f32 %v4064, 1.0
        %v4067 = vrcp.pop %v4065
        %v4068 = vmul.f32 1.0, %v4067
        %v4069 = vrcp.pop %v4066
        %v4070 = vmul.f32 1.0, %v4069
        %v4071 = vmul.f32 %v4051, %v4068
        %v4072 = vmul.f32 %v4056, %v4070
        %s4073 = scalar_lea.vmem %s5, 128
        %v4074 = vld [vmem:[%s4073] sm:$0xff]
        %v4075 = vld [vmem:[%s4073 + $0x8] sm:$0xff]
        %v4076 = vld [vmem:[%s4073 + $0x10] sm:$0xff]
        %v4077 = vld [vmem:[%s4073 + $0x18] sm:$0xff]
        %v4078 = vld [vmem:[%s4073 + $0x20] sm:$0xff]
        %v4079 = vld [vmem:[%s4073 + $0x28] sm:$0xff]
        %v4080 = vld [vmem:[%s4073 + $0x30] sm:$0xff]
        %v4081 = vld [vmem:[%s4073 + $0x38] sm:$0xff]
        %v4082 = vld [vmem:[%s4073 + $0x40] sm:$0xff]
        %v4083 = vld [vmem:[%s4073 + $0x48] sm:$0xff]
        %v4084 = vld [vmem:[%s4073 + $0x50] sm:$0xff]
        %v4085 = vld [vmem:[%s4073 + $0x58] sm:$0xff]
        %v4086 = vld [vmem:[%s4073 + $0x60] sm:$0xff]
        %v4087 = vld [vmem:[%s4073 + $0x68] sm:$0xff]
        %v4088 = vld [vmem:[%s4073 + $0x70] sm:$0xff]
        %v4089 = vld [vmem:[%s4073 + $0x78] sm:$0xff]
        %v4090 = vld [vmem:[%s2 + $0x13] sm:$0x1]
        %v4091 = vlaneseq
        %v4092 = vshrl.u32 %v4091, 7
        %v4093 = vsub.s32 0, %v4092
        %v4094 = vrot.slane %v4090, %v4093
        %4095 = vmatprep.subr.mxu0 0.0
        %4096 = vmatpush1.msra.mxu0 %v4089
        %4097 = vmatprep.subr.mxu0 0.0
        %4098 = vmatpush1.msra.mxu0 %v4088
        %4099 = vmatprep.subr.mxu0 0.0
        %4100 = vmatpush1.msra.mxu0 %v4087
        %4101 = vmatprep.subr.mxu0 0.0
        %4102 = vmatpush1.msra.mxu0 %v4086
        %4103 = vmatprep.subr.mxu0 0.0
        %4104 = vmatpush1.msra.mxu0 %v4085
        %4105 = vmatprep.subr.mxu0 0.0
        %4106 = vmatpush1.msra.mxu0 %v4084
        %4107 = vmatprep.subr.mxu0 0.0
        %4108 = vmatpush1.msra.mxu0 %v4083
        %4109 = vmatprep.subr.mxu0 0.0
        %4110 = vmatpush1.msra.mxu0 %v4082
        %4111 = vmatprep.subr.mxu0 0.0
        %4112 = vmatpush1.msra.mxu0 %v4081
        %4113 = vmatprep.subr.mxu0 0.0
        %4114 = vmatpush1.msra.mxu0 %v4080
        %4115 = vmatprep.subr.mxu0 0.0
        %4116 = vmatpush1.msra.mxu0 %v4079
        %4117 = vmatprep.subr.mxu0 0.0
        %4118 = vmatpush1.msra.mxu0 %v4078
        %4119 = vmatprep.subr.mxu0 0.0
        %4120 = vmatpush1.msra.mxu0 %v4077
        %4121 = vmatprep.subr.mxu0 0.0
        %4122 = vmatpush1.msra.mxu0 %v4076
        %4123 = vmatprep.subr.mxu0 0.0
        %4124 = vmatpush1.msra.mxu0 %v4075
        %4125 = vmatprep.subr.mxu0 0.0
        %4126 = vmatpush1.msra.mxu0 %v4074
        %4127 = vmatprep.subr.mxu0 0.0
        %4128 = vmatpush2.msra.mxu0 0.0
        %4129 = vmatprep.subr.mxu0 0.0
        %4130 = vmatpush2.msra.mxu0 0.0
        %4131 = vmatprep.subr.mxu0 0.0
        %4132 = vmatpush2.msra.mxu0 0.0
        %4133 = vmatprep.subr.mxu0 0.0
        %4134 = vmatpush2.msra.mxu0 0.0
        %4135 = vmatprep.subr.mxu0 0.0
        %4136 = vmatpush2.msra.mxu0 0.0
        %4137 = vmatprep.subr.mxu0 0.0
        %4138 = vmatpush2.msra.mxu0 0.0
        %4139 = vmatprep.subr.mxu0 0.0
        %4140 = vmatpush2.msra.mxu0 0.0
        %4141 = vmatprep.subr.mxu0 0.0
        %4142 = vmatpush2.msra.mxu0 0.0
        %4143 = vmatprep.subr.mxu0 0.0
        %4144 = vmatpush2.msra.mxu0 0.0
        %4145 = vmatprep.subr.mxu0 0.0
        %4146 = vmatpush2.msra.mxu0 0.0
        %4147 = vmatprep.subr.mxu0 0.0
        %4148 = vmatpush2.msra.mxu0 0.0
        %4149 = vmatprep.subr.mxu0 0.0
        %4150 = vmatpush2.msra.mxu0 0.0
        %4151 = vmatprep.subr.mxu0 0.0
        %4152 = vmatpush2.msra.mxu0 0.0
        %4153 = vmatprep.subr.mxu0 0.0
        %4154 = vmatpush2.msra.mxu0 0.0
        %4155 = vmatprep.subr.mxu0 0.0
        %4156 = vmatpush2.msra.mxu0 0.0
        %4157 = vmatprep.subr.mxu0 0.0
        %4158 = vmatpush2.msra.mxu0 0.0
        %4159 = vmatprep.mubr.f32.mxu0 0.0
        %4160 = vmatmul.mubr.f32.gmra.mxu0 %v4071
        %v4161 = vpop.f32.mrf.mxu0
        %v4162 = vadd.f32 %v4094, %v4161
        %v4163 = vpop.f32.mrf.mxu0
        %4164 = vmatprep.mubr.f32.mxu0 0.0
        %4165 = vmatmul.mubr.f32.gmra.mxu0 %v4072
        %v4166 = vpop.f32.mrf.mxu0
        %v4167 = vadd.f32 %v4094, %v4166
        %v4168 = vpop.f32.mrf.mxu0
        %4169 = vdwg.mxu0
        %v4170 = vmul.f32 %v4162, 0.5
        %v4171 = vmul.f32 %v4167, 0.5
        %v4172 = vadd.f32 %v3926, %v4170
        %v4173 = vadd.f32 %v3927, %v4171
        %v4174 = vld [vmem:[%s2 + $0x14] sm:$0x1]
        %v4175 = vld [vmem:[%s2 + $0x15] sm:$0x1]
        %v4176 = vsel %vm532, %v4172, 0.0
        %4177 = vadd.xlane.f32.xlu0 %v4176
        %v4178 = vpop.xlane.xlu0 %4177
        %v4179 = vsel %vm532, %v4173, 0.0
        %4180 = vadd.xlane.f32.xlu0 %v4179
        %v4181 = vpop.xlane.xlu0 %4180
        %v4182 = vmul.f32 %v4178, %v539
        %v4183 = vmul.f32 %v4181, %v539
        %v4184 = vsub.f32 %v4172, %v4182
        %v4185 = vsub.f32 %v4173, %v4183
        %v4186 = vmul.f32 %v4184, %v4184
        %v4187 = vmul.f32 %v4185, %v4185
        %v4188 = vsel %vm532, %v4186, 0.0
        %4189 = vadd.xlane.f32.xlu0 %v4188
        %v4190 = vpop.xlane.xlu0 %4189
        %v4191 = vsel %vm532, %v4187, 0.0
        %4192 = vadd.xlane.f32.xlu0 %v4191
        %v4193 = vpop.xlane.xlu0 %4192
        %v4194 = vmul.f32 %v4190, %v539
        %v4195 = vmul.f32 %v4193, %v539
        %v4196 = vadd.f32 %v4194, 1e-05
        %v4197 = vadd.f32 %v4195, 1e-05
        %v4198 = vrsqrt.pop %v4196
        %v4199 = vrsqrt.pop %v4197
        %v4200 = vmul.f32 %v4184, %v4198
        %v4201 = vmul.f32 %v4185, %v4199
        %v4202 = vlaneseq
        %v4203 = vshrl.u32 %v4202, 7
        %v4204 = vsub.s32 0, %v4203
        %v4205 = vrot.slane %v4174, %v4204
        %v4206 = vmul.f32 %v4200, %v4205
        %v4207 = vmul.f32 %v4201, %v4205
        %v4208 = vlaneseq
        %v4209 = vshrl.u32 %v4208, 7
        %v4210 = vsub.s32 0, %v4209
        %v4211 = vrot.slane %v4175, %v4210
        %v4212 = vadd.f32 %v4206, %v4211
        %v4213 = vadd.f32 %v4207, %v4211
        %v4214 = vld [vmem:[%s2 + $0x16] sm:$0x1]
        %v4215 = vld [vmem:[%s2 + $0x17] sm:$0x1]
        %v4216 = vsel %vm532, %v4212, 0.0
        %4217 = vadd.xlane.f32.xlu0 %v4216
        %v4218 = vpop.xlane.xlu0 %4217
        %v4219 = vsel %vm532, %v4213, 0.0
        %4220 = vadd.xlane.f32.xlu0 %v4219
        %v4221 = vpop.xlane.xlu0 %4220
        %v4222 = vmul.f32 %v4218, %v539
        %v4223 = vmul.f32 %v4221, %v539
        %v4224 = vsub.f32 %v4212, %v4222
        %v4225 = vsub.f32 %v4213, %v4223
        %v4226 = vmul.f32 %v4224, %v4224
        %v4227 = vmul.f32 %v4225, %v4225
        %v4228 = vsel %vm532, %v4226, 0.0
        %4229 = vadd.xlane.f32.xlu0 %v4228
        %v4230 = vpop.xlane.xlu0 %4229
        %v4231 = vsel %vm532, %v4227, 0.0
        %4232 = vadd.xlane.f32.xlu0 %v4231
        %v4233 = vpop.xlane.xlu0 %4232
        %v4234 = vmul.f32 %v4230, %v539
        %v4235 = vmul.f32 %v4233, %v539
        %v4236 = vadd.f32 %v4234, 1e-05
        %v4237 = vadd.f32 %v4235, 1e-05
        %v4238 = vrsqrt.pop %v4236
        %v4239 = vrsqrt.pop %v4237
        %v4240 = vmul.f32 %v4224, %v4238
        %v4241 = vmul.f32 %v4225, %v4239
        %v4242 = vlaneseq
        %v4243 = vshrl.u32 %v4242, 7
        %v4244 = vsub.s32 0, %v4243
        %v4245 = vrot.slane %v4214, %v4244
        %v4246 = vmul.f32 %v4240, %v4245
        %v4247 = vmul.f32 %v4241, %v4245
        %v4248 = vlaneseq
        %v4249 = vshrl.u32 %v4248, 7
        %v4250 = vsub.s32 0, %v4249
        %v4251 = vrot.slane %v4215, %v4250
        %v4252 = vadd.f32 %v4246, %v4251
        %v4253 = vadd.f32 %v4247, %v4251
        %s4254 = scalar_lea.vmem %s3, 64
        %v4255 = vld [vmem:[%s4254] sm:$0xff]
        %v4256 = vld [vmem:[%s4254 + $0x8] sm:$0xff]
        %v4257 = vld [vmem:[%s4254 + $0x10] sm:$0xff]
        %v4258 = vld [vmem:[%s4254 + $0x18] sm:$0xff]
        %v4259 = vld [vmem:[%s4 + $0x2] sm:$0x1]
        %v4260 = vlaneseq
        %v4261 = vshrl.u32 %v4260, 7
        %v4262 = vsub.s32 0, %v4261
        %v4263 = vrot.slane %v4259, %v4262
        %v4265 = vsel %vm532, %v4252, 0
        %v4268 = vsel %vm532, %v4253, 0
        %4270 = vmatprep.subr.mxu0 0.0
        %4271 = vmatpush1.msra.mxu0 0.0
        %4272 = vmatprep.subr.mxu0 0.0
        %4273 = vmatpush1.msra.mxu0 0.0
        %4274 = vmatprep.subr.mxu0 0.0
        %4275 = vmatpush1.msra.mxu0 0.0
        %4276 = vmatprep.subr.mxu0 0.0
        %4277 = vmatpush1.msra.mxu0 0.0
        %4278 = vmatprep.subr.mxu0 0.0
        %4279 = vmatpush1.msra.mxu0 0.0
        %4280 = vmatprep.subr.mxu0 0.0
        %4281 = vmatpush1.msra.mxu0 0.0
        %4282 = vmatprep.subr.mxu0 0.0
        %4283 = vmatpush1.msra.mxu0 0.0
        %4284 = vmatprep.subr.mxu0 0.0
        %4285 = vmatpush1.msra.mxu0 0.0
        %4286 = vmatprep.subr.mxu0 0.0
        %4287 = vmatpush1.msra.mxu0 0.0
        %4288 = vmatprep.subr.mxu0 0.0
        %4289 = vmatpush1.msra.mxu0 0.0
        %4290 = vmatprep.subr.mxu0 0.0
        %4291 = vmatpush1.msra.mxu0 0.0
        %4292 = vmatprep.subr.mxu0 0.0
        %4293 = vmatpush1.msra.mxu0 0.0
        %4294 = vmatprep.subr.mxu0 0.0
        %4295 = vmatpush1.msra.mxu0 %v4258
        %4296 = vmatprep.subr.mxu0 0.0
        %4297 = vmatpush1.msra.mxu0 %v4257
        %4298 = vmatprep.subr.mxu0 0.0
        %4299 = vmatpush1.msra.mxu0 %v4256
        %4300 = vmatprep.subr.mxu0 0.0
        %4301 = vmatpush1.msra.mxu0 %v4255
        %4302 = vmatprep.subr.mxu0 0.0
        %4303 = vmatpush2.msra.mxu0 0.0
        %4304 = vmatprep.subr.mxu0 0.0
        %4305 = vmatpush2.msra.mxu0 0.0
        %4306 = vmatprep.subr.mxu0 0.0
        %4307 = vmatpush2.msra.mxu0 0.0
        %4308 = vmatprep.subr.mxu0 0.0
        %4309 = vmatpush2.msra.mxu0 0.0
        %4310 = vmatprep.subr.mxu0 0.0
        %4311 = vmatpush2.msra.mxu0 0.0
        %4312 = vmatprep.subr.mxu0 0.0
        %4313 = vmatpush2.msra.mxu0 0.0
        %4314 = vmatprep.subr.mxu0 0.0
        %4315 = vmatpush2.msra.mxu0 0.0
        %4316 = vmatprep.subr.mxu0 0.0
        %4317 = vmatpush2.msra.mxu0 0.0
        %4318 = vmatprep.subr.mxu0 0.0
        %4319 = vmatpush2.msra.mxu0 0.0
        %4320 = vmatprep.subr.mxu0 0.0
        %4321 = vmatpush2.msra.mxu0 0.0
        %4322 = vmatprep.subr.mxu0 0.0
        %4323 = vmatpush2.msra.mxu0 0.0
        %4324 = vmatprep.subr.mxu0 0.0
        %4325 = vmatpush2.msra.mxu0 0.0
        %4326 = vmatprep.subr.mxu0 0.0
        %4327 = vmatpush2.msra.mxu0 0.0
        %4328 = vmatprep.subr.mxu0 0.0
        %4329 = vmatpush2.msra.mxu0 0.0
        %4330 = vmatprep.subr.mxu0 0.0
        %4331 = vmatpush2.msra.mxu0 0.0
        %4332 = vmatprep.subr.mxu0 0.0
        %4333 = vmatpush2.msra.mxu0 0.0
        %4334 = vmatprep.mubr.f32.mxu0 0.0
        %4335 = vmatmul.mubr.f32.gmra.mxu0 %v4265
        %v4336 = vpop.f32.mrf.mxu0
        %v4337 = vadd.f32 %v4263, %v4336
        %v4338 = vpop.f32.mrf.mxu0
        %4339 = vmatprep.mubr.f32.mxu0 0.0
        %4340 = vmatmul.mubr.f32.gmra.mxu0 %v4268
        %v4341 = vpop.f32.mrf.mxu0
        %v4342 = vadd.f32 %v4263, %v4341
        %v4343 = vpop.f32.mrf.mxu0
        %4344 = vdwg.mxu0
        %v4345 = vxor.u32 %v4337, 2147483648
        %v4346 = vxor.u32 %v4342, 2147483648
        %v4347 = vmul.f32 %v4345, 1.442695
        %v4348 = vpow.pop %v4347
        %v4349 = vmul.f32 %v4346, 1.442695
        %v4350 = vpow.pop %v4349
        %v4351 = vadd.f32 %v4348, 1.0
        %v4352 = vadd.f32 %v4350, 1.0
        %v4353 = vrcp.pop %v4351
        %v4354 = vmul.f32 1.0, %v4353
        %v4355 = vrcp.pop %v4352
        %v4356 = vmul.f32 1.0, %v4355
        %v4357 = vmul.f32 %v4337, %v4354
        %v4358 = vmul.f32 %v4342, %v4356
        %s4359 = scalar_lea.vmem %s5, 256
        %v4360 = vld [vmem:[%s4359] sm:$0xff]
        %v4361 = vld [vmem:[%s4359 + $0x8] sm:$0xff]
        %v4362 = vld [vmem:[%s4359 + $0x10] sm:$0xff]
        %v4363 = vld [vmem:[%s4359 + $0x18] sm:$0xff]
        %v4364 = vld [vmem:[%s4359 + $0x20] sm:$0xff]
        %v4365 = vld [vmem:[%s4359 + $0x28] sm:$0xff]
        %v4366 = vld [vmem:[%s4359 + $0x30] sm:$0xff]
        %v4367 = vld [vmem:[%s4359 + $0x38] sm:$0xff]
        %v4368 = vld [vmem:[%s4359 + $0x40] sm:$0xff]
        %v4369 = vld [vmem:[%s4359 + $0x48] sm:$0xff]
        %v4370 = vld [vmem:[%s4359 + $0x50] sm:$0xff]
        %v4371 = vld [vmem:[%s4359 + $0x58] sm:$0xff]
        %v4372 = vld [vmem:[%s4359 + $0x60] sm:$0xff]
        %v4373 = vld [vmem:[%s4359 + $0x68] sm:$0xff]
        %v4374 = vld [vmem:[%s4359 + $0x70] sm:$0xff]
        %v4375 = vld [vmem:[%s4359 + $0x78] sm:$0xff]
        %v4376 = vld [vmem:[%s2 + $0x18] sm:$0x1]
        %v4377 = vlaneseq
        %v4378 = vshrl.u32 %v4377, 7
        %v4379 = vsub.s32 0, %v4378
        %v4380 = vrot.slane %v4376, %v4379
        %4381 = vmatprep.subr.mxu0 0.0
        %4382 = vmatpush1.msra.mxu0 %v4375
        %4383 = vmatprep.subr.mxu0 0.0
        %4384 = vmatpush1.msra.mxu0 %v4374
        %4385 = vmatprep.subr.mxu0 0.0
        %4386 = vmatpush1.msra.mxu0 %v4373
        %4387 = vmatprep.subr.mxu0 0.0
        %4388 = vmatpush1.msra.mxu0 %v4372
        %4389 = vmatprep.subr.mxu0 0.0
        %4390 = vmatpush1.msra.mxu0 %v4371
        %4391 = vmatprep.subr.mxu0 0.0
        %4392 = vmatpush1.msra.mxu0 %v4370
        %4393 = vmatprep.subr.mxu0 0.0
        %4394 = vmatpush1.msra.mxu0 %v4369
        %4395 = vmatprep.subr.mxu0 0.0
        %4396 = vmatpush1.msra.mxu0 %v4368
        %4397 = vmatprep.subr.mxu0 0.0
        %4398 = vmatpush1.msra.mxu0 %v4367
        %4399 = vmatprep.subr.mxu0 0.0
        %4400 = vmatpush1.msra.mxu0 %v4366
        %4401 = vmatprep.subr.mxu0 0.0
        %4402 = vmatpush1.msra.mxu0 %v4365
        %4403 = vmatprep.subr.mxu0 0.0
        %4404 = vmatpush1.msra.mxu0 %v4364
        %4405 = vmatprep.subr.mxu0 0.0
        %4406 = vmatpush1.msra.mxu0 %v4363
        %4407 = vmatprep.subr.mxu0 0.0
        %4408 = vmatpush1.msra.mxu0 %v4362
        %4409 = vmatprep.subr.mxu0 0.0
        %4410 = vmatpush1.msra.mxu0 %v4361
        %4411 = vmatprep.subr.mxu0 0.0
        %4412 = vmatpush1.msra.mxu0 %v4360
        %4413 = vmatprep.subr.mxu0 0.0
        %4414 = vmatpush2.msra.mxu0 0.0
        %4415 = vmatprep.subr.mxu0 0.0
        %4416 = vmatpush2.msra.mxu0 0.0
        %4417 = vmatprep.subr.mxu0 0.0
        %4418 = vmatpush2.msra.mxu0 0.0
        %4419 = vmatprep.subr.mxu0 0.0
        %4420 = vmatpush2.msra.mxu0 0.0
        %4421 = vmatprep.subr.mxu0 0.0
        %4422 = vmatpush2.msra.mxu0 0.0
        %4423 = vmatprep.subr.mxu0 0.0
        %4424 = vmatpush2.msra.mxu0 0.0
        %4425 = vmatprep.subr.mxu0 0.0
        %4426 = vmatpush2.msra.mxu0 0.0
        %4427 = vmatprep.subr.mxu0 0.0
        %4428 = vmatpush2.msra.mxu0 0.0
        %4429 = vmatprep.subr.mxu0 0.0
        %4430 = vmatpush2.msra.mxu0 0.0
        %4431 = vmatprep.subr.mxu0 0.0
        %4432 = vmatpush2.msra.mxu0 0.0
        %4433 = vmatprep.subr.mxu0 0.0
        %4434 = vmatpush2.msra.mxu0 0.0
        %4435 = vmatprep.subr.mxu0 0.0
        %4436 = vmatpush2.msra.mxu0 0.0
        %4437 = vmatprep.subr.mxu0 0.0
        %4438 = vmatpush2.msra.mxu0 0.0
        %4439 = vmatprep.subr.mxu0 0.0
        %4440 = vmatpush2.msra.mxu0 0.0
        %4441 = vmatprep.subr.mxu0 0.0
        %4442 = vmatpush2.msra.mxu0 0.0
        %4443 = vmatprep.subr.mxu0 0.0
        %4444 = vmatpush2.msra.mxu0 0.0
        %4445 = vmatprep.mubr.f32.mxu0 0.0
        %4446 = vmatmul.mubr.f32.gmra.mxu0 %v4357
        %v4447 = vpop.f32.mrf.mxu0
        %v4448 = vadd.f32 %v4380, %v4447
        %v4449 = vpop.f32.mrf.mxu0
        %4450 = vmatprep.mubr.f32.mxu0 0.0
        %4451 = vmatmul.mubr.f32.gmra.mxu0 %v4358
        %v4452 = vpop.f32.mrf.mxu0
        %v4453 = vadd.f32 %v4380, %v4452
        %v4454 = vpop.f32.mrf.mxu0
        %4455 = vdwg.mxu0
        %v4456 = vmul.f32 %v4448, 0.5
        %v4457 = vmul.f32 %v4453, 0.5
        %v4458 = vadd.f32 %v4212, %v4456
        %v4459 = vadd.f32 %v4213, %v4457
        %v4460 = vld [vmem:[%s2 + $0x19] sm:$0x1]
        %v4461 = vld [vmem:[%s2 + $0x1a] sm:$0x1]
        %v4462 = vsel %vm532, %v4458, 0.0
        %4463 = vadd.xlane.f32.xlu0 %v4462
        %v4464 = vpop.xlane.xlu0 %4463
        %v4465 = vsel %vm532, %v4459, 0.0
        %4466 = vadd.xlane.f32.xlu0 %v4465
        %v4467 = vpop.xlane.xlu0 %4466
        %v4468 = vmul.f32 %v4464, %v539
        %v4469 = vmul.f32 %v4467, %v539
        %v4470 = vsub.f32 %v4458, %v4468
        %v4471 = vsub.f32 %v4459, %v4469
        %v4472 = vmul.f32 %v4470, %v4470
        %v4473 = vmul.f32 %v4471, %v4471
        %v4474 = vsel %vm532, %v4472, 0.0
        %4475 = vadd.xlane.f32.xlu0 %v4474
        %v4476 = vpop.xlane.xlu0 %4475
        %v4477 = vsel %vm532, %v4473, 0.0
        %4478 = vadd.xlane.f32.xlu0 %v4477
        %v4479 = vpop.xlane.xlu0 %4478
        %v4480 = vmul.f32 %v4476, %v539
        %v4481 = vmul.f32 %v4479, %v539
        %v4482 = vadd.f32 %v4480, 1e-05
        %v4483 = vadd.f32 %v4481, 1e-05
        %v4484 = vrsqrt.pop %v4482
        %v4485 = vrsqrt.pop %v4483
        %v4486 = vmul.f32 %v4470, %v4484
        %v4487 = vmul.f32 %v4471, %v4485
        %v4488 = vlaneseq
        %v4489 = vshrl.u32 %v4488, 7
        %v4490 = vsub.s32 0, %v4489
        %v4491 = vrot.slane %v4460, %v4490
        %v4492 = vmul.f32 %v4486, %v4491
        %v4493 = vmul.f32 %v4487, %v4491
        %v4494 = vlaneseq
        %v4495 = vshrl.u32 %v4494, 7
        %v4496 = vsub.s32 0, %v4495
        %v4497 = vrot.slane %v4461, %v4496
        %v4498 = vadd.f32 %v4492, %v4497
        %v4499 = vadd.f32 %v4493, %v4497
        %v4500 = vld [vmem:[%s2 + $0x1b] sm:$0x1]
        %v4501 = vlaneseq
        %v4502 = vshrl.u32 %v4501, 7
        %v4503 = vsub.s32 0, %v4502
        %v4504 = vrot.slane %v4500, %v4503
        %v4505 = vadd.f32 %v4504, 0.0
        %s4506 = scalar_lea.vmem %s6, 384
        %v4507 = vld [vmem:[%s4506] sm:$0xff]
        %v4508 = vld [vmem:[%s4506 + $0x8] sm:$0xff]
        %v4509 = vld [vmem:[%s4506 + $0x10] sm:$0xff]
        %v4510 = vld [vmem:[%s4506 + $0x18] sm:$0xff]
        %v4511 = vld [vmem:[%s7 + $0xc] sm:$0x1]
        %v4512 = vlaneseq
        %v4513 = vshrl.u32 %v4512, 7
        %v4514 = vsub.s32 0, %v4513
        %v4515 = vrot.slane %v4511, %v4514
        %v4517 = vsel %vm532, %v4498, 0
        %v4520 = vsel %vm532, %v4499, 0
        %4522 = vmatprep.subr.mxu0 0.0
        %4523 = vmatpush1.msra.mxu0 0.0
        %4524 = vmatprep.subr.mxu0 0.0
        %4525 = vmatpush1.msra.mxu0 0.0
        %4526 = vmatprep.subr.mxu0 0.0
        %4527 = vmatpush1.msra.mxu0 0.0
        %4528 = vmatprep.subr.mxu0 0.0
        %4529 = vmatpush1.msra.mxu0 0.0
        %4530 = vmatprep.subr.mxu0 0.0
        %4531 = vmatpush1.msra.mxu0 0.0
        %4532 = vmatprep.subr.mxu0 0.0
        %4533 = vmatpush1.msra.mxu0 0.0
        %4534 = vmatprep.subr.mxu0 0.0
        %4535 = vmatpush1.msra.mxu0 0.0
        %4536 = vmatprep.subr.mxu0 0.0
        %4537 = vmatpush1.msra.mxu0 0.0
        %4538 = vmatprep.subr.mxu0 0.0
        %4539 = vmatpush1.msra.mxu0 0.0
        %4540 = vmatprep.subr.mxu0 0.0
        %4541 = vmatpush1.msra.mxu0 0.0
        %4542 = vmatprep.subr.mxu0 0.0
        %4543 = vmatpush1.msra.mxu0 0.0
        %4544 = vmatprep.subr.mxu0 0.0
        %4545 = vmatpush1.msra.mxu0 0.0
        %4546 = vmatprep.subr.mxu0 0.0
        %4547 = vmatpush1.msra.mxu0 %v4510
        %4548 = vmatprep.subr.mxu0 0.0
        %4549 = vmatpush1.msra.mxu0 %v4509
        %4550 = vmatprep.subr.mxu0 0.0
        %4551 = vmatpush1.msra.mxu0 %v4508
        %4552 = vmatprep.subr.mxu0 0.0
        %4553 = vmatpush1.msra.mxu0 %v4507
        %4554 = vmatprep.subr.mxu0 0.0
        %4555 = vmatpush2.msra.mxu0 0.0
        %4556 = vmatprep.subr.mxu0 0.0
        %4557 = vmatpush2.msra.mxu0 0.0
        %4558 = vmatprep.subr.mxu0 0.0
        %4559 = vmatpush2.msra.mxu0 0.0
        %4560 = vmatprep.subr.mxu0 0.0
        %4561 = vmatpush2.msra.mxu0 0.0
        %4562 = vmatprep.subr.mxu0 0.0
        %4563 = vmatpush2.msra.mxu0 0.0
        %4564 = vmatprep.subr.mxu0 0.0
        %4565 = vmatpush2.msra.mxu0 0.0
        %4566 = vmatprep.subr.mxu0 0.0
        %4567 = vmatpush2.msra.mxu0 0.0
        %4568 = vmatprep.subr.mxu0 0.0
        %4569 = vmatpush2.msra.mxu0 0.0
        %4570 = vmatprep.subr.mxu0 0.0
        %4571 = vmatpush2.msra.mxu0 0.0
        %4572 = vmatprep.subr.mxu0 0.0
        %4573 = vmatpush2.msra.mxu0 0.0
        %4574 = vmatprep.subr.mxu0 0.0
        %4575 = vmatpush2.msra.mxu0 0.0
        %4576 = vmatprep.subr.mxu0 0.0
        %4577 = vmatpush2.msra.mxu0 0.0
        %4578 = vmatprep.subr.mxu0 0.0
        %4579 = vmatpush2.msra.mxu0 0.0
        %4580 = vmatprep.subr.mxu0 0.0
        %4581 = vmatpush2.msra.mxu0 0.0
        %4582 = vmatprep.subr.mxu0 0.0
        %4583 = vmatpush2.msra.mxu0 0.0
        %4584 = vmatprep.subr.mxu0 0.0
        %4585 = vmatpush2.msra.mxu0 0.0
        %4586 = vmatprep.mubr.f32.mxu0 0.0
        %4587 = vmatmul.mubr.f32.gmra.mxu0 %v4517
        %v4588 = vpop.f32.mrf.mxu0
        %v4589 = vadd.f32 %v4515, %v4588
        %v4590 = vpop.f32.mrf.mxu0
        %4591 = vmatprep.mubr.f32.mxu0 0.0
        %4592 = vmatmul.mubr.f32.gmra.mxu0 %v4520
        %v4593 = vpop.f32.mrf.mxu0
        %v4594 = vadd.f32 %v4515, %v4593
        %v4595 = vpop.f32.mrf.mxu0
        %4596 = vdwg.mxu0
        %v4597 = vmul.f32 %v4589, 0.35355338
        %v4598 = vmul.f32 %v4594, 0.35355338
        %s4599 = scalar_lea.vmem %s6, 512
        %v4600 = vld [vmem:[%s4599] sm:$0xff]
        %v4601 = vld [vmem:[%s4599 + $0x8] sm:$0xff]
        %v4602 = vld [vmem:[%s4599 + $0x10] sm:$0xff]
        %v4603 = vld [vmem:[%s4599 + $0x18] sm:$0xff]
        %v4604 = vld [vmem:[%s7 + $0x10] sm:$0x1]
        %v4605 = vlaneseq
        %v4606 = vshrl.u32 %v4605, 7
        %v4607 = vsub.s32 0, %v4606
        %v4608 = vrot.slane %v4604, %v4607
        %4609 = vmatprep.subr.mxu0 0.0
        %4610 = vmatpush1.msra.mxu0 0.0
        %4611 = vmatprep.subr.mxu0 0.0
        %4612 = vmatpush1.msra.mxu0 0.0
        %4613 = vmatprep.subr.mxu0 0.0
        %4614 = vmatpush1.msra.mxu0 0.0
        %4615 = vmatprep.subr.mxu0 0.0
        %4616 = vmatpush1.msra.mxu0 0.0
        %4617 = vmatprep.subr.mxu0 0.0
        %4618 = vmatpush1.msra.mxu0 0.0
        %4619 = vmatprep.subr.mxu0 0.0
        %4620 = vmatpush1.msra.mxu0 0.0
        %4621 = vmatprep.subr.mxu0 0.0
        %4622 = vmatpush1.msra.mxu0 0.0
        %4623 = vmatprep.subr.mxu0 0.0
        %4624 = vmatpush1.msra.mxu0 0.0
        %4625 = vmatprep.subr.mxu0 0.0
        %4626 = vmatpush1.msra.mxu0 0.0
        %4627 = vmatprep.subr.mxu0 0.0
        %4628 = vmatpush1.msra.mxu0 0.0
        %4629 = vmatprep.subr.mxu0 0.0
        %4630 = vmatpush1.msra.mxu0 0.0
        %4631 = vmatprep.subr.mxu0 0.0
        %4632 = vmatpush1.msra.mxu0 0.0
        %4633 = vmatprep.subr.mxu0 0.0
        %4634 = vmatpush1.msra.mxu0 %v4603
        %4635 = vmatprep.subr.mxu0 0.0
        %4636 = vmatpush1.msra.mxu0 %v4602
        %4637 = vmatprep.subr.mxu0 0.0
        %4638 = vmatpush1.msra.mxu0 %v4601
        %4639 = vmatprep.subr.mxu0 0.0
        %4640 = vmatpush1.msra.mxu0 %v4600
        %4641 = vmatprep.subr.mxu0 0.0
        %4642 = vmatpush2.msra.mxu0 0.0
        %4643 = vmatprep.subr.mxu0 0.0
        %4644 = vmatpush2.msra.mxu0 0.0
        %4645 = vmatprep.subr.mxu0 0.0
        %4646 = vmatpush2.msra.mxu0 0.0
        %4647 = vmatprep.subr.mxu0 0.0
        %4648 = vmatpush2.msra.mxu0 0.0
        %4649 = vmatprep.subr.mxu0 0.0
        %4650 = vmatpush2.msra.mxu0 0.0
        %4651 = vmatprep.subr.mxu0 0.0
        %4652 = vmatpush2.msra.mxu0 0.0
        %4653 = vmatprep.subr.mxu0 0.0
        %4654 = vmatpush2.msra.mxu0 0.0
        %4655 = vmatprep.subr.mxu0 0.0
        %4656 = vmatpush2.msra.mxu0 0.0
        %4657 = vmatprep.subr.mxu0 0.0
        %4658 = vmatpush2.msra.mxu0 0.0
        %4659 = vmatprep.subr.mxu0 0.0
        %4660 = vmatpush2.msra.mxu0 0.0
        %4661 = vmatprep.subr.mxu0 0.0
        %4662 = vmatpush2.msra.mxu0 0.0
        %4663 = vmatprep.subr.mxu0 0.0
        %4664 = vmatpush2.msra.mxu0 0.0
        %4665 = vmatprep.subr.mxu0 0.0
        %4666 = vmatpush2.msra.mxu0 0.0
        %4667 = vmatprep.subr.mxu0 0.0
        %4668 = vmatpush2.msra.mxu0 0.0
        %4669 = vmatprep.subr.mxu0 0.0
        %4670 = vmatpush2.msra.mxu0 0.0
        %4671 = vmatprep.subr.mxu0 0.0
        %4672 = vmatpush2.msra.mxu0 0.0
        %4673 = vmatprep.mubr.f32.mxu0 0.0
        %4674 = vmatmul.mubr.f32.gmra.mxu0 %v4517
        %v4675 = vpop.f32.mrf.mxu0
        %v4676 = vadd.f32 %v4608, %v4675
        %v4677 = vpop.f32.mrf.mxu0
        %4678 = vmatprep.mubr.f32.mxu0 0.0
        %4679 = vmatmul.mubr.f32.gmra.mxu0 %v4520
        %v4680 = vpop.f32.mrf.mxu0
        %v4681 = vadd.f32 %v4608, %v4680
        %v4682 = vpop.f32.mrf.mxu0
        %4683 = vdwg.mxu0
        %s4684 = scalar_lea.vmem %s6, 640
        %v4685 = vld [vmem:[%s4684] sm:$0xff]
        %v4686 = vld [vmem:[%s4684 + $0x8] sm:$0xff]
        %v4687 = vld [vmem:[%s4684 + $0x10] sm:$0xff]
        %v4688 = vld [vmem:[%s4684 + $0x18] sm:$0xff]
        %v4689 = vld [vmem:[%s7 + $0x14] sm:$0x1]
        %v4690 = vlaneseq
        %v4691 = vshrl.u32 %v4690, 7
        %v4692 = vsub.s32 0, %v4691
        %v4693 = vrot.slane %v4689, %v4692
        %4694 = vmatprep.subr.mxu0 0.0
        %4695 = vmatpush1.msra.mxu0 0.0
        %4696 = vmatprep.subr.mxu0 0.0
        %4697 = vmatpush1.msra.mxu0 0.0
        %4698 = vmatprep.subr.mxu0 0.0
        %4699 = vmatpush1.msra.mxu0 0.0
        %4700 = vmatprep.subr.mxu0 0.0
        %4701 = vmatpush1.msra.mxu0 0.0
        %4702 = vmatprep.subr.mxu0 0.0
        %4703 = vmatpush1.msra.mxu0 0.0
        %4704 = vmatprep.subr.mxu0 0.0
        %4705 = vmatpush1.msra.mxu0 0.0
        %4706 = vmatprep.subr.mxu0 0.0
        %4707 = vmatpush1.msra.mxu0 0.0
        %4708 = vmatprep.subr.mxu0 0.0
        %4709 = vmatpush1.msra.mxu0 0.0
        %4710 = vmatprep.subr.mxu0 0.0
        %4711 = vmatpush1.msra.mxu0 0.0
        %4712 = vmatprep.subr.mxu0 0.0
        %4713 = vmatpush1.msra.mxu0 0.0
        %4714 = vmatprep.subr.mxu0 0.0
        %4715 = vmatpush1.msra.mxu0 0.0
        %4716 = vmatprep.subr.mxu0 0.0
        %4717 = vmatpush1.msra.mxu0 0.0
        %4718 = vmatprep.subr.mxu0 0.0
        %4719 = vmatpush1.msra.mxu0 %v4688
        %4720 = vmatprep.subr.mxu0 0.0
        %4721 = vmatpush1.msra.mxu0 %v4687
        %4722 = vmatprep.subr.mxu0 0.0
        %4723 = vmatpush1.msra.mxu0 %v4686
        %4724 = vmatprep.subr.mxu0 0.0
        %4725 = vmatpush1.msra.mxu0 %v4685
        %4726 = vmatprep.subr.mxu0 0.0
        %4727 = vmatpush2.msra.mxu0 0.0
        %4728 = vmatprep.subr.mxu0 0.0
        %4729 = vmatpush2.msra.mxu0 0.0
        %4730 = vmatprep.subr.mxu0 0.0
        %4731 = vmatpush2.msra.mxu0 0.0
        %4732 = vmatprep.subr.mxu0 0.0
        %4733 = vmatpush2.msra.mxu0 0.0
        %4734 = vmatprep.subr.mxu0 0.0
        %4735 = vmatpush2.msra.mxu0 0.0
        %4736 = vmatprep.subr.mxu0 0.0
        %4737 = vmatpush2.msra.mxu0 0.0
        %4738 = vmatprep.subr.mxu0 0.0
        %4739 = vmatpush2.msra.mxu0 0.0
        %4740 = vmatprep.subr.mxu0 0.0
        %4741 = vmatpush2.msra.mxu0 0.0
        %4742 = vmatprep.subr.mxu0 0.0
        %4743 = vmatpush2.msra.mxu0 0.0
        %4744 = vmatprep.subr.mxu0 0.0
        %4745 = vmatpush2.msra.mxu0 0.0
        %4746 = vmatprep.subr.mxu0 0.0
        %4747 = vmatpush2.msra.mxu0 0.0
        %4748 = vmatprep.subr.mxu0 0.0
        %4749 = vmatpush2.msra.mxu0 0.0
        %4750 = vmatprep.subr.mxu0 0.0
        %4751 = vmatpush2.msra.mxu0 0.0
        %4752 = vmatprep.subr.mxu0 0.0
        %4753 = vmatpush2.msra.mxu0 0.0
        %4754 = vmatprep.subr.mxu0 0.0
        %4755 = vmatpush2.msra.mxu0 0.0
        %4756 = vmatprep.subr.mxu0 0.0
        %4757 = vmatpush2.msra.mxu0 0.0
        %4758 = vmatprep.mubr.f32.mxu0 0.0
        %4759 = vmatmul.mubr.f32.gmra.mxu0 %v4517
        %v4760 = vpop.f32.mrf.mxu0
        %v4761 = vadd.f32 %v4693, %v4760
        %v4762 = vpop.f32.mrf.mxu0
        %4763 = vmatprep.mubr.f32.mxu0 0.0
        %4764 = vmatmul.mubr.f32.gmra.mxu0 %v4520
        %v4765 = vpop.f32.mrf.mxu0
        %v4766 = vadd.f32 %v4693, %v4765
        %v4767 = vpop.f32.mrf.mxu0
        %4768 = vdwg.mxu0
        %v4770 = vsel %vm1124, %v4597, 0
        %v4773 = vsel %vm1124, %v4598, 0
        %v4776 = vsel %vm1124, %v4676, 0
        %v4779 = vsel %vm1124, %v4681, 0
        %4781 = vmatprep.subr.mxu0 0.0
        %4782 = vmatpush1.xpose.msra.mxu0 0.0
        %4783 = vmatprep.subr.mxu0 0.0
        %4784 = vmatpush1.xpose.msra.mxu0 0.0
        %4785 = vmatprep.subr.mxu0 0.0
        %4786 = vmatpush1.xpose.msra.mxu0 0.0
        %4787 = vmatprep.subr.mxu0 0.0
        %4788 = vmatpush1.xpose.msra.mxu0 0.0
        %4789 = vmatprep.subr.mxu0 0.0
        %4790 = vmatpush1.xpose.msra.mxu0 0.0
        %4791 = vmatprep.subr.mxu0 0.0
        %4792 = vmatpush1.xpose.msra.mxu0 0.0
        %4793 = vmatprep.subr.mxu0 0.0
        %4794 = vmatpush1.xpose.msra.mxu0 0.0
        %4795 = vmatprep.subr.mxu0 0.0
        %4796 = vmatpush1.xpose.msra.mxu0 0.0
        %4797 = vmatprep.subr.mxu0 0.0
        %4798 = vmatpush1.xpose.msra.mxu0 0.0
        %4799 = vmatprep.subr.mxu0 0.0
        %4800 = vmatpush1.xpose.msra.mxu0 0.0
        %4801 = vmatprep.subr.mxu0 0.0
        %4802 = vmatpush1.xpose.msra.mxu0 0.0
        %4803 = vmatprep.subr.mxu0 0.0
        %4804 = vmatpush1.xpose.msra.mxu0 0.0
        %4805 = vmatprep.subr.mxu0 0.0
        %4806 = vmatpush1.xpose.msra.mxu0 0.0
        %4807 = vmatprep.subr.mxu0 0.0
        %4808 = vmatpush1.xpose.msra.mxu0 0.0
        %4809 = vmatprep.subr.mxu0 0.0
        %4810 = vmatpush1.xpose.msra.mxu0 %v4779
        %4811 = vmatprep.subr.mxu0 0.0
        %4812 = vmatpush1.xpose.msra.mxu0 %v4776
        %4813 = vmatprep.subr.mxu0 0.0
        %4814 = vmatpush2.xpose.msra.mxu0 0.0
        %4815 = vmatprep.subr.mxu0 0.0
        %4816 = vmatpush2.xpose.msra.mxu0 0.0
        %4817 = vmatprep.subr.mxu0 0.0
        %4818 = vmatpush2.xpose.msra.mxu0 0.0
        %4819 = vmatprep.subr.mxu0 0.0
        %4820 = vmatpush2.xpose.msra.mxu0 0.0
        %4821 = vmatprep.subr.mxu0 0.0
        %4822 = vmatpush2.xpose.msra.mxu0 0.0
        %4823 = vmatprep.subr.mxu0 0.0
        %4824 = vmatpush2.xpose.msra.mxu0 0.0
        %4825 = vmatprep.subr.mxu0 0.0
        %4826 = vmatpush2.xpose.msra.mxu0 0.0
        %4827 = vmatprep.subr.mxu0 0.0
        %4828 = vmatpush2.xpose.msra.mxu0 0.0
        %4829 = vmatprep.subr.mxu0 0.0
        %4830 = vmatpush2.xpose.msra.mxu0 0.0
        %4831 = vmatprep.subr.mxu0 0.0
        %4832 = vmatpush2.xpose.msra.mxu0 0.0
        %4833 = vmatprep.subr.mxu0 0.0
        %4834 = vmatpush2.xpose.msra.mxu0 0.0
        %4835 = vmatprep.subr.mxu0 0.0
        %4836 = vmatpush2.xpose.msra.mxu0 0.0
        %4837 = vmatprep.subr.mxu0 0.0
        %4838 = vmatpush2.xpose.msra.mxu0 0.0
        %4839 = vmatprep.subr.mxu0 0.0
        %4840 = vmatpush2.xpose.msra.mxu0 0.0
        %4841 = vmatprep.subr.mxu0 0.0
        %4842 = vmatpush2.xpose.msra.mxu0 0.0
        %4843 = vmatprep.subr.mxu0 0.0
        %4844 = vmatpush2.xpose.msra.mxu0 0.0
        %4845 = vmatprep.mubr.f32.mxu0 0.0
        %4846 = vmatmul.mubr.f32.gmra.mxu0 %v4770
        %v4847 = vpop.f32.mrf.mxu0
        %v4848 = vadd.f32 0.0, %v4847
        %v4849 = vpop.f32.mrf.mxu0
        %4850 = vmatprep.mubr.f32.mxu0 0.0
        %4851 = vmatmul.mubr.f32.gmra.mxu0 %v4773
        %v4852 = vpop.f32.mrf.mxu0
        %v4853 = vadd.f32 0.0, %v4852
        %v4854 = vpop.f32.mrf.mxu0
        %4855 = vdwg.mxu0
        %v4856 = vsel %vm448, %v4848, -inf
        %4857 = vmax.xlane.f32.xlu0 %v4856
        %v4858 = vpop.xlane.xlu0 %4857
        %v4859 = vsel %vm448, %v4853, -inf
        %4860 = vmax.xlane.f32.xlu0 %v4859
        %v4861 = vpop.xlane.xlu0 %4860
        %v4862 = vsub.f32 %v4848, %v4858
        %v4863 = vsub.f32 %v4853, %v4861
        %v4864 = vmul.f32 %v4862, 1.442695
        %v4865 = vpow.pop %v4864
        %v4866 = vmul.f32 %v4863, 1.442695
        %v4867 = vpow.pop %v4866
        %v4868 = vsel %vm448, %v4865, 0.0
        %4869 = vadd.xlane.f32.xlu0 %v4868
        %v4870 = vpop.xlane.xlu0 %4869
        %v4871 = vsel %vm448, %v4867, 0.0
        %4872 = vadd.xlane.f32.xlu0 %v4871
        %v4873 = vpop.xlane.xlu0 %4872
        %v4874 = vrcp.pop %v4870
        %v4875 = vmul.f32 %v4865, %v4874
        %v4876 = vrcp.pop %v4873
        %v4877 = vmul.f32 %v4867, %v4876
        %v4879 = vsel %vm448, %v4875, 0
        %v4882 = vsel %vm448, %v4877, 0
        %4884 = vmatprep.subr.mxu0 0.0
        %4885 = vmatpush1.msra.mxu0 0.0
        %4886 = vmatprep.subr.mxu0 0.0
        %4887 = vmatpush1.msra.mxu0 0.0
        %4888 = vmatprep.subr.mxu0 0.0
        %4889 = vmatpush1.msra.mxu0 0.0
        %4890 = vmatprep.subr.mxu0 0.0
        %4891 = vmatpush1.msra.mxu0 0.0
        %4892 = vmatprep.subr.mxu0 0.0
        %4893 = vmatpush1.msra.mxu0 0.0
        %4894 = vmatprep.subr.mxu0 0.0
        %4895 = vmatpush1.msra.mxu0 0.0
        %4896 = vmatprep.subr.mxu0 0.0
        %4897 = vmatpush1.msra.mxu0 0.0
        %4898 = vmatprep.subr.mxu0 0.0
        %4899 = vmatpush1.msra.mxu0 0.0
        %4900 = vmatprep.subr.mxu0 0.0
        %4901 = vmatpush1.msra.mxu0 0.0
        %4902 = vmatprep.subr.mxu0 0.0
        %4903 = vmatpush1.msra.mxu0 0.0
        %4904 = vmatprep.subr.mxu0 0.0
        %4905 = vmatpush1.msra.mxu0 0.0
        %4906 = vmatprep.subr.mxu0 0.0
        %4907 = vmatpush1.msra.mxu0 0.0
        %4908 = vmatprep.subr.mxu0 0.0
        %4909 = vmatpush1.msra.mxu0 0.0
        %4910 = vmatprep.subr.mxu0 0.0
        %4911 = vmatpush1.msra.mxu0 0.0
        %4912 = vmatprep.subr.mxu0 0.0
        %4913 = vmatpush1.msra.mxu0 %v4766
        %4914 = vmatprep.subr.mxu0 0.0
        %4915 = vmatpush1.msra.mxu0 %v4761
        %4916 = vmatprep.subr.mxu0 0.0
        %4917 = vmatpush2.msra.mxu0 0.0
        %4918 = vmatprep.subr.mxu0 0.0
        %4919 = vmatpush2.msra.mxu0 0.0
        %4920 = vmatprep.subr.mxu0 0.0
        %4921 = vmatpush2.msra.mxu0 0.0
        %4922 = vmatprep.subr.mxu0 0.0
        %4923 = vmatpush2.msra.mxu0 0.0
        %4924 = vmatprep.subr.mxu0 0.0
        %4925 = vmatpush2.msra.mxu0 0.0
        %4926 = vmatprep.subr.mxu0 0.0
        %4927 = vmatpush2.msra.mxu0 0.0
        %4928 = vmatprep.subr.mxu0 0.0
        %4929 = vmatpush2.msra.mxu0 0.0
        %4930 = vmatprep.subr.mxu0 0.0
        %4931 = vmatpush2.msra.mxu0 0.0
        %4932 = vmatprep.subr.mxu0 0.0
        %4933 = vmatpush2.msra.mxu0 0.0
        %4934 = vmatprep.subr.mxu0 0.0
        %4935 = vmatpush2.msra.mxu0 0.0
        %4936 = vmatprep.subr.mxu0 0.0
        %4937 = vmatpush2.msra.mxu0 0.0
        %4938 = vmatprep.subr.mxu0 0.0
        %4939 = vmatpush2.msra.mxu0 0.0
        %4940 = vmatprep.subr.mxu0 0.0
        %4941 = vmatpush2.msra.mxu0 0.0
        %4942 = vmatprep.subr.mxu0 0.0
        %4943 = vmatpush2.msra.mxu0 0.0
        %4944 = vmatprep.subr.mxu0 0.0
        %4945 = vmatpush2.msra.mxu0 0.0
        %4946 = vmatprep.subr.mxu0 0.0
        %4947 = vmatpush2.msra.mxu0 0.0
        %4948 = vmatprep.mubr.f32.mxu0 0.0
        %4949 = vmatmul.mubr.f32.gmra.mxu0 %v4879
        %v4950 = vpop.f32.mrf.mxu0
        %v4951 = vadd.f32 0.0, %v4950
        %v4952 = vpop.f32.mrf.mxu0
        %4953 = vmatprep.mubr.f32.mxu0 0.0
        %4954 = vmatmul.mubr.f32.gmra.mxu0 %v4882
        %v4955 = vpop.f32.mrf.mxu0
        %v4956 = vadd.f32 0.0, %v4955
        %v4957 = vpop.f32.mrf.mxu0
        %4958 = vdwg.mxu0
        %s4959 = scalar_lea.vmem %s8, 32
        %v4960 = vld [vmem:[%s4959] sm:$0xff]
        %v4962 = vsel %vm1124, %v4951, 0
        %v4965 = vsel %vm1124, %v4956, 0
        %4967 = vmatprep.subr.mxu0 0.0
        %4968 = vmatpush1.msra.mxu0 0.0
        %4969 = vmatprep.subr.mxu0 0.0
        %4970 = vmatpush1.msra.mxu0 0.0
        %4971 = vmatprep.subr.mxu0 0.0
        %4972 = vmatpush1.msra.mxu0 0.0
        %4973 = vmatprep.subr.mxu0 0.0
        %4974 = vmatpush1.msra.mxu0 0.0
        %4975 = vmatprep.subr.mxu0 0.0
        %4976 = vmatpush1.msra.mxu0 0.0
        %4977 = vmatprep.subr.mxu0 0.0
        %4978 = vmatpush1.msra.mxu0 0.0
        %4979 = vmatprep.subr.mxu0 0.0
        %4980 = vmatpush1.msra.mxu0 0.0
        %4981 = vmatprep.subr.mxu0 0.0
        %4982 = vmatpush1.msra.mxu0 0.0
        %4983 = vmatprep.subr.mxu0 0.0
        %4984 = vmatpush1.msra.mxu0 0.0
        %4985 = vmatprep.subr.mxu0 0.0
        %4986 = vmatpush1.msra.mxu0 0.0
        %4987 = vmatprep.subr.mxu0 0.0
        %4988 = vmatpush1.msra.mxu0 0.0
        %4989 = vmatprep.subr.mxu0 0.0
        %4990 = vmatpush1.msra.mxu0 0.0
        %4991 = vmatprep.subr.mxu0 0.0
        %4992 = vmatpush1.msra.mxu0 0.0
        %4993 = vmatprep.subr.mxu0 0.0
        %4994 = vmatpush1.msra.mxu0 0.0
        %4995 = vmatprep.subr.mxu0 0.0
        %4996 = vmatpush1.msra.mxu0 0.0
        %4997 = vmatprep.subr.mxu0 0.0
        %4998 = vmatpush1.msra.mxu0 %v4960
        %4999 = vmatprep.subr.mxu0 0.0
        %5000 = vmatpush2.msra.mxu0 0.0
        %5001 = vmatprep.subr.mxu0 0.0
        %5002 = vmatpush2.msra.mxu0 0.0
        %5003 = vmatprep.subr.mxu0 0.0
        %5004 = vmatpush2.msra.mxu0 0.0
        %5005 = vmatprep.subr.mxu0 0.0
        %5006 = vmatpush2.msra.mxu0 0.0
        %5007 = vmatprep.subr.mxu0 0.0
        %5008 = vmatpush2.msra.mxu0 0.0
        %5009 = vmatprep.subr.mxu0 0.0
        %5010 = vmatpush2.msra.mxu0 0.0
        %5011 = vmatprep.subr.mxu0 0.0
        %5012 = vmatpush2.msra.mxu0 0.0
        %5013 = vmatprep.subr.mxu0 0.0
        %5014 = vmatpush2.msra.mxu0 0.0
        %5015 = vmatprep.subr.mxu0 0.0
        %5016 = vmatpush2.msra.mxu0 0.0
        %5017 = vmatprep.subr.mxu0 0.0
        %5018 = vmatpush2.msra.mxu0 0.0
        %5019 = vmatprep.subr.mxu0 0.0
        %5020 = vmatpush2.msra.mxu0 0.0
        %5021 = vmatprep.subr.mxu0 0.0
        %5022 = vmatpush2.msra.mxu0 0.0
        %5023 = vmatprep.subr.mxu0 0.0
        %5024 = vmatpush2.msra.mxu0 0.0
        %5025 = vmatprep.subr.mxu0 0.0
        %5026 = vmatpush2.msra.mxu0 0.0
        %5027 = vmatprep.subr.mxu0 0.0
        %5028 = vmatpush2.msra.mxu0 0.0
        %5029 = vmatprep.subr.mxu0 0.0
        %5030 = vmatpush2.msra.mxu0 0.0
        %5031 = vmatprep.mubr.f32.mxu0 0.0
        %5032 = vmatmul.mubr.f32.gmra.mxu0 %v4962
        %v5033 = vpop.f32.mrf.mxu0
        %v5034 = vadd.f32 0.0, %v5033
        %v5035 = vpop.f32.mrf.mxu0
        %5036 = vmatprep.mubr.f32.mxu0 0.0
        %5037 = vmatmul.mubr.f32.gmra.mxu0 %v4965
        %v5038 = vpop.f32.mrf.mxu0
        %v5039 = vadd.f32 0.0, %v5038
        %v5040 = vpop.f32.mrf.mxu0
        %5041 = vdwg.mxu0
        %v5042 = vadd.f32 %v4505, %v5034
        %v5043 = vadd.f32 %v4505, %v5039
        %s5044 = scalar_lea.vmem %s6, 416
        %v5045 = vld [vmem:[%s5044] sm:$0xff]
        %v5046 = vld [vmem:[%s5044 + $0x8] sm:$0xff]
        %v5047 = vld [vmem:[%s5044 + $0x10] sm:$0xff]
        %v5048 = vld [vmem:[%s5044 + $0x18] sm:$0xff]
        %v5049 = vld [vmem:[%s7 + $0xd] sm:$0x1]
        %v5050 = vlaneseq
        %v5051 = vshrl.u32 %v5050, 7
        %v5052 = vsub.s32 0, %v5051
        %v5053 = vrot.slane %v5049, %v5052
        %5054 = vmatprep.subr.mxu0 0.0
        %5055 = vmatpush1.msra.mxu0 0.0
        %5056 = vmatprep.subr.mxu0 0.0
        %5057 = vmatpush1.msra.mxu0 0.0
        %5058 = vmatprep.subr.mxu0 0.0
        %5059 = vmatpush1.msra.mxu0 0.0
        %5060 = vmatprep.subr.mxu0 0.0
        %5061 = vmatpush1.msra.mxu0 0.0
        %5062 = vmatprep.subr.mxu0 0.0
        %5063 = vmatpush1.msra.mxu0 0.0
        %5064 = vmatprep.subr.mxu0 0.0
        %5065 = vmatpush1.msra.mxu0 0.0
        %5066 = vmatprep.subr.mxu0 0.0
        %5067 = vmatpush1.msra.mxu0 0.0
        %5068 = vmatprep.subr.mxu0 0.0
        %5069 = vmatpush1.msra.mxu0 0.0
        %5070 = vmatprep.subr.mxu0 0.0
        %5071 = vmatpush1.msra.mxu0 0.0
        %5072 = vmatprep.subr.mxu0 0.0
        %5073 = vmatpush1.msra.mxu0 0.0
        %5074 = vmatprep.subr.mxu0 0.0
        %5075 = vmatpush1.msra.mxu0 0.0
        %5076 = vmatprep.subr.mxu0 0.0
        %5077 = vmatpush1.msra.mxu0 0.0
        %5078 = vmatprep.subr.mxu0 0.0
        %5079 = vmatpush1.msra.mxu0 %v5048
        %5080 = vmatprep.subr.mxu0 0.0
        %5081 = vmatpush1.msra.mxu0 %v5047
        %5082 = vmatprep.subr.mxu0 0.0
        %5083 = vmatpush1.msra.mxu0 %v5046
        %5084 = vmatprep.subr.mxu0 0.0
        %5085 = vmatpush1.msra.mxu0 %v5045
        %5086 = vmatprep.subr.mxu0 0.0
        %5087 = vmatpush2.msra.mxu0 0.0
        %5088 = vmatprep.subr.mxu0 0.0
        %5089 = vmatpush2.msra.mxu0 0.0
        %5090 = vmatprep.subr.mxu0 0.0
        %5091 = vmatpush2.msra.mxu0 0.0
        %5092 = vmatprep.subr.mxu0 0.0
        %5093 = vmatpush2.msra.mxu0 0.0
        %5094 = vmatprep.subr.mxu0 0.0
        %5095 = vmatpush2.msra.mxu0 0.0
        %5096 = vmatprep.subr.mxu0 0.0
        %5097 = vmatpush2.msra.mxu0 0.0
        %5098 = vmatprep.subr.mxu0 0.0
        %5099 = vmatpush2.msra.mxu0 0.0
        %5100 = vmatprep.subr.mxu0 0.0
        %5101 = vmatpush2.msra.mxu0 0.0
        %5102 = vmatprep.subr.mxu0 0.0
        %5103 = vmatpush2.msra.mxu0 0.0
        %5104 = vmatprep.subr.mxu0 0.0
        %5105 = vmatpush2.msra.mxu0 0.0
        %5106 = vmatprep.subr.mxu0 0.0
        %5107 = vmatpush2.msra.mxu0 0.0
        %5108 = vmatprep.subr.mxu0 0.0
        %5109 = vmatpush2.msra.mxu0 0.0
        %5110 = vmatprep.subr.mxu0 0.0
        %5111 = vmatpush2.msra.mxu0 0.0
        %5112 = vmatprep.subr.mxu0 0.0
        %5113 = vmatpush2.msra.mxu0 0.0
        %5114 = vmatprep.subr.mxu0 0.0
        %5115 = vmatpush2.msra.mxu0 0.0
        %5116 = vmatprep.subr.mxu0 0.0
        %5117 = vmatpush2.msra.mxu0 0.0
        %5118 = vmatprep.mubr.f32.mxu0 0.0
        %5119 = vmatmul.mubr.f32.gmra.mxu0 %v4517
        %v5120 = vpop.f32.mrf.mxu0
        %v5121 = vadd.f32 %v5053, %v5120
        %v5122 = vpop.f32.mrf.mxu0
        %5123 = vmatprep.mubr.f32.mxu0 0.0
        %5124 = vmatmul.mubr.f32.gmra.mxu0 %v4520
        %v5125 = vpop.f32.mrf.mxu0
        %v5126 = vadd.f32 %v5053, %v5125
        %v5127 = vpop.f32.mrf.mxu0
        %5128 = vdwg.mxu0
        %v5129 = vmul.f32 %v5121, 0.35355338
        %v5130 = vmul.f32 %v5126, 0.35355338
        %s5131 = scalar_lea.vmem %s6, 544
        %v5132 = vld [vmem:[%s5131] sm:$0xff]
        %v5133 = vld [vmem:[%s5131 + $0x8] sm:$0xff]
        %v5134 = vld [vmem:[%s5131 + $0x10] sm:$0xff]
        %v5135 = vld [vmem:[%s5131 + $0x18] sm:$0xff]
        %v5136 = vld [vmem:[%s7 + $0x11] sm:$0x1]
        %v5137 = vlaneseq
        %v5138 = vshrl.u32 %v5137, 7
        %v5139 = vsub.s32 0, %v5138
        %v5140 = vrot.slane %v5136, %v5139
        %5141 = vmatprep.subr.mxu0 0.0
        %5142 = vmatpush1.msra.mxu0 0.0
        %5143 = vmatprep.subr.mxu0 0.0
        %5144 = vmatpush1.msra.mxu0 0.0
        %5145 = vmatprep.subr.mxu0 0.0
        %5146 = vmatpush1.msra.mxu0 0.0
        %5147 = vmatprep.subr.mxu0 0.0
        %5148 = vmatpush1.msra.mxu0 0.0
        %5149 = vmatprep.subr.mxu0 0.0
        %5150 = vmatpush1.msra.mxu0 0.0
        %5151 = vmatprep.subr.mxu0 0.0
        %5152 = vmatpush1.msra.mxu0 0.0
        %5153 = vmatprep.subr.mxu0 0.0
        %5154 = vmatpush1.msra.mxu0 0.0
        %5155 = vmatprep.subr.mxu0 0.0
        %5156 = vmatpush1.msra.mxu0 0.0
        %5157 = vmatprep.subr.mxu0 0.0
        %5158 = vmatpush1.msra.mxu0 0.0
        %5159 = vmatprep.subr.mxu0 0.0
        %5160 = vmatpush1.msra.mxu0 0.0
        %5161 = vmatprep.subr.mxu0 0.0
        %5162 = vmatpush1.msra.mxu0 0.0
        %5163 = vmatprep.subr.mxu0 0.0
        %5164 = vmatpush1.msra.mxu0 0.0
        %5165 = vmatprep.subr.mxu0 0.0
        %5166 = vmatpush1.msra.mxu0 %v5135
        %5167 = vmatprep.subr.mxu0 0.0
        %5168 = vmatpush1.msra.mxu0 %v5134
        %5169 = vmatprep.subr.mxu0 0.0
        %5170 = vmatpush1.msra.mxu0 %v5133
        %5171 = vmatprep.subr.mxu0 0.0
        %5172 = vmatpush1.msra.mxu0 %v5132
        %5173 = vmatprep.subr.mxu0 0.0
        %5174 = vmatpush2.msra.mxu0 0.0
        %5175 = vmatprep.subr.mxu0 0.0
        %5176 = vmatpush2.msra.mxu0 0.0
        %5177 = vmatprep.subr.mxu0 0.0
        %5178 = vmatpush2.msra.mxu0 0.0
        %5179 = vmatprep.subr.mxu0 0.0
        %5180 = vmatpush2.msra.mxu0 0.0
        %5181 = vmatprep.subr.mxu0 0.0
        %5182 = vmatpush2.msra.mxu0 0.0
        %5183 = vmatprep.subr.mxu0 0.0
        %5184 = vmatpush2.msra.mxu0 0.0
        %5185 = vmatprep.subr.mxu0 0.0
        %5186 = vmatpush2.msra.mxu0 0.0
        %5187 = vmatprep.subr.mxu0 0.0
        %5188 = vmatpush2.msra.mxu0 0.0
        %5189 = vmatprep.subr.mxu0 0.0
        %5190 = vmatpush2.msra.mxu0 0.0
        %5191 = vmatprep.subr.mxu0 0.0
        %5192 = vmatpush2.msra.mxu0 0.0
        %5193 = vmatprep.subr.mxu0 0.0
        %5194 = vmatpush2.msra.mxu0 0.0
        %5195 = vmatprep.subr.mxu0 0.0
        %5196 = vmatpush2.msra.mxu0 0.0
        %5197 = vmatprep.subr.mxu0 0.0
        %5198 = vmatpush2.msra.mxu0 0.0
        %5199 = vmatprep.subr.mxu0 0.0
        %5200 = vmatpush2.msra.mxu0 0.0
        %5201 = vmatprep.subr.mxu0 0.0
        %5202 = vmatpush2.msra.mxu0 0.0
        %5203 = vmatprep.subr.mxu0 0.0
        %5204 = vmatpush2.msra.mxu0 0.0
        %5205 = vmatprep.mubr.f32.mxu0 0.0
        %5206 = vmatmul.mubr.f32.gmra.mxu0 %v4517
        %v5207 = vpop.f32.mrf.mxu0
        %v5208 = vadd.f32 %v5140, %v5207
        %v5209 = vpop.f32.mrf.mxu0
        %5210 = vmatprep.mubr.f32.mxu0 0.0
        %5211 = vmatmul.mubr.f32.gmra.mxu0 %v4520
        %v5212 = vpop.f32.mrf.mxu0
        %v5213 = vadd.f32 %v5140, %v5212
        %v5214 = vpop.f32.mrf.mxu0
        %5215 = vdwg.mxu0
        %s5216 = scalar_lea.vmem %s6, 672
        %v5217 = vld [vmem:[%s5216] sm:$0xff]
        %v5218 = vld [vmem:[%s5216 + $0x8] sm:$0xff]
        %v5219 = vld [vmem:[%s5216 + $0x10] sm:$0xff]
        %v5220 = vld [vmem:[%s5216 + $0x18] sm:$0xff]
        %v5221 = vld [vmem:[%s7 + $0x15] sm:$0x1]
        %v5222 = vlaneseq
        %v5223 = vshrl.u32 %v5222, 7
        %v5224 = vsub.s32 0, %v5223
        %v5225 = vrot.slane %v5221, %v5224
        %5226 = vmatprep.subr.mxu0 0.0
        %5227 = vmatpush1.msra.mxu0 0.0
        %5228 = vmatprep.subr.mxu0 0.0
        %5229 = vmatpush1.msra.mxu0 0.0
        %5230 = vmatprep.subr.mxu0 0.0
        %5231 = vmatpush1.msra.mxu0 0.0
        %5232 = vmatprep.subr.mxu0 0.0
        %5233 = vmatpush1.msra.mxu0 0.0
        %5234 = vmatprep.subr.mxu0 0.0
        %5235 = vmatpush1.msra.mxu0 0.0
        %5236 = vmatprep.subr.mxu0 0.0
        %5237 = vmatpush1.msra.mxu0 0.0
        %5238 = vmatprep.subr.mxu0 0.0
        %5239 = vmatpush1.msra.mxu0 0.0
        %5240 = vmatprep.subr.mxu0 0.0
        %5241 = vmatpush1.msra.mxu0 0.0
        %5242 = vmatprep.subr.mxu0 0.0
        %5243 = vmatpush1.msra.mxu0 0.0
        %5244 = vmatprep.subr.mxu0 0.0
        %5245 = vmatpush1.msra.mxu0 0.0
        %5246 = vmatprep.subr.mxu0 0.0
        %5247 = vmatpush1.msra.mxu0 0.0
        %5248 = vmatprep.subr.mxu0 0.0
        %5249 = vmatpush1.msra.mxu0 0.0
        %5250 = vmatprep.subr.mxu0 0.0
        %5251 = vmatpush1.msra.mxu0 %v5220
        %5252 = vmatprep.subr.mxu0 0.0
        %5253 = vmatpush1.msra.mxu0 %v5219
        %5254 = vmatprep.subr.mxu0 0.0
        %5255 = vmatpush1.msra.mxu0 %v5218
        %5256 = vmatprep.subr.mxu0 0.0
        %5257 = vmatpush1.msra.mxu0 %v5217
        %5258 = vmatprep.subr.mxu0 0.0
        %5259 = vmatpush2.msra.mxu0 0.0
        %5260 = vmatprep.subr.mxu0 0.0
        %5261 = vmatpush2.msra.mxu0 0.0
        %5262 = vmatprep.subr.mxu0 0.0
        %5263 = vmatpush2.msra.mxu0 0.0
        %5264 = vmatprep.subr.mxu0 0.0
        %5265 = vmatpush2.msra.mxu0 0.0
        %5266 = vmatprep.subr.mxu0 0.0
        %5267 = vmatpush2.msra.mxu0 0.0
        %5268 = vmatprep.subr.mxu0 0.0
        %5269 = vmatpush2.msra.mxu0 0.0
        %5270 = vmatprep.subr.mxu0 0.0
        %5271 = vmatpush2.msra.mxu0 0.0
        %5272 = vmatprep.subr.mxu0 0.0
        %5273 = vmatpush2.msra.mxu0 0.0
        %5274 = vmatprep.subr.mxu0 0.0
        %5275 = vmatpush2.msra.mxu0 0.0
        %5276 = vmatprep.subr.mxu0 0.0
        %5277 = vmatpush2.msra.mxu0 0.0
        %5278 = vmatprep.subr.mxu0 0.0
        %5279 = vmatpush2.msra.mxu0 0.0
        %5280 = vmatprep.subr.mxu0 0.0
        %5281 = vmatpush2.msra.mxu0 0.0
        %5282 = vmatprep.subr.mxu0 0.0
        %5283 = vmatpush2.msra.mxu0 0.0
        %5284 = vmatprep.subr.mxu0 0.0
        %5285 = vmatpush2.msra.mxu0 0.0
        %5286 = vmatprep.subr.mxu0 0.0
        %5287 = vmatpush2.msra.mxu0 0.0
        %5288 = vmatprep.subr.mxu0 0.0
        %5289 = vmatpush2.msra.mxu0 0.0
        %5290 = vmatprep.mubr.f32.mxu0 0.0
        %5291 = vmatmul.mubr.f32.gmra.mxu0 %v4517
        %v5292 = vpop.f32.mrf.mxu0
        %v5293 = vadd.f32 %v5225, %v5292
        %v5294 = vpop.f32.mrf.mxu0
        %5295 = vmatprep.mubr.f32.mxu0 0.0
        %5296 = vmatmul.mubr.f32.gmra.mxu0 %v4520
        %v5297 = vpop.f32.mrf.mxu0
        %v5298 = vadd.f32 %v5225, %v5297
        %v5299 = vpop.f32.mrf.mxu0
        %5300 = vdwg.mxu0
        %v5302 = vsel %vm1124, %v5129, 0
        %v5305 = vsel %vm1124, %v5130, 0
        %v5308 = vsel %vm1124, %v5208, 0
        %v5311 = vsel %vm1124, %v5213, 0
        %5313 = vmatprep.subr.mxu0 0.0
        %5314 = vmatpush1.xpose.msra.mxu0 0.0
        %5315 = vmatprep.subr.mxu0 0.0
        %5316 = vmatpush1.xpose.msra.mxu0 0.0
        %5317 = vmatprep.subr.mxu0 0.0
        %5318 = vmatpush1.xpose.msra.mxu0 0.0
        %5319 = vmatprep.subr.mxu0 0.0
        %5320 = vmatpush1.xpose.msra.mxu0 0.0
        %5321 = vmatprep.subr.mxu0 0.0
        %5322 = vmatpush1.xpose.msra.mxu0 0.0
        %5323 = vmatprep.subr.mxu0 0.0
        %5324 = vmatpush1.xpose.msra.mxu0 0.0
        %5325 = vmatprep.subr.mxu0 0.0
        %5326 = vmatpush1.xpose.msra.mxu0 0.0
        %5327 = vmatprep.subr.mxu0 0.0
        %5328 = vmatpush1.xpose.msra.mxu0 0.0
        %5329 = vmatprep.subr.mxu0 0.0
        %5330 = vmatpush1.xpose.msra.mxu0 0.0
        %5331 = vmatprep.subr.mxu0 0.0
        %5332 = vmatpush1.xpose.msra.mxu0 0.0
        %5333 = vmatprep.subr.mxu0 0.0
        %5334 = vmatpush1.xpose.msra.mxu0 0.0
        %5335 = vmatprep.subr.mxu0 0.0
        %5336 = vmatpush1.xpose.msra.mxu0 0.0
        %5337 = vmatprep.subr.mxu0 0.0
        %5338 = vmatpush1.xpose.msra.mxu0 0.0
        %5339 = vmatprep.subr.mxu0 0.0
        %5340 = vmatpush1.xpose.msra.mxu0 0.0
        %5341 = vmatprep.subr.mxu0 0.0
        %5342 = vmatpush1.xpose.msra.mxu0 %v5311
        %5343 = vmatprep.subr.mxu0 0.0
        %5344 = vmatpush1.xpose.msra.mxu0 %v5308
        %5345 = vmatprep.subr.mxu0 0.0
        %5346 = vmatpush2.xpose.msra.mxu0 0.0
        %5347 = vmatprep.subr.mxu0 0.0
        %5348 = vmatpush2.xpose.msra.mxu0 0.0
        %5349 = vmatprep.subr.mxu0 0.0
        %5350 = vmatpush2.xpose.msra.mxu0 0.0
        %5351 = vmatprep.subr.mxu0 0.0
        %5352 = vmatpush2.xpose.msra.mxu0 0.0
        %5353 = vmatprep.subr.mxu0 0.0
        %5354 = vmatpush2.xpose.msra.mxu0 0.0
        %5355 = vmatprep.subr.mxu0 0.0
        %5356 = vmatpush2.xpose.msra.mxu0 0.0
        %5357 = vmatprep.subr.mxu0 0.0
        %5358 = vmatpush2.xpose.msra.mxu0 0.0
        %5359 = vmatprep.subr.mxu0 0.0
        %5360 = vmatpush2.xpose.msra.mxu0 0.0
        %5361 = vmatprep.subr.mxu0 0.0
        %5362 = vmatpush2.xpose.msra.mxu0 0.0
        %5363 = vmatprep.subr.mxu0 0.0
        %5364 = vmatpush2.xpose.msra.mxu0 0.0
        %5365 = vmatprep.subr.mxu0 0.0
        %5366 = vmatpush2.xpose.msra.mxu0 0.0
        %5367 = vmatprep.subr.mxu0 0.0
        %5368 = vmatpush2.xpose.msra.mxu0 0.0
        %5369 = vmatprep.subr.mxu0 0.0
        %5370 = vmatpush2.xpose.msra.mxu0 0.0
        %5371 = vmatprep.subr.mxu0 0.0
        %5372 = vmatpush2.xpose.msra.mxu0 0.0
        %5373 = vmatprep.subr.mxu0 0.0
        %5374 = vmatpush2.xpose.msra.mxu0 0.0
        %5375 = vmatprep.subr.mxu0 0.0
        %5376 = vmatpush2.xpose.msra.mxu0 0.0
        %5377 = vmatprep.mubr.f32.mxu0 0.0
        %5378 = vmatmul.mubr.f32.gmra.mxu0 %v5302
        %v5379 = vpop.f32.mrf.mxu0
        %v5380 = vadd.f32 0.0, %v5379
        %v5381 = vpop.f32.mrf.mxu0
        %5382 = vmatprep.mubr.f32.mxu0 0.0
        %5383 = vmatmul.mubr.f32.gmra.mxu0 %v5305
        %v5384 = vpop.f32.mrf.mxu0
        %v5385 = vadd.f32 0.0, %v5384
        %v5386 = vpop.f32.mrf.mxu0
        %5387 = vdwg.mxu0
        %v5388 = vsel %vm448, %v5380, -inf
        %5389 = vmax.xlane.f32.xlu0 %v5388
        %v5390 = vpop.xlane.xlu0 %5389
        %v5391 = vsel %vm448, %v5385, -inf
        %5392 = vmax.xlane.f32.xlu0 %v5391
        %v5393 = vpop.xlane.xlu0 %5392
        %v5394 = vsub.f32 %v5380, %v5390
        %v5395 = vsub.f32 %v5385, %v5393
        %v5396 = vmul.f32 %v5394, 1.442695
        %v5397 = vpow.pop %v5396
        %v5398 = vmul.f32 %v5395, 1.442695
        %v5399 = vpow.pop %v5398
        %v5400 = vsel %vm448, %v5397, 0.0
        %5401 = vadd.xlane.f32.xlu0 %v5400
        %v5402 = vpop.xlane.xlu0 %5401
        %v5403 = vsel %vm448, %v5399, 0.0
        %5404 = vadd.xlane.f32.xlu0 %v5403
        %v5405 = vpop.xlane.xlu0 %5404
        %v5406 = vrcp.pop %v5402
        %v5407 = vmul.f32 %v5397, %v5406
        %v5408 = vrcp.pop %v5405
        %v5409 = vmul.f32 %v5399, %v5408
        %v5411 = vsel %vm448, %v5407, 0
        %v5414 = vsel %vm448, %v5409, 0
        %5416 = vmatprep.subr.mxu0 0.0
        %5417 = vmatpush1.msra.mxu0 0.0
        %5418 = vmatprep.subr.mxu0 0.0
        %5419 = vmatpush1.msra.mxu0 0.0
        %5420 = vmatprep.subr.mxu0 0.0
        %5421 = vmatpush1.msra.mxu0 0.0
        %5422 = vmatprep.subr.mxu0 0.0
        %5423 = vmatpush1.msra.mxu0 0.0
        %5424 = vmatprep.subr.mxu0 0.0
        %5425 = vmatpush1.msra.mxu0 0.0
        %5426 = vmatprep.subr.mxu0 0.0
        %5427 = vmatpush1.msra.mxu0 0.0
        %5428 = vmatprep.subr.mxu0 0.0
        %5429 = vmatpush1.msra.mxu0 0.0
        %5430 = vmatprep.subr.mxu0 0.0
        %5431 = vmatpush1.msra.mxu0 0.0
        %5432 = vmatprep.subr.mxu0 0.0
        %5433 = vmatpush1.msra.mxu0 0.0
        %5434 = vmatprep.subr.mxu0 0.0
        %5435 = vmatpush1.msra.mxu0 0.0
        %5436 = vmatprep.subr.mxu0 0.0
        %5437 = vmatpush1.msra.mxu0 0.0
        %5438 = vmatprep.subr.mxu0 0.0
        %5439 = vmatpush1.msra.mxu0 0.0
        %5440 = vmatprep.subr.mxu0 0.0
        %5441 = vmatpush1.msra.mxu0 0.0
        %5442 = vmatprep.subr.mxu0 0.0
        %5443 = vmatpush1.msra.mxu0 0.0
        %5444 = vmatprep.subr.mxu0 0.0
        %5445 = vmatpush1.msra.mxu0 %v5298
        %5446 = vmatprep.subr.mxu0 0.0
        %5447 = vmatpush1.msra.mxu0 %v5293
        %5448 = vmatprep.subr.mxu0 0.0
        %5449 = vmatpush2.msra.mxu0 0.0
        %5450 = vmatprep.subr.mxu0 0.0
        %5451 = vmatpush2.msra.mxu0 0.0
        %5452 = vmatprep.subr.mxu0 0.0
        %5453 = vmatpush2.msra.mxu0 0.0
        %5454 = vmatprep.subr.mxu0 0.0
        %5455 = vmatpush2.msra.mxu0 0.0
        %5456 = vmatprep.subr.mxu0 0.0
        %5457 = vmatpush2.msra.mxu0 0.0
        %5458 = vmatprep.subr.mxu0 0.0
        %5459 = vmatpush2.msra.mxu0 0.0
        %5460 = vmatprep.subr.mxu0 0.0
        %5461 = vmatpush2.msra.mxu0 0.0
        %5462 = vmatprep.subr.mxu0 0.0
        %5463 = vmatpush2.msra.mxu0 0.0
        %5464 = vmatprep.subr.mxu0 0.0
        %5465 = vmatpush2.msra.mxu0 0.0
        %5466 = vmatprep.subr.mxu0 0.0
        %5467 = vmatpush2.msra.mxu0 0.0
        %5468 = vmatprep.subr.mxu0 0.0
        %5469 = vmatpush2.msra.mxu0 0.0
        %5470 = vmatprep.subr.mxu0 0.0
        %5471 = vmatpush2.msra.mxu0 0.0
        %5472 = vmatprep.subr.mxu0 0.0
        %5473 = vmatpush2.msra.mxu0 0.0
        %5474 = vmatprep.subr.mxu0 0.0
        %5475 = vmatpush2.msra.mxu0 0.0
        %5476 = vmatprep.subr.mxu0 0.0
        %5477 = vmatpush2.msra.mxu0 0.0
        %5478 = vmatprep.subr.mxu0 0.0
        %5479 = vmatpush2.msra.mxu0 0.0
        %5480 = vmatprep.mubr.f32.mxu0 0.0
        %5481 = vmatmul.mubr.f32.gmra.mxu0 %v5411
        %v5482 = vpop.f32.mrf.mxu0
        %v5483 = vadd.f32 0.0, %v5482
        %v5484 = vpop.f32.mrf.mxu0
        %5485 = vmatprep.mubr.f32.mxu0 0.0
        %5486 = vmatmul.mubr.f32.gmra.mxu0 %v5414
        %v5487 = vpop.f32.mrf.mxu0
        %v5488 = vadd.f32 0.0, %v5487
        %v5489 = vpop.f32.mrf.mxu0
        %5490 = vdwg.mxu0
        %s5491 = scalar_lea.vmem %s8, 40
        %v5492 = vld [vmem:[%s5491] sm:$0xff]
        %v5494 = vsel %vm1124, %v5483, 0
        %v5497 = vsel %vm1124, %v5488, 0
        %5499 = vmatprep.subr.mxu0 0.0
        %5500 = vmatpush1.msra.mxu0 0.0
        %5501 = vmatprep.subr.mxu0 0.0
        %5502 = vmatpush1.msra.mxu0 0.0
        %5503 = vmatprep.subr.mxu0 0.0
        %5504 = vmatpush1.msra.mxu0 0.0
        %5505 = vmatprep.subr.mxu0 0.0
        %5506 = vmatpush1.msra.mxu0 0.0
        %5507 = vmatprep.subr.mxu0 0.0
        %5508 = vmatpush1.msra.mxu0 0.0
        %5509 = vmatprep.subr.mxu0 0.0
        %5510 = vmatpush1.msra.mxu0 0.0
        %5511 = vmatprep.subr.mxu0 0.0
        %5512 = vmatpush1.msra.mxu0 0.0
        %5513 = vmatprep.subr.mxu0 0.0
        %5514 = vmatpush1.msra.mxu0 0.0
        %5515 = vmatprep.subr.mxu0 0.0
        %5516 = vmatpush1.msra.mxu0 0.0
        %5517 = vmatprep.subr.mxu0 0.0
        %5518 = vmatpush1.msra.mxu0 0.0
        %5519 = vmatprep.subr.mxu0 0.0
        %5520 = vmatpush1.msra.mxu0 0.0
        %5521 = vmatprep.subr.mxu0 0.0
        %5522 = vmatpush1.msra.mxu0 0.0
        %5523 = vmatprep.subr.mxu0 0.0
        %5524 = vmatpush1.msra.mxu0 0.0
        %5525 = vmatprep.subr.mxu0 0.0
        %5526 = vmatpush1.msra.mxu0 0.0
        %5527 = vmatprep.subr.mxu0 0.0
        %5528 = vmatpush1.msra.mxu0 0.0
        %5529 = vmatprep.subr.mxu0 0.0
        %5530 = vmatpush1.msra.mxu0 %v5492
        %5531 = vmatprep.subr.mxu0 0.0
        %5532 = vmatpush2.msra.mxu0 0.0
        %5533 = vmatprep.subr.mxu0 0.0
        %5534 = vmatpush2.msra.mxu0 0.0
        %5535 = vmatprep.subr.mxu0 0.0
        %5536 = vmatpush2.msra.mxu0 0.0
        %5537 = vmatprep.subr.mxu0 0.0
        %5538 = vmatpush2.msra.mxu0 0.0
        %5539 = vmatprep.subr.mxu0 0.0
        %5540 = vmatpush2.msra.mxu0 0.0
        %5541 = vmatprep.subr.mxu0 0.0
        %5542 = vmatpush2.msra.mxu0 0.0
        %5543 = vmatprep.subr.mxu0 0.0
        %5544 = vmatpush2.msra.mxu0 0.0
        %5545 = vmatprep.subr.mxu0 0.0
        %5546 = vmatpush2.msra.mxu0 0.0
        %5547 = vmatprep.subr.mxu0 0.0
        %5548 = vmatpush2.msra.mxu0 0.0
        %5549 = vmatprep.subr.mxu0 0.0
        %5550 = vmatpush2.msra.mxu0 0.0
        %5551 = vmatprep.subr.mxu0 0.0
        %5552 = vmatpush2.msra.mxu0 0.0
        %5553 = vmatprep.subr.mxu0 0.0
        %5554 = vmatpush2.msra.mxu0 0.0
        %5555 = vmatprep.subr.mxu0 0.0
        %5556 = vmatpush2.msra.mxu0 0.0
        %5557 = vmatprep.subr.mxu0 0.0
        %5558 = vmatpush2.msra.mxu0 0.0
        %5559 = vmatprep.subr.mxu0 0.0
        %5560 = vmatpush2.msra.mxu0 0.0
        %5561 = vmatprep.subr.mxu0 0.0
        %5562 = vmatpush2.msra.mxu0 0.0
        %5563 = vmatprep.mubr.f32.mxu0 0.0
        %5564 = vmatmul.mubr.f32.gmra.mxu0 %v5494
        %v5565 = vpop.f32.mrf.mxu0
        %v5566 = vadd.f32 0.0, %v5565
        %v5567 = vpop.f32.mrf.mxu0
        %5568 = vmatprep.mubr.f32.mxu0 0.0
        %5569 = vmatmul.mubr.f32.gmra.mxu0 %v5497
        %v5570 = vpop.f32.mrf.mxu0
        %v5571 = vadd.f32 0.0, %v5570
        %v5572 = vpop.f32.mrf.mxu0
        %5573 = vdwg.mxu0
        %v5574 = vadd.f32 %v5042, %v5566
        %v5575 = vadd.f32 %v5043, %v5571
        %s5576 = scalar_lea.vmem %s6, 448
        %v5577 = vld [vmem:[%s5576] sm:$0xff]
        %v5578 = vld [vmem:[%s5576 + $0x8] sm:$0xff]
        %v5579 = vld [vmem:[%s5576 + $0x10] sm:$0xff]
        %v5580 = vld [vmem:[%s5576 + $0x18] sm:$0xff]
        %v5581 = vld [vmem:[%s7 + $0xe] sm:$0x1]
        %v5582 = vlaneseq
        %v5583 = vshrl.u32 %v5582, 7
        %v5584 = vsub.s32 0, %v5583
        %v5585 = vrot.slane %v5581, %v5584
        %5586 = vmatprep.subr.mxu0 0.0
        %5587 = vmatpush1.msra.mxu0 0.0
        %5588 = vmatprep.subr.mxu0 0.0
        %5589 = vmatpush1.msra.mxu0 0.0
        %5590 = vmatprep.subr.mxu0 0.0
        %5591 = vmatpush1.msra.mxu0 0.0
        %5592 = vmatprep.subr.mxu0 0.0
        %5593 = vmatpush1.msra.mxu0 0.0
        %5594 = vmatprep.subr.mxu0 0.0
        %5595 = vmatpush1.msra.mxu0 0.0
        %5596 = vmatprep.subr.mxu0 0.0
        %5597 = vmatpush1.msra.mxu0 0.0
        %5598 = vmatprep.subr.mxu0 0.0
        %5599 = vmatpush1.msra.mxu0 0.0
        %5600 = vmatprep.subr.mxu0 0.0
        %5601 = vmatpush1.msra.mxu0 0.0
        %5602 = vmatprep.subr.mxu0 0.0
        %5603 = vmatpush1.msra.mxu0 0.0
        %5604 = vmatprep.subr.mxu0 0.0
        %5605 = vmatpush1.msra.mxu0 0.0
        %5606 = vmatprep.subr.mxu0 0.0
        %5607 = vmatpush1.msra.mxu0 0.0
        %5608 = vmatprep.subr.mxu0 0.0
        %5609 = vmatpush1.msra.mxu0 0.0
        %5610 = vmatprep.subr.mxu0 0.0
        %5611 = vmatpush1.msra.mxu0 %v5580
        %5612 = vmatprep.subr.mxu0 0.0
        %5613 = vmatpush1.msra.mxu0 %v5579
        %5614 = vmatprep.subr.mxu0 0.0
        %5615 = vmatpush1.msra.mxu0 %v5578
        %5616 = vmatprep.subr.mxu0 0.0
        %5617 = vmatpush1.msra.mxu0 %v5577
        %5618 = vmatprep.subr.mxu0 0.0
        %5619 = vmatpush2.msra.mxu0 0.0
        %5620 = vmatprep.subr.mxu0 0.0
        %5621 = vmatpush2.msra.mxu0 0.0
        %5622 = vmatprep.subr.mxu0 0.0
        %5623 = vmatpush2.msra.mxu0 0.0
        %5624 = vmatprep.subr.mxu0 0.0
        %5625 = vmatpush2.msra.mxu0 0.0
        %5626 = vmatprep.subr.mxu0 0.0
        %5627 = vmatpush2.msra.mxu0 0.0
        %5628 = vmatprep.subr.mxu0 0.0
        %5629 = vmatpush2.msra.mxu0 0.0
        %5630 = vmatprep.subr.mxu0 0.0
        %5631 = vmatpush2.msra.mxu0 0.0
        %5632 = vmatprep.subr.mxu0 0.0
        %5633 = vmatpush2.msra.mxu0 0.0
        %5634 = vmatprep.subr.mxu0 0.0
        %5635 = vmatpush2.msra.mxu0 0.0
        %5636 = vmatprep.subr.mxu0 0.0
        %5637 = vmatpush2.msra.mxu0 0.0
        %5638 = vmatprep.subr.mxu0 0.0
        %5639 = vmatpush2.msra.mxu0 0.0
        %5640 = vmatprep.subr.mxu0 0.0
        %5641 = vmatpush2.msra.mxu0 0.0
        %5642 = vmatprep.subr.mxu0 0.0
        %5643 = vmatpush2.msra.mxu0 0.0
        %5644 = vmatprep.subr.mxu0 0.0
        %5645 = vmatpush2.msra.mxu0 0.0
        %5646 = vmatprep.subr.mxu0 0.0
        %5647 = vmatpush2.msra.mxu0 0.0
        %5648 = vmatprep.subr.mxu0 0.0
        %5649 = vmatpush2.msra.mxu0 0.0
        %5650 = vmatprep.mubr.f32.mxu0 0.0
        %5651 = vmatmul.mubr.f32.gmra.mxu0 %v4517
        %v5652 = vpop.f32.mrf.mxu0
        %v5653 = vadd.f32 %v5585, %v5652
        %v5654 = vpop.f32.mrf.mxu0
        %5655 = vmatprep.mubr.f32.mxu0 0.0
        %5656 = vmatmul.mubr.f32.gmra.mxu0 %v4520
        %v5657 = vpop.f32.mrf.mxu0
        %v5658 = vadd.f32 %v5585, %v5657
        %v5659 = vpop.f32.mrf.mxu0
        %5660 = vdwg.mxu0
        %v5661 = vmul.f32 %v5653, 0.35355338
        %v5662 = vmul.f32 %v5658, 0.35355338
        %s5663 = scalar_lea.vmem %s6, 576
        %v5664 = vld [vmem:[%s5663] sm:$0xff]
        %v5665 = vld [vmem:[%s5663 + $0x8] sm:$0xff]
        %v5666 = vld [vmem:[%s5663 + $0x10] sm:$0xff]
        %v5667 = vld [vmem:[%s5663 + $0x18] sm:$0xff]
        %v5668 = vld [vmem:[%s7 + $0x12] sm:$0x1]
        %v5669 = vlaneseq
        %v5670 = vshrl.u32 %v5669, 7
        %v5671 = vsub.s32 0, %v5670
        %v5672 = vrot.slane %v5668, %v5671
        %5673 = vmatprep.subr.mxu0 0.0
        %5674 = vmatpush1.msra.mxu0 0.0
        %5675 = vmatprep.subr.mxu0 0.0
        %5676 = vmatpush1.msra.mxu0 0.0
        %5677 = vmatprep.subr.mxu0 0.0
        %5678 = vmatpush1.msra.mxu0 0.0
        %5679 = vmatprep.subr.mxu0 0.0
        %5680 = vmatpush1.msra.mxu0 0.0
        %5681 = vmatprep.subr.mxu0 0.0
        %5682 = vmatpush1.msra.mxu0 0.0
        %5683 = vmatprep.subr.mxu0 0.0
        %5684 = vmatpush1.msra.mxu0 0.0
        %5685 = vmatprep.subr.mxu0 0.0
        %5686 = vmatpush1.msra.mxu0 0.0
        %5687 = vmatprep.subr.mxu0 0.0
        %5688 = vmatpush1.msra.mxu0 0.0
        %5689 = vmatprep.subr.mxu0 0.0
        %5690 = vmatpush1.msra.mxu0 0.0
        %5691 = vmatprep.subr.mxu0 0.0
        %5692 = vmatpush1.msra.mxu0 0.0
        %5693 = vmatprep.subr.mxu0 0.0
        %5694 = vmatpush1.msra.mxu0 0.0
        %5695 = vmatprep.subr.mxu0 0.0
        %5696 = vmatpush1.msra.mxu0 0.0
        %5697 = vmatprep.subr.mxu0 0.0
        %5698 = vmatpush1.msra.mxu0 %v5667
        %5699 = vmatprep.subr.mxu0 0.0
        %5700 = vmatpush1.msra.mxu0 %v5666
        %5701 = vmatprep.subr.mxu0 0.0
        %5702 = vmatpush1.msra.mxu0 %v5665
        %5703 = vmatprep.subr.mxu0 0.0
        %5704 = vmatpush1.msra.mxu0 %v5664
        %5705 = vmatprep.subr.mxu0 0.0
        %5706 = vmatpush2.msra.mxu0 0.0
        %5707 = vmatprep.subr.mxu0 0.0
        %5708 = vmatpush2.msra.mxu0 0.0
        %5709 = vmatprep.subr.mxu0 0.0
        %5710 = vmatpush2.msra.mxu0 0.0
        %5711 = vmatprep.subr.mxu0 0.0
        %5712 = vmatpush2.msra.mxu0 0.0
        %5713 = vmatprep.subr.mxu0 0.0
        %5714 = vmatpush2.msra.mxu0 0.0
        %5715 = vmatprep.subr.mxu0 0.0
        %5716 = vmatpush2.msra.mxu0 0.0
        %5717 = vmatprep.subr.mxu0 0.0
        %5718 = vmatpush2.msra.mxu0 0.0
        %5719 = vmatprep.subr.mxu0 0.0
        %5720 = vmatpush2.msra.mxu0 0.0
        %5721 = vmatprep.subr.mxu0 0.0
        %5722 = vmatpush2.msra.mxu0 0.0
        %5723 = vmatprep.subr.mxu0 0.0
        %5724 = vmatpush2.msra.mxu0 0.0
        %5725 = vmatprep.subr.mxu0 0.0
        %5726 = vmatpush2.msra.mxu0 0.0
        %5727 = vmatprep.subr.mxu0 0.0
        %5728 = vmatpush2.msra.mxu0 0.0
        %5729 = vmatprep.subr.mxu0 0.0
        %5730 = vmatpush2.msra.mxu0 0.0
        %5731 = vmatprep.subr.mxu0 0.0
        %5732 = vmatpush2.msra.mxu0 0.0
        %5733 = vmatprep.subr.mxu0 0.0
        %5734 = vmatpush2.msra.mxu0 0.0
        %5735 = vmatprep.subr.mxu0 0.0
        %5736 = vmatpush2.msra.mxu0 0.0
        %5737 = vmatprep.mubr.f32.mxu0 0.0
        %5738 = vmatmul.mubr.f32.gmra.mxu0 %v4517
        %v5739 = vpop.f32.mrf.mxu0
        %v5740 = vadd.f32 %v5672, %v5739
        %v5741 = vpop.f32.mrf.mxu0
        %5742 = vmatprep.mubr.f32.mxu0 0.0
        %5743 = vmatmul.mubr.f32.gmra.mxu0 %v4520
        %v5744 = vpop.f32.mrf.mxu0
        %v5745 = vadd.f32 %v5672, %v5744
        %v5746 = vpop.f32.mrf.mxu0
        %5747 = vdwg.mxu0
        %s5748 = scalar_lea.vmem %s6, 704
        %v5749 = vld [vmem:[%s5748] sm:$0xff]
        %v5750 = vld [vmem:[%s5748 + $0x8] sm:$0xff]
        %v5751 = vld [vmem:[%s5748 + $0x10] sm:$0xff]
        %v5752 = vld [vmem:[%s5748 + $0x18] sm:$0xff]
        %v5753 = vld [vmem:[%s7 + $0x16] sm:$0x1]
        %v5754 = vlaneseq
        %v5755 = vshrl.u32 %v5754, 7
        %v5756 = vsub.s32 0, %v5755
        %v5757 = vrot.slane %v5753, %v5756
        %5758 = vmatprep.subr.mxu0 0.0
        %5759 = vmatpush1.msra.mxu0 0.0
        %5760 = vmatprep.subr.mxu0 0.0
        %5761 = vmatpush1.msra.mxu0 0.0
        %5762 = vmatprep.subr.mxu0 0.0
        %5763 = vmatpush1.msra.mxu0 0.0
        %5764 = vmatprep.subr.mxu0 0.0
        %5765 = vmatpush1.msra.mxu0 0.0
        %5766 = vmatprep.subr.mxu0 0.0
        %5767 = vmatpush1.msra.mxu0 0.0
        %5768 = vmatprep.subr.mxu0 0.0
        %5769 = vmatpush1.msra.mxu0 0.0
        %5770 = vmatprep.subr.mxu0 0.0
        %5771 = vmatpush1.msra.mxu0 0.0
        %5772 = vmatprep.subr.mxu0 0.0
        %5773 = vmatpush1.msra.mxu0 0.0
        %5774 = vmatprep.subr.mxu0 0.0
        %5775 = vmatpush1.msra.mxu0 0.0
        %5776 = vmatprep.subr.mxu0 0.0
        %5777 = vmatpush1.msra.mxu0 0.0
        %5778 = vmatprep.subr.mxu0 0.0
        %5779 = vmatpush1.msra.mxu0 0.0
        %5780 = vmatprep.subr.mxu0 0.0
        %5781 = vmatpush1.msra.mxu0 0.0
        %5782 = vmatprep.subr.mxu0 0.0
        %5783 = vmatpush1.msra.mxu0 %v5752
        %5784 = vmatprep.subr.mxu0 0.0
        %5785 = vmatpush1.msra.mxu0 %v5751
        %5786 = vmatprep.subr.mxu0 0.0
        %5787 = vmatpush1.msra.mxu0 %v5750
        %5788 = vmatprep.subr.mxu0 0.0
        %5789 = vmatpush1.msra.mxu0 %v5749
        %5790 = vmatprep.subr.mxu0 0.0
        %5791 = vmatpush2.msra.mxu0 0.0
        %5792 = vmatprep.subr.mxu0 0.0
        %5793 = vmatpush2.msra.mxu0 0.0
        %5794 = vmatprep.subr.mxu0 0.0
        %5795 = vmatpush2.msra.mxu0 0.0
        %5796 = vmatprep.subr.mxu0 0.0
        %5797 = vmatpush2.msra.mxu0 0.0
        %5798 = vmatprep.subr.mxu0 0.0
        %5799 = vmatpush2.msra.mxu0 0.0
        %5800 = vmatprep.subr.mxu0 0.0
        %5801 = vmatpush2.msra.mxu0 0.0
        %5802 = vmatprep.subr.mxu0 0.0
        %5803 = vmatpush2.msra.mxu0 0.0
        %5804 = vmatprep.subr.mxu0 0.0
        %5805 = vmatpush2.msra.mxu0 0.0
        %5806 = vmatprep.subr.mxu0 0.0
        %5807 = vmatpush2.msra.mxu0 0.0
        %5808 = vmatprep.subr.mxu0 0.0
        %5809 = vmatpush2.msra.mxu0 0.0
        %5810 = vmatprep.subr.mxu0 0.0
        %5811 = vmatpush2.msra.mxu0 0.0
        %5812 = vmatprep.subr.mxu0 0.0
        %5813 = vmatpush2.msra.mxu0 0.0
        %5814 = vmatprep.subr.mxu0 0.0
        %5815 = vmatpush2.msra.mxu0 0.0
        %5816 = vmatprep.subr.mxu0 0.0
        %5817 = vmatpush2.msra.mxu0 0.0
        %5818 = vmatprep.subr.mxu0 0.0
        %5819 = vmatpush2.msra.mxu0 0.0
        %5820 = vmatprep.subr.mxu0 0.0
        %5821 = vmatpush2.msra.mxu0 0.0
        %5822 = vmatprep.mubr.f32.mxu0 0.0
        %5823 = vmatmul.mubr.f32.gmra.mxu0 %v4517
        %v5824 = vpop.f32.mrf.mxu0
        %v5825 = vadd.f32 %v5757, %v5824
        %v5826 = vpop.f32.mrf.mxu0
        %5827 = vmatprep.mubr.f32.mxu0 0.0
        %5828 = vmatmul.mubr.f32.gmra.mxu0 %v4520
        %v5829 = vpop.f32.mrf.mxu0
        %v5830 = vadd.f32 %v5757, %v5829
        %v5831 = vpop.f32.mrf.mxu0
        %5832 = vdwg.mxu0
        %v5834 = vsel %vm1124, %v5661, 0
        %v5837 = vsel %vm1124, %v5662, 0
        %v5840 = vsel %vm1124, %v5740, 0
        %v5843 = vsel %vm1124, %v5745, 0
        %5845 = vmatprep.subr.mxu0 0.0
        %5846 = vmatpush1.xpose.msra.mxu0 0.0
        %5847 = vmatprep.subr.mxu0 0.0
        %5848 = vmatpush1.xpose.msra.mxu0 0.0
        %5849 = vmatprep.subr.mxu0 0.0
        %5850 = vmatpush1.xpose.msra.mxu0 0.0
        %5851 = vmatprep.subr.mxu0 0.0
        %5852 = vmatpush1.xpose.msra.mxu0 0.0
        %5853 = vmatprep.subr.mxu0 0.0
        %5854 = vmatpush1.xpose.msra.mxu0 0.0
        %5855 = vmatprep.subr.mxu0 0.0
        %5856 = vmatpush1.xpose.msra.mxu0 0.0
        %5857 = vmatprep.subr.mxu0 0.0
        %5858 = vmatpush1.xpose.msra.mxu0 0.0
        %5859 = vmatprep.subr.mxu0 0.0
        %5860 = vmatpush1.xpose.msra.mxu0 0.0
        %5861 = vmatprep.subr.mxu0 0.0
        %5862 = vmatpush1.xpose.msra.mxu0 0.0
        %5863 = vmatprep.subr.mxu0 0.0
        %5864 = vmatpush1.xpose.msra.mxu0 0.0
        %5865 = vmatprep.subr.mxu0 0.0
        %5866 = vmatpush1.xpose.msra.mxu0 0.0
        %5867 = vmatprep.subr.mxu0 0.0
        %5868 = vmatpush1.xpose.msra.mxu0 0.0
        %5869 = vmatprep.subr.mxu0 0.0
        %5870 = vmatpush1.xpose.msra.mxu0 0.0
        %5871 = vmatprep.subr.mxu0 0.0
        %5872 = vmatpush1.xpose.msra.mxu0 0.0
        %5873 = vmatprep.subr.mxu0 0.0
        %5874 = vmatpush1.xpose.msra.mxu0 %v5843
        %5875 = vmatprep.subr.mxu0 0.0
        %5876 = vmatpush1.xpose.msra.mxu0 %v5840
        %5877 = vmatprep.subr.mxu0 0.0
        %5878 = vmatpush2.xpose.msra.mxu0 0.0
        %5879 = vmatprep.subr.mxu0 0.0
        %5880 = vmatpush2.xpose.msra.mxu0 0.0
        %5881 = vmatprep.subr.mxu0 0.0
        %5882 = vmatpush2.xpose.msra.mxu0 0.0
        %5883 = vmatprep.subr.mxu0 0.0
        %5884 = vmatpush2.xpose.msra.mxu0 0.0
        %5885 = vmatprep.subr.mxu0 0.0
        %5886 = vmatpush2.xpose.msra.mxu0 0.0
        %5887 = vmatprep.subr.mxu0 0.0
        %5888 = vmatpush2.xpose.msra.mxu0 0.0
        %5889 = vmatprep.subr.mxu0 0.0
        %5890 = vmatpush2.xpose.msra.mxu0 0.0
        %5891 = vmatprep.subr.mxu0 0.0
        %5892 = vmatpush2.xpose.msra.mxu0 0.0
        %5893 = vmatprep.subr.mxu0 0.0
        %5894 = vmatpush2.xpose.msra.mxu0 0.0
        %5895 = vmatprep.subr.mxu0 0.0
        %5896 = vmatpush2.xpose.msra.mxu0 0.0
        %5897 = vmatprep.subr.mxu0 0.0
        %5898 = vmatpush2.xpose.msra.mxu0 0.0
        %5899 = vmatprep.subr.mxu0 0.0
        %5900 = vmatpush2.xpose.msra.mxu0 0.0
        %5901 = vmatprep.subr.mxu0 0.0
        %5902 = vmatpush2.xpose.msra.mxu0 0.0
        %5903 = vmatprep.subr.mxu0 0.0
        %5904 = vmatpush2.xpose.msra.mxu0 0.0
        %5905 = vmatprep.subr.mxu0 0.0
        %5906 = vmatpush2.xpose.msra.mxu0 0.0
        %5907 = vmatprep.subr.mxu0 0.0
        %5908 = vmatpush2.xpose.msra.mxu0 0.0
        %5909 = vmatprep.mubr.f32.mxu0 0.0
        %5910 = vmatmul.mubr.f32.gmra.mxu0 %v5834
        %v5911 = vpop.f32.mrf.mxu0
        %v5912 = vadd.f32 0.0, %v5911
        %v5913 = vpop.f32.mrf.mxu0
        %5914 = vmatprep.mubr.f32.mxu0 0.0
        %5915 = vmatmul.mubr.f32.gmra.mxu0 %v5837
        %v5916 = vpop.f32.mrf.mxu0
        %v5917 = vadd.f32 0.0, %v5916
        %v5918 = vpop.f32.mrf.mxu0
        %5919 = vdwg.mxu0
        %v5920 = vsel %vm448, %v5912, -inf
        %5921 = vmax.xlane.f32.xlu0 %v5920
        %v5922 = vpop.xlane.xlu0 %5921
        %v5923 = vsel %vm448, %v5917, -inf
        %5924 = vmax.xlane.f32.xlu0 %v5923
        %v5925 = vpop.xlane.xlu0 %5924
        %v5926 = vsub.f32 %v5912, %v5922
        %v5927 = vsub.f32 %v5917, %v5925
        %v5928 = vmul.f32 %v5926, 1.442695
        %v5929 = vpow.pop %v5928
        %v5930 = vmul.f32 %v5927, 1.442695
        %v5931 = vpow.pop %v5930
        %v5932 = vsel %vm448, %v5929, 0.0
        %5933 = vadd.xlane.f32.xlu0 %v5932
        %v5934 = vpop.xlane.xlu0 %5933
        %v5935 = vsel %vm448, %v5931, 0.0
        %5936 = vadd.xlane.f32.xlu0 %v5935
        %v5937 = vpop.xlane.xlu0 %5936
        %v5938 = vrcp.pop %v5934
        %v5939 = vmul.f32 %v5929, %v5938
        %v5940 = vrcp.pop %v5937
        %v5941 = vmul.f32 %v5931, %v5940
        %v5943 = vsel %vm448, %v5939, 0
        %v5946 = vsel %vm448, %v5941, 0
        %5948 = vmatprep.subr.mxu0 0.0
        %5949 = vmatpush1.msra.mxu0 0.0
        %5950 = vmatprep.subr.mxu0 0.0
        %5951 = vmatpush1.msra.mxu0 0.0
        %5952 = vmatprep.subr.mxu0 0.0
        %5953 = vmatpush1.msra.mxu0 0.0
        %5954 = vmatprep.subr.mxu0 0.0
        %5955 = vmatpush1.msra.mxu0 0.0
        %5956 = vmatprep.subr.mxu0 0.0
        %5957 = vmatpush1.msra.mxu0 0.0
        %5958 = vmatprep.subr.mxu0 0.0
        %5959 = vmatpush1.msra.mxu0 0.0
        %5960 = vmatprep.subr.mxu0 0.0
        %5961 = vmatpush1.msra.mxu0 0.0
        %5962 = vmatprep.subr.mxu0 0.0
        %5963 = vmatpush1.msra.mxu0 0.0
        %5964 = vmatprep.subr.mxu0 0.0
        %5965 = vmatpush1.msra.mxu0 0.0
        %5966 = vmatprep.subr.mxu0 0.0
        %5967 = vmatpush1.msra.mxu0 0.0
        %5968 = vmatprep.subr.mxu0 0.0
        %5969 = vmatpush1.msra.mxu0 0.0
        %5970 = vmatprep.subr.mxu0 0.0
        %5971 = vmatpush1.msra.mxu0 0.0
        %5972 = vmatprep.subr.mxu0 0.0
        %5973 = vmatpush1.msra.mxu0 0.0
        %5974 = vmatprep.subr.mxu0 0.0
        %5975 = vmatpush1.msra.mxu0 0.0
        %5976 = vmatprep.subr.mxu0 0.0
        %5977 = vmatpush1.msra.mxu0 %v5830
        %5978 = vmatprep.subr.mxu0 0.0
        %5979 = vmatpush1.msra.mxu0 %v5825
        %5980 = vmatprep.subr.mxu0 0.0
        %5981 = vmatpush2.msra.mxu0 0.0
        %5982 = vmatprep.subr.mxu0 0.0
        %5983 = vmatpush2.msra.mxu0 0.0
        %5984 = vmatprep.subr.mxu0 0.0
        %5985 = vmatpush2.msra.mxu0 0.0
        %5986 = vmatprep.subr.mxu0 0.0
        %5987 = vmatpush2.msra.mxu0 0.0
        %5988 = vmatprep.subr.mxu0 0.0
        %5989 = vmatpush2.msra.mxu0 0.0
        %5990 = vmatprep.subr.mxu0 0.0
        %5991 = vmatpush2.msra.mxu0 0.0
        %5992 = vmatprep.subr.mxu0 0.0
        %5993 = vmatpush2.msra.mxu0 0.0
        %5994 = vmatprep.subr.mxu0 0.0
        %5995 = vmatpush2.msra.mxu0 0.0
        %5996 = vmatprep.subr.mxu0 0.0
        %5997 = vmatpush2.msra.mxu0 0.0
        %5998 = vmatprep.subr.mxu0 0.0
        %5999 = vmatpush2.msra.mxu0 0.0
        %6000 = vmatprep.subr.mxu0 0.0
        %6001 = vmatpush2.msra.mxu0 0.0
        %6002 = vmatprep.subr.mxu0 0.0
        %6003 = vmatpush2.msra.mxu0 0.0
        %6004 = vmatprep.subr.mxu0 0.0
        %6005 = vmatpush2.msra.mxu0 0.0
        %6006 = vmatprep.subr.mxu0 0.0
        %6007 = vmatpush2.msra.mxu0 0.0
        %6008 = vmatprep.subr.mxu0 0.0
        %6009 = vmatpush2.msra.mxu0 0.0
        %6010 = vmatprep.subr.mxu0 0.0
        %6011 = vmatpush2.msra.mxu0 0.0
        %6012 = vmatprep.mubr.f32.mxu0 0.0
        %6013 = vmatmul.mubr.f32.gmra.mxu0 %v5943
        %v6014 = vpop.f32.mrf.mxu0
        %v6015 = vadd.f32 0.0, %v6014
        %v6016 = vpop.f32.mrf.mxu0
        %6017 = vmatprep.mubr.f32.mxu0 0.0
        %6018 = vmatmul.mubr.f32.gmra.mxu0 %v5946
        %v6019 = vpop.f32.mrf.mxu0
        %v6020 = vadd.f32 0.0, %v6019
        %v6021 = vpop.f32.mrf.mxu0
        %6022 = vdwg.mxu0
        %s6023 = scalar_lea.vmem %s8, 48
        %v6024 = vld [vmem:[%s6023] sm:$0xff]
        %v6026 = vsel %vm1124, %v6015, 0
        %v6029 = vsel %vm1124, %v6020, 0
        %6031 = vmatprep.subr.mxu0 0.0
        %6032 = vmatpush1.msra.mxu0 0.0
        %6033 = vmatprep.subr.mxu0 0.0
        %6034 = vmatpush1.msra.mxu0 0.0
        %6035 = vmatprep.subr.mxu0 0.0
        %6036 = vmatpush1.msra.mxu0 0.0
        %6037 = vmatprep.subr.mxu0 0.0
        %6038 = vmatpush1.msra.mxu0 0.0
        %6039 = vmatprep.subr.mxu0 0.0
        %6040 = vmatpush1.msra.mxu0 0.0
        %6041 = vmatprep.subr.mxu0 0.0
        %6042 = vmatpush1.msra.mxu0 0.0
        %6043 = vmatprep.subr.mxu0 0.0
        %6044 = vmatpush1.msra.mxu0 0.0
        %6045 = vmatprep.subr.mxu0 0.0
        %6046 = vmatpush1.msra.mxu0 0.0
        %6047 = vmatprep.subr.mxu0 0.0
        %6048 = vmatpush1.msra.mxu0 0.0
        %6049 = vmatprep.subr.mxu0 0.0
        %6050 = vmatpush1.msra.mxu0 0.0
        %6051 = vmatprep.subr.mxu0 0.0
        %6052 = vmatpush1.msra.mxu0 0.0
        %6053 = vmatprep.subr.mxu0 0.0
        %6054 = vmatpush1.msra.mxu0 0.0
        %6055 = vmatprep.subr.mxu0 0.0
        %6056 = vmatpush1.msra.mxu0 0.0
        %6057 = vmatprep.subr.mxu0 0.0
        %6058 = vmatpush1.msra.mxu0 0.0
        %6059 = vmatprep.subr.mxu0 0.0
        %6060 = vmatpush1.msra.mxu0 0.0
        %6061 = vmatprep.subr.mxu0 0.0
        %6062 = vmatpush1.msra.mxu0 %v6024
        %6063 = vmatprep.subr.mxu0 0.0
        %6064 = vmatpush2.msra.mxu0 0.0
        %6065 = vmatprep.subr.mxu0 0.0
        %6066 = vmatpush2.msra.mxu0 0.0
        %6067 = vmatprep.subr.mxu0 0.0
        %6068 = vmatpush2.msra.mxu0 0.0
        %6069 = vmatprep.subr.mxu0 0.0
        %6070 = vmatpush2.msra.mxu0 0.0
        %6071 = vmatprep.subr.mxu0 0.0
        %6072 = vmatpush2.msra.mxu0 0.0
        %6073 = vmatprep.subr.mxu0 0.0
        %6074 = vmatpush2.msra.mxu0 0.0
        %6075 = vmatprep.subr.mxu0 0.0
        %6076 = vmatpush2.msra.mxu0 0.0
        %6077 = vmatprep.subr.mxu0 0.0
        %6078 = vmatpush2.msra.mxu0 0.0
        %6079 = vmatprep.subr.mxu0 0.0
        %6080 = vmatpush2.msra.mxu0 0.0
        %6081 = vmatprep.subr.mxu0 0.0
        %6082 = vmatpush2.msra.mxu0 0.0
        %6083 = vmatprep.subr.mxu0 0.0
        %6084 = vmatpush2.msra.mxu0 0.0
        %6085 = vmatprep.subr.mxu0 0.0
        %6086 = vmatpush2.msra.mxu0 0.0
        %6087 = vmatprep.subr.mxu0 0.0
        %6088 = vmatpush2.msra.mxu0 0.0
        %6089 = vmatprep.subr.mxu0 0.0
        %6090 = vmatpush2.msra.mxu0 0.0
        %6091 = vmatprep.subr.mxu0 0.0
        %6092 = vmatpush2.msra.mxu0 0.0
        %6093 = vmatprep.subr.mxu0 0.0
        %6094 = vmatpush2.msra.mxu0 0.0
        %6095 = vmatprep.mubr.f32.mxu0 0.0
        %6096 = vmatmul.mubr.f32.gmra.mxu0 %v6026
        %v6097 = vpop.f32.mrf.mxu0
        %v6098 = vadd.f32 0.0, %v6097
        %v6099 = vpop.f32.mrf.mxu0
        %6100 = vmatprep.mubr.f32.mxu0 0.0
        %6101 = vmatmul.mubr.f32.gmra.mxu0 %v6029
        %v6102 = vpop.f32.mrf.mxu0
        %v6103 = vadd.f32 0.0, %v6102
        %v6104 = vpop.f32.mrf.mxu0
        %6105 = vdwg.mxu0
        %v6106 = vadd.f32 %v5574, %v6098
        %v6107 = vadd.f32 %v5575, %v6103
        %s6108 = scalar_lea.vmem %s6, 480
        %v6109 = vld [vmem:[%s6108] sm:$0xff]
        %v6110 = vld [vmem:[%s6108 + $0x8] sm:$0xff]
        %v6111 = vld [vmem:[%s6108 + $0x10] sm:$0xff]
        %v6112 = vld [vmem:[%s6108 + $0x18] sm:$0xff]
        %v6113 = vld [vmem:[%s7 + $0xf] sm:$0x1]
        %v6114 = vlaneseq
        %v6115 = vshrl.u32 %v6114, 7
        %v6116 = vsub.s32 0, %v6115
        %v6117 = vrot.slane %v6113, %v6116
        %6118 = vmatprep.subr.mxu0 0.0
        %6119 = vmatpush1.msra.mxu0 0.0
        %6120 = vmatprep.subr.mxu0 0.0
        %6121 = vmatpush1.msra.mxu0 0.0
        %6122 = vmatprep.subr.mxu0 0.0
        %6123 = vmatpush1.msra.mxu0 0.0
        %6124 = vmatprep.subr.mxu0 0.0
        %6125 = vmatpush1.msra.mxu0 0.0
        %6126 = vmatprep.subr.mxu0 0.0
        %6127 = vmatpush1.msra.mxu0 0.0
        %6128 = vmatprep.subr.mxu0 0.0
        %6129 = vmatpush1.msra.mxu0 0.0
        %6130 = vmatprep.subr.mxu0 0.0
        %6131 = vmatpush1.msra.mxu0 0.0
        %6132 = vmatprep.subr.mxu0 0.0
        %6133 = vmatpush1.msra.mxu0 0.0
        %6134 = vmatprep.subr.mxu0 0.0
        %6135 = vmatpush1.msra.mxu0 0.0
        %6136 = vmatprep.subr.mxu0 0.0
        %6137 = vmatpush1.msra.mxu0 0.0
        %6138 = vmatprep.subr.mxu0 0.0
        %6139 = vmatpush1.msra.mxu0 0.0
        %6140 = vmatprep.subr.mxu0 0.0
        %6141 = vmatpush1.msra.mxu0 0.0
        %6142 = vmatprep.subr.mxu0 0.0
        %6143 = vmatpush1.msra.mxu0 %v6112
        %6144 = vmatprep.subr.mxu0 0.0
        %6145 = vmatpush1.msra.mxu0 %v6111
        %6146 = vmatprep.subr.mxu0 0.0
        %6147 = vmatpush1.msra.mxu0 %v6110
        %6148 = vmatprep.subr.mxu0 0.0
        %6149 = vmatpush1.msra.mxu0 %v6109
        %6150 = vmatprep.subr.mxu0 0.0
        %6151 = vmatpush2.msra.mxu0 0.0
        %6152 = vmatprep.subr.mxu0 0.0
        %6153 = vmatpush2.msra.mxu0 0.0
        %6154 = vmatprep.subr.mxu0 0.0
        %6155 = vmatpush2.msra.mxu0 0.0
        %6156 = vmatprep.subr.mxu0 0.0
        %6157 = vmatpush2.msra.mxu0 0.0
        %6158 = vmatprep.subr.mxu0 0.0
        %6159 = vmatpush2.msra.mxu0 0.0
        %6160 = vmatprep.subr.mxu0 0.0
        %6161 = vmatpush2.msra.mxu0 0.0
        %6162 = vmatprep.subr.mxu0 0.0
        %6163 = vmatpush2.msra.mxu0 0.0
        %6164 = vmatprep.subr.mxu0 0.0
        %6165 = vmatpush2.msra.mxu0 0.0
        %6166 = vmatprep.subr.mxu0 0.0
        %6167 = vmatpush2.msra.mxu0 0.0
        %6168 = vmatprep.subr.mxu0 0.0
        %6169 = vmatpush2.msra.mxu0 0.0
        %6170 = vmatprep.subr.mxu0 0.0
        %6171 = vmatpush2.msra.mxu0 0.0
        %6172 = vmatprep.subr.mxu0 0.0
        %6173 = vmatpush2.msra.mxu0 0.0
        %6174 = vmatprep.subr.mxu0 0.0
        %6175 = vmatpush2.msra.mxu0 0.0
        %6176 = vmatprep.subr.mxu0 0.0
        %6177 = vmatpush2.msra.mxu0 0.0
        %6178 = vmatprep.subr.mxu0 0.0
        %6179 = vmatpush2.msra.mxu0 0.0
        %6180 = vmatprep.subr.mxu0 0.0
        %6181 = vmatpush2.msra.mxu0 0.0
        %6182 = vmatprep.mubr.f32.mxu0 0.0
        %6183 = vmatmul.mubr.f32.gmra.mxu0 %v4517
        %v6184 = vpop.f32.mrf.mxu0
        %v6185 = vadd.f32 %v6117, %v6184
        %v6186 = vpop.f32.mrf.mxu0
        %6187 = vmatprep.mubr.f32.mxu0 0.0
        %6188 = vmatmul.mubr.f32.gmra.mxu0 %v4520
        %v6189 = vpop.f32.mrf.mxu0
        %v6190 = vadd.f32 %v6117, %v6189
        %v6191 = vpop.f32.mrf.mxu0
        %6192 = vdwg.mxu0
        %v6193 = vmul.f32 %v6185, 0.35355338
        %v6194 = vmul.f32 %v6190, 0.35355338
        %s6195 = scalar_lea.vmem %s6, 608
        %v6196 = vld [vmem:[%s6195] sm:$0xff]
        %v6197 = vld [vmem:[%s6195 + $0x8] sm:$0xff]
        %v6198 = vld [vmem:[%s6195 + $0x10] sm:$0xff]
        %v6199 = vld [vmem:[%s6195 + $0x18] sm:$0xff]
        %v6200 = vld [vmem:[%s7 + $0x13] sm:$0x1]
        %v6201 = vlaneseq
        %v6202 = vshrl.u32 %v6201, 7
        %v6203 = vsub.s32 0, %v6202
        %v6204 = vrot.slane %v6200, %v6203
        %6205 = vmatprep.subr.mxu0 0.0
        %6206 = vmatpush1.msra.mxu0 0.0
        %6207 = vmatprep.subr.mxu0 0.0
        %6208 = vmatpush1.msra.mxu0 0.0
        %6209 = vmatprep.subr.mxu0 0.0
        %6210 = vmatpush1.msra.mxu0 0.0
        %6211 = vmatprep.subr.mxu0 0.0
        %6212 = vmatpush1.msra.mxu0 0.0
        %6213 = vmatprep.subr.mxu0 0.0
        %6214 = vmatpush1.msra.mxu0 0.0
        %6215 = vmatprep.subr.mxu0 0.0
        %6216 = vmatpush1.msra.mxu0 0.0
        %6217 = vmatprep.subr.mxu0 0.0
        %6218 = vmatpush1.msra.mxu0 0.0
        %6219 = vmatprep.subr.mxu0 0.0
        %6220 = vmatpush1.msra.mxu0 0.0
        %6221 = vmatprep.subr.mxu0 0.0
        %6222 = vmatpush1.msra.mxu0 0.0
        %6223 = vmatprep.subr.mxu0 0.0
        %6224 = vmatpush1.msra.mxu0 0.0
        %6225 = vmatprep.subr.mxu0 0.0
        %6226 = vmatpush1.msra.mxu0 0.0
        %6227 = vmatprep.subr.mxu0 0.0
        %6228 = vmatpush1.msra.mxu0 0.0
        %6229 = vmatprep.subr.mxu0 0.0
        %6230 = vmatpush1.msra.mxu0 %v6199
        %6231 = vmatprep.subr.mxu0 0.0
        %6232 = vmatpush1.msra.mxu0 %v6198
        %6233 = vmatprep.subr.mxu0 0.0
        %6234 = vmatpush1.msra.mxu0 %v6197
        %6235 = vmatprep.subr.mxu0 0.0
        %6236 = vmatpush1.msra.mxu0 %v6196
        %6237 = vmatprep.subr.mxu0 0.0
        %6238 = vmatpush2.msra.mxu0 0.0
        %6239 = vmatprep.subr.mxu0 0.0
        %6240 = vmatpush2.msra.mxu0 0.0
        %6241 = vmatprep.subr.mxu0 0.0
        %6242 = vmatpush2.msra.mxu0 0.0
        %6243 = vmatprep.subr.mxu0 0.0
        %6244 = vmatpush2.msra.mxu0 0.0
        %6245 = vmatprep.subr.mxu0 0.0
        %6246 = vmatpush2.msra.mxu0 0.0
        %6247 = vmatprep.subr.mxu0 0.0
        %6248 = vmatpush2.msra.mxu0 0.0
        %6249 = vmatprep.subr.mxu0 0.0
        %6250 = vmatpush2.msra.mxu0 0.0
        %6251 = vmatprep.subr.mxu0 0.0
        %6252 = vmatpush2.msra.mxu0 0.0
        %6253 = vmatprep.subr.mxu0 0.0
        %6254 = vmatpush2.msra.mxu0 0.0
        %6255 = vmatprep.subr.mxu0 0.0
        %6256 = vmatpush2.msra.mxu0 0.0
        %6257 = vmatprep.subr.mxu0 0.0
        %6258 = vmatpush2.msra.mxu0 0.0
        %6259 = vmatprep.subr.mxu0 0.0
        %6260 = vmatpush2.msra.mxu0 0.0
        %6261 = vmatprep.subr.mxu0 0.0
        %6262 = vmatpush2.msra.mxu0 0.0
        %6263 = vmatprep.subr.mxu0 0.0
        %6264 = vmatpush2.msra.mxu0 0.0
        %6265 = vmatprep.subr.mxu0 0.0
        %6266 = vmatpush2.msra.mxu0 0.0
        %6267 = vmatprep.subr.mxu0 0.0
        %6268 = vmatpush2.msra.mxu0 0.0
        %6269 = vmatprep.mubr.f32.mxu0 0.0
        %6270 = vmatmul.mubr.f32.gmra.mxu0 %v4517
        %v6271 = vpop.f32.mrf.mxu0
        %v6272 = vadd.f32 %v6204, %v6271
        %v6273 = vpop.f32.mrf.mxu0
        %6274 = vmatprep.mubr.f32.mxu0 0.0
        %6275 = vmatmul.mubr.f32.gmra.mxu0 %v4520
        %v6276 = vpop.f32.mrf.mxu0
        %v6277 = vadd.f32 %v6204, %v6276
        %v6278 = vpop.f32.mrf.mxu0
        %6279 = vdwg.mxu0
        %s6280 = scalar_lea.vmem %s6, 736
        %v6281 = vld [vmem:[%s6280] sm:$0xff]
        %v6282 = vld [vmem:[%s6280 + $0x8] sm:$0xff]
        %v6283 = vld [vmem:[%s6280 + $0x10] sm:$0xff]
        %v6284 = vld [vmem:[%s6280 + $0x18] sm:$0xff]
        %v6285 = vld [vmem:[%s7 + $0x17] sm:$0x1]
        %v6286 = vlaneseq
        %v6287 = vshrl.u32 %v6286, 7
        %v6288 = vsub.s32 0, %v6287
        %v6289 = vrot.slane %v6285, %v6288
        %6290 = vmatprep.subr.mxu0 0.0
        %6291 = vmatpush1.msra.mxu0 0.0
        %6292 = vmatprep.subr.mxu0 0.0
        %6293 = vmatpush1.msra.mxu0 0.0
        %6294 = vmatprep.subr.mxu0 0.0
        %6295 = vmatpush1.msra.mxu0 0.0
        %6296 = vmatprep.subr.mxu0 0.0
        %6297 = vmatpush1.msra.mxu0 0.0
        %6298 = vmatprep.subr.mxu0 0.0
        %6299 = vmatpush1.msra.mxu0 0.0
        %6300 = vmatprep.subr.mxu0 0.0
        %6301 = vmatpush1.msra.mxu0 0.0
        %6302 = vmatprep.subr.mxu0 0.0
        %6303 = vmatpush1.msra.mxu0 0.0
        %6304 = vmatprep.subr.mxu0 0.0
        %6305 = vmatpush1.msra.mxu0 0.0
        %6306 = vmatprep.subr.mxu0 0.0
        %6307 = vmatpush1.msra.mxu0 0.0
        %6308 = vmatprep.subr.mxu0 0.0
        %6309 = vmatpush1.msra.mxu0 0.0
        %6310 = vmatprep.subr.mxu0 0.0
        %6311 = vmatpush1.msra.mxu0 0.0
        %6312 = vmatprep.subr.mxu0 0.0
        %6313 = vmatpush1.msra.mxu0 0.0
        %6314 = vmatprep.subr.mxu0 0.0
        %6315 = vmatpush1.msra.mxu0 %v6284
        %6316 = vmatprep.subr.mxu0 0.0
        %6317 = vmatpush1.msra.mxu0 %v6283
        %6318 = vmatprep.subr.mxu0 0.0
        %6319 = vmatpush1.msra.mxu0 %v6282
        %6320 = vmatprep.subr.mxu0 0.0
        %6321 = vmatpush1.msra.mxu0 %v6281
        %6322 = vmatprep.subr.mxu0 0.0
        %6323 = vmatpush2.msra.mxu0 0.0
        %6324 = vmatprep.subr.mxu0 0.0
        %6325 = vmatpush2.msra.mxu0 0.0
        %6326 = vmatprep.subr.mxu0 0.0
        %6327 = vmatpush2.msra.mxu0 0.0
        %6328 = vmatprep.subr.mxu0 0.0
        %6329 = vmatpush2.msra.mxu0 0.0
        %6330 = vmatprep.subr.mxu0 0.0
        %6331 = vmatpush2.msra.mxu0 0.0
        %6332 = vmatprep.subr.mxu0 0.0
        %6333 = vmatpush2.msra.mxu0 0.0
        %6334 = vmatprep.subr.mxu0 0.0
        %6335 = vmatpush2.msra.mxu0 0.0
        %6336 = vmatprep.subr.mxu0 0.0
        %6337 = vmatpush2.msra.mxu0 0.0
        %6338 = vmatprep.subr.mxu0 0.0
        %6339 = vmatpush2.msra.mxu0 0.0
        %6340 = vmatprep.subr.mxu0 0.0
        %6341 = vmatpush2.msra.mxu0 0.0
        %6342 = vmatprep.subr.mxu0 0.0
        %6343 = vmatpush2.msra.mxu0 0.0
        %6344 = vmatprep.subr.mxu0 0.0
        %6345 = vmatpush2.msra.mxu0 0.0
        %6346 = vmatprep.subr.mxu0 0.0
        %6347 = vmatpush2.msra.mxu0 0.0
        %6348 = vmatprep.subr.mxu0 0.0
        %6349 = vmatpush2.msra.mxu0 0.0
        %6350 = vmatprep.subr.mxu0 0.0
        %6351 = vmatpush2.msra.mxu0 0.0
        %6352 = vmatprep.subr.mxu0 0.0
        %6353 = vmatpush2.msra.mxu0 0.0
        %6354 = vmatprep.mubr.f32.mxu0 0.0
        %6355 = vmatmul.mubr.f32.gmra.mxu0 %v4517
        %v6356 = vpop.f32.mrf.mxu0
        %v6357 = vadd.f32 %v6289, %v6356
        %v6358 = vpop.f32.mrf.mxu0
        %6359 = vmatprep.mubr.f32.mxu0 0.0
        %6360 = vmatmul.mubr.f32.gmra.mxu0 %v4520
        %v6361 = vpop.f32.mrf.mxu0
        %v6362 = vadd.f32 %v6289, %v6361
        %v6363 = vpop.f32.mrf.mxu0
        %6364 = vdwg.mxu0
        %v6366 = vsel %vm1124, %v6193, 0
        %v6369 = vsel %vm1124, %v6194, 0
        %v6372 = vsel %vm1124, %v6272, 0
        %v6375 = vsel %vm1124, %v6277, 0
        %6377 = vmatprep.subr.mxu0 0.0
        %6378 = vmatpush1.xpose.msra.mxu0 0.0
        %6379 = vmatprep.subr.mxu0 0.0
        %6380 = vmatpush1.xpose.msra.mxu0 0.0
        %6381 = vmatprep.subr.mxu0 0.0
        %6382 = vmatpush1.xpose.msra.mxu0 0.0
        %6383 = vmatprep.subr.mxu0 0.0
        %6384 = vmatpush1.xpose.msra.mxu0 0.0
        %6385 = vmatprep.subr.mxu0 0.0
        %6386 = vmatpush1.xpose.msra.mxu0 0.0
        %6387 = vmatprep.subr.mxu0 0.0
        %6388 = vmatpush1.xpose.msra.mxu0 0.0
        %6389 = vmatprep.subr.mxu0 0.0
        %6390 = vmatpush1.xpose.msra.mxu0 0.0
        %6391 = vmatprep.subr.mxu0 0.0
        %6392 = vmatpush1.xpose.msra.mxu0 0.0
        %6393 = vmatprep.subr.mxu0 0.0
        %6394 = vmatpush1.xpose.msra.mxu0 0.0
        %6395 = vmatprep.subr.mxu0 0.0
        %6396 = vmatpush1.xpose.msra.mxu0 0.0
        %6397 = vmatprep.subr.mxu0 0.0
        %6398 = vmatpush1.xpose.msra.mxu0 0.0
        %6399 = vmatprep.subr.mxu0 0.0
        %6400 = vmatpush1.xpose.msra.mxu0 0.0
        %6401 = vmatprep.subr.mxu0 0.0
        %6402 = vmatpush1.xpose.msra.mxu0 0.0
        %6403 = vmatprep.subr.mxu0 0.0
        %6404 = vmatpush1.xpose.msra.mxu0 0.0
        %6405 = vmatprep.subr.mxu0 0.0
        %6406 = vmatpush1.xpose.msra.mxu0 %v6375
        %6407 = vmatprep.subr.mxu0 0.0
        %6408 = vmatpush1.xpose.msra.mxu0 %v6372
        %6409 = vmatprep.subr.mxu0 0.0
        %6410 = vmatpush2.xpose.msra.mxu0 0.0
        %6411 = vmatprep.subr.mxu0 0.0
        %6412 = vmatpush2.xpose.msra.mxu0 0.0
        %6413 = vmatprep.subr.mxu0 0.0
        %6414 = vmatpush2.xpose.msra.mxu0 0.0
        %6415 = vmatprep.subr.mxu0 0.0
        %6416 = vmatpush2.xpose.msra.mxu0 0.0
        %6417 = vmatprep.subr.mxu0 0.0
        %6418 = vmatpush2.xpose.msra.mxu0 0.0
        %6419 = vmatprep.subr.mxu0 0.0
        %6420 = vmatpush2.xpose.msra.mxu0 0.0
        %6421 = vmatprep.subr.mxu0 0.0
        %6422 = vmatpush2.xpose.msra.mxu0 0.0
        %6423 = vmatprep.subr.mxu0 0.0
        %6424 = vmatpush2.xpose.msra.mxu0 0.0
        %6425 = vmatprep.subr.mxu0 0.0
        %6426 = vmatpush2.xpose.msra.mxu0 0.0
        %6427 = vmatprep.subr.mxu0 0.0
        %6428 = vmatpush2.xpose.msra.mxu0 0.0
        %6429 = vmatprep.subr.mxu0 0.0
        %6430 = vmatpush2.xpose.msra.mxu0 0.0
        %6431 = vmatprep.subr.mxu0 0.0
        %6432 = vmatpush2.xpose.msra.mxu0 0.0
        %6433 = vmatprep.subr.mxu0 0.0
        %6434 = vmatpush2.xpose.msra.mxu0 0.0
        %6435 = vmatprep.subr.mxu0 0.0
        %6436 = vmatpush2.xpose.msra.mxu0 0.0
        %6437 = vmatprep.subr.mxu0 0.0
        %6438 = vmatpush2.xpose.msra.mxu0 0.0
        %6439 = vmatprep.subr.mxu0 0.0
        %6440 = vmatpush2.xpose.msra.mxu0 0.0
        %6441 = vmatprep.mubr.f32.mxu0 0.0
        %6442 = vmatmul.mubr.f32.gmra.mxu0 %v6366
        %v6443 = vpop.f32.mrf.mxu0
        %v6444 = vadd.f32 0.0, %v6443
        %v6445 = vpop.f32.mrf.mxu0
        %6446 = vmatprep.mubr.f32.mxu0 0.0
        %6447 = vmatmul.mubr.f32.gmra.mxu0 %v6369
        %v6448 = vpop.f32.mrf.mxu0
        %v6449 = vadd.f32 0.0, %v6448
        %v6450 = vpop.f32.mrf.mxu0
        %6451 = vdwg.mxu0
        %v6452 = vsel %vm448, %v6444, -inf
        %6453 = vmax.xlane.f32.xlu0 %v6452
        %v6454 = vpop.xlane.xlu0 %6453
        %v6455 = vsel %vm448, %v6449, -inf
        %6456 = vmax.xlane.f32.xlu0 %v6455
        %v6457 = vpop.xlane.xlu0 %6456
        %v6458 = vsub.f32 %v6444, %v6454
        %v6459 = vsub.f32 %v6449, %v6457
        %v6460 = vmul.f32 %v6458, 1.442695
        %v6461 = vpow.pop %v6460
        %v6462 = vmul.f32 %v6459, 1.442695
        %v6463 = vpow.pop %v6462
        %v6464 = vsel %vm448, %v6461, 0.0
        %6465 = vadd.xlane.f32.xlu0 %v6464
        %v6466 = vpop.xlane.xlu0 %6465
        %v6467 = vsel %vm448, %v6463, 0.0
        %6468 = vadd.xlane.f32.xlu0 %v6467
        %v6469 = vpop.xlane.xlu0 %6468
        %v6470 = vrcp.pop %v6466
        %v6471 = vmul.f32 %v6461, %v6470
        %v6472 = vrcp.pop %v6469
        %v6473 = vmul.f32 %v6463, %v6472
        %v6475 = vsel %vm448, %v6471, 0
        %v6478 = vsel %vm448, %v6473, 0
        %6480 = vmatprep.subr.mxu0 0.0
        %6481 = vmatpush1.msra.mxu0 0.0
        %6482 = vmatprep.subr.mxu0 0.0
        %6483 = vmatpush1.msra.mxu0 0.0
        %6484 = vmatprep.subr.mxu0 0.0
        %6485 = vmatpush1.msra.mxu0 0.0
        %6486 = vmatprep.subr.mxu0 0.0
        %6487 = vmatpush1.msra.mxu0 0.0
        %6488 = vmatprep.subr.mxu0 0.0
        %6489 = vmatpush1.msra.mxu0 0.0
        %6490 = vmatprep.subr.mxu0 0.0
        %6491 = vmatpush1.msra.mxu0 0.0
        %6492 = vmatprep.subr.mxu0 0.0
        %6493 = vmatpush1.msra.mxu0 0.0
        %6494 = vmatprep.subr.mxu0 0.0
        %6495 = vmatpush1.msra.mxu0 0.0
        %6496 = vmatprep.subr.mxu0 0.0
        %6497 = vmatpush1.msra.mxu0 0.0
        %6498 = vmatprep.subr.mxu0 0.0
        %6499 = vmatpush1.msra.mxu0 0.0
        %6500 = vmatprep.subr.mxu0 0.0
        %6501 = vmatpush1.msra.mxu0 0.0
        %6502 = vmatprep.subr.mxu0 0.0
        %6503 = vmatpush1.msra.mxu0 0.0
        %6504 = vmatprep.subr.mxu0 0.0
        %6505 = vmatpush1.msra.mxu0 0.0
        %6506 = vmatprep.subr.mxu0 0.0
        %6507 = vmatpush1.msra.mxu0 0.0
        %6508 = vmatprep.subr.mxu0 0.0
        %6509 = vmatpush1.msra.mxu0 %v6362
        %6510 = vmatprep.subr.mxu0 0.0
        %6511 = vmatpush1.msra.mxu0 %v6357
        %6512 = vmatprep.subr.mxu0 0.0
        %6513 = vmatpush2.msra.mxu0 0.0
        %6514 = vmatprep.subr.mxu0 0.0
        %6515 = vmatpush2.msra.mxu0 0.0
        %6516 = vmatprep.subr.mxu0 0.0
        %6517 = vmatpush2.msra.mxu0 0.0
        %6518 = vmatprep.subr.mxu0 0.0
        %6519 = vmatpush2.msra.mxu0 0.0
        %6520 = vmatprep.subr.mxu0 0.0
        %6521 = vmatpush2.msra.mxu0 0.0
        %6522 = vmatprep.subr.mxu0 0.0
        %6523 = vmatpush2.msra.mxu0 0.0
        %6524 = vmatprep.subr.mxu0 0.0
        %6525 = vmatpush2.msra.mxu0 0.0
        %6526 = vmatprep.subr.mxu0 0.0
        %6527 = vmatpush2.msra.mxu0 0.0
        %6528 = vmatprep.subr.mxu0 0.0
        %6529 = vmatpush2.msra.mxu0 0.0
        %6530 = vmatprep.subr.mxu0 0.0
        %6531 = vmatpush2.msra.mxu0 0.0
        %6532 = vmatprep.subr.mxu0 0.0
        %6533 = vmatpush2.msra.mxu0 0.0
        %6534 = vmatprep.subr.mxu0 0.0
        %6535 = vmatpush2.msra.mxu0 0.0
        %6536 = vmatprep.subr.mxu0 0.0
        %6537 = vmatpush2.msra.mxu0 0.0
        %6538 = vmatprep.subr.mxu0 0.0
        %6539 = vmatpush2.msra.mxu0 0.0
        %6540 = vmatprep.subr.mxu0 0.0
        %6541 = vmatpush2.msra.mxu0 0.0
        %6542 = vmatprep.subr.mxu0 0.0
        %6543 = vmatpush2.msra.mxu0 0.0
        %6544 = vmatprep.mubr.f32.mxu0 0.0
        %6545 = vmatmul.mubr.f32.gmra.mxu0 %v6475
        %v6546 = vpop.f32.mrf.mxu0
        %v6547 = vadd.f32 0.0, %v6546
        %v6548 = vpop.f32.mrf.mxu0
        %6549 = vmatprep.mubr.f32.mxu0 0.0
        %6550 = vmatmul.mubr.f32.gmra.mxu0 %v6478
        %v6551 = vpop.f32.mrf.mxu0
        %v6552 = vadd.f32 0.0, %v6551
        %v6553 = vpop.f32.mrf.mxu0
        %6554 = vdwg.mxu0
        %s6555 = scalar_lea.vmem %s8, 56
        %v6556 = vld [vmem:[%s6555] sm:$0xff]
        %v6558 = vsel %vm1124, %v6547, 0
        %v6561 = vsel %vm1124, %v6552, 0
        %6563 = vmatprep.subr.mxu0 0.0
        %6564 = vmatpush1.msra.mxu0 0.0
        %6565 = vmatprep.subr.mxu0 0.0
        %6566 = vmatpush1.msra.mxu0 0.0
        %6567 = vmatprep.subr.mxu0 0.0
        %6568 = vmatpush1.msra.mxu0 0.0
        %6569 = vmatprep.subr.mxu0 0.0
        %6570 = vmatpush1.msra.mxu0 0.0
        %6571 = vmatprep.subr.mxu0 0.0
        %6572 = vmatpush1.msra.mxu0 0.0
        %6573 = vmatprep.subr.mxu0 0.0
        %6574 = vmatpush1.msra.mxu0 0.0
        %6575 = vmatprep.subr.mxu0 0.0
        %6576 = vmatpush1.msra.mxu0 0.0
        %6577 = vmatprep.subr.mxu0 0.0
        %6578 = vmatpush1.msra.mxu0 0.0
        %6579 = vmatprep.subr.mxu0 0.0
        %6580 = vmatpush1.msra.mxu0 0.0
        %6581 = vmatprep.subr.mxu0 0.0
        %6582 = vmatpush1.msra.mxu0 0.0
        %6583 = vmatprep.subr.mxu0 0.0
        %6584 = vmatpush1.msra.mxu0 0.0
        %6585 = vmatprep.subr.mxu0 0.0
        %6586 = vmatpush1.msra.mxu0 0.0
        %6587 = vmatprep.subr.mxu0 0.0
        %6588 = vmatpush1.msra.mxu0 0.0
        %6589 = vmatprep.subr.mxu0 0.0
        %6590 = vmatpush1.msra.mxu0 0.0
        %6591 = vmatprep.subr.mxu0 0.0
        %6592 = vmatpush1.msra.mxu0 0.0
        %6593 = vmatprep.subr.mxu0 0.0
        %6594 = vmatpush1.msra.mxu0 %v6556
        %6595 = vmatprep.subr.mxu0 0.0
        %6596 = vmatpush2.msra.mxu0 0.0
        %6597 = vmatprep.subr.mxu0 0.0
        %6598 = vmatpush2.msra.mxu0 0.0
        %6599 = vmatprep.subr.mxu0 0.0
        %6600 = vmatpush2.msra.mxu0 0.0
        %6601 = vmatprep.subr.mxu0 0.0
        %6602 = vmatpush2.msra.mxu0 0.0
        %6603 = vmatprep.subr.mxu0 0.0
        %6604 = vmatpush2.msra.mxu0 0.0
        %6605 = vmatprep.subr.mxu0 0.0
        %6606 = vmatpush2.msra.mxu0 0.0
        %6607 = vmatprep.subr.mxu0 0.0
        %6608 = vmatpush2.msra.mxu0 0.0
        %6609 = vmatprep.subr.mxu0 0.0
        %6610 = vmatpush2.msra.mxu0 0.0
        %6611 = vmatprep.subr.mxu0 0.0
        %6612 = vmatpush2.msra.mxu0 0.0
        %6613 = vmatprep.subr.mxu0 0.0
        %6614 = vmatpush2.msra.mxu0 0.0
        %6615 = vmatprep.subr.mxu0 0.0
        %6616 = vmatpush2.msra.mxu0 0.0
        %6617 = vmatprep.subr.mxu0 0.0
        %6618 = vmatpush2.msra.mxu0 0.0
        %6619 = vmatprep.subr.mxu0 0.0
        %6620 = vmatpush2.msra.mxu0 0.0
        %6621 = vmatprep.subr.mxu0 0.0
        %6622 = vmatpush2.msra.mxu0 0.0
        %6623 = vmatprep.subr.mxu0 0.0
        %6624 = vmatpush2.msra.mxu0 0.0
        %6625 = vmatprep.subr.mxu0 0.0
        %6626 = vmatpush2.msra.mxu0 0.0
        %6627 = vmatprep.mubr.f32.mxu0 0.0
        %6628 = vmatmul.mubr.f32.gmra.mxu0 %v6558
        %v6629 = vpop.f32.mrf.mxu0
        %v6630 = vadd.f32 0.0, %v6629
        %v6631 = vpop.f32.mrf.mxu0
        %6632 = vmatprep.mubr.f32.mxu0 0.0
        %6633 = vmatmul.mubr.f32.gmra.mxu0 %v6561
        %v6634 = vpop.f32.mrf.mxu0
        %v6635 = vadd.f32 0.0, %v6634
        %v6636 = vpop.f32.mrf.mxu0
        %6637 = vdwg.mxu0
        %v6638 = vadd.f32 %v6106, %v6630
        %v6639 = vadd.f32 %v6107, %v6635
        %v6640 = vadd.f32 %v4458, %v6638
        %v6641 = vadd.f32 %v4459, %v6639
        %v6642 = vld [vmem:[%s2 + $0x1c] sm:$0x1]
        %v6643 = vld [vmem:[%s2 + $0x1d] sm:$0x1]
        %v6644 = vsel %vm532, %v6640, 0.0
        %6645 = vadd.xlane.f32.xlu0 %v6644
        %v6646 = vpop.xlane.xlu0 %6645
        %v6647 = vsel %vm532, %v6641, 0.0
        %6648 = vadd.xlane.f32.xlu0 %v6647
        %v6649 = vpop.xlane.xlu0 %6648
        %v6650 = vmul.f32 %v6646, %v539
        %v6651 = vmul.f32 %v6649, %v539
        %v6652 = vsub.f32 %v6640, %v6650
        %v6653 = vsub.f32 %v6641, %v6651
        %v6654 = vmul.f32 %v6652, %v6652
        %v6655 = vmul.f32 %v6653, %v6653
        %v6656 = vsel %vm532, %v6654, 0.0
        %6657 = vadd.xlane.f32.xlu0 %v6656
        %v6658 = vpop.xlane.xlu0 %6657
        %v6659 = vsel %vm532, %v6655, 0.0
        %6660 = vadd.xlane.f32.xlu0 %v6659
        %v6661 = vpop.xlane.xlu0 %6660
        %v6662 = vmul.f32 %v6658, %v539
        %v6663 = vmul.f32 %v6661, %v539
        %v6664 = vadd.f32 %v6662, 1e-05
        %v6665 = vadd.f32 %v6663, 1e-05
        %v6666 = vrsqrt.pop %v6664
        %v6667 = vrsqrt.pop %v6665
        %v6668 = vmul.f32 %v6652, %v6666
        %v6669 = vmul.f32 %v6653, %v6667
        %v6670 = vlaneseq
        %v6671 = vshrl.u32 %v6670, 7
        %v6672 = vsub.s32 0, %v6671
        %v6673 = vrot.slane %v6642, %v6672
        %v6674 = vmul.f32 %v6668, %v6673
        %v6675 = vmul.f32 %v6669, %v6673
        %v6676 = vlaneseq
        %v6677 = vshrl.u32 %v6676, 7
        %v6678 = vsub.s32 0, %v6677
        %v6679 = vrot.slane %v6643, %v6678
        %v6680 = vadd.f32 %v6674, %v6679
        %v6681 = vadd.f32 %v6675, %v6679
        %s6682 = scalar_lea.vmem %s9, 96
        %v6683 = vld [vmem:[%s6682] sm:$0xff]
        %v6684 = vld [vmem:[%s6682 + $0x8] sm:$0xff]
        %v6685 = vld [vmem:[%s6682 + $0x10] sm:$0xff]
        %v6686 = vld [vmem:[%s6682 + $0x18] sm:$0xff]
        %v6687 = vld [vmem:[%s2 + $0x1e] sm:$0x1]
        %v6688 = vlaneseq
        %v6689 = vshrl.u32 %v6688, 7
        %v6690 = vsub.s32 0, %v6689
        %v6691 = vrot.slane %v6687, %v6690
        %v6693 = vsel %vm532, %v6680, 0
        %v6696 = vsel %vm532, %v6681, 0
        %6698 = vmatprep.subr.mxu0 0.0
        %6699 = vmatpush1.msra.mxu0 0.0
        %6700 = vmatprep.subr.mxu0 0.0
        %6701 = vmatpush1.msra.mxu0 0.0
        %6702 = vmatprep.subr.mxu0 0.0
        %6703 = vmatpush1.msra.mxu0 0.0
        %6704 = vmatprep.subr.mxu0 0.0
        %6705 = vmatpush1.msra.mxu0 0.0
        %6706 = vmatprep.subr.mxu0 0.0
        %6707 = vmatpush1.msra.mxu0 0.0
        %6708 = vmatprep.subr.mxu0 0.0
        %6709 = vmatpush1.msra.mxu0 0.0
        %6710 = vmatprep.subr.mxu0 0.0
        %6711 = vmatpush1.msra.mxu0 0.0
        %6712 = vmatprep.subr.mxu0 0.0
        %6713 = vmatpush1.msra.mxu0 0.0
        %6714 = vmatprep.subr.mxu0 0.0
        %6715 = vmatpush1.msra.mxu0 0.0
        %6716 = vmatprep.subr.mxu0 0.0
        %6717 = vmatpush1.msra.mxu0 0.0
        %6718 = vmatprep.subr.mxu0 0.0
        %6719 = vmatpush1.msra.mxu0 0.0
        %6720 = vmatprep.subr.mxu0 0.0
        %6721 = vmatpush1.msra.mxu0 0.0
        %6722 = vmatprep.subr.mxu0 0.0
        %6723 = vmatpush1.msra.mxu0 %v6686
        %6724 = vmatprep.subr.mxu0 0.0
        %6725 = vmatpush1.msra.mxu0 %v6685
        %6726 = vmatprep.subr.mxu0 0.0
        %6727 = vmatpush1.msra.mxu0 %v6684
        %6728 = vmatprep.subr.mxu0 0.0
        %6729 = vmatpush1.msra.mxu0 %v6683
        %6730 = vmatprep.subr.mxu0 0.0
        %6731 = vmatpush2.msra.mxu0 0.0
        %6732 = vmatprep.subr.mxu0 0.0
        %6733 = vmatpush2.msra.mxu0 0.0
        %6734 = vmatprep.subr.mxu0 0.0
        %6735 = vmatpush2.msra.mxu0 0.0
        %6736 = vmatprep.subr.mxu0 0.0
        %6737 = vmatpush2.msra.mxu0 0.0
        %6738 = vmatprep.subr.mxu0 0.0
        %6739 = vmatpush2.msra.mxu0 0.0
        %6740 = vmatprep.subr.mxu0 0.0
        %6741 = vmatpush2.msra.mxu0 0.0
        %6742 = vmatprep.subr.mxu0 0.0
        %6743 = vmatpush2.msra.mxu0 0.0
        %6744 = vmatprep.subr.mxu0 0.0
        %6745 = vmatpush2.msra.mxu0 0.0
        %6746 = vmatprep.subr.mxu0 0.0
        %6747 = vmatpush2.msra.mxu0 0.0
        %6748 = vmatprep.subr.mxu0 0.0
        %6749 = vmatpush2.msra.mxu0 0.0
        %6750 = vmatprep.subr.mxu0 0.0
        %6751 = vmatpush2.msra.mxu0 0.0
        %6752 = vmatprep.subr.mxu0 0.0
        %6753 = vmatpush2.msra.mxu0 0.0
        %6754 = vmatprep.subr.mxu0 0.0
        %6755 = vmatpush2.msra.mxu0 0.0
        %6756 = vmatprep.subr.mxu0 0.0
        %6757 = vmatpush2.msra.mxu0 0.0
        %6758 = vmatprep.subr.mxu0 0.0
        %6759 = vmatpush2.msra.mxu0 0.0
        %6760 = vmatprep.subr.mxu0 0.0
        %6761 = vmatpush2.msra.mxu0 0.0
        %6762 = vmatprep.mubr.f32.mxu0 0.0
        %6763 = vmatmul.mubr.f32.gmra.mxu0 %v6693
        %v6764 = vpop.f32.mrf.mxu0
        %v6765 = vadd.f32 %v6691, %v6764
        %v6766 = vpop.f32.mrf.mxu0
        %6767 = vmatprep.mubr.f32.mxu0 0.0
        %6768 = vmatmul.mubr.f32.gmra.mxu0 %v6696
        %v6769 = vpop.f32.mrf.mxu0
        %v6770 = vadd.f32 %v6691, %v6769
        %v6771 = vpop.f32.mrf.mxu0
        %6772 = vdwg.mxu0
        %s6773 = scalar_lea.vmem %s9, 128
        %v6774 = vld [vmem:[%s6773] sm:$0xff]
        %v6775 = vld [vmem:[%s6773 + $0x8] sm:$0xff]
        %v6776 = vld [vmem:[%s6773 + $0x10] sm:$0xff]
        %v6777 = vld [vmem:[%s6773 + $0x18] sm:$0xff]
        %v6778 = vld [vmem:[%s2 + $0x1f] sm:$0x1]
        %v6779 = vlaneseq
        %v6780 = vshrl.u32 %v6779, 7
        %v6781 = vsub.s32 0, %v6780
        %v6782 = vrot.slane %v6778, %v6781
        %6783 = vmatprep.subr.mxu0 0.0
        %6784 = vmatpush1.msra.mxu0 0.0
        %6785 = vmatprep.subr.mxu0 0.0
        %6786 = vmatpush1.msra.mxu0 0.0
        %6787 = vmatprep.subr.mxu0 0.0
        %6788 = vmatpush1.msra.mxu0 0.0
        %6789 = vmatprep.subr.mxu0 0.0
        %6790 = vmatpush1.msra.mxu0 0.0
        %6791 = vmatprep.subr.mxu0 0.0
        %6792 = vmatpush1.msra.mxu0 0.0
        %6793 = vmatprep.subr.mxu0 0.0
        %6794 = vmatpush1.msra.mxu0 0.0
        %6795 = vmatprep.subr.mxu0 0.0
        %6796 = vmatpush1.msra.mxu0 0.0
        %6797 = vmatprep.subr.mxu0 0.0
        %6798 = vmatpush1.msra.mxu0 0.0
        %6799 = vmatprep.subr.mxu0 0.0
        %6800 = vmatpush1.msra.mxu0 0.0
        %6801 = vmatprep.subr.mxu0 0.0
        %6802 = vmatpush1.msra.mxu0 0.0
        %6803 = vmatprep.subr.mxu0 0.0
        %6804 = vmatpush1.msra.mxu0 0.0
        %6805 = vmatprep.subr.mxu0 0.0
        %6806 = vmatpush1.msra.mxu0 0.0
        %6807 = vmatprep.subr.mxu0 0.0
        %6808 = vmatpush1.msra.mxu0 %v6777
        %6809 = vmatprep.subr.mxu0 0.0
        %6810 = vmatpush1.msra.mxu0 %v6776
        %6811 = vmatprep.subr.mxu0 0.0
        %6812 = vmatpush1.msra.mxu0 %v6775
        %6813 = vmatprep.subr.mxu0 0.0
        %6814 = vmatpush1.msra.mxu0 %v6774
        %6815 = vmatprep.subr.mxu0 0.0
        %6816 = vmatpush2.msra.mxu0 0.0
        %6817 = vmatprep.subr.mxu0 0.0
        %6818 = vmatpush2.msra.mxu0 0.0
        %6819 = vmatprep.subr.mxu0 0.0
        %6820 = vmatpush2.msra.mxu0 0.0
        %6821 = vmatprep.subr.mxu0 0.0
        %6822 = vmatpush2.msra.mxu0 0.0
        %6823 = vmatprep.subr.mxu0 0.0
        %6824 = vmatpush2.msra.mxu0 0.0
        %6825 = vmatprep.subr.mxu0 0.0
        %6826 = vmatpush2.msra.mxu0 0.0
        %6827 = vmatprep.subr.mxu0 0.0
        %6828 = vmatpush2.msra.mxu0 0.0
        %6829 = vmatprep.subr.mxu0 0.0
        %6830 = vmatpush2.msra.mxu0 0.0
        %6831 = vmatprep.subr.mxu0 0.0
        %6832 = vmatpush2.msra.mxu0 0.0
        %6833 = vmatprep.subr.mxu0 0.0
        %6834 = vmatpush2.msra.mxu0 0.0
        %6835 = vmatprep.subr.mxu0 0.0
        %6836 = vmatpush2.msra.mxu0 0.0
        %6837 = vmatprep.subr.mxu0 0.0
        %6838 = vmatpush2.msra.mxu0 0.0
        %6839 = vmatprep.subr.mxu0 0.0
        %6840 = vmatpush2.msra.mxu0 0.0
        %6841 = vmatprep.subr.mxu0 0.0
        %6842 = vmatpush2.msra.mxu0 0.0
        %6843 = vmatprep.subr.mxu0 0.0
        %6844 = vmatpush2.msra.mxu0 0.0
        %6845 = vmatprep.subr.mxu0 0.0
        %6846 = vmatpush2.msra.mxu0 0.0
        %6847 = vmatprep.mubr.f32.mxu0 0.0
        %6848 = vmatmul.mubr.f32.gmra.mxu0 %v6693
        %v6849 = vpop.f32.mrf.mxu0
        %v6850 = vadd.f32 %v6782, %v6849
        %v6851 = vpop.f32.mrf.mxu0
        %6852 = vmatprep.mubr.f32.mxu0 0.0
        %6853 = vmatmul.mubr.f32.gmra.mxu0 %v6696
        %v6854 = vpop.f32.mrf.mxu0
        %v6855 = vadd.f32 %v6782, %v6854
        %v6856 = vpop.f32.mrf.mxu0
        %6857 = vdwg.mxu0
        %v6858 = vxor.u32 %v6850, 2147483648
        %v6859 = vxor.u32 %v6855, 2147483648
        %v6860 = vmul.f32 %v6858, 1.442695
        %v6861 = vpow.pop %v6860
        %v6862 = vmul.f32 %v6859, 1.442695
        %v6863 = vpow.pop %v6862
        %v6864 = vadd.f32 %v6861, 1.0
        %v6865 = vadd.f32 %v6863, 1.0
        %v6866 = vrcp.pop %v6864
        %v6867 = vmul.f32 1.0, %v6866
        %v6868 = vrcp.pop %v6865
        %v6869 = vmul.f32 1.0, %v6868
        %v6870 = vmul.f32 %v6765, %v6867
        %v6871 = vmul.f32 %v6770, %v6869
        %v6874 = vrot.slane %v6870, 1
        %v6875 = vrot.slane %v6871, 1
        %v6876 = vsel %vm3228, %v6874, %v6875
        %v6880 = vsel %vm3228, 0.0, %v6874
        %v6881 = vsel %vm3228, %v6875, 0.0
        %v6882 = vld [vmem:[%s2 + $0x20] sm:$0x1]
        %v6883 = vlaneseq
        %v6884 = vshrl.u32 %v6883, 7
        %v6885 = vsub.s32 0, %v6884
        %v6886 = vrot.slane %v6882, %v6885
        %v6887 = vadd.f32 %v6886, 0.0
        %s6888 = scalar_lea.vmem %s10, 32
        %v6889 = vld [vmem:[%s6888] sm:$0x1]
        %v6890 = vlaneseq
        %v6891 = vshrl.u32 %v6890, 7
        %v6892 = vsub.s32 0, %v6891
        %v6893 = vrot.slane %v6889, %v6892
        %v6894 = vmul.f32 %v6893, 0.0
        %v6895 = vmul.f32 %v6880, %v6893
        %v6896 = vadd.f32 %v6887, %v6894
        %v6897 = vadd.f32 %v6887, %v6895
        %v6898 = vld [vmem:[%s6888 + $0x1] sm:$0x1]
        %v6899 = vlaneseq
        %v6900 = vshrl.u32 %v6899, 7
        %v6901 = vsub.s32 0, %v6900
        %v6902 = vrot.slane %v6898, %v6901
        %v6903 = vmul.f32 %v6902, 0.0
        %v6904 = vmul.f32 %v6880, %v6902
        %v6905 = vmul.f32 %v6876, %v6902
        %v6909 = vrot.slane %v6903, 1
        %v6910 = vrot.slane %v6904, 1
        %v6911 = vsel %vm3228, %v6909, %v6910
        %v6912 = vrot.slane %v6905, 1
        %v6913 = vsel %vm3228, %v6910, %v6912
        %v6916 = vadd.f32 %v6896, %v6911
        %v6917 = vadd.f32 %v6897, %v6913
        %v6918 = vld [vmem:[%s6888 + $0x2] sm:$0x1]
        %v6919 = vlaneseq
        %v6920 = vshrl.u32 %v6919, 7
        %v6921 = vsub.s32 0, %v6920
        %v6922 = vrot.slane %v6918, %v6921
        %v6923 = vmul.f32 %v6922, 0.0
        %v6924 = vmul.f32 %v6880, %v6922
        %v6925 = vmul.f32 %v6876, %v6922
        %v6929 = vrot.slane %v6923, 2
        %v6930 = vrot.slane %v6924, 2
        %v6931 = vsel %vm3283, %v6929, %v6930
        %v6932 = vrot.slane %v6925, 2
        %v6933 = vsel %vm3283, %v6930, %v6932
        %v6936 = vadd.f32 %v6916, %v6931
        %v6937 = vadd.f32 %v6917, %v6933
        %v6938 = vld [vmem:[%s6888 + $0x3] sm:$0x1]
        %v6939 = vlaneseq
        %v6940 = vshrl.u32 %v6939, 7
        %v6941 = vsub.s32 0, %v6940
        %v6942 = vrot.slane %v6938, %v6941
        %v6943 = vmul.f32 %v6942, 0.0
        %v6944 = vmul.f32 %v6880, %v6942
        %v6945 = vmul.f32 %v6876, %v6942
        %v6949 = vrot.slane %v6943, 3
        %v6950 = vrot.slane %v6944, 3
        %v6951 = vsel %vm3304, %v6949, %v6950
        %v6952 = vrot.slane %v6945, 3
        %v6953 = vsel %vm3304, %v6950, %v6952
        %v6956 = vadd.f32 %v6936, %v6951
        %v6957 = vadd.f32 %v6937, %v6953
        %v6958 = vld [vmem:[%s6888 + $0x4] sm:$0x1]
        %v6959 = vlaneseq
        %v6960 = vshrl.u32 %v6959, 7
        %v6961 = vsub.s32 0, %v6960
        %v6962 = vrot.slane %v6958, %v6961
        %v6963 = vmul.f32 %v6962, 0.0
        %v6964 = vmul.f32 %v6880, %v6962
        %v6965 = vmul.f32 %v6876, %v6962
        %v6969 = vrot.slane %v6963, 4
        %v6970 = vrot.slane %v6964, 4
        %v6971 = vsel %vm3325, %v6969, %v6970
        %v6972 = vrot.slane %v6965, 4
        %v6973 = vsel %vm3325, %v6970, %v6972
        %v6976 = vadd.f32 %v6956, %v6971
        %v6977 = vadd.f32 %v6957, %v6973
        %v6978 = vld [vmem:[%s6888 + $0x5] sm:$0x1]
        %v6979 = vlaneseq
        %v6980 = vshrl.u32 %v6979, 7
        %v6981 = vsub.s32 0, %v6980
        %v6982 = vrot.slane %v6978, %v6981
        %v6983 = vmul.f32 %v6982, 0.0
        %v6984 = vmul.f32 %v6880, %v6982
        %v6985 = vmul.f32 %v6876, %v6982
        %v6989 = vrot.slane %v6983, 5
        %v6990 = vrot.slane %v6984, 5
        %v6991 = vsel %vm3346, %v6989, %v6990
        %v6992 = vrot.slane %v6985, 5
        %v6993 = vsel %vm3346, %v6990, %v6992
        %v6996 = vadd.f32 %v6976, %v6991
        %v6997 = vadd.f32 %v6977, %v6993
        %v6998 = vld [vmem:[%s6888 + $0x6] sm:$0x1]
        %v6999 = vlaneseq
        %v7000 = vshrl.u32 %v6999, 7
        %v7001 = vsub.s32 0, %v7000
        %v7002 = vrot.slane %v6998, %v7001
        %v7003 = vmul.f32 %v7002, 0.0
        %v7004 = vmul.f32 %v6880, %v7002
        %v7005 = vmul.f32 %v6876, %v7002
        %v7009 = vrot.slane %v7003, 6
        %v7010 = vrot.slane %v7004, 6
        %v7011 = vsel %vm3367, %v7009, %v7010
        %v7012 = vrot.slane %v7005, 6
        %v7013 = vsel %vm3367, %v7010, %v7012
        %v7016 = vadd.f32 %v6996, %v7011
        %v7017 = vadd.f32 %v6997, %v7013
        %v7018 = vld [vmem:[%s6888 + $0x7] sm:$0x1]
        %v7019 = vlaneseq
        %v7020 = vshrl.u32 %v7019, 7
        %v7021 = vsub.s32 0, %v7020
        %v7022 = vrot.slane %v7018, %v7021
        %v7023 = vmul.f32 %v7022, 0.0
        %v7024 = vmul.f32 %v6880, %v7022
        %v7025 = vmul.f32 %v6876, %v7022
        %v7029 = vrot.slane %v7023, 7
        %v7030 = vrot.slane %v7024, 7
        %v7031 = vsel %vm3388, %v7029, %v7030
        %v7032 = vrot.slane %v7025, 7
        %v7033 = vsel %vm3388, %v7030, %v7032
        %v7036 = vadd.f32 %v7016, %v7031
        %v7037 = vadd.f32 %v7017, %v7033
        %v7038 = vld [vmem:[%s6888 + $0x8] sm:$0x1]
        %v7039 = vlaneseq
        %v7040 = vshrl.u32 %v7039, 7
        %v7041 = vsub.s32 0, %v7040
        %v7042 = vrot.slane %v7038, %v7041
        %v7043 = vmul.f32 %v6880, %v7042
        %v7044 = vmul.f32 %v6876, %v7042
        %v7045 = vadd.f32 %v7036, %v7043
        %v7046 = vadd.f32 %v7037, %v7044
        %v7047 = vld [vmem:[%s6888 + $0x9] sm:$0x1]
        %v7048 = vlaneseq
        %v7049 = vshrl.u32 %v7048, 7
        %v7050 = vsub.s32 0, %v7049
        %v7051 = vrot.slane %v7047, %v7050
        %v7052 = vmul.f32 %v6880, %v7051
        %v7053 = vmul.f32 %v6876, %v7051
        %v7054 = vmul.f32 %v6881, %v7051
        %v7058 = vrot.slane %v7052, 1
        %v7059 = vrot.slane %v7053, 1
        %v7060 = vsel %vm3228, %v7058, %v7059
        %v7061 = vrot.slane %v7054, 1
        %v7062 = vsel %vm3228, %v7059, %v7061
        %v7065 = vadd.f32 %v7045, %v7060
        %v7066 = vadd.f32 %v7046, %v7062
        %v7067 = vld [vmem:[%s6888 + $0xa] sm:$0x1]
        %v7068 = vlaneseq
        %v7069 = vshrl.u32 %v7068, 7
        %v7070 = vsub.s32 0, %v7069
        %v7071 = vrot.slane %v7067, %v7070
        %v7072 = vmul.f32 %v6880, %v7071
        %v7073 = vmul.f32 %v6876, %v7071
        %v7074 = vmul.f32 %v6881, %v7071
        %v7078 = vrot.slane %v7072, 2
        %v7079 = vrot.slane %v7073, 2
        %v7080 = vsel %vm3283, %v7078, %v7079
        %v7081 = vrot.slane %v7074, 2
        %v7082 = vsel %vm3283, %v7079, %v7081
        %v7085 = vadd.f32 %v7065, %v7080
        %v7086 = vadd.f32 %v7066, %v7082
        %v7087 = vld [vmem:[%s6888 + $0xb] sm:$0x1]
        %v7088 = vlaneseq
        %v7089 = vshrl.u32 %v7088, 7
        %v7090 = vsub.s32 0, %v7089
        %v7091 = vrot.slane %v7087, %v7090
        %v7092 = vmul.f32 %v6880, %v7091
        %v7093 = vmul.f32 %v6876, %v7091
        %v7094 = vmul.f32 %v6881, %v7091
        %v7098 = vrot.slane %v7092, 3
        %v7099 = vrot.slane %v7093, 3
        %v7100 = vsel %vm3304, %v7098, %v7099
        %v7101 = vrot.slane %v7094, 3
        %v7102 = vsel %vm3304, %v7099, %v7101
        %v7105 = vadd.f32 %v7085, %v7100
        %v7106 = vadd.f32 %v7086, %v7102
        %v7107 = vld [vmem:[%s6888 + $0xc] sm:$0x1]
        %v7108 = vlaneseq
        %v7109 = vshrl.u32 %v7108, 7
        %v7110 = vsub.s32 0, %v7109
        %v7111 = vrot.slane %v7107, %v7110
        %v7112 = vmul.f32 %v6880, %v7111
        %v7113 = vmul.f32 %v6876, %v7111
        %v7114 = vmul.f32 %v6881, %v7111
        %v7118 = vrot.slane %v7112, 4
        %v7119 = vrot.slane %v7113, 4
        %v7120 = vsel %vm3325, %v7118, %v7119
        %v7121 = vrot.slane %v7114, 4
        %v7122 = vsel %vm3325, %v7119, %v7121
        %v7125 = vadd.f32 %v7105, %v7120
        %v7126 = vadd.f32 %v7106, %v7122
        %v7127 = vld [vmem:[%s6888 + $0xd] sm:$0x1]
        %v7128 = vlaneseq
        %v7129 = vshrl.u32 %v7128, 7
        %v7130 = vsub.s32 0, %v7129
        %v7131 = vrot.slane %v7127, %v7130
        %v7132 = vmul.f32 %v6880, %v7131
        %v7133 = vmul.f32 %v6876, %v7131
        %v7134 = vmul.f32 %v6881, %v7131
        %v7138 = vrot.slane %v7132, 5
        %v7139 = vrot.slane %v7133, 5
        %v7140 = vsel %vm3346, %v7138, %v7139
        %v7141 = vrot.slane %v7134, 5
        %v7142 = vsel %vm3346, %v7139, %v7141
        %v7145 = vadd.f32 %v7125, %v7140
        %v7146 = vadd.f32 %v7126, %v7142
        %v7147 = vld [vmem:[%s6888 + $0xe] sm:$0x1]
        %v7148 = vlaneseq
        %v7149 = vshrl.u32 %v7148, 7
        %v7150 = vsub.s32 0, %v7149
        %v7151 = vrot.slane %v7147, %v7150
        %v7152 = vmul.f32 %v6880, %v7151
        %v7153 = vmul.f32 %v6876, %v7151
        %v7154 = vmul.f32 %v6881, %v7151
        %v7158 = vrot.slane %v7152, 6
        %v7159 = vrot.slane %v7153, 6
        %v7160 = vsel %vm3367, %v7158, %v7159
        %v7161 = vrot.slane %v7154, 6
        %v7162 = vsel %vm3367, %v7159, %v7161
        %v7165 = vadd.f32 %v7145, %v7160
        %v7166 = vadd.f32 %v7146, %v7162
        %v7167 = vld [vmem:[%s6888 + $0xf] sm:$0x1]
        %v7168 = vlaneseq
        %v7169 = vshrl.u32 %v7168, 7
        %v7170 = vsub.s32 0, %v7169
        %v7171 = vrot.slane %v7167, %v7170
        %v7172 = vmul.f32 %v6880, %v7171
        %v7173 = vmul.f32 %v6876, %v7171
        %v7174 = vmul.f32 %v6881, %v7171
        %v7178 = vrot.slane %v7172, 7
        %v7179 = vrot.slane %v7173, 7
        %v7180 = vsel %vm3388, %v7178, %v7179
        %v7181 = vrot.slane %v7174, 7
        %v7182 = vsel %vm3388, %v7179, %v7181
        %v7185 = vadd.f32 %v7165, %v7180
        %v7186 = vadd.f32 %v7166, %v7182
        %v7187 = vld [vmem:[%s6888 + $0x10] sm:$0x1]
        %v7188 = vlaneseq
        %v7189 = vshrl.u32 %v7188, 7
        %v7190 = vsub.s32 0, %v7189
        %v7191 = vrot.slane %v7187, %v7190
        %v7192 = vmul.f32 %v6876, %v7191
        %v7193 = vmul.f32 %v6881, %v7191
        %v7194 = vadd.f32 %v7185, %v7192
        %v7195 = vadd.f32 %v7186, %v7193
        %v7196 = vld [vmem:[%s6888 + $0x11] sm:$0x1]
        %v7197 = vlaneseq
        %v7198 = vshrl.u32 %v7197, 7
        %v7199 = vsub.s32 0, %v7198
        %v7200 = vrot.slane %v7196, %v7199
        %v7201 = vmul.f32 %v6876, %v7200
        %v7202 = vmul.f32 %v6881, %v7200
        %v7203 = vmul.f32 %v7200, 0.0
        %v7207 = vrot.slane %v7201, 1
        %v7208 = vrot.slane %v7202, 1
        %v7209 = vsel %vm3228, %v7207, %v7208
        %v7210 = vrot.slane %v7203, 1
        %v7211 = vsel %vm3228, %v7208, %v7210
        %v7214 = vadd.f32 %v7194, %v7209
        %v7215 = vadd.f32 %v7195, %v7211
        %v7216 = vld [vmem:[%s6888 + $0x12] sm:$0x1]
        %v7217 = vlaneseq
        %v7218 = vshrl.u32 %v7217, 7
        %v7219 = vsub.s32 0, %v7218
        %v7220 = vrot.slane %v7216, %v7219
        %v7221 = vmul.f32 %v6876, %v7220
        %v7222 = vmul.f32 %v6881, %v7220
        %v7223 = vmul.f32 %v7220, 0.0
        %v7227 = vrot.slane %v7221, 2
        %v7228 = vrot.slane %v7222, 2
        %v7229 = vsel %vm3283, %v7227, %v7228
        %v7230 = vrot.slane %v7223, 2
        %v7231 = vsel %vm3283, %v7228, %v7230
        %v7234 = vadd.f32 %v7214, %v7229
        %v7235 = vadd.f32 %v7215, %v7231
        %v7236 = vld [vmem:[%s6888 + $0x13] sm:$0x1]
        %v7237 = vlaneseq
        %v7238 = vshrl.u32 %v7237, 7
        %v7239 = vsub.s32 0, %v7238
        %v7240 = vrot.slane %v7236, %v7239
        %v7241 = vmul.f32 %v6876, %v7240
        %v7242 = vmul.f32 %v6881, %v7240
        %v7243 = vmul.f32 %v7240, 0.0
        %v7247 = vrot.slane %v7241, 3
        %v7248 = vrot.slane %v7242, 3
        %v7249 = vsel %vm3304, %v7247, %v7248
        %v7250 = vrot.slane %v7243, 3
        %v7251 = vsel %vm3304, %v7248, %v7250
        %v7254 = vadd.f32 %v7234, %v7249
        %v7255 = vadd.f32 %v7235, %v7251
        %v7256 = vld [vmem:[%s6888 + $0x14] sm:$0x1]
        %v7257 = vlaneseq
        %v7258 = vshrl.u32 %v7257, 7
        %v7259 = vsub.s32 0, %v7258
        %v7260 = vrot.slane %v7256, %v7259
        %v7261 = vmul.f32 %v6876, %v7260
        %v7262 = vmul.f32 %v6881, %v7260
        %v7263 = vmul.f32 %v7260, 0.0
        %v7267 = vrot.slane %v7261, 4
        %v7268 = vrot.slane %v7262, 4
        %v7269 = vsel %vm3325, %v7267, %v7268
        %v7270 = vrot.slane %v7263, 4
        %v7271 = vsel %vm3325, %v7268, %v7270
        %v7274 = vadd.f32 %v7254, %v7269
        %v7275 = vadd.f32 %v7255, %v7271
        %v7276 = vld [vmem:[%s6888 + $0x15] sm:$0x1]
        %v7277 = vlaneseq
        %v7278 = vshrl.u32 %v7277, 7
        %v7279 = vsub.s32 0, %v7278
        %v7280 = vrot.slane %v7276, %v7279
        %v7281 = vmul.f32 %v6876, %v7280
        %v7282 = vmul.f32 %v6881, %v7280
        %v7283 = vmul.f32 %v7280, 0.0
        %v7287 = vrot.slane %v7281, 5
        %v7288 = vrot.slane %v7282, 5
        %v7289 = vsel %vm3346, %v7287, %v7288
        %v7290 = vrot.slane %v7283, 5
        %v7291 = vsel %vm3346, %v7288, %v7290
        %v7294 = vadd.f32 %v7274, %v7289
        %v7295 = vadd.f32 %v7275, %v7291
        %v7296 = vld [vmem:[%s6888 + $0x16] sm:$0x1]
        %v7297 = vlaneseq
        %v7298 = vshrl.u32 %v7297, 7
        %v7299 = vsub.s32 0, %v7298
        %v7300 = vrot.slane %v7296, %v7299
        %v7301 = vmul.f32 %v6876, %v7300
        %v7302 = vmul.f32 %v6881, %v7300
        %v7303 = vmul.f32 %v7300, 0.0
        %v7307 = vrot.slane %v7301, 6
        %v7308 = vrot.slane %v7302, 6
        %v7309 = vsel %vm3367, %v7307, %v7308
        %v7310 = vrot.slane %v7303, 6
        %v7311 = vsel %vm3367, %v7308, %v7310
        %v7314 = vadd.f32 %v7294, %v7309
        %v7315 = vadd.f32 %v7295, %v7311
        %v7316 = vld [vmem:[%s6888 + $0x17] sm:$0x1]
        %v7317 = vlaneseq
        %v7318 = vshrl.u32 %v7317, 7
        %v7319 = vsub.s32 0, %v7318
        %v7320 = vrot.slane %v7316, %v7319
        %v7321 = vmul.f32 %v6876, %v7320
        %v7322 = vmul.f32 %v6881, %v7320
        %v7323 = vmul.f32 %v7320, 0.0
        %v7327 = vrot.slane %v7321, 7
        %v7328 = vrot.slane %v7322, 7
        %v7329 = vsel %vm3388, %v7327, %v7328
        %v7330 = vrot.slane %v7323, 7
        %v7331 = vsel %vm3388, %v7328, %v7330
        %v7334 = vadd.f32 %v7314, %v7329
        %v7335 = vadd.f32 %v7315, %v7331
        %v7336 = vld [vmem:[%s6888 + $0x18] sm:$0x1]
        %v7337 = vlaneseq
        %v7338 = vshrl.u32 %v7337, 7
        %v7339 = vsub.s32 0, %v7338
        %v7340 = vrot.slane %v7336, %v7339
        %v7341 = vmul.f32 %v6881, %v7340
        %v7342 = vmul.f32 %v7340, 0.0
        %v7343 = vadd.f32 %v7334, %v7341
        %v7344 = vadd.f32 %v7335, %v7342
        %v7345 = vld [vmem:[%s6888 + $0x19] sm:$0x1]
        %v7346 = vlaneseq
        %v7347 = vshrl.u32 %v7346, 7
        %v7348 = vsub.s32 0, %v7347
        %v7349 = vrot.slane %v7345, %v7348
        %v7350 = vmul.f32 %v6881, %v7349
        %v7351 = vmul.f32 %v7349, 0.0
        %v7354 = vrot.slane %v7350, 1
        %v7355 = vrot.slane %v7351, 1
        %v7356 = vsel %vm3228, %v7354, %v7355
        %v7357 = vsel %vm3228, %v7355, %v7355
        %v7360 = vadd.f32 %v7343, %v7356
        %v7361 = vadd.f32 %v7344, %v7357
        %v7362 = vld [vmem:[%s6888 + $0x1a] sm:$0x1]
        %v7363 = vlaneseq
        %v7364 = vshrl.u32 %v7363, 7
        %v7365 = vsub.s32 0, %v7364
        %v7366 = vrot.slane %v7362, %v7365
        %v7367 = vmul.f32 %v6881, %v7366
        %v7368 = vmul.f32 %v7366, 0.0
        %v7371 = vrot.slane %v7367, 2
        %v7372 = vrot.slane %v7368, 2
        %v7373 = vsel %vm3283, %v7371, %v7372
        %v7374 = vsel %vm3283, %v7372, %v7372
        %v7377 = vadd.f32 %v7360, %v7373
        %v7378 = vadd.f32 %v7361, %v7374
        %v7379 = vld [vmem:[%s6888 + $0x1b] sm:$0x1]
        %v7380 = vlaneseq
        %v7381 = vshrl.u32 %v7380, 7
        %v7382 = vsub.s32 0, %v7381
        %v7383 = vrot.slane %v7379, %v7382
        %v7384 = vmul.f32 %v6881, %v7383
        %v7385 = vmul.f32 %v7383, 0.0
        %v7388 = vrot.slane %v7384, 3
        %v7389 = vrot.slane %v7385, 3
        %v7390 = vsel %vm3304, %v7388, %v7389
        %v7391 = vsel %vm3304, %v7389, %v7389
        %v7394 = vadd.f32 %v7377, %v7390
        %v7395 = vadd.f32 %v7378, %v7391
        %v7396 = vld [vmem:[%s6888 + $0x1c] sm:$0x1]
        %v7397 = vlaneseq
        %v7398 = vshrl.u32 %v7397, 7
        %v7399 = vsub.s32 0, %v7398
        %v7400 = vrot.slane %v7396, %v7399
        %v7401 = vmul.f32 %v6881, %v7400
        %v7402 = vmul.f32 %v7400, 0.0
        %v7405 = vrot.slane %v7401, 4
        %v7406 = vrot.slane %v7402, 4
        %v7407 = vsel %vm3325, %v7405, %v7406
        %v7408 = vsel %vm3325, %v7406, %v7406
        %v7411 = vadd.f32 %v7394, %v7407
        %v7412 = vadd.f32 %v7395, %v7408
        %v7413 = vld [vmem:[%s6888 + $0x1d] sm:$0x1]
        %v7414 = vlaneseq
        %v7415 = vshrl.u32 %v7414, 7
        %v7416 = vsub.s32 0, %v7415
        %v7417 = vrot.slane %v7413, %v7416
        %v7418 = vmul.f32 %v6881, %v7417
        %v7419 = vmul.f32 %v7417, 0.0
        %v7422 = vrot.slane %v7418, 5
        %v7423 = vrot.slane %v7419, 5
        %v7424 = vsel %vm3346, %v7422, %v7423
        %v7425 = vsel %vm3346, %v7423, %v7423
        %v7428 = vadd.f32 %v7411, %v7424
        %v7429 = vadd.f32 %v7412, %v7425
        %v7430 = vld [vmem:[%s6888 + $0x1e] sm:$0x1]
        %v7431 = vlaneseq
        %v7432 = vshrl.u32 %v7431, 7
        %v7433 = vsub.s32 0, %v7432
        %v7434 = vrot.slane %v7430, %v7433
        %v7435 = vmul.f32 %v6881, %v7434
        %v7436 = vmul.f32 %v7434, 0.0
        %v7439 = vrot.slane %v7435, 6
        %v7440 = vrot.slane %v7436, 6
        %v7441 = vsel %vm3367, %v7439, %v7440
        %v7442 = vsel %vm3367, %v7440, %v7440
        %v7445 = vadd.f32 %v7428, %v7441
        %v7446 = vadd.f32 %v7429, %v7442
        %v7447 = vld [vmem:[%s2 + $0x21] sm:$0x1]
        %v7448 = vlaneseq
        %v7449 = vshrl.u32 %v7448, 7
        %v7450 = vsub.s32 0, %v7449
        %v7451 = vrot.slane %v7447, %v7450
        %v7452 = vmul.f32 %v7445, %v7451
        %v7453 = vmul.f32 %v7446, %v7451
        %v7454 = vld [vmem:[%s2 + $0x22] sm:$0x1]
        %v7455 = vlaneseq
        %v7456 = vshrl.u32 %v7455, 7
        %v7457 = vsub.s32 0, %v7456
        %v7458 = vrot.slane %v7454, %v7457
        %v7459 = vadd.f32 %v7452, %v7458
        %v7460 = vadd.f32 %v7453, %v7458
        %v7461 = vxor.u32 %v7459, 2147483648
        %v7462 = vxor.u32 %v7460, 2147483648
        %v7463 = vmul.f32 %v7461, 1.442695
        %v7464 = vpow.pop %v7463
        %v7465 = vmul.f32 %v7462, 1.442695
        %v7466 = vpow.pop %v7465
        %v7467 = vadd.f32 %v7464, 1.0
        %v7468 = vadd.f32 %v7466, 1.0
        %v7469 = vrcp.pop %v7467
        %v7470 = vmul.f32 1.0, %v7469
        %v7471 = vrcp.pop %v7468
        %v7472 = vmul.f32 1.0, %v7471
        %v7473 = vmul.f32 %v7459, %v7470
        %v7474 = vmul.f32 %v7460, %v7472
        %s7475 = scalar_lea.vmem %s9, 160
        %v7476 = vld [vmem:[%s7475] sm:$0xff]
        %v7477 = vld [vmem:[%s7475 + $0x8] sm:$0xff]
        %v7478 = vld [vmem:[%s7475 + $0x10] sm:$0xff]
        %v7479 = vld [vmem:[%s7475 + $0x18] sm:$0xff]
        %v7480 = vld [vmem:[%s2 + $0x23] sm:$0x1]
        %v7481 = vlaneseq
        %v7482 = vshrl.u32 %v7481, 7
        %v7483 = vsub.s32 0, %v7482
        %v7484 = vrot.slane %v7480, %v7483
        %v7486 = vsel %vm532, %v7473, 0
        %v7489 = vsel %vm532, %v7474, 0
        %7491 = vmatprep.subr.mxu0 0.0
        %7492 = vmatpush1.msra.mxu0 0.0
        %7493 = vmatprep.subr.mxu0 0.0
        %7494 = vmatpush1.msra.mxu0 0.0
        %7495 = vmatprep.subr.mxu0 0.0
        %7496 = vmatpush1.msra.mxu0 0.0
        %7497 = vmatprep.subr.mxu0 0.0
        %7498 = vmatpush1.msra.mxu0 0.0
        %7499 = vmatprep.subr.mxu0 0.0
        %7500 = vmatpush1.msra.mxu0 0.0
        %7501 = vmatprep.subr.mxu0 0.0
        %7502 = vmatpush1.msra.mxu0 0.0
        %7503 = vmatprep.subr.mxu0 0.0
        %7504 = vmatpush1.msra.mxu0 0.0
        %7505 = vmatprep.subr.mxu0 0.0
        %7506 = vmatpush1.msra.mxu0 0.0
        %7507 = vmatprep.subr.mxu0 0.0
        %7508 = vmatpush1.msra.mxu0 0.0
        %7509 = vmatprep.subr.mxu0 0.0
        %7510 = vmatpush1.msra.mxu0 0.0
        %7511 = vmatprep.subr.mxu0 0.0
        %7512 = vmatpush1.msra.mxu0 0.0
        %7513 = vmatprep.subr.mxu0 0.0
        %7514 = vmatpush1.msra.mxu0 0.0
        %7515 = vmatprep.subr.mxu0 0.0
        %7516 = vmatpush1.msra.mxu0 %v7479
        %7517 = vmatprep.subr.mxu0 0.0
        %7518 = vmatpush1.msra.mxu0 %v7478
        %7519 = vmatprep.subr.mxu0 0.0
        %7520 = vmatpush1.msra.mxu0 %v7477
        %7521 = vmatprep.subr.mxu0 0.0
        %7522 = vmatpush1.msra.mxu0 %v7476
        %7523 = vmatprep.subr.mxu0 0.0
        %7524 = vmatpush2.msra.mxu0 0.0
        %7525 = vmatprep.subr.mxu0 0.0
        %7526 = vmatpush2.msra.mxu0 0.0
        %7527 = vmatprep.subr.mxu0 0.0
        %7528 = vmatpush2.msra.mxu0 0.0
        %7529 = vmatprep.subr.mxu0 0.0
        %7530 = vmatpush2.msra.mxu0 0.0
        %7531 = vmatprep.subr.mxu0 0.0
        %7532 = vmatpush2.msra.mxu0 0.0
        %7533 = vmatprep.subr.mxu0 0.0
        %7534 = vmatpush2.msra.mxu0 0.0
        %7535 = vmatprep.subr.mxu0 0.0
        %7536 = vmatpush2.msra.mxu0 0.0
        %7537 = vmatprep.subr.mxu0 0.0
        %7538 = vmatpush2.msra.mxu0 0.0
        %7539 = vmatprep.subr.mxu0 0.0
        %7540 = vmatpush2.msra.mxu0 0.0
        %7541 = vmatprep.subr.mxu0 0.0
        %7542 = vmatpush2.msra.mxu0 0.0
        %7543 = vmatprep.subr.mxu0 0.0
        %7544 = vmatpush2.msra.mxu0 0.0
        %7545 = vmatprep.subr.mxu0 0.0
        %7546 = vmatpush2.msra.mxu0 0.0
        %7547 = vmatprep.subr.mxu0 0.0
        %7548 = vmatpush2.msra.mxu0 0.0
        %7549 = vmatprep.subr.mxu0 0.0
        %7550 = vmatpush2.msra.mxu0 0.0
        %7551 = vmatprep.subr.mxu0 0.0
        %7552 = vmatpush2.msra.mxu0 0.0
        %7553 = vmatprep.subr.mxu0 0.0
        %7554 = vmatpush2.msra.mxu0 0.0
        %7555 = vmatprep.mubr.f32.mxu0 0.0
        %7556 = vmatmul.mubr.f32.gmra.mxu0 %v7486
        %v7557 = vpop.f32.mrf.mxu0
        %v7558 = vadd.f32 %v7484, %v7557
        %v7559 = vpop.f32.mrf.mxu0
        %7560 = vmatprep.mubr.f32.mxu0 0.0
        %7561 = vmatmul.mubr.f32.gmra.mxu0 %v7489
        %v7562 = vpop.f32.mrf.mxu0
        %v7563 = vadd.f32 %v7484, %v7562
        %v7564 = vpop.f32.mrf.mxu0
        %7565 = vdwg.mxu0
        %v7566 = vadd.f32 %v6640, %v7558
        %v7567 = vadd.f32 %v6641, %v7563
        %v7568 = vld [vmem:[%s2 + $0x24] sm:$0x1]
        %v7569 = vld [vmem:[%s2 + $0x25] sm:$0x1]
        %v7570 = vsel %vm532, %v7566, 0.0
        %7571 = vadd.xlane.f32.xlu0 %v7570
        %v7572 = vpop.xlane.xlu0 %7571
        %v7573 = vsel %vm532, %v7567, 0.0
        %7574 = vadd.xlane.f32.xlu0 %v7573
        %v7575 = vpop.xlane.xlu0 %7574
        %v7576 = vmul.f32 %v7572, %v539
        %v7577 = vmul.f32 %v7575, %v539
        %v7578 = vsub.f32 %v7566, %v7576
        %v7579 = vsub.f32 %v7567, %v7577
        %v7580 = vmul.f32 %v7578, %v7578
        %v7581 = vmul.f32 %v7579, %v7579
        %v7582 = vsel %vm532, %v7580, 0.0
        %7583 = vadd.xlane.f32.xlu0 %v7582
        %v7584 = vpop.xlane.xlu0 %7583
        %v7585 = vsel %vm532, %v7581, 0.0
        %7586 = vadd.xlane.f32.xlu0 %v7585
        %v7587 = vpop.xlane.xlu0 %7586
        %v7588 = vmul.f32 %v7584, %v539
        %v7589 = vmul.f32 %v7587, %v539
        %v7590 = vadd.f32 %v7588, 1e-05
        %v7591 = vadd.f32 %v7589, 1e-05
        %v7592 = vrsqrt.pop %v7590
        %v7593 = vrsqrt.pop %v7591
        %v7594 = vmul.f32 %v7578, %v7592
        %v7595 = vmul.f32 %v7579, %v7593
        %v7596 = vlaneseq
        %v7597 = vshrl.u32 %v7596, 7
        %v7598 = vsub.s32 0, %v7597
        %v7599 = vrot.slane %v7568, %v7598
        %v7600 = vmul.f32 %v7594, %v7599
        %v7601 = vmul.f32 %v7595, %v7599
        %v7602 = vlaneseq
        %v7603 = vshrl.u32 %v7602, 7
        %v7604 = vsub.s32 0, %v7603
        %v7605 = vrot.slane %v7569, %v7604
        %v7606 = vadd.f32 %v7600, %v7605
        %v7607 = vadd.f32 %v7601, %v7605
        %s7608 = scalar_lea.vmem %s3, 96
        %v7609 = vld [vmem:[%s7608] sm:$0xff]
        %v7610 = vld [vmem:[%s7608 + $0x8] sm:$0xff]
        %v7611 = vld [vmem:[%s7608 + $0x10] sm:$0xff]
        %v7612 = vld [vmem:[%s7608 + $0x18] sm:$0xff]
        %v7613 = vld [vmem:[%s4 + $0x3] sm:$0x1]
        %v7614 = vlaneseq
        %v7615 = vshrl.u32 %v7614, 7
        %v7616 = vsub.s32 0, %v7615
        %v7617 = vrot.slane %v7613, %v7616
        %v7619 = vsel %vm532, %v7606, 0
        %v7622 = vsel %vm532, %v7607, 0
        %7624 = vmatprep.subr.mxu0 0.0
        %7625 = vmatpush1.msra.mxu0 0.0
        %7626 = vmatprep.subr.mxu0 0.0
        %7627 = vmatpush1.msra.mxu0 0.0
        %7628 = vmatprep.subr.mxu0 0.0
        %7629 = vmatpush1.msra.mxu0 0.0
        %7630 = vmatprep.subr.mxu0 0.0
        %7631 = vmatpush1.msra.mxu0 0.0
        %7632 = vmatprep.subr.mxu0 0.0
        %7633 = vmatpush1.msra.mxu0 0.0
        %7634 = vmatprep.subr.mxu0 0.0
        %7635 = vmatpush1.msra.mxu0 0.0
        %7636 = vmatprep.subr.mxu0 0.0
        %7637 = vmatpush1.msra.mxu0 0.0
        %7638 = vmatprep.subr.mxu0 0.0
        %7639 = vmatpush1.msra.mxu0 0.0
        %7640 = vmatprep.subr.mxu0 0.0
        %7641 = vmatpush1.msra.mxu0 0.0
        %7642 = vmatprep.subr.mxu0 0.0
        %7643 = vmatpush1.msra.mxu0 0.0
        %7644 = vmatprep.subr.mxu0 0.0
        %7645 = vmatpush1.msra.mxu0 0.0
        %7646 = vmatprep.subr.mxu0 0.0
        %7647 = vmatpush1.msra.mxu0 0.0
        %7648 = vmatprep.subr.mxu0 0.0
        %7649 = vmatpush1.msra.mxu0 %v7612
        %7650 = vmatprep.subr.mxu0 0.0
        %7651 = vmatpush1.msra.mxu0 %v7611
        %7652 = vmatprep.subr.mxu0 0.0
        %7653 = vmatpush1.msra.mxu0 %v7610
        %7654 = vmatprep.subr.mxu0 0.0
        %7655 = vmatpush1.msra.mxu0 %v7609
        %7656 = vmatprep.subr.mxu0 0.0
        %7657 = vmatpush2.msra.mxu0 0.0
        %7658 = vmatprep.subr.mxu0 0.0
        %7659 = vmatpush2.msra.mxu0 0.0
        %7660 = vmatprep.subr.mxu0 0.0
        %7661 = vmatpush2.msra.mxu0 0.0
        %7662 = vmatprep.subr.mxu0 0.0
        %7663 = vmatpush2.msra.mxu0 0.0
        %7664 = vmatprep.subr.mxu0 0.0
        %7665 = vmatpush2.msra.mxu0 0.0
        %7666 = vmatprep.subr.mxu0 0.0
        %7667 = vmatpush2.msra.mxu0 0.0
        %7668 = vmatprep.subr.mxu0 0.0
        %7669 = vmatpush2.msra.mxu0 0.0
        %7670 = vmatprep.subr.mxu0 0.0
        %7671 = vmatpush2.msra.mxu0 0.0
        %7672 = vmatprep.subr.mxu0 0.0
        %7673 = vmatpush2.msra.mxu0 0.0
        %7674 = vmatprep.subr.mxu0 0.0
        %7675 = vmatpush2.msra.mxu0 0.0
        %7676 = vmatprep.subr.mxu0 0.0
        %7677 = vmatpush2.msra.mxu0 0.0
        %7678 = vmatprep.subr.mxu0 0.0
        %7679 = vmatpush2.msra.mxu0 0.0
        %7680 = vmatprep.subr.mxu0 0.0
        %7681 = vmatpush2.msra.mxu0 0.0
        %7682 = vmatprep.subr.mxu0 0.0
        %7683 = vmatpush2.msra.mxu0 0.0
        %7684 = vmatprep.subr.mxu0 0.0
        %7685 = vmatpush2.msra.mxu0 0.0
        %7686 = vmatprep.subr.mxu0 0.0
        %7687 = vmatpush2.msra.mxu0 0.0
        %7688 = vmatprep.mubr.f32.mxu0 0.0
        %7689 = vmatmul.mubr.f32.gmra.mxu0 %v7619
        %v7690 = vpop.f32.mrf.mxu0
        %v7691 = vadd.f32 %v7617, %v7690
        %v7692 = vpop.f32.mrf.mxu0
        %7693 = vmatprep.mubr.f32.mxu0 0.0
        %7694 = vmatmul.mubr.f32.gmra.mxu0 %v7622
        %v7695 = vpop.f32.mrf.mxu0
        %v7696 = vadd.f32 %v7617, %v7695
        %v7697 = vpop.f32.mrf.mxu0
        %7698 = vdwg.mxu0
        %v7699 = vxor.u32 %v7691, 2147483648
        %v7700 = vxor.u32 %v7696, 2147483648
        %v7701 = vmul.f32 %v7699, 1.442695
        %v7702 = vpow.pop %v7701
        %v7703 = vmul.f32 %v7700, 1.442695
        %v7704 = vpow.pop %v7703
        %v7705 = vadd.f32 %v7702, 1.0
        %v7706 = vadd.f32 %v7704, 1.0
        %v7707 = vrcp.pop %v7705
        %v7708 = vmul.f32 1.0, %v7707
        %v7709 = vrcp.pop %v7706
        %v7710 = vmul.f32 1.0, %v7709
        %v7711 = vmul.f32 %v7691, %v7708
        %v7712 = vmul.f32 %v7696, %v7710
        %s7713 = scalar_lea.vmem %s5, 384
        %v7714 = vld [vmem:[%s7713] sm:$0xff]
        %v7715 = vld [vmem:[%s7713 + $0x8] sm:$0xff]
        %v7716 = vld [vmem:[%s7713 + $0x10] sm:$0xff]
        %v7717 = vld [vmem:[%s7713 + $0x18] sm:$0xff]
        %v7718 = vld [vmem:[%s7713 + $0x20] sm:$0xff]
        %v7719 = vld [vmem:[%s7713 + $0x28] sm:$0xff]
        %v7720 = vld [vmem:[%s7713 + $0x30] sm:$0xff]
        %v7721 = vld [vmem:[%s7713 + $0x38] sm:$0xff]
        %v7722 = vld [vmem:[%s7713 + $0x40] sm:$0xff]
        %v7723 = vld [vmem:[%s7713 + $0x48] sm:$0xff]
        %v7724 = vld [vmem:[%s7713 + $0x50] sm:$0xff]
        %v7725 = vld [vmem:[%s7713 + $0x58] sm:$0xff]
        %v7726 = vld [vmem:[%s7713 + $0x60] sm:$0xff]
        %v7727 = vld [vmem:[%s7713 + $0x68] sm:$0xff]
        %v7728 = vld [vmem:[%s7713 + $0x70] sm:$0xff]
        %v7729 = vld [vmem:[%s7713 + $0x78] sm:$0xff]
        %v7730 = vld [vmem:[%s2 + $0x26] sm:$0x1]
        %v7731 = vlaneseq
        %v7732 = vshrl.u32 %v7731, 7
        %v7733 = vsub.s32 0, %v7732
        %v7734 = vrot.slane %v7730, %v7733
        %7735 = vmatprep.subr.mxu0 0.0
        %7736 = vmatpush1.msra.mxu0 %v7729
        %7737 = vmatprep.subr.mxu0 0.0
        %7738 = vmatpush1.msra.mxu0 %v7728
        %7739 = vmatprep.subr.mxu0 0.0
        %7740 = vmatpush1.msra.mxu0 %v7727
        %7741 = vmatprep.subr.mxu0 0.0
        %7742 = vmatpush1.msra.mxu0 %v7726
        %7743 = vmatprep.subr.mxu0 0.0
        %7744 = vmatpush1.msra.mxu0 %v7725
        %7745 = vmatprep.subr.mxu0 0.0
        %7746 = vmatpush1.msra.mxu0 %v7724
        %7747 = vmatprep.subr.mxu0 0.0
        %7748 = vmatpush1.msra.mxu0 %v7723
        %7749 = vmatprep.subr.mxu0 0.0
        %7750 = vmatpush1.msra.mxu0 %v7722
        %7751 = vmatprep.subr.mxu0 0.0
        %7752 = vmatpush1.msra.mxu0 %v7721
        %7753 = vmatprep.subr.mxu0 0.0
        %7754 = vmatpush1.msra.mxu0 %v7720
        %7755 = vmatprep.subr.mxu0 0.0
        %7756 = vmatpush1.msra.mxu0 %v7719
        %7757 = vmatprep.subr.mxu0 0.0
        %7758 = vmatpush1.msra.mxu0 %v7718
        %7759 = vmatprep.subr.mxu0 0.0
        %7760 = vmatpush1.msra.mxu0 %v7717
        %7761 = vmatprep.subr.mxu0 0.0
        %7762 = vmatpush1.msra.mxu0 %v7716
        %7763 = vmatprep.subr.mxu0 0.0
        %7764 = vmatpush1.msra.mxu0 %v7715
        %7765 = vmatprep.subr.mxu0 0.0
        %7766 = vmatpush1.msra.mxu0 %v7714
        %7767 = vmatprep.subr.mxu0 0.0
        %7768 = vmatpush2.msra.mxu0 0.0
        %7769 = vmatprep.subr.mxu0 0.0
        %7770 = vmatpush2.msra.mxu0 0.0
        %7771 = vmatprep.subr.mxu0 0.0
        %7772 = vmatpush2.msra.mxu0 0.0
        %7773 = vmatprep.subr.mxu0 0.0
        %7774 = vmatpush2.msra.mxu0 0.0
        %7775 = vmatprep.subr.mxu0 0.0
        %7776 = vmatpush2.msra.mxu0 0.0
        %7777 = vmatprep.subr.mxu0 0.0
        %7778 = vmatpush2.msra.mxu0 0.0
        %7779 = vmatprep.subr.mxu0 0.0
        %7780 = vmatpush2.msra.mxu0 0.0
        %7781 = vmatprep.subr.mxu0 0.0
        %7782 = vmatpush2.msra.mxu0 0.0
        %7783 = vmatprep.subr.mxu0 0.0
        %7784 = vmatpush2.msra.mxu0 0.0
        %7785 = vmatprep.subr.mxu0 0.0
        %7786 = vmatpush2.msra.mxu0 0.0
        %7787 = vmatprep.subr.mxu0 0.0
        %7788 = vmatpush2.msra.mxu0 0.0
        %7789 = vmatprep.subr.mxu0 0.0
        %7790 = vmatpush2.msra.mxu0 0.0
        %7791 = vmatprep.subr.mxu0 0.0
        %7792 = vmatpush2.msra.mxu0 0.0
        %7793 = vmatprep.subr.mxu0 0.0
        %7794 = vmatpush2.msra.mxu0 0.0
        %7795 = vmatprep.subr.mxu0 0.0
        %7796 = vmatpush2.msra.mxu0 0.0
        %7797 = vmatprep.subr.mxu0 0.0
        %7798 = vmatpush2.msra.mxu0 0.0
        %7799 = vmatprep.mubr.f32.mxu0 0.0
        %7800 = vmatmul.mubr.f32.gmra.mxu0 %v7711
        %v7801 = vpop.f32.mrf.mxu0
        %v7802 = vadd.f32 %v7734, %v7801
        %v7803 = vpop.f32.mrf.mxu0
        %7804 = vmatprep.mubr.f32.mxu0 0.0
        %7805 = vmatmul.mubr.f32.gmra.mxu0 %v7712
        %v7806 = vpop.f32.mrf.mxu0
        %v7807 = vadd.f32 %v7734, %v7806
        %v7808 = vpop.f32.mrf.mxu0
        %7809 = vdwg.mxu0
        %v7810 = vmul.f32 %v7802, 0.5
        %v7811 = vmul.f32 %v7807, 0.5
        %v7812 = vadd.f32 %v7566, %v7810
        %v7813 = vadd.f32 %v7567, %v7811
        %v7814 = vld [vmem:[%s2 + $0x27] sm:$0x1]
        %v7815 = vld [vmem:[%s2 + $0x28] sm:$0x1]
        %v7816 = vsel %vm532, %v7812, 0.0
        %7817 = vadd.xlane.f32.xlu0 %v7816
        %v7818 = vpop.xlane.xlu0 %7817
        %v7819 = vsel %vm532, %v7813, 0.0
        %7820 = vadd.xlane.f32.xlu0 %v7819
        %v7821 = vpop.xlane.xlu0 %7820
        %v7822 = vmul.f32 %v7818, %v539
        %v7823 = vmul.f32 %v7821, %v539
        %v7824 = vsub.f32 %v7812, %v7822
        %v7825 = vsub.f32 %v7813, %v7823
        %v7826 = vmul.f32 %v7824, %v7824
        %v7827 = vmul.f32 %v7825, %v7825
        %v7828 = vsel %vm532, %v7826, 0.0
        %7829 = vadd.xlane.f32.xlu0 %v7828
        %v7830 = vpop.xlane.xlu0 %7829
        %v7831 = vsel %vm532, %v7827, 0.0
        %7832 = vadd.xlane.f32.xlu0 %v7831
        %v7833 = vpop.xlane.xlu0 %7832
        %v7834 = vmul.f32 %v7830, %v539
        %v7835 = vmul.f32 %v7833, %v539
        %v7836 = vadd.f32 %v7834, 1e-05
        %v7837 = vadd.f32 %v7835, 1e-05
        %v7838 = vrsqrt.pop %v7836
        %v7839 = vrsqrt.pop %v7837
        %v7840 = vmul.f32 %v7824, %v7838
        %v7841 = vmul.f32 %v7825, %v7839
        %v7842 = vlaneseq
        %v7843 = vshrl.u32 %v7842, 7
        %v7844 = vsub.s32 0, %v7843
        %v7845 = vrot.slane %v7814, %v7844
        %v7846 = vmul.f32 %v7840, %v7845
        %v7847 = vmul.f32 %v7841, %v7845
        %v7848 = vlaneseq
        %v7849 = vshrl.u32 %v7848, 7
        %v7850 = vsub.s32 0, %v7849
        %v7851 = vrot.slane %v7815, %v7850
        %v7852 = vadd.f32 %v7846, %v7851
        %v7853 = vadd.f32 %v7847, %v7851
        %v7854 = vld [vmem:[%s11] sm:$0x1]
        %s7855 = sld [smem:[#allocation2]]
        %v7856 = vstv %s7855
        %v7858 = vsel %vm532, %v7854, 0
        %v7861 = vsel %vm532, %v7852, 0
        %v7864 = vsel %vm532, %v7853, 0
        %7866 = vmatprep.subr.mxu0 0.0
        %7867 = vmatpush1.xpose.msra.mxu0 0.0
        %7868 = vmatprep.subr.mxu0 0.0
        %7869 = vmatpush1.xpose.msra.mxu0 0.0
        %7870 = vmatprep.subr.mxu0 0.0
        %7871 = vmatpush1.xpose.msra.mxu0 0.0
        %7872 = vmatprep.subr.mxu0 0.0
        %7873 = vmatpush1.xpose.msra.mxu0 0.0
        %7874 = vmatprep.subr.mxu0 0.0
        %7875 = vmatpush1.xpose.msra.mxu0 0.0
        %7876 = vmatprep.subr.mxu0 0.0
        %7877 = vmatpush1.xpose.msra.mxu0 0.0
        %7878 = vmatprep.subr.mxu0 0.0
        %7879 = vmatpush1.xpose.msra.mxu0 0.0
        %7880 = vmatprep.subr.mxu0 0.0
        %7881 = vmatpush1.xpose.msra.mxu0 0.0
        %7882 = vmatprep.subr.mxu0 0.0
        %7883 = vmatpush1.xpose.msra.mxu0 0.0
        %7884 = vmatprep.subr.mxu0 0.0
        %7885 = vmatpush1.xpose.msra.mxu0 0.0
        %7886 = vmatprep.subr.mxu0 0.0
        %7887 = vmatpush1.xpose.msra.mxu0 0.0
        %7888 = vmatprep.subr.mxu0 0.0
        %7889 = vmatpush1.xpose.msra.mxu0 0.0
        %7890 = vmatprep.subr.mxu0 0.0
        %7891 = vmatpush1.xpose.msra.mxu0 0.0
        %7892 = vmatprep.subr.mxu0 0.0
        %7893 = vmatpush1.xpose.msra.mxu0 0.0
        %7894 = vmatprep.subr.mxu0 0.0
        %7895 = vmatpush1.xpose.msra.mxu0 %v7864
        %7896 = vmatprep.subr.mxu0 0.0
        %7897 = vmatpush1.xpose.msra.mxu0 %v7861
        %7898 = vmatprep.subr.mxu0 0.0
        %7899 = vmatpush2.xpose.msra.mxu0 0.0
        %7900 = vmatprep.subr.mxu0 0.0
        %7901 = vmatpush2.xpose.msra.mxu0 0.0
        %7902 = vmatprep.subr.mxu0 0.0
        %7903 = vmatpush2.xpose.msra.mxu0 0.0
        %7904 = vmatprep.subr.mxu0 0.0
        %7905 = vmatpush2.xpose.msra.mxu0 0.0
        %7906 = vmatprep.subr.mxu0 0.0
        %7907 = vmatpush2.xpose.msra.mxu0 0.0
        %7908 = vmatprep.subr.mxu0 0.0
        %7909 = vmatpush2.xpose.msra.mxu0 0.0
        %7910 = vmatprep.subr.mxu0 0.0
        %7911 = vmatpush2.xpose.msra.mxu0 0.0
        %7912 = vmatprep.subr.mxu0 0.0
        %7913 = vmatpush2.xpose.msra.mxu0 0.0
        %7914 = vmatprep.subr.mxu0 0.0
        %7915 = vmatpush2.xpose.msra.mxu0 0.0
        %7916 = vmatprep.subr.mxu0 0.0
        %7917 = vmatpush2.xpose.msra.mxu0 0.0
        %7918 = vmatprep.subr.mxu0 0.0
        %7919 = vmatpush2.xpose.msra.mxu0 0.0
        %7920 = vmatprep.subr.mxu0 0.0
        %7921 = vmatpush2.xpose.msra.mxu0 0.0
        %7922 = vmatprep.subr.mxu0 0.0
        %7923 = vmatpush2.xpose.msra.mxu0 0.0
        %7924 = vmatprep.subr.mxu0 0.0
        %7925 = vmatpush2.xpose.msra.mxu0 0.0
        %7926 = vmatprep.subr.mxu0 0.0
        %7927 = vmatpush2.xpose.msra.mxu0 0.0
        %7928 = vmatprep.subr.mxu0 0.0
        %7929 = vmatpush2.xpose.msra.mxu0 0.0
        %7930 = vmatprep.mubr.f32.mxu0 0.0
        %7931 = vmatmul.mubr.f32.gmra.mxu0 %v7858
        %v7932 = vpop.f32.mrf.mxu0
        %v7933 = vadd.f32 %v7856, %v7932
        %v7934 = vpop.f32.mrf.mxu0
        %7935 = vdwg.mxu0
        %vm7936 = vcmask 122880
        %7937 = vst.msk [vmem:[%s433] sm:$0x1] %vm7936, %v7933
        %s7938 = sand.u32 %s314, 1
        %s7939 = scalar_lea.sflag [#allocation4], %s7938
        %s7940 = sand.u32 %s314, 1
        %s7941 = scalar_lea.vmem [#allocation3], %s7940
        // Predicated region
        $region73: #{sad_forward.1} parent=71 // pred_check
          %p7942 = pneg %p324
        $region74: #{sad_forward.1} parent=71 // pred_check_branch
          %7944 = sbr.rel (%p7942) target = $region76
        $region75: #{sad_forward.1} parent=71 // pred_region
          %s7946 = ssub.s32 16, 16
          %7947 = vsyncadd %s7939, %s7946
          %s7948 = smul.addr %s28, 16
          %s7949 = scalar_lea.hbm %s13, %s7948
          %s7951 = sshll.u32 %s7941, 4
          %s7952 = int_to_ptr.vmem [resolvable:$true] %s7951
          %7954 = dma.vmem_to_hbm [thread:$0]  %s7952, 16, %s7949, %s7939
        $region76: #{sad_forward.1} parent=71 // pred_fallthru
          _
      $region72: #{sad_forward.1} parent=5 // pred_fallthru
        _
      %p7955 = scmp.le.s32.totalorder 2, %s23
      // Predicated region
      $region77: #{sad_forward.1} parent=5 // pred_check
        %p7956 = pneg %p7955
      $region78: #{sad_forward.1} parent=5 // pred_check_branch
        %7958 = sbr.rel (%p7956) target = $region80
      $region79: #{sad_forward.1} parent=5 // pred_region
        %s7959 = ssub.s32 %s23, 2
        // Predicated region
        $region81: #{sad_forward.1} parent=79 // pred_check
          %p7960 = pneg %p330
        $region82: #{sad_forward.1} parent=79 // pred_check_branch
          %7962 = sbr.rel (%p7960) target = $region84
        $region83: #{sad_forward.1} parent=79 // pred_region
          %s7963 = sand.u32 %s315, 1
          %s7964 = scalar_lea.sflag [#allocation4], %s7963
          %s7965 = sand.u32 %s315, 1
          %s7966 = scalar_lea.vmem [#allocation3], %s7965
          %7967 = dma.done %s7964, 16
        $region84: #{sad_forward.1} parent=79 // pred_fallthru
          _
      $region80: #{sad_forward.1} parent=5 // pred_fallthru
        _
    $region6: #{sad_forward.1} parent=1 // loop_footer
      %s27 = sadd.s32 1, %s23
    $region7: #{sad_forward.1} parent=1 // loop_footer_branch
      %22 = sbr.rel target = $region3
    $region8: #{sad_forward.1} parent=1 // loop_exit
      _
    %7968 = vsyncpa [#allocation4], 1
    %s7969 = scalar_lea.sflag [#allocation4], 1
    %7970 = vsyncpa %s7969, 1

</llo_original>
